<compile_context>
chip_gen: v7x
topology: tpu7x:2x2x1
jax: 0.10.0
libtpu: 0.0.40
codegen_flags: <defaults>
</compile_context>

<pallas_src>
import functools

import jax
import jax.numpy as jnp
from jax import lax
from jax.experimental import pallas as pl
from jax.experimental.pallas import tpu as pltpu

BN_EPS = 1e-5


def _round_up(v, m):
    return (v + m - 1) // m * m


# ----------------------------------------------------------------------------
# Fused kernel factory.
#   inputs : x(CP,LA)  w(9,CP,9*CP)  bias(9,CP,1)
#            maskA(1,LA)  maskB(1,LB)  pool_sel(LA,LB)
#   outputs: 9 per-layer activations (emit_feats) or only the final one,
#            all in the padded lane-dense layout.
#   scratch: im2col buffers (9*CP, LA) and (9*CP, LB).
# ----------------------------------------------------------------------------
def _make_fused_kernel(emit_feats, CP, shifts_a, shifts_b, wp_a, n_pre,
                       n_layers):

    def kernel(x_ref, w_ref, bias_ref, ma_ref, mb_ref, sel_ref, *refs):
        n_out = n_layers if emit_feats else 1
        outs = refs[:n_out]
        im_a_ref, im_b_ref = refs[n_out], refs[n_out + 1]

        def conv_block(layer, a, im_ref, mask, shifts):
            L = a.shape[1]
            # Build im2col (9*CP, L): 9 lane-rotated copies of the activation.
            for k, s in enumerate(shifts):
                t = a if s == 0 else pltpu.roll(a, (-s) % L, axis=1)
                im_ref[k * CP:(k + 1) * CP, :] = t
            # One MXU matmul with K = 9*CP, lane-dense output (CP, L).
            # BN scale already folded into w_ref; bias + ReLU + halo re-zero.
            y = jnp.dot(w_ref[layer], im_ref[...],
                        preferred_element_type=jnp.float32)
            return jnp.maximum(y + bias_ref[layer], 0.0) * mask

        mask_a = ma_ref[...]   # (1, LA)
        mask_b = mb_ref[...]   # (1, LB)

        a = x_ref[...]         # (CP, LA), halo + channel padding already zero
        for l in range(n_pre):
            a = conv_block(l, a, im_a_ref, mask_a, shifts_a)
            if emit_feats:
                outs[l][...] = a

        # MaxPool 3x3 stride 2 pad 1.  Inputs are post-ReLU >= 0, so the zero
        # halo is equivalent to -inf padding.  Separable window max (x then y)
        # via lane rotations, then stride-2 selection + re-embedding into the
        # padded post-pool layout via a constant 0/1 matmul (MXU).
        L = a.shape[1]
        mx = jnp.maximum(a, jnp.maximum(pltpu.roll(a, (L - 1) % L, axis=1),
                                        pltpu.roll(a, 1, axis=1)))
        m = jnp.maximum(mx, jnp.maximum(pltpu.roll(mx, (L - wp_a) % L, axis=1),
                                        pltpu.roll(mx, wp_a, axis=1)))
        a = jnp.dot(m, sel_ref[...], preferred_element_type=jnp.float32)

        for l in range(n_pre, n_layers):
            a = conv_block(l, a, im_b_ref, mask_b, shifts_b)
            if emit_feats:
                outs[l][...] = a

        if not emit_feats:
            outs[0][...] = a

    return kernel


# ----------------------------------------------------------------------------
# Host-side packing helpers (tiny, run once under jit).
# ----------------------------------------------------------------------------
def _pack_params(params, CP):
    ws, bs = [], []
    for (w, scale, bias) in params:
        kh, kw, cin, cout = w.shape
        wf = w * scale[None, None, None, :]                        # fold BN scale
        wt = jnp.transpose(wf, (3, 0, 1, 2))                       # (co,3,3,ci)
        wt = jnp.pad(wt, ((0, CP - cout), (0, 0), (0, 0), (0, CP - cin)))
        ws.append(wt.reshape(CP, kh * kw * CP))                    # (CP, 9*CP)
        bs.append(jnp.pad(bias, (0, CP - cout)).reshape(CP, 1))
    return (jnp.stack(ws).astype(jnp.float32),
            jnp.stack(bs).astype(jnp.float32))


def _interior_mask(N, H, W, L):
    Hp, Wp = H + 2, W + 2
    m = jnp.zeros((N, Hp, Wp), jnp.float32)
    m = m.at[:, 1:H + 1, 1:W + 1].set(1.0)
    m = m.reshape(1, N * Hp * Wp)
    return jnp.pad(m, ((0, 0), (0, L - N * Hp * Wp)))


def _pool_select(N, H, W, LA, LB):
    """0/1 matrix mapping padded pre-pool flat positions (window centers at
    stride 2) to padded post-pool flat positions."""
    Ho = (H + 2 - 3) // 2 + 1
    Wo = (W + 2 - 3) // 2 + 1
    HpA, WpA = H + 2, W + 2
    HpB, WpB = Ho + 2, Wo + 2
    n, oy, ox = jnp.meshgrid(jnp.arange(N), jnp.arange(Ho), jnp.arange(Wo),
                             indexing="ij")
    pa = (n * HpA * WpA + (2 * oy + 1) * WpA + (2 * ox + 1)).ravel()
    pb = (n * HpB * WpB + (oy + 1) * WpB + (ox + 1)).ravel()
    sel = jnp.zeros((N * HpA * WpA, N * HpB * WpB), jnp.float32)
    sel = sel.at[pa, pb].set(1.0)
    sel = jnp.pad(sel, ((0, LA - N * HpA * WpA), (0, LB - N * HpB * WpB)))
    return sel, Ho, Wo


# ----------------------------------------------------------------------------
# CNN9.forward
# ----------------------------------------------------------------------------
@functools.partial(jax.jit, static_argnames=("return_feature_maps",))
def cnn9_forward(x_nchw, params, return_feature_maps=False):
    N, Cin, H, W = x_nchw.shape
    n_layers = len(params)          # 9
    n_pre = 3                       # maxpool sits after the 3rd block
    cins = [p[0].shape[2] for p in params]
    couts = [p[0].shape[3] for p in params]
    CP = max(8, _round_up(max(cins + couts + [Cin]), 8))

    HpA, WpA = H + 2, W + 2
    nA = N * HpA * WpA
    LA = _round_up(nA, 128)
    Ho = (H + 2 - 3) // 2 + 1
    Wo = (W + 2 - 3) // 2 + 1
    HpB, WpB = Ho + 2, Wo + 2
    nB = N * HpB * WpB
    LB = _round_up(nB, 128)

    # Input NCHW -> lane-dense padded layout (CP, LA).
    xp = jnp.pad(x_nchw.astype(jnp.float32),
                 ((0, 0), (0, CP - Cin), (1, 1), (1, 1)))
    xflat = jnp.transpose(xp, (1, 0, 2, 3)).reshape(CP, nA)
    xflat = jnp.pad(xflat, ((0, 0), (0, LA - nA)))

    w_pk, b_pk = _pack_params(params, CP)
    mask_a = _interior_mask(N, H, W, LA)
    mask_b = _interior_mask(N, Ho, Wo, LB)
    sel, _, _ = _pool_select(N, H, W, LA, LB)

    shifts_a = tuple((dy - 1) * WpA + (dx - 1)
                     for dy in range(3) for dx in range(3))
    shifts_b = tuple((dy - 1) * WpB + (dx - 1)
                     for dy in range(3) for dx in range(3))

    kernel = _make_fused_kernel(return_feature_maps, CP, shifts_a, shifts_b,
                                WpA, n_pre, n_layers)

    if return_feature_maps:
        out_shape = tuple(
            jax.ShapeDtypeStruct((CP, LA if l < n_pre else LB), jnp.float32)
            for l in range(n_layers))
        out_specs = tuple(
            pl.BlockSpec((CP, LA if l < n_pre else LB), lambda i: (0, 0))
            for l in range(n_layers))
    else:
        out_shape = jax.ShapeDtypeStruct((CP, LB), jnp.float32)
        out_specs = pl.BlockSpec((CP, LB), lambda i: (0, 0))

    in_specs = [
        pl.BlockSpec((CP, LA), lambda i: (0, 0)),
        pl.BlockSpec(w_pk.shape, lambda i: (0, 0, 0)),
        pl.BlockSpec(b_pk.shape, lambda i: (0, 0, 0)),
        pl.BlockSpec((1, LA), lambda i: (0, 0)),
        pl.BlockSpec((1, LB), lambda i: (0, 0)),
        pl.BlockSpec((LA, LB), lambda i: (0, 0)),
    ]

    outs = pl.pallas_call(
        kernel,
        out_shape=out_shape,
        grid=(1,),
        in_specs=in_specs,
        out_specs=out_specs,
        scratch_shapes=[pltpu.VMEM((9 * CP, LA), jnp.float32),
                        pltpu.VMEM((9 * CP, LB), jnp.float32)],
        compiler_params=pltpu.CompilerParams(
            dimension_semantics=("arbitrary",)),
    )(xflat, w_pk, b_pk, mask_a, mask_b, sel)

    def to_nchw(flat, cout, n, h, w):
        f = flat[:, :n * (h + 2) * (w + 2)].reshape(CP, n, h + 2, w + 2)
        f = f[:cout, :, 1:h + 1, 1:w + 1]
        return jnp.transpose(f, (1, 0, 2, 3))

    if return_feature_maps:
        feats = []
        for l in range(n_layers):
            if l < n_pre:
                feats.append(to_nchw(outs[l], couts[l], N, H, W))
            else:
                feats.append(to_nchw(outs[l], couts[l], N, Ho, Wo))
        return feats
    return [to_nchw(outs, couts[-1], N, Ho, Wo)]


# ----------------------------------------------------------------------------
# Pure-JAX reference (XLA) for correctness checking.
# ----------------------------------------------------------------------------
def cnn9_reference(x_nchw, params):
    x = x_nchw.astype(jnp.float32)
    for i, (w, scale, bias) in enumerate(params):
        x = lax.conv_general_dilated(
            x, w.astype(jnp.float32), (1, 1), ((1, 1), (1, 1)),
            dimension_numbers=("NCHW", "HWIO", "NCHW"),
            precision=lax.Precision.HIGHEST)
        x = x * scale[None, :, None, None] + bias[None, :, None, None]
        x = jnp.maximum(x, 0.0)
        if i == 2:
            x = lax.reduce_window(x, -jnp.inf, lax.max,
                                  (1, 1, 3, 3), (1, 1, 2, 2),
                                  ((0, 0), (0, 0), (1, 1), (1, 1)))
    return x


# ----------------------------------------------------------------------------
# Synthetic, deterministic parameters.  Conv weight in HWIO (3,3,Cin,Cout);
# BN running stats folded into scale/bias.
# ----------------------------------------------------------------------------
def make_layer_params(key, cin, cout):
    k1, k2, k3, k4, k5, k6 = jax.random.split(key, 6)
    w = jax.random.normal(k1, (3, 3, cin, cout), jnp.float32) * 0.1
    conv_b = jax.random.normal(k2, (cout,), jnp.float32) * 0.05
    gamma = 1.0 + 0.1 * jax.random.normal(k3, (cout,), jnp.float32)
    beta = 0.05 * jax.random.normal(k4, (cout,), jnp.float32)
    run_mean = 0.01 * jax.random.normal(k5, (cout,), jnp.float32)
    run_var = 0.9 + 0.1 * jnp.abs(jax.random.normal(k6, (cout,), jnp.float32))
    scale = gamma / jnp.sqrt(run_var + BN_EPS)
    bias = (conv_b - run_mean) * scale + beta
    return w, scale, bias


def init_cnn9_params(key):
    # channel plan: 4 -> 8 -> 8 -> 16 -> (maxpool) -> 16 x 6
    chans = [(4, 8), (8, 8), (8, 16),
             (16, 16), (16, 16), (16, 16), (16, 16), (16, 16), (16, 16)]
    keys = jax.random.split(key, len(chans))
    return [make_layer_params(k, ci, co) for k, (ci, co) in zip(keys, chans)]


if __name__ == "__main__":
    key = jax.random.PRNGKey(0)
    kx, kp = jax.random.split(key)
    x = jax.random.normal(kx, (2, 4, 16, 16), jnp.float32)  # NCHW like PyTorch
    params = init_cnn9_params(kp)

    out = cnn9_forward(x, params, return_feature_maps=False)
    result = jax.block_until_ready(out[0])
    assert result.shape == (2, 16, 8, 8), result.shape
    assert bool(jnp.all(jnp.isfinite(result)))

    ref = cnn9_reference(x, params)
    max_err = float(jnp.max(jnp.abs(result - ref)))
    assert bool(jnp.allclose(result, ref, atol=5e-2, rtol=5e-2)), max_err

    # exercise the feature-map path once as well
    feats = cnn9_forward(x, params, return_feature_maps=True)
    jax.block_until_ready(feats[-1])
    assert feats[0].shape == (2, 8, 16, 16), feats[0].shape
    assert feats[-1].shape == (2, 16, 8, 8), feats[-1].shape
    assert bool(jnp.allclose(feats[-1], ref, atol=5e-2, rtol=5e-2))

    print("KERNEL_OK")
</pallas_src>

<mosaic_0001>
module attributes {stable_mosaic.version = 11 : i64} {
  func.func @kernel(%arg0: i32, %arg1: memref<16x768xf32, #tpu.memory_space<vmem>>, %arg2: memref<9x16x144xf32, #tpu.memory_space<vmem>>, %arg3: memref<9x16x1xf32, #tpu.memory_space<vmem>>, %arg4: memref<1x768xf32, #tpu.memory_space<vmem>>, %arg5: memref<1x256xf32, #tpu.memory_space<vmem>>, %arg6: memref<768x256xf32, #tpu.memory_space<vmem>>, %arg7: memref<16x256xf32, #tpu.memory_space<vmem>>, %arg8: memref<144x768xf32, #tpu.memory_space<vmem>>, %arg9: memref<144x256xf32, #tpu.memory_space<vmem>>) attributes {dimension_semantics = [#tpu.dimension_semantics<arbitrary>], iteration_bounds = array<i64: 1>, scalar_prefetch = 0 : i64, scratch_operands = 2 : i64, tpu.core_type = #tpu.core_type<tc>, window_params = [{pipeline_mode = #tpu.pipeline_mode<synchronous>, transform_indices = @transform_0, window_bounds = array<i64: 16, 768>}, {pipeline_mode = #tpu.pipeline_mode<synchronous>, transform_indices = @transform_1, window_bounds = array<i64: 9, 16, 144>}, {pipeline_mode = #tpu.pipeline_mode<synchronous>, transform_indices = @transform_2, window_bounds = array<i64: 9, 16, 1>}, {pipeline_mode = #tpu.pipeline_mode<synchronous>, transform_indices = @transform_3, window_bounds = array<i64: 1, 768>}, {pipeline_mode = #tpu.pipeline_mode<synchronous>, transform_indices = @transform_4, window_bounds = array<i64: 1, 256>}, {pipeline_mode = #tpu.pipeline_mode<synchronous>, transform_indices = @transform_5, window_bounds = array<i64: 768, 256>}, {pipeline_mode = #tpu.pipeline_mode<synchronous>, transform_indices = @transform_6, window_bounds = array<i64: 16, 256>}]} {
    %c0 = arith.constant 0 : index
    %c0_0 = arith.constant 0 : index
    %0 = vector.load %arg4[%c0, %c0_0] : memref<1x768xf32, #tpu.memory_space<vmem>>, vector<1x768xf32>
    %c0_1 = arith.constant 0 : index
    %c0_2 = arith.constant 0 : index
    %1 = vector.load %arg5[%c0_1, %c0_2] : memref<1x256xf32, #tpu.memory_space<vmem>>, vector<1x256xf32>
    %c0_3 = arith.constant 0 : index
    %c0_4 = arith.constant 0 : index
    %2 = vector.load %arg1[%c0_3, %c0_4] : memref<16x768xf32, #tpu.memory_space<vmem>>, vector<16x768xf32>
    %c19_i32 = arith.constant 19 : i32
    %3 = tpu.dynamic_rotate %2 by %c19_i32 dim 1 : vector<16x768xf32>, i32 -> vector<16x768xf32>
    %c0_5 = arith.constant 0 : index
    %c0_6 = arith.constant 0 : index
    %4 = vector.load %arg8[%c0_5, %c0_6] : memref<144x768xf32, #tpu.memory_space<vmem>>, vector<16x768xf32>
    tpu.vector_store %arg8[%c0_5, %c0_6], %3 {strides = array<i32>} : memref<144x768xf32, #tpu.memory_space<vmem>>, vector<16x768xf32>,
    %c18_i32 = arith.constant 18 : i32
    %5 = tpu.dynamic_rotate %2 by %c18_i32 dim 1 : vector<16x768xf32>, i32 -> vector<16x768xf32>
    %c16 = arith.constant 16 : index
    %c0_7 = arith.constant 0 : index
    %6 = vector.load %arg8[%c16, %c0_7] : memref<144x768xf32, #tpu.memory_space<vmem>>, vector<16x768xf32>
    tpu.vector_store %arg8[%c16, %c0_7], %5 {strides = array<i32>} : memref<144x768xf32, #tpu.memory_space<vmem>>, vector<16x768xf32>,
    %c17_i32 = arith.constant 17 : i32
    %7 = tpu.dynamic_rotate %2 by %c17_i32 dim 1 : vector<16x768xf32>, i32 -> vector<16x768xf32>
    %c32 = arith.constant 32 : index
    %c0_8 = arith.constant 0 : index
    %8 = vector.load %arg8[%c32, %c0_8] : memref<144x768xf32, #tpu.memory_space<vmem>>, vector<16x768xf32>
    tpu.vector_store %arg8[%c32, %c0_8], %7 {strides = array<i32>} : memref<144x768xf32, #tpu.memory_space<vmem>>, vector<16x768xf32>,
    %c1_i32 = arith.constant 1 : i32
    %9 = tpu.dynamic_rotate %2 by %c1_i32 dim 1 : vector<16x768xf32>, i32 -> vector<16x768xf32>
    %c48 = arith.constant 48 : index
    %c0_9 = arith.constant 0 : index
    %10 = vector.load %arg8[%c48, %c0_9] : memref<144x768xf32, #tpu.memory_space<vmem>>, vector<16x768xf32>
    tpu.vector_store %arg8[%c48, %c0_9], %9 {strides = array<i32>} : memref<144x768xf32, #tpu.memory_space<vmem>>, vector<16x768xf32>,
    %c64 = arith.constant 64 : index
    %c0_10 = arith.constant 0 : index
    %11 = vector.load %arg8[%c64, %c0_10] : memref<144x768xf32, #tpu.memory_space<vmem>>, vector<16x768xf32>
    tpu.vector_store %arg8[%c64, %c0_10], %2 {strides = array<i32>} : memref<144x768xf32, #tpu.memory_space<vmem>>, vector<16x768xf32>,
    %c767_i32 = arith.constant 767 : i32
    %12 = tpu.dynamic_rotate %2 by %c767_i32 dim 1 : vector<16x768xf32>, i32 -> vector<16x768xf32>
    %c80 = arith.constant 80 : index
    %c0_11 = arith.constant 0 : index
    %13 = vector.load %arg8[%c80, %c0_11] : memref<144x768xf32, #tpu.memory_space<vmem>>, vector<16x768xf32>
    tpu.vector_store %arg8[%c80, %c0_11], %12 {strides = array<i32>} : memref<144x768xf32, #tpu.memory_space<vmem>>, vector<16x768xf32>,
    %c751_i32 = arith.constant 751 : i32
    %14 = tpu.dynamic_rotate %2 by %c751_i32 dim 1 : vector<16x768xf32>, i32 -> vector<16x768xf32>
    %c96 = arith.constant 96 : index
    %c0_12 = arith.constant 0 : index
    %15 = vector.load %arg8[%c96, %c0_12] : memref<144x768xf32, #tpu.memory_space<vmem>>, vector<16x768xf32>
    tpu.vector_store %arg8[%c96, %c0_12], %14 {strides = array<i32>} : memref<144x768xf32, #tpu.memory_space<vmem>>, vector<16x768xf32>,
    %c750_i32 = arith.constant 750 : i32
    %16 = tpu.dynamic_rotate %2 by %c750_i32 dim 1 : vector<16x768xf32>, i32 -> vector<16x768xf32>
    %c112 = arith.constant 112 : index
    %c0_13 = arith.constant 0 : index
    %17 = vector.load %arg8[%c112, %c0_13] : memref<144x768xf32, #tpu.memory_space<vmem>>, vector<16x768xf32>
    tpu.vector_store %arg8[%c112, %c0_13], %16 {strides = array<i32>} : memref<144x768xf32, #tpu.memory_space<vmem>>, vector<16x768xf32>,
    %c749_i32 = arith.constant 749 : i32
    %18 = tpu.dynamic_rotate %2 by %c749_i32 dim 1 : vector<16x768xf32>, i32 -> vector<16x768xf32>
    %c128 = arith.constant 128 : index
    %c0_14 = arith.constant 0 : index
    %19 = vector.load %arg8[%c128, %c0_14] : memref<144x768xf32, #tpu.memory_space<vmem>>, vector<16x768xf32>
    tpu.vector_store %arg8[%c128, %c0_14], %18 {strides = array<i32>} : memref<144x768xf32, #tpu.memory_space<vmem>>, vector<16x768xf32>,
    %c0_15 = arith.constant 0 : index
    %c0_16 = arith.constant 0 : index
    %c0_17 = arith.constant 0 : index
    %20 = vector.load %arg2[%c0_15, %c0_16, %c0_17] : memref<9x16x144xf32, #tpu.memory_space<vmem>>, vector<1x16x144xf32>
    %21 = vector.shape_cast %20 : vector<1x16x144xf32> to vector<16x144xf32>
    %c0_18 = arith.constant 0 : index
    %c0_19 = arith.constant 0 : index
    %22 = vector.load %arg8[%c0_18, %c0_19] : memref<144x768xf32, #tpu.memory_space<vmem>>, vector<144x768xf32>
    %cst = arith.constant dense<0.000000e+00> : vector<16x768xf32>
    %23 = tpu.matmul %21, %22, %cst {dimension_numbers = #tpu.dot_dimension_numbers<[1], [0], [0], [1], [0, 0, 1, 1], [], []>} : vector<16x144xf32>, vector<144x768xf32>, vector<16x768xf32> -> vector<16x768xf32>
    %c0_20 = arith.constant 0 : index
    %c0_21 = arith.constant 0 : index
    %c0_22 = arith.constant 0 : index
    %24 = vector.load %arg3[%c0_20, %c0_21, %c0_22] : memref<9x16x1xf32, #tpu.memory_space<vmem>>, vector<1x16x1xf32>
    %25 = vector.shape_cast %24 : vector<1x16x1xf32> to vector<16x1xf32>
    %26 = vector.broadcast %25 : vector<16x1xf32> to vector<16x768xf32>
    %27 = arith.addf %23, %26 : vector<16x768xf32>
    %cst_23 = arith.constant 0.000000e+00 : f32
    %28 = vector.broadcast %cst_23 : f32 to vector<16x768xf32>
    %29 = arith.maximumf %27, %28 : vector<16x768xf32>
    %30 = vector.broadcast %0 : vector<1x768xf32> to vector<16x768xf32>
    %31 = arith.mulf %29, %30 : vector<16x768xf32>
    %c19_i32_24 = arith.constant 19 : i32
    %32 = tpu.dynamic_rotate %31 by %c19_i32_24 dim 1 : vector<16x768xf32>, i32 -> vector<16x768xf32>
    %c0_25 = arith.constant 0 : index
    %c0_26 = arith.constant 0 : index
    %33 = vector.load %arg8[%c0_25, %c0_26] : memref<144x768xf32, #tpu.memory_space<vmem>>, vector<16x768xf32>
    tpu.vector_store %arg8[%c0_25, %c0_26], %32 {strides = array<i32>} : memref<144x768xf32, #tpu.memory_space<vmem>>, vector<16x768xf32>,
    %c18_i32_27 = arith.constant 18 : i32
    %34 = tpu.dynamic_rotate %31 by %c18_i32_27 dim 1 : vector<16x768xf32>, i32 -> vector<16x768xf32>
    %c16_28 = arith.constant 16 : index
    %c0_29 = arith.constant 0 : index
    %35 = vector.load %arg8[%c16_28, %c0_29] : memref<144x768xf32, #tpu.memory_space<vmem>>, vector<16x768xf32>
    tpu.vector_store %arg8[%c16_28, %c0_29], %34 {strides = array<i32>} : memref<144x768xf32, #tpu.memory_space<vmem>>, vector<16x768xf32>,
    %c17_i32_30 = arith.constant 17 : i32
    %36 = tpu.dynamic_rotate %31 by %c17_i32_30 dim 1 : vector<16x768xf32>, i32 -> vector<16x768xf32>
    %c32_31 = arith.constant 32 : index
    %c0_32 = arith.constant 0 : index
    %37 = vector.load %arg8[%c32_31, %c0_32] : memref<144x768xf32, #tpu.memory_space<vmem>>, vector<16x768xf32>
    tpu.vector_store %arg8[%c32_31, %c0_32], %36 {strides = array<i32>} : memref<144x768xf32, #tpu.memory_space<vmem>>, vector<16x768xf32>,
    %c1_i32_33 = arith.constant 1 : i32
    %38 = tpu.dynamic_rotate %31 by %c1_i32_33 dim 1 : vector<16x768xf32>, i32 -> vector<16x768xf32>
    %c48_34 = arith.constant 48 : index
    %c0_35 = arith.constant 0 : index
    %39 = vector.load %arg8[%c48_34, %c0_35] : memref<144x768xf32, #tpu.memory_space<vmem>>, vector<16x768xf32>
    tpu.vector_store %arg8[%c48_34, %c0_35], %38 {strides = array<i32>} : memref<144x768xf32, #tpu.memory_space<vmem>>, vector<16x768xf32>,
    %c64_36 = arith.constant 64 : index
    %c0_37 = arith.constant 0 : index
    %40 = vector.load %arg8[%c64_36, %c0_37] : memref<144x768xf32, #tpu.memory_space<vmem>>, vector<16x768xf32>
    tpu.vector_store %arg8[%c64_36, %c0_37], %31 {strides = array<i32>} : memref<144x768xf32, #tpu.memory_space<vmem>>, vector<16x768xf32>,
    %c767_i32_38 = arith.constant 767 : i32
    %41 = tpu.dynamic_rotate %31 by %c767_i32_38 dim 1 : vector<16x768xf32>, i32 -> vector<16x768xf32>
    %c80_39 = arith.constant 80 : index
    %c0_40 = arith.constant 0 : index
    %42 = vector.load %arg8[%c80_39, %c0_40] : memref<144x768xf32, #tpu.memory_space<vmem>>, vector<16x768xf32>
    tpu.vector_store %arg8[%c80_39, %c0_40], %41 {strides = array<i32>} : memref<144x768xf32, #tpu.memory_space<vmem>>, vector<16x768xf32>,
    %c751_i32_41 = arith.constant 751 : i32
    %43 = tpu.dynamic_rotate %31 by %c751_i32_41 dim 1 : vector<16x768xf32>, i32 -> vector<16x768xf32>
    %c96_42 = arith.constant 96 : index
    %c0_43 = arith.constant 0 : index
    %44 = vector.load %arg8[%c96_42, %c0_43] : memref<144x768xf32, #tpu.memory_space<vmem>>, vector<16x768xf32>
    tpu.vector_store %arg8[%c96_42, %c0_43], %43 {strides = array<i32>} : memref<144x768xf32, #tpu.memory_space<vmem>>, vector<16x768xf32>,
    %c750_i32_44 = arith.constant 750 : i32
    %45 = tpu.dynamic_rotate %31 by %c750_i32_44 dim 1 : vector<16x768xf32>, i32 -> vector<16x768xf32>
    %c112_45 = arith.constant 112 : index
    %c0_46 = arith.constant 0 : index
    %46 = vector.load %arg8[%c112_45, %c0_46] : memref<144x768xf32, #tpu.memory_space<vmem>>, vector<16x768xf32>
    tpu.vector_store %arg8[%c112_45, %c0_46], %45 {strides = array<i32>} : memref<144x768xf32, #tpu.memory_space<vmem>>, vector<16x768xf32>,
    %c749_i32_47 = arith.constant 749 : i32
    %47 = tpu.dynamic_rotate %31 by %c749_i32_47 dim 1 : vector<16x768xf32>, i32 -> vector<16x768xf32>
    %c128_48 = arith.constant 128 : index
    %c0_49 = arith.constant 0 : index
    %48 = vector.load %arg8[%c128_48, %c0_49] : memref<144x768xf32, #tpu.memory_space<vmem>>, vector<16x768xf32>
    tpu.vector_store %arg8[%c128_48, %c0_49], %47 {strides = array<i32>} : memref<144x768xf32, #tpu.memory_space<vmem>>, vector<16x768xf32>,
    %c1 = arith.constant 1 : index
    %c0_50 = arith.constant 0 : index
    %c0_51 = arith.constant 0 : index
    %49 = vector.load %arg2[%c1, %c0_50, %c0_51] : memref<9x16x144xf32, #tpu.memory_space<vmem>>, vector<1x16x144xf32>
    %50 = vector.shape_cast %49 : vector<1x16x144xf32> to vector<16x144xf32>
    %c0_52 = arith.constant 0 : index
    %c0_53 = arith.constant 0 : index
    %51 = vector.load %arg8[%c0_52, %c0_53] : memref<144x768xf32, #tpu.memory_space<vmem>>, vector<144x768xf32>
    %cst_54 = arith.constant dense<0.000000e+00> : vector<16x768xf32>
    %52 = tpu.matmul %50, %51, %cst_54 {dimension_numbers = #tpu.dot_dimension_numbers<[1], [0], [0], [1], [0, 0, 1, 1], [], []>} : vector<16x144xf32>, vector<144x768xf32>, vector<16x768xf32> -> vector<16x768xf32>
    %c1_55 = arith.constant 1 : index
    %c0_56 = arith.constant 0 : index
    %c0_57 = arith.constant 0 : index
    %53 = vector.load %arg3[%c1_55, %c0_56, %c0_57] : memref<9x16x1xf32, #tpu.memory_space<vmem>>, vector<1x16x1xf32>
    %54 = vector.shape_cast %53 : vector<1x16x1xf32> to vector<16x1xf32>
    %55 = vector.broadcast %54 : vector<16x1xf32> to vector<16x768xf32>
    %56 = arith.addf %52, %55 : vector<16x768xf32>
    %cst_58 = arith.constant 0.000000e+00 : f32
    %57 = vector.broadcast %cst_58 : f32 to vector<16x768xf32>
    %58 = arith.maximumf %56, %57 : vector<16x768xf32>
    %59 = vector.broadcast %0 : vector<1x768xf32> to vector<16x768xf32>
    %60 = arith.mulf %58, %59 : vector<16x768xf32>
    %c19_i32_59 = arith.constant 19 : i32
    %61 = tpu.dynamic_rotate %60 by %c19_i32_59 dim 1 : vector<16x768xf32>, i32 -> vector<16x768xf32>
    %c0_60 = arith.constant 0 : index
    %c0_61 = arith.constant 0 : index
    %62 = vector.load %arg8[%c0_60, %c0_61] : memref<144x768xf32, #tpu.memory_space<vmem>>, vector<16x768xf32>
    tpu.vector_store %arg8[%c0_60, %c0_61], %61 {strides = array<i32>} : memref<144x768xf32, #tpu.memory_space<vmem>>, vector<16x768xf32>,
    %c18_i32_62 = arith.constant 18 : i32
    %63 = tpu.dynamic_rotate %60 by %c18_i32_62 dim 1 : vector<16x768xf32>, i32 -> vector<16x768xf32>
    %c16_63 = arith.constant 16 : index
    %c0_64 = arith.constant 0 : index
    %64 = vector.load %arg8[%c16_63, %c0_64] : memref<144x768xf32, #tpu.memory_space<vmem>>, vector<16x768xf32>
    tpu.vector_store %arg8[%c16_63, %c0_64], %63 {strides = array<i32>} : memref<144x768xf32, #tpu.memory_space<vmem>>, vector<16x768xf32>,
    %c17_i32_65 = arith.constant 17 : i32
    %65 = tpu.dynamic_rotate %60 by %c17_i32_65 dim 1 : vector<16x768xf32>, i32 -> vector<16x768xf32>
    %c32_66 = arith.constant 32 : index
    %c0_67 = arith.constant 0 : index
    %66 = vector.load %arg8[%c32_66, %c0_67] : memref<144x768xf32, #tpu.memory_space<vmem>>, vector<16x768xf32>
    tpu.vector_store %arg8[%c32_66, %c0_67], %65 {strides = array<i32>} : memref<144x768xf32, #tpu.memory_space<vmem>>, vector<16x768xf32>,
    %c1_i32_68 = arith.constant 1 : i32
    %67 = tpu.dynamic_rotate %60 by %c1_i32_68 dim 1 : vector<16x768xf32>, i32 -> vector<16x768xf32>
    %c48_69 = arith.constant 48 : index
    %c0_70 = arith.constant 0 : index
    %68 = vector.load %arg8[%c48_69, %c0_70] : memref<144x768xf32, #tpu.memory_space<vmem>>, vector<16x768xf32>
    tpu.vector_store %arg8[%c48_69, %c0_70], %67 {strides = array<i32>} : memref<144x768xf32, #tpu.memory_space<vmem>>, vector<16x768xf32>,
    %c64_71 = arith.constant 64 : index
    %c0_72 = arith.constant 0 : index
    %69 = vector.load %arg8[%c64_71, %c0_72] : memref<144x768xf32, #tpu.memory_space<vmem>>, vector<16x768xf32>
    tpu.vector_store %arg8[%c64_71, %c0_72], %60 {strides = array<i32>} : memref<144x768xf32, #tpu.memory_space<vmem>>, vector<16x768xf32>,
    %c767_i32_73 = arith.constant 767 : i32
    %70 = tpu.dynamic_rotate %60 by %c767_i32_73 dim 1 : vector<16x768xf32>, i32 -> vector<16x768xf32>
    %c80_74 = arith.constant 80 : index
    %c0_75 = arith.constant 0 : index
    %71 = vector.load %arg8[%c80_74, %c0_75] : memref<144x768xf32, #tpu.memory_space<vmem>>, vector<16x768xf32>
    tpu.vector_store %arg8[%c80_74, %c0_75], %70 {strides = array<i32>} : memref<144x768xf32, #tpu.memory_space<vmem>>, vector<16x768xf32>,
    %c751_i32_76 = arith.constant 751 : i32
    %72 = tpu.dynamic_rotate %60 by %c751_i32_76 dim 1 : vector<16x768xf32>, i32 -> vector<16x768xf32>
    %c96_77 = arith.constant 96 : index
    %c0_78 = arith.constant 0 : index
    %73 = vector.load %arg8[%c96_77, %c0_78] : memref<144x768xf32, #tpu.memory_space<vmem>>, vector<16x768xf32>
    tpu.vector_store %arg8[%c96_77, %c0_78], %72 {strides = array<i32>} : memref<144x768xf32, #tpu.memory_space<vmem>>, vector<16x768xf32>,
    %c750_i32_79 = arith.constant 750 : i32
    %74 = tpu.dynamic_rotate %60 by %c750_i32_79 dim 1 : vector<16x768xf32>, i32 -> vector<16x768xf32>
    %c112_80 = arith.constant 112 : index
    %c0_81 = arith.constant 0 : index
    %75 = vector.load %arg8[%c112_80, %c0_81] : memref<144x768xf32, #tpu.memory_space<vmem>>, vector<16x768xf32>
    tpu.vector_store %arg8[%c112_80, %c0_81], %74 {strides = array<i32>} : memref<144x768xf32, #tpu.memory_space<vmem>>, vector<16x768xf32>,
    %c749_i32_82 = arith.constant 749 : i32
    %76 = tpu.dynamic_rotate %60 by %c749_i32_82 dim 1 : vector<16x768xf32>, i32 -> vector<16x768xf32>
    %c128_83 = arith.constant 128 : index
    %c0_84 = arith.constant 0 : index
    %77 = vector.load %arg8[%c128_83, %c0_84] : memref<144x768xf32, #tpu.memory_space<vmem>>, vector<16x768xf32>
    tpu.vector_store %arg8[%c128_83, %c0_84], %76 {strides = array<i32>} : memref<144x768xf32, #tpu.memory_space<vmem>>, vector<16x768xf32>,
    %c2 = arith.constant 2 : index
    %c0_85 = arith.constant 0 : index
    %c0_86 = arith.constant 0 : index
    %78 = vector.load %arg2[%c2, %c0_85, %c0_86] : memref<9x16x144xf32, #tpu.memory_space<vmem>>, vector<1x16x144xf32>
    %79 = vector.shape_cast %78 : vector<1x16x144xf32> to vector<16x144xf32>
    %c0_87 = arith.constant 0 : index
    %c0_88 = arith.constant 0 : index
    %80 = vector.load %arg8[%c0_87, %c0_88] : memref<144x768xf32, #tpu.memory_space<vmem>>, vector<144x768xf32>
    %cst_89 = arith.constant dense<0.000000e+00> : vector<16x768xf32>
    %81 = tpu.matmul %79, %80, %cst_89 {dimension_numbers = #tpu.dot_dimension_numbers<[1], [0], [0], [1], [0, 0, 1, 1], [], []>} : vector<16x144xf32>, vector<144x768xf32>, vector<16x768xf32> -> vector<16x768xf32>
    %c2_90 = arith.constant 2 : index
    %c0_91 = arith.constant 0 : index
    %c0_92 = arith.constant 0 : index
    %82 = vector.load %arg3[%c2_90, %c0_91, %c0_92] : memref<9x16x1xf32, #tpu.memory_space<vmem>>, vector<1x16x1xf32>
    %83 = vector.shape_cast %82 : vector<1x16x1xf32> to vector<16x1xf32>
    %84 = vector.broadcast %83 : vector<16x1xf32> to vector<16x768xf32>
    %85 = arith.addf %81, %84 : vector<16x768xf32>
    %cst_93 = arith.constant 0.000000e+00 : f32
    %86 = vector.broadcast %cst_93 : f32 to vector<16x768xf32>
    %87 = arith.maximumf %85, %86 : vector<16x768xf32>
    %88 = vector.broadcast %0 : vector<1x768xf32> to vector<16x768xf32>
    %89 = arith.mulf %87, %88 : vector<16x768xf32>
    %c767_i32_94 = arith.constant 767 : i32
    %90 = tpu.dynamic_rotate %89 by %c767_i32_94 dim 1 : vector<16x768xf32>, i32 -> vector<16x768xf32>
    %c1_i32_95 = arith.constant 1 : i32
    %91 = tpu.dynamic_rotate %89 by %c1_i32_95 dim 1 : vector<16x768xf32>, i32 -> vector<16x768xf32>
    %92 = arith.maximumf %90, %91 : vector<16x768xf32>
    %93 = arith.maximumf %89, %92 : vector<16x768xf32>
    %c750_i32_96 = arith.constant 750 : i32
    %94 = tpu.dynamic_rotate %93 by %c750_i32_96 dim 1 : vector<16x768xf32>, i32 -> vector<16x768xf32>
    %c18_i32_97 = arith.constant 18 : i32
    %95 = tpu.dynamic_rotate %93 by %c18_i32_97 dim 1 : vector<16x768xf32>, i32 -> vector<16x768xf32>
    %96 = arith.maximumf %94, %95 : vector<16x768xf32>
    %97 = arith.maximumf %93, %96 : vector<16x768xf32>
    %c0_98 = arith.constant 0 : index
    %c0_99 = arith.constant 0 : index
    %98 = vector.load %arg6[%c0_98, %c0_99] : memref<768x256xf32, #tpu.memory_space<vmem>>, vector<768x256xf32>
    %cst_100 = arith.constant dense<0.000000e+00> : vector<16x256xf32>
    %99 = tpu.matmul %97, %98, %cst_100 {dimension_numbers = #tpu.dot_dimension_numbers<[1], [0], [0], [1], [0, 0, 1, 1], [], []>} : vector<16x768xf32>, vector<768x256xf32>, vector<16x256xf32> -> vector<16x256xf32>
    %c11_i32 = arith.constant 11 : i32
    %100 = tpu.dynamic_rotate %99 by %c11_i32 dim 1 : vector<16x256xf32>, i32 -> vector<16x256xf32>
    %c0_101 = arith.constant 0 : index
    %c0_102 = arith.constant 0 : index
    %101 = vector.load %arg9[%c0_101, %c0_102] : memref<144x256xf32, #tpu.memory_space<vmem>>, vector<16x256xf32>
    tpu.vector_store %arg9[%c0_101, %c0_102], %100 {strides = array<i32>} : memref<144x256xf32, #tpu.memory_space<vmem>>, vector<16x256xf32>,
    %c10_i32 = arith.constant 10 : i32
    %102 = tpu.dynamic_rotate %99 by %c10_i32 dim 1 : vector<16x256xf32>, i32 -> vector<16x256xf32>
    %c16_103 = arith.constant 16 : index
    %c0_104 = arith.constant 0 : index
    %103 = vector.load %arg9[%c16_103, %c0_104] : memref<144x256xf32, #tpu.memory_space<vmem>>, vector<16x256xf32>
    tpu.vector_store %arg9[%c16_103, %c0_104], %102 {strides = array<i32>} : memref<144x256xf32, #tpu.memory_space<vmem>>, vector<16x256xf32>,
    %c9_i32 = arith.constant 9 : i32
    %104 = tpu.dynamic_rotate %99 by %c9_i32 dim 1 : vector<16x256xf32>, i32 -> vector<16x256xf32>
    %c32_105 = arith.constant 32 : index
    %c0_106 = arith.constant 0 : index
    %105 = vector.load %arg9[%c32_105, %c0_106] : memref<144x256xf32, #tpu.memory_space<vmem>>, vector<16x256xf32>
    tpu.vector_store %arg9[%c32_105, %c0_106], %104 {strides = array<i32>} : memref<144x256xf32, #tpu.memory_space<vmem>>, vector<16x256xf32>,
    %c1_i32_107 = arith.constant 1 : i32
    %106 = tpu.dynamic_rotate %99 by %c1_i32_107 dim 1 : vector<16x256xf32>, i32 -> vector<16x256xf32>
    %c48_108 = arith.constant 48 : index
    %c0_109 = arith.constant 0 : index
    %107 = vector.load %arg9[%c48_108, %c0_109] : memref<144x256xf32, #tpu.memory_space<vmem>>, vector<16x256xf32>
    tpu.vector_store %arg9[%c48_108, %c0_109], %106 {strides = array<i32>} : memref<144x256xf32, #tpu.memory_space<vmem>>, vector<16x256xf32>,
    %c64_110 = arith.constant 64 : index
    %c0_111 = arith.constant 0 : index
    %108 = vector.load %arg9[%c64_110, %c0_111] : memref<144x256xf32, #tpu.memory_space<vmem>>, vector<16x256xf32>
    tpu.vector_store %arg9[%c64_110, %c0_111], %99 {strides = array<i32>} : memref<144x256xf32, #tpu.memory_space<vmem>>, vector<16x256xf32>,
    %c255_i32 = arith.constant 255 : i32
    %109 = tpu.dynamic_rotate %99 by %c255_i32 dim 1 : vector<16x256xf32>, i32 -> vector<16x256xf32>
    %c80_112 = arith.constant 80 : index
    %c0_113 = arith.constant 0 : index
    %110 = vector.load %arg9[%c80_112, %c0_113] : memref<144x256xf32, #tpu.memory_space<vmem>>, vector<16x256xf32>
    tpu.vector_store %arg9[%c80_112, %c0_113], %109 {strides = array<i32>} : memref<144x256xf32, #tpu.memory_space<vmem>>, vector<16x256xf32>,
    %c247_i32 = arith.constant 247 : i32
    %111 = tpu.dynamic_rotate %99 by %c247_i32 dim 1 : vector<16x256xf32>, i32 -> vector<16x256xf32>
    %c96_114 = arith.constant 96 : index
    %c0_115 = arith.constant 0 : index
    %112 = vector.load %arg9[%c96_114, %c0_115] : memref<144x256xf32, #tpu.memory_space<vmem>>, vector<16x256xf32>
    tpu.vector_store %arg9[%c96_114, %c0_115], %111 {strides = array<i32>} : memref<144x256xf32, #tpu.memory_space<vmem>>, vector<16x256xf32>,
    %c246_i32 = arith.constant 246 : i32
    %113 = tpu.dynamic_rotate %99 by %c246_i32 dim 1 : vector<16x256xf32>, i32 -> vector<16x256xf32>
    %c112_116 = arith.constant 112 : index
    %c0_117 = arith.constant 0 : index
    %114 = vector.load %arg9[%c112_116, %c0_117] : memref<144x256xf32, #tpu.memory_space<vmem>>, vector<16x256xf32>
    tpu.vector_store %arg9[%c112_116, %c0_117], %113 {strides = array<i32>} : memref<144x256xf32, #tpu.memory_space<vmem>>, vector<16x256xf32>,
    %c245_i32 = arith.constant 245 : i32
    %115 = tpu.dynamic_rotate %99 by %c245_i32 dim 1 : vector<16x256xf32>, i32 -> vector<16x256xf32>
    %c128_118 = arith.constant 128 : index
    %c0_119 = arith.constant 0 : index
    %116 = vector.load %arg9[%c128_118, %c0_119] : memref<144x256xf32, #tpu.memory_space<vmem>>, vector<16x256xf32>
    tpu.vector_store %arg9[%c128_118, %c0_119], %115 {strides = array<i32>} : memref<144x256xf32, #tpu.memory_space<vmem>>, vector<16x256xf32>,
    %c3 = arith.constant 3 : index
    %c0_120 = arith.constant 0 : index
    %c0_121 = arith.constant 0 : index
    %117 = vector.load %arg2[%c3, %c0_120, %c0_121] : memref<9x16x144xf32, #tpu.memory_space<vmem>>, vector<1x16x144xf32>
    %118 = vector.shape_cast %117 : vector<1x16x144xf32> to vector<16x144xf32>
    %c0_122 = arith.constant 0 : index
    %c0_123 = arith.constant 0 : index
    %119 = vector.load %arg9[%c0_122, %c0_123] : memref<144x256xf32, #tpu.memory_space<vmem>>, vector<144x256xf32>
    %cst_124 = arith.constant dense<0.000000e+00> : vector<16x256xf32>
    %120 = tpu.matmul %118, %119, %cst_124 {dimension_numbers = #tpu.dot_dimension_numbers<[1], [0], [0], [1], [0, 0, 1, 1], [], []>} : vector<16x144xf32>, vector<144x256xf32>, vector<16x256xf32> -> vector<16x256xf32>
    %c3_125 = arith.constant 3 : index
    %c0_126 = arith.constant 0 : index
    %c0_127 = arith.constant 0 : index
    %121 = vector.load %arg3[%c3_125, %c0_126, %c0_127] : memref<9x16x1xf32, #tpu.memory_space<vmem>>, vector<1x16x1xf32>
    %122 = vector.shape_cast %121 : vector<1x16x1xf32> to vector<16x1xf32>
    %123 = vector.broadcast %122 : vector<16x1xf32> to vector<16x256xf32>
    %124 = arith.addf %120, %123 : vector<16x256xf32>
    %cst_128 = arith.constant 0.000000e+00 : f32
    %125 = vector.broadcast %cst_128 : f32 to vector<16x256xf32>
    %126 = arith.maximumf %124, %125 : vector<16x256xf32>
    %127 = vector.broadcast %1 : vector<1x256xf32> to vector<16x256xf32>
    %128 = arith.mulf %126, %127 : vector<16x256xf32>
    %c11_i32_129 = arith.constant 11 : i32
    %129 = tpu.dynamic_rotate %128 by %c11_i32_129 dim 1 : vector<16x256xf32>, i32 -> vector<16x256xf32>
    %c0_130 = arith.constant 0 : index
    %c0_131 = arith.constant 0 : index
    %130 = vector.load %arg9[%c0_130, %c0_131] : memref<144x256xf32, #tpu.memory_space<vmem>>, vector<16x256xf32>
    tpu.vector_store %arg9[%c0_130, %c0_131], %129 {strides = array<i32>} : memref<144x256xf32, #tpu.memory_space<vmem>>, vector<16x256xf32>,
    %c10_i32_132 = arith.constant 10 : i32
    %131 = tpu.dynamic_rotate %128 by %c10_i32_132 dim 1 : vector<16x256xf32>, i32 -> vector<16x256xf32>
    %c16_133 = arith.constant 16 : index
    %c0_134 = arith.constant 0 : index
    %132 = vector.load %arg9[%c16_133, %c0_134] : memref<144x256xf32, #tpu.memory_space<vmem>>, vector<16x256xf32>
    tpu.vector_store %arg9[%c16_133, %c0_134], %131 {strides = array<i32>} : memref<144x256xf32, #tpu.memory_space<vmem>>, vector<16x256xf32>,
    %c9_i32_135 = arith.constant 9 : i32
    %133 = tpu.dynamic_rotate %128 by %c9_i32_135 dim 1 : vector<16x256xf32>, i32 -> vector<16x256xf32>
    %c32_136 = arith.constant 32 : index
    %c0_137 = arith.constant 0 : index
    %134 = vector.load %arg9[%c32_136, %c0_137] : memref<144x256xf32, #tpu.memory_space<vmem>>, vector<16x256xf32>
    tpu.vector_store %arg9[%c32_136, %c0_137], %133 {strides = array<i32>} : memref<144x256xf32, #tpu.memory_space<vmem>>, vector<16x256xf32>,
    %c1_i32_138 = arith.constant 1 : i32
    %135 = tpu.dynamic_rotate %128 by %c1_i32_138 dim 1 : vector<16x256xf32>, i32 -> vector<16x256xf32>
    %c48_139 = arith.constant 48 : index
    %c0_140 = arith.constant 0 : index
    %136 = vector.load %arg9[%c48_139, %c0_140] : memref<144x256xf32, #tpu.memory_space<vmem>>, vector<16x256xf32>
    tpu.vector_store %arg9[%c48_139, %c0_140], %135 {strides = array<i32>} : memref<144x256xf32, #tpu.memory_space<vmem>>, vector<16x256xf32>,
    %c64_141 = arith.constant 64 : index
    %c0_142 = arith.constant 0 : index
    %137 = vector.load %arg9[%c64_141, %c0_142] : memref<144x256xf32, #tpu.memory_space<vmem>>, vector<16x256xf32>
    tpu.vector_store %arg9[%c64_141, %c0_142], %128 {strides = array<i32>} : memref<144x256xf32, #tpu.memory_space<vmem>>, vector<16x256xf32>,
    %c255_i32_143 = arith.constant 255 : i32
    %138 = tpu.dynamic_rotate %128 by %c255_i32_143 dim 1 : vector<16x256xf32>, i32 -> vector<16x256xf32>
    %c80_144 = arith.constant 80 : index
    %c0_145 = arith.constant 0 : index
    %139 = vector.load %arg9[%c80_144, %c0_145] : memref<144x256xf32, #tpu.memory_space<vmem>>, vector<16x256xf32>
    tpu.vector_store %arg9[%c80_144, %c0_145], %138 {strides = array<i32>} : memref<144x256xf32, #tpu.memory_space<vmem>>, vector<16x256xf32>,
    %c247_i32_146 = arith.constant 247 : i32
    %140 = tpu.dynamic_rotate %128 by %c247_i32_146 dim 1 : vector<16x256xf32>, i32 -> vector<16x256xf32>
    %c96_147 = arith.constant 96 : index
    %c0_148 = arith.constant 0 : index
    %141 = vector.load %arg9[%c96_147, %c0_148] : memref<144x256xf32, #tpu.memory_space<vmem>>, vector<16x256xf32>
    tpu.vector_store %arg9[%c96_147, %c0_148], %140 {strides = array<i32>} : memref<144x256xf32, #tpu.memory_space<vmem>>, vector<16x256xf32>,
    %c246_i32_149 = arith.constant 246 : i32
    %142 = tpu.dynamic_rotate %128 by %c246_i32_149 dim 1 : vector<16x256xf32>, i32 -> vector<16x256xf32>
    %c112_150 = arith.constant 112 : index
    %c0_151 = arith.constant 0 : index
    %143 = vector.load %arg9[%c112_150, %c0_151] : memref<144x256xf32, #tpu.memory_space<vmem>>, vector<16x256xf32>
    tpu.vector_store %arg9[%c112_150, %c0_151], %142 {strides = array<i32>} : memref<144x256xf32, #tpu.memory_space<vmem>>, vector<16x256xf32>,
    %c245_i32_152 = arith.constant 245 : i32
    %144 = tpu.dynamic_rotate %128 by %c245_i32_152 dim 1 : vector<16x256xf32>, i32 -> vector<16x256xf32>
    %c128_153 = arith.constant 128 : index
    %c0_154 = arith.constant 0 : index
    %145 = vector.load %arg9[%c128_153, %c0_154] : memref<144x256xf32, #tpu.memory_space<vmem>>, vector<16x256xf32>
    tpu.vector_store %arg9[%c128_153, %c0_154], %144 {strides = array<i32>} : memref<144x256xf32, #tpu.memory_space<vmem>>, vector<16x256xf32>,
    %c4 = arith.constant 4 : index
    %c0_155 = arith.constant 0 : index
    %c0_156 = arith.constant 0 : index
    %146 = vector.load %arg2[%c4, %c0_155, %c0_156] : memref<9x16x144xf32, #tpu.memory_space<vmem>>, vector<1x16x144xf32>
    %147 = vector.shape_cast %146 : vector<1x16x144xf32> to vector<16x144xf32>
    %c0_157 = arith.constant 0 : index
    %c0_158 = arith.constant 0 : index
    %148 = vector.load %arg9[%c0_157, %c0_158] : memref<144x256xf32, #tpu.memory_space<vmem>>, vector<144x256xf32>
    %cst_159 = arith.constant dense<0.000000e+00> : vector<16x256xf32>
    %149 = tpu.matmul %147, %148, %cst_159 {dimension_numbers = #tpu.dot_dimension_numbers<[1], [0], [0], [1], [0, 0, 1, 1], [], []>} : vector<16x144xf32>, vector<144x256xf32>, vector<16x256xf32> -> vector<16x256xf32>
    %c4_160 = arith.constant 4 : index
    %c0_161 = arith.constant 0 : index
    %c0_162 = arith.constant 0 : index
    %150 = vector.load %arg3[%c4_160, %c0_161, %c0_162] : memref<9x16x1xf32, #tpu.memory_space<vmem>>, vector<1x16x1xf32>
    %151 = vector.shape_cast %150 : vector<1x16x1xf32> to vector<16x1xf32>
    %152 = vector.broadcast %151 : vector<16x1xf32> to vector<16x256xf32>
    %153 = arith.addf %149, %152 : vector<16x256xf32>
    %cst_163 = arith.constant 0.000000e+00 : f32
    %154 = vector.broadcast %cst_163 : f32 to vector<16x256xf32>
    %155 = arith.maximumf %153, %154 : vector<16x256xf32>
    %156 = vector.broadcast %1 : vector<1x256xf32> to vector<16x256xf32>
    %157 = arith.mulf %155, %156 : vector<16x256xf32>
    %c11_i32_164 = arith.constant 11 : i32
    %158 = tpu.dynamic_rotate %157 by %c11_i32_164 dim 1 : vector<16x256xf32>, i32 -> vector<16x256xf32>
    %c0_165 = arith.constant 0 : index
    %c0_166 = arith.constant 0 : index
    %159 = vector.load %arg9[%c0_165, %c0_166] : memref<144x256xf32, #tpu.memory_space<vmem>>, vector<16x256xf32>
    tpu.vector_store %arg9[%c0_165, %c0_166], %158 {strides = array<i32>} : memref<144x256xf32, #tpu.memory_space<vmem>>, vector<16x256xf32>,
    %c10_i32_167 = arith.constant 10 : i32
    %160 = tpu.dynamic_rotate %157 by %c10_i32_167 dim 1 : vector<16x256xf32>, i32 -> vector<16x256xf32>
    %c16_168 = arith.constant 16 : index
    %c0_169 = arith.constant 0 : index
    %161 = vector.load %arg9[%c16_168, %c0_169] : memref<144x256xf32, #tpu.memory_space<vmem>>, vector<16x256xf32>
    tpu.vector_store %arg9[%c16_168, %c0_169], %160 {strides = array<i32>} : memref<144x256xf32, #tpu.memory_space<vmem>>, vector<16x256xf32>,
    %c9_i32_170 = arith.constant 9 : i32
    %162 = tpu.dynamic_rotate %157 by %c9_i32_170 dim 1 : vector<16x256xf32>, i32 -> vector<16x256xf32>
    %c32_171 = arith.constant 32 : index
    %c0_172 = arith.constant 0 : index
    %163 = vector.load %arg9[%c32_171, %c0_172] : memref<144x256xf32, #tpu.memory_space<vmem>>, vector<16x256xf32>
    tpu.vector_store %arg9[%c32_171, %c0_172], %162 {strides = array<i32>} : memref<144x256xf32, #tpu.memory_space<vmem>>, vector<16x256xf32>,
    %c1_i32_173 = arith.constant 1 : i32
    %164 = tpu.dynamic_rotate %157 by %c1_i32_173 dim 1 : vector<16x256xf32>, i32 -> vector<16x256xf32>
    %c48_174 = arith.constant 48 : index
    %c0_175 = arith.constant 0 : index
    %165 = vector.load %arg9[%c48_174, %c0_175] : memref<144x256xf32, #tpu.memory_space<vmem>>, vector<16x256xf32>
    tpu.vector_store %arg9[%c48_174, %c0_175], %164 {strides = array<i32>} : memref<144x256xf32, #tpu.memory_space<vmem>>, vector<16x256xf32>,
    %c64_176 = arith.constant 64 : index
    %c0_177 = arith.constant 0 : index
    %166 = vector.load %arg9[%c64_176, %c0_177] : memref<144x256xf32, #tpu.memory_space<vmem>>, vector<16x256xf32>
    tpu.vector_store %arg9[%c64_176, %c0_177], %157 {strides = array<i32>} : memref<144x256xf32, #tpu.memory_space<vmem>>, vector<16x256xf32>,
    %c255_i32_178 = arith.constant 255 : i32
    %167 = tpu.dynamic_rotate %157 by %c255_i32_178 dim 1 : vector<16x256xf32>, i32 -> vector<16x256xf32>
    %c80_179 = arith.constant 80 : index
    %c0_180 = arith.constant 0 : index
    %168 = vector.load %arg9[%c80_179, %c0_180] : memref<144x256xf32, #tpu.memory_space<vmem>>, vector<16x256xf32>
    tpu.vector_store %arg9[%c80_179, %c0_180], %167 {strides = array<i32>} : memref<144x256xf32, #tpu.memory_space<vmem>>, vector<16x256xf32>,
    %c247_i32_181 = arith.constant 247 : i32
    %169 = tpu.dynamic_rotate %157 by %c247_i32_181 dim 1 : vector<16x256xf32>, i32 -> vector<16x256xf32>
    %c96_182 = arith.constant 96 : index
    %c0_183 = arith.constant 0 : index
    %170 = vector.load %arg9[%c96_182, %c0_183] : memref<144x256xf32, #tpu.memory_space<vmem>>, vector<16x256xf32>
    tpu.vector_store %arg9[%c96_182, %c0_183], %169 {strides = array<i32>} : memref<144x256xf32, #tpu.memory_space<vmem>>, vector<16x256xf32>,
    %c246_i32_184 = arith.constant 246 : i32
    %171 = tpu.dynamic_rotate %157 by %c246_i32_184 dim 1 : vector<16x256xf32>, i32 -> vector<16x256xf32>
    %c112_185 = arith.constant 112 : index
    %c0_186 = arith.constant 0 : index
    %172 = vector.load %arg9[%c112_185, %c0_186] : memref<144x256xf32, #tpu.memory_space<vmem>>, vector<16x256xf32>
    tpu.vector_store %arg9[%c112_185, %c0_186], %171 {strides = array<i32>} : memref<144x256xf32, #tpu.memory_space<vmem>>, vector<16x256xf32>,
    %c245_i32_187 = arith.constant 245 : i32
    %173 = tpu.dynamic_rotate %157 by %c245_i32_187 dim 1 : vector<16x256xf32>, i32 -> vector<16x256xf32>
    %c128_188 = arith.constant 128 : index
    %c0_189 = arith.constant 0 : index
    %174 = vector.load %arg9[%c128_188, %c0_189] : memref<144x256xf32, #tpu.memory_space<vmem>>, vector<16x256xf32>
    tpu.vector_store %arg9[%c128_188, %c0_189], %173 {strides = array<i32>} : memref<144x256xf32, #tpu.memory_space<vmem>>, vector<16x256xf32>,
    %c5 = arith.constant 5 : index
    %c0_190 = arith.constant 0 : index
    %c0_191 = arith.constant 0 : index
    %175 = vector.load %arg2[%c5, %c0_190, %c0_191] : memref<9x16x144xf32, #tpu.memory_space<vmem>>, vector<1x16x144xf32>
    %176 = vector.shape_cast %175 : vector<1x16x144xf32> to vector<16x144xf32>
    %c0_192 = arith.constant 0 : index
    %c0_193 = arith.constant 0 : index
    %177 = vector.load %arg9[%c0_192, %c0_193] : memref<144x256xf32, #tpu.memory_space<vmem>>, vector<144x256xf32>
    %cst_194 = arith.constant dense<0.000000e+00> : vector<16x256xf32>
    %178 = tpu.matmul %176, %177, %cst_194 {dimension_numbers = #tpu.dot_dimension_numbers<[1], [0], [0], [1], [0, 0, 1, 1], [], []>} : vector<16x144xf32>, vector<144x256xf32>, vector<16x256xf32> -> vector<16x256xf32>
    %c5_195 = arith.constant 5 : index
    %c0_196 = arith.constant 0 : index
    %c0_197 = arith.constant 0 : index
    %179 = vector.load %arg3[%c5_195, %c0_196, %c0_197] : memref<9x16x1xf32, #tpu.memory_space<vmem>>, vector<1x16x1xf32>
    %180 = vector.shape_cast %179 : vector<1x16x1xf32> to vector<16x1xf32>
    %181 = vector.broadcast %180 : vector<16x1xf32> to vector<16x256xf32>
    %182 = arith.addf %178, %181 : vector<16x256xf32>
    %cst_198 = arith.constant 0.000000e+00 : f32
    %183 = vector.broadcast %cst_198 : f32 to vector<16x256xf32>
    %184 = arith.maximumf %182, %183 : vector<16x256xf32>
    %185 = vector.broadcast %1 : vector<1x256xf32> to vector<16x256xf32>
    %186 = arith.mulf %184, %185 : vector<16x256xf32>
    %c11_i32_199 = arith.constant 11 : i32
    %187 = tpu.dynamic_rotate %186 by %c11_i32_199 dim 1 : vector<16x256xf32>, i32 -> vector<16x256xf32>
    %c0_200 = arith.constant 0 : index
    %c0_201 = arith.constant 0 : index
    %188 = vector.load %arg9[%c0_200, %c0_201] : memref<144x256xf32, #tpu.memory_space<vmem>>, vector<16x256xf32>
    tpu.vector_store %arg9[%c0_200, %c0_201], %187 {strides = array<i32>} : memref<144x256xf32, #tpu.memory_space<vmem>>, vector<16x256xf32>,
    %c10_i32_202 = arith.constant 10 : i32
    %189 = tpu.dynamic_rotate %186 by %c10_i32_202 dim 1 : vector<16x256xf32>, i32 -> vector<16x256xf32>
    %c16_203 = arith.constant 16 : index
    %c0_204 = arith.constant 0 : index
    %190 = vector.load %arg9[%c16_203, %c0_204] : memref<144x256xf32, #tpu.memory_space<vmem>>, vector<16x256xf32>
    tpu.vector_store %arg9[%c16_203, %c0_204], %189 {strides = array<i32>} : memref<144x256xf32, #tpu.memory_space<vmem>>, vector<16x256xf32>,
    %c9_i32_205 = arith.constant 9 : i32
    %191 = tpu.dynamic_rotate %186 by %c9_i32_205 dim 1 : vector<16x256xf32>, i32 -> vector<16x256xf32>
    %c32_206 = arith.constant 32 : index
    %c0_207 = arith.constant 0 : index
    %192 = vector.load %arg9[%c32_206, %c0_207] : memref<144x256xf32, #tpu.memory_space<vmem>>, vector<16x256xf32>
    tpu.vector_store %arg9[%c32_206, %c0_207], %191 {strides = array<i32>} : memref<144x256xf32, #tpu.memory_space<vmem>>, vector<16x256xf32>,
    %c1_i32_208 = arith.constant 1 : i32
    %193 = tpu.dynamic_rotate %186 by %c1_i32_208 dim 1 : vector<16x256xf32>, i32 -> vector<16x256xf32>
    %c48_209 = arith.constant 48 : index
    %c0_210 = arith.constant 0 : index
    %194 = vector.load %arg9[%c48_209, %c0_210] : memref<144x256xf32, #tpu.memory_space<vmem>>, vector<16x256xf32>
    tpu.vector_store %arg9[%c48_209, %c0_210], %193 {strides = array<i32>} : memref<144x256xf32, #tpu.memory_space<vmem>>, vector<16x256xf32>,
    %c64_211 = arith.constant 64 : index
    %c0_212 = arith.constant 0 : index
    %195 = vector.load %arg9[%c64_211, %c0_212] : memref<144x256xf32, #tpu.memory_space<vmem>>, vector<16x256xf32>
    tpu.vector_store %arg9[%c64_211, %c0_212], %186 {strides = array<i32>} : memref<144x256xf32, #tpu.memory_space<vmem>>, vector<16x256xf32>,
    %c255_i32_213 = arith.constant 255 : i32
    %196 = tpu.dynamic_rotate %186 by %c255_i32_213 dim 1 : vector<16x256xf32>, i32 -> vector<16x256xf32>
    %c80_214 = arith.constant 80 : index
    %c0_215 = arith.constant 0 : index
    %197 = vector.load %arg9[%c80_214, %c0_215] : memref<144x256xf32, #tpu.memory_space<vmem>>, vector<16x256xf32>
    tpu.vector_store %arg9[%c80_214, %c0_215], %196 {strides = array<i32>} : memref<144x256xf32, #tpu.memory_space<vmem>>, vector<16x256xf32>,
    %c247_i32_216 = arith.constant 247 : i32
    %198 = tpu.dynamic_rotate %186 by %c247_i32_216 dim 1 : vector<16x256xf32>, i32 -> vector<16x256xf32>
    %c96_217 = arith.constant 96 : index
    %c0_218 = arith.constant 0 : index
    %199 = vector.load %arg9[%c96_217, %c0_218] : memref<144x256xf32, #tpu.memory_space<vmem>>, vector<16x256xf32>
    tpu.vector_store %arg9[%c96_217, %c0_218], %198 {strides = array<i32>} : memref<144x256xf32, #tpu.memory_space<vmem>>, vector<16x256xf32>,
    %c246_i32_219 = arith.constant 246 : i32
    %200 = tpu.dynamic_rotate %186 by %c246_i32_219 dim 1 : vector<16x256xf32>, i32 -> vector<16x256xf32>
    %c112_220 = arith.constant 112 : index
    %c0_221 = arith.constant 0 : index
    %201 = vector.load %arg9[%c112_220, %c0_221] : memref<144x256xf32, #tpu.memory_space<vmem>>, vector<16x256xf32>
    tpu.vector_store %arg9[%c112_220, %c0_221], %200 {strides = array<i32>} : memref<144x256xf32, #tpu.memory_space<vmem>>, vector<16x256xf32>,
    %c245_i32_222 = arith.constant 245 : i32
    %202 = tpu.dynamic_rotate %186 by %c245_i32_222 dim 1 : vector<16x256xf32>, i32 -> vector<16x256xf32>
    %c128_223 = arith.constant 128 : index
    %c0_224 = arith.constant 0 : index
    %203 = vector.load %arg9[%c128_223, %c0_224] : memref<144x256xf32, #tpu.memory_space<vmem>>, vector<16x256xf32>
    tpu.vector_store %arg9[%c128_223, %c0_224], %202 {strides = array<i32>} : memref<144x256xf32, #tpu.memory_space<vmem>>, vector<16x256xf32>,
    %c6 = arith.constant 6 : index
    %c0_225 = arith.constant 0 : index
    %c0_226 = arith.constant 0 : index
    %204 = vector.load %arg2[%c6, %c0_225, %c0_226] : memref<9x16x144xf32, #tpu.memory_space<vmem>>, vector<1x16x144xf32>
    %205 = vector.shape_cast %204 : vector<1x16x144xf32> to vector<16x144xf32>
    %c0_227 = arith.constant 0 : index
    %c0_228 = arith.constant 0 : index
    %206 = vector.load %arg9[%c0_227, %c0_228] : memref<144x256xf32, #tpu.memory_space<vmem>>, vector<144x256xf32>
    %cst_229 = arith.constant dense<0.000000e+00> : vector<16x256xf32>
    %207 = tpu.matmul %205, %206, %cst_229 {dimension_numbers = #tpu.dot_dimension_numbers<[1], [0], [0], [1], [0, 0, 1, 1], [], []>} : vector<16x144xf32>, vector<144x256xf32>, vector<16x256xf32> -> vector<16x256xf32>
    %c6_230 = arith.constant 6 : index
    %c0_231 = arith.constant 0 : index
    %c0_232 = arith.constant 0 : index
    %208 = vector.load %arg3[%c6_230, %c0_231, %c0_232] : memref<9x16x1xf32, #tpu.memory_space<vmem>>, vector<1x16x1xf32>
    %209 = vector.shape_cast %208 : vector<1x16x1xf32> to vector<16x1xf32>
    %210 = vector.broadcast %209 : vector<16x1xf32> to vector<16x256xf32>
    %211 = arith.addf %207, %210 : vector<16x256xf32>
    %cst_233 = arith.constant 0.000000e+00 : f32
    %212 = vector.broadcast %cst_233 : f32 to vector<16x256xf32>
    %213 = arith.maximumf %211, %212 : vector<16x256xf32>
    %214 = vector.broadcast %1 : vector<1x256xf32> to vector<16x256xf32>
    %215 = arith.mulf %213, %214 : vector<16x256xf32>
    %c11_i32_234 = arith.constant 11 : i32
    %216 = tpu.dynamic_rotate %215 by %c11_i32_234 dim 1 : vector<16x256xf32>, i32 -> vector<16x256xf32>
    %c0_235 = arith.constant 0 : index
    %c0_236 = arith.constant 0 : index
    %217 = vector.load %arg9[%c0_235, %c0_236] : memref<144x256xf32, #tpu.memory_space<vmem>>, vector<16x256xf32>
    tpu.vector_store %arg9[%c0_235, %c0_236], %216 {strides = array<i32>} : memref<144x256xf32, #tpu.memory_space<vmem>>, vector<16x256xf32>,
    %c10_i32_237 = arith.constant 10 : i32
    %218 = tpu.dynamic_rotate %215 by %c10_i32_237 dim 1 : vector<16x256xf32>, i32 -> vector<16x256xf32>
    %c16_238 = arith.constant 16 : index
    %c0_239 = arith.constant 0 : index
    %219 = vector.load %arg9[%c16_238, %c0_239] : memref<144x256xf32, #tpu.memory_space<vmem>>, vector<16x256xf32>
    tpu.vector_store %arg9[%c16_238, %c0_239], %218 {strides = array<i32>} : memref<144x256xf32, #tpu.memory_space<vmem>>, vector<16x256xf32>,
    %c9_i32_240 = arith.constant 9 : i32
    %220 = tpu.dynamic_rotate %215 by %c9_i32_240 dim 1 : vector<16x256xf32>, i32 -> vector<16x256xf32>
    %c32_241 = arith.constant 32 : index
    %c0_242 = arith.constant 0 : index
    %221 = vector.load %arg9[%c32_241, %c0_242] : memref<144x256xf32, #tpu.memory_space<vmem>>, vector<16x256xf32>
    tpu.vector_store %arg9[%c32_241, %c0_242], %220 {strides = array<i32>} : memref<144x256xf32, #tpu.memory_space<vmem>>, vector<16x256xf32>,
    %c1_i32_243 = arith.constant 1 : i32
    %222 = tpu.dynamic_rotate %215 by %c1_i32_243 dim 1 : vector<16x256xf32>, i32 -> vector<16x256xf32>
    %c48_244 = arith.constant 48 : index
    %c0_245 = arith.constant 0 : index
    %223 = vector.load %arg9[%c48_244, %c0_245] : memref<144x256xf32, #tpu.memory_space<vmem>>, vector<16x256xf32>
    tpu.vector_store %arg9[%c48_244, %c0_245], %222 {strides = array<i32>} : memref<144x256xf32, #tpu.memory_space<vmem>>, vector<16x256xf32>,
    %c64_246 = arith.constant 64 : index
    %c0_247 = arith.constant 0 : index
    %224 = vector.load %arg9[%c64_246, %c0_247] : memref<144x256xf32, #tpu.memory_space<vmem>>, vector<16x256xf32>
    tpu.vector_store %arg9[%c64_246, %c0_247], %215 {strides = array<i32>} : memref<144x256xf32, #tpu.memory_space<vmem>>, vector<16x256xf32>,
    %c255_i32_248 = arith.constant 255 : i32
    %225 = tpu.dynamic_rotate %215 by %c255_i32_248 dim 1 : vector<16x256xf32>, i32 -> vector<16x256xf32>
    %c80_249 = arith.constant 80 : index
    %c0_250 = arith.constant 0 : index
    %226 = vector.load %arg9[%c80_249, %c0_250] : memref<144x256xf32, #tpu.memory_space<vmem>>, vector<16x256xf32>
    tpu.vector_store %arg9[%c80_249, %c0_250], %225 {strides = array<i32>} : memref<144x256xf32, #tpu.memory_space<vmem>>, vector<16x256xf32>,
    %c247_i32_251 = arith.constant 247 : i32
    %227 = tpu.dynamic_rotate %215 by %c247_i32_251 dim 1 : vector<16x256xf32>, i32 -> vector<16x256xf32>
    %c96_252 = arith.constant 96 : index
    %c0_253 = arith.constant 0 : index
    %228 = vector.load %arg9[%c96_252, %c0_253] : memref<144x256xf32, #tpu.memory_space<vmem>>, vector<16x256xf32>
    tpu.vector_store %arg9[%c96_252, %c0_253], %227 {strides = array<i32>} : memref<144x256xf32, #tpu.memory_space<vmem>>, vector<16x256xf32>,
    %c246_i32_254 = arith.constant 246 : i32
    %229 = tpu.dynamic_rotate %215 by %c246_i32_254 dim 1 : vector<16x256xf32>, i32 -> vector<16x256xf32>
    %c112_255 = arith.constant 112 : index
    %c0_256 = arith.constant 0 : index
    %230 = vector.load %arg9[%c112_255, %c0_256] : memref<144x256xf32, #tpu.memory_space<vmem>>, vector<16x256xf32>
    tpu.vector_store %arg9[%c112_255, %c0_256], %229 {strides = array<i32>} : memref<144x256xf32, #tpu.memory_space<vmem>>, vector<16x256xf32>,
    %c245_i32_257 = arith.constant 245 : i32
    %231 = tpu.dynamic_rotate %215 by %c245_i32_257 dim 1 : vector<16x256xf32>, i32 -> vector<16x256xf32>
    %c128_258 = arith.constant 128 : index
    %c0_259 = arith.constant 0 : index
    %232 = vector.load %arg9[%c128_258, %c0_259] : memref<144x256xf32, #tpu.memory_space<vmem>>, vector<16x256xf32>
    tpu.vector_store %arg9[%c128_258, %c0_259], %231 {strides = array<i32>} : memref<144x256xf32, #tpu.memory_space<vmem>>, vector<16x256xf32>,
    %c7 = arith.constant 7 : index
    %c0_260 = arith.constant 0 : index
    %c0_261 = arith.constant 0 : index
    %233 = vector.load %arg2[%c7, %c0_260, %c0_261] : memref<9x16x144xf32, #tpu.memory_space<vmem>>, vector<1x16x144xf32>
    %234 = vector.shape_cast %233 : vector<1x16x144xf32> to vector<16x144xf32>
    %c0_262 = arith.constant 0 : index
    %c0_263 = arith.constant 0 : index
    %235 = vector.load %arg9[%c0_262, %c0_263] : memref<144x256xf32, #tpu.memory_space<vmem>>, vector<144x256xf32>
    %cst_264 = arith.constant dense<0.000000e+00> : vector<16x256xf32>
    %236 = tpu.matmul %234, %235, %cst_264 {dimension_numbers = #tpu.dot_dimension_numbers<[1], [0], [0], [1], [0, 0, 1, 1], [], []>} : vector<16x144xf32>, vector<144x256xf32>, vector<16x256xf32> -> vector<16x256xf32>
    %c7_265 = arith.constant 7 : index
    %c0_266 = arith.constant 0 : index
    %c0_267 = arith.constant 0 : index
    %237 = vector.load %arg3[%c7_265, %c0_266, %c0_267] : memref<9x16x1xf32, #tpu.memory_space<vmem>>, vector<1x16x1xf32>
    %238 = vector.shape_cast %237 : vector<1x16x1xf32> to vector<16x1xf32>
    %239 = vector.broadcast %238 : vector<16x1xf32> to vector<16x256xf32>
    %240 = arith.addf %236, %239 : vector<16x256xf32>
    %cst_268 = arith.constant 0.000000e+00 : f32
    %241 = vector.broadcast %cst_268 : f32 to vector<16x256xf32>
    %242 = arith.maximumf %240, %241 : vector<16x256xf32>
    %243 = vector.broadcast %1 : vector<1x256xf32> to vector<16x256xf32>
    %244 = arith.mulf %242, %243 : vector<16x256xf32>
    %c11_i32_269 = arith.constant 11 : i32
    %245 = tpu.dynamic_rotate %244 by %c11_i32_269 dim 1 : vector<16x256xf32>, i32 -> vector<16x256xf32>
    %c0_270 = arith.constant 0 : index
    %c0_271 = arith.constant 0 : index
    %246 = vector.load %arg9[%c0_270, %c0_271] : memref<144x256xf32, #tpu.memory_space<vmem>>, vector<16x256xf32>
    tpu.vector_store %arg9[%c0_270, %c0_271], %245 {strides = array<i32>} : memref<144x256xf32, #tpu.memory_space<vmem>>, vector<16x256xf32>,
    %c10_i32_272 = arith.constant 10 : i32
    %247 = tpu.dynamic_rotate %244 by %c10_i32_272 dim 1 : vector<16x256xf32>, i32 -> vector<16x256xf32>
    %c16_273 = arith.constant 16 : index
    %c0_274 = arith.constant 0 : index
    %248 = vector.load %arg9[%c16_273, %c0_274] : memref<144x256xf32, #tpu.memory_space<vmem>>, vector<16x256xf32>
    tpu.vector_store %arg9[%c16_273, %c0_274], %247 {strides = array<i32>} : memref<144x256xf32, #tpu.memory_space<vmem>>, vector<16x256xf32>,
    %c9_i32_275 = arith.constant 9 : i32
    %249 = tpu.dynamic_rotate %244 by %c9_i32_275 dim 1 : vector<16x256xf32>, i32 -> vector<16x256xf32>
    %c32_276 = arith.constant 32 : index
    %c0_277 = arith.constant 0 : index
    %250 = vector.load %arg9[%c32_276, %c0_277] : memref<144x256xf32, #tpu.memory_space<vmem>>, vector<16x256xf32>
    tpu.vector_store %arg9[%c32_276, %c0_277], %249 {strides = array<i32>} : memref<144x256xf32, #tpu.memory_space<vmem>>, vector<16x256xf32>,
    %c1_i32_278 = arith.constant 1 : i32
    %251 = tpu.dynamic_rotate %244 by %c1_i32_278 dim 1 : vector<16x256xf32>, i32 -> vector<16x256xf32>
    %c48_279 = arith.constant 48 : index
    %c0_280 = arith.constant 0 : index
    %252 = vector.load %arg9[%c48_279, %c0_280] : memref<144x256xf32, #tpu.memory_space<vmem>>, vector<16x256xf32>
    tpu.vector_store %arg9[%c48_279, %c0_280], %251 {strides = array<i32>} : memref<144x256xf32, #tpu.memory_space<vmem>>, vector<16x256xf32>,
    %c64_281 = arith.constant 64 : index
    %c0_282 = arith.constant 0 : index
    %253 = vector.load %arg9[%c64_281, %c0_282] : memref<144x256xf32, #tpu.memory_space<vmem>>, vector<16x256xf32>
    tpu.vector_store %arg9[%c64_281, %c0_282], %244 {strides = array<i32>} : memref<144x256xf32, #tpu.memory_space<vmem>>, vector<16x256xf32>,
    %c255_i32_283 = arith.constant 255 : i32
    %254 = tpu.dynamic_rotate %244 by %c255_i32_283 dim 1 : vector<16x256xf32>, i32 -> vector<16x256xf32>
    %c80_284 = arith.constant 80 : index
    %c0_285 = arith.constant 0 : index
    %255 = vector.load %arg9[%c80_284, %c0_285] : memref<144x256xf32, #tpu.memory_space<vmem>>, vector<16x256xf32>
    tpu.vector_store %arg9[%c80_284, %c0_285], %254 {strides = array<i32>} : memref<144x256xf32, #tpu.memory_space<vmem>>, vector<16x256xf32>,
    %c247_i32_286 = arith.constant 247 : i32
    %256 = tpu.dynamic_rotate %244 by %c247_i32_286 dim 1 : vector<16x256xf32>, i32 -> vector<16x256xf32>
    %c96_287 = arith.constant 96 : index
    %c0_288 = arith.constant 0 : index
    %257 = vector.load %arg9[%c96_287, %c0_288] : memref<144x256xf32, #tpu.memory_space<vmem>>, vector<16x256xf32>
    tpu.vector_store %arg9[%c96_287, %c0_288], %256 {strides = array<i32>} : memref<144x256xf32, #tpu.memory_space<vmem>>, vector<16x256xf32>,
    %c246_i32_289 = arith.constant 246 : i32
    %258 = tpu.dynamic_rotate %244 by %c246_i32_289 dim 1 : vector<16x256xf32>, i32 -> vector<16x256xf32>
    %c112_290 = arith.constant 112 : index
    %c0_291 = arith.constant 0 : index
    %259 = vector.load %arg9[%c112_290, %c0_291] : memref<144x256xf32, #tpu.memory_space<vmem>>, vector<16x256xf32>
    tpu.vector_store %arg9[%c112_290, %c0_291], %258 {strides = array<i32>} : memref<144x256xf32, #tpu.memory_space<vmem>>, vector<16x256xf32>,
    %c245_i32_292 = arith.constant 245 : i32
    %260 = tpu.dynamic_rotate %244 by %c245_i32_292 dim 1 : vector<16x256xf32>, i32 -> vector<16x256xf32>
    %c128_293 = arith.constant 128 : index
    %c0_294 = arith.constant 0 : index
    %261 = vector.load %arg9[%c128_293, %c0_294] : memref<144x256xf32, #tpu.memory_space<vmem>>, vector<16x256xf32>
    tpu.vector_store %arg9[%c128_293, %c0_294], %260 {strides = array<i32>} : memref<144x256xf32, #tpu.memory_space<vmem>>, vector<16x256xf32>,
    %c8 = arith.constant 8 : index
    %c0_295 = arith.constant 0 : index
    %c0_296 = arith.constant 0 : index
    %262 = vector.load %arg2[%c8, %c0_295, %c0_296] : memref<9x16x144xf32, #tpu.memory_space<vmem>>, vector<1x16x144xf32>
    %263 = vector.shape_cast %262 : vector<1x16x144xf32> to vector<16x144xf32>
    %c0_297 = arith.constant 0 : index
    %c0_298 = arith.constant 0 : index
    %264 = vector.load %arg9[%c0_297, %c0_298] : memref<144x256xf32, #tpu.memory_space<vmem>>, vector<144x256xf32>
    %cst_299 = arith.constant dense<0.000000e+00> : vector<16x256xf32>
    %265 = tpu.matmul %263, %264, %cst_299 {dimension_numbers = #tpu.dot_dimension_numbers<[1], [0], [0], [1], [0, 0, 1, 1], [], []>} : vector<16x144xf32>, vector<144x256xf32>, vector<16x256xf32> -> vector<16x256xf32>
    %c8_300 = arith.constant 8 : index
    %c0_301 = arith.constant 0 : index
    %c0_302 = arith.constant 0 : index
    %266 = vector.load %arg3[%c8_300, %c0_301, %c0_302] : memref<9x16x1xf32, #tpu.memory_space<vmem>>, vector<1x16x1xf32>
    %267 = vector.shape_cast %266 : vector<1x16x1xf32> to vector<16x1xf32>
    %268 = vector.broadcast %267 : vector<16x1xf32> to vector<16x256xf32>
    %269 = arith.addf %265, %268 : vector<16x256xf32>
    %cst_303 = arith.constant 0.000000e+00 : f32
    %270 = vector.broadcast %cst_303 : f32 to vector<16x256xf32>
    %271 = arith.maximumf %269, %270 : vector<16x256xf32>
    %272 = vector.broadcast %1 : vector<1x256xf32> to vector<16x256xf32>
    %273 = arith.mulf %271, %272 : vector<16x256xf32>
    %c0_304 = arith.constant 0 : index
    %c0_305 = arith.constant 0 : index
    %274 = vector.load %arg7[%c0_304, %c0_305] : memref<16x256xf32, #tpu.memory_space<vmem>>, vector<16x256xf32>
    tpu.vector_store %arg7[%c0_304, %c0_305], %273 {strides = array<i32>} : memref<16x256xf32, #tpu.memory_space<vmem>>, vector<16x256xf32>,
    return
  }
  func.func @transform_0(%arg0: i32) -> (i32, i32) {
    %c0_i32 = arith.constant 0 : i32
    %c0_i32_0 = arith.constant 0 : i32
    %c0_i32_1 = arith.constant 0 : i32
    return %c0_i32, %c0_i32_0 : i32, i32
  }
  func.func @transform_1(%arg0: i32) -> (i32, i32, i32) {
    %c0_i32 = arith.constant 0 : i32
    %c0_i32_0 = arith.constant 0 : i32
    %c0_i32_1 = arith.constant 0 : i32
    %c0_i32_2 = arith.constant 0 : i32
    return %c0_i32, %c0_i32_0, %c0_i32_1 : i32, i32, i32
  }
  func.func @transform_2(%arg0: i32) -> (i32, i32, i32) {
    %c0_i32 = arith.constant 0 : i32
    %c0_i32_0 = arith.constant 0 : i32
    %c0_i32_1 = arith.constant 0 : i32
    %c0_i32_2 = arith.constant 0 : i32
    return %c0_i32, %c0_i32_0, %c0_i32_1 : i32, i32, i32
  }
  func.func @transform_3(%arg0: i32) -> (i32, i32) {
    %c0_i32 = arith.constant 0 : i32
    %c0_i32_0 = arith.constant 0 : i32
    %c0_i32_1 = arith.constant 0 : i32
    return %c0_i32, %c0_i32_0 : i32, i32
  }
  func.func @transform_4(%arg0: i32) -> (i32, i32) {
    %c0_i32 = arith.constant 0 : i32
    %c0_i32_0 = arith.constant 0 : i32
    %c0_i32_1 = arith.constant 0 : i32
    return %c0_i32, %c0_i32_0 : i32, i32
  }
  func.func @transform_5(%arg0: i32) -> (i32, i32) {
    %c0_i32 = arith.constant 0 : i32
    %c0_i32_0 = arith.constant 0 : i32
    %c0_i32_1 = arith.constant 0 : i32
    return %c0_i32, %c0_i32_0 : i32, i32
  }
  func.func @transform_6(%arg0: i32) -> (i32, i32) {
    %c0_i32 = arith.constant 0 : i32
    %c0_i32_0 = arith.constant 0 : i32
    %c0_i32_1 = arith.constant 0 : i32
    return %c0_i32, %c0_i32_0 : i32, i32
  }
}

</mosaic_0001>

<llo_original>
// kernel: cnn9_forward.1
$region0: #{cnn9_forward.1}
  #allocation0 [shape = 'u32[]', space=smem, size = 0x4, offset = 0x4, fixed_abs, tag = 'smem constant byte address 0x4 - core index']
  #allocation1 [shape = 'u32[144,128]{1,0:T(1,128)}', space=vmem, size = 0x12000, scoped, tag = 'internal scratch']
  #allocation2 [shape = 'f32[144,768]{1,0:T(8,128)}', space=vmem, size = 0x6c000, scoped, tag = 'scratch operand']
  #allocation3 [shape = 'f32[144,256]{1,0:T(8,128)}', space=vmem, size = 0x24000, scoped, tag = 'scratch operand']
  %s0 = inlined_call_operand.vmem [shape: f32[16,768], index: 0, kind: input, shape index: {}]
  %s1 = inlined_call_operand.vmem [shape: f32[9,16,144], index: 1, kind: input, shape index: {}]
  %s2 = inlined_call_operand.vmem [shape: f32[9,16,1], index: 2, kind: input, shape index: {}]
  %s3 = inlined_call_operand.vmem [shape: f32[1,768], index: 3, kind: input, shape index: {}]
  %s4 = inlined_call_operand.vmem [shape: f32[1,256], index: 4, kind: input, shape index: {}]
  %s5 = inlined_call_operand.vmem [shape: f32[768,256], index: 5, kind: input, shape index: {}]
  %s6 = inlined_call_operand.vmem [shape: f32[16,256], index: 6, kind: output, shape index: {}]
  %s7 = sld [smem:[#allocation0]]
  $region34: #{cnn9_forward.1} parent=0
    _
  %s9 = ssub.s32 1, %s7
  %s10 = scalar_select 0, %s9, %s7
  // Predicated region
  $region2: #{cnn9_forward.1} parent=0 // pred_check
    _
  $region3: #{cnn9_forward.1} parent=0 // pred_check_branch
    %12 = sbr.rel (0) target = $region5
  $region4: #{cnn9_forward.1} parent=0 // pred_region
    _
  $region5: #{cnn9_forward.1} parent=0 // pred_fallthru
    _
  // Predicated region
  $region6: #{cnn9_forward.1} parent=0 // pred_check
    _
  $region7: #{cnn9_forward.1} parent=0 // pred_check_branch
    %14 = sbr.rel (0) target = $region9
  $region8: #{cnn9_forward.1} parent=0 // pred_region
    _
  $region9: #{cnn9_forward.1} parent=0 // pred_fallthru
    _
  // Predicated region
  $region10: #{cnn9_forward.1} parent=0 // pred_check
    _
  $region11: #{cnn9_forward.1} parent=0 // pred_check_branch
    %16 = sbr.rel (0) target = $region13
  $region12: #{cnn9_forward.1} parent=0 // pred_region
    _
  $region13: #{cnn9_forward.1} parent=0 // pred_fallthru
    _
  // Predicated region
  $region14: #{cnn9_forward.1} parent=0 // pred_check
    _
  $region15: #{cnn9_forward.1} parent=0 // pred_check_branch
    %18 = sbr.rel (0) target = $region17
  $region16: #{cnn9_forward.1} parent=0 // pred_region
    _
  $region17: #{cnn9_forward.1} parent=0 // pred_fallthru
    _
  // Predicated region
  $region18: #{cnn9_forward.1} parent=0 // pred_check
    _
  $region19: #{cnn9_forward.1} parent=0 // pred_check_branch
    %20 = sbr.rel (0) target = $region21
  $region20: #{cnn9_forward.1} parent=0 // pred_region
    _
  $region21: #{cnn9_forward.1} parent=0 // pred_fallthru
    _
  // Predicated region
  $region22: #{cnn9_forward.1} parent=0 // pred_check
    _
  $region23: #{cnn9_forward.1} parent=0 // pred_check_branch
    %22 = sbr.rel (0) target = $region25
  $region24: #{cnn9_forward.1} parent=0 // pred_region
    _
  $region25: #{cnn9_forward.1} parent=0 // pred_fallthru
    _
  %v23 = vld [vmem:[%s3] sm:$0x3f]
  %v24 = vld [vmem:[%s4] sm:$0x3]
  %v25 = vld [vmem:[%s0] sm:$0xff]
  %v26 = vld [vmem:[%s0 + $0x8] sm:$0xff]
  %v27 = vld [vmem:[%s0 + $0x10] sm:$0xff]
  %v28 = vld [vmem:[%s0 + $0x18] sm:$0xff]
  %v29 = vld [vmem:[%s0 + $0x20] sm:$0xff]
  %v30 = vld [vmem:[%s0 + $0x28] sm:$0xff]
  %v31 = vld [vmem:[%s0 + $0x30] sm:$0xff]
  %v32 = vld [vmem:[%s0 + $0x38] sm:$0xff]
  %v33 = vld [vmem:[%s0 + $0x40] sm:$0xff]
  %v34 = vld [vmem:[%s0 + $0x48] sm:$0xff]
  %v35 = vld [vmem:[%s0 + $0x50] sm:$0xff]
  %v36 = vld [vmem:[%s0 + $0x58] sm:$0xff]
  %37 = vrot.lane.b32.xlu0 %v25, 19
  %v38 = vpop.permute.xlu0 %37
  %39 = vrot.lane.b32.xlu0 %v31, 19
  %v40 = vpop.permute.xlu0 %39
  %41 = vrot.lane.b32.xlu0 %v26, 19
  %v42 = vpop.permute.xlu0 %41
  %43 = vrot.lane.b32.xlu0 %v32, 19
  %v44 = vpop.permute.xlu0 %43
  %45 = vrot.lane.b32.xlu0 %v27, 19
  %v46 = vpop.permute.xlu0 %45
  %47 = vrot.lane.b32.xlu0 %v33, 19
  %v48 = vpop.permute.xlu0 %47
  %49 = vrot.lane.b32.xlu0 %v28, 19
  %v50 = vpop.permute.xlu0 %49
  %51 = vrot.lane.b32.xlu0 %v34, 19
  %v52 = vpop.permute.xlu0 %51
  %53 = vrot.lane.b32.xlu0 %v29, 19
  %v54 = vpop.permute.xlu0 %53
  %55 = vrot.lane.b32.xlu0 %v35, 19
  %v56 = vpop.permute.xlu0 %55
  %57 = vrot.lane.b32.xlu0 %v30, 19
  %v58 = vpop.permute.xlu0 %57
  %59 = vrot.lane.b32.xlu0 %v36, 19
  %v60 = vpop.permute.xlu0 %59
  %v61 = vlaneseq
  %v62 = vand.u32 %v61, 127
  %vm63 = vcmp.lt.s32.totalorder %v62, 19
  %v64 = vsel %vm63, %v54, %v58
  %v65 = vsel %vm63, %v56, %v60
  %v66 = vsel %vm63, %v50, %v54
  %v67 = vsel %vm63, %v52, %v56
  %v68 = vsel %vm63, %v46, %v50
  %v69 = vsel %vm63, %v48, %v52
  %v70 = vsel %vm63, %v42, %v46
  %v71 = vsel %vm63, %v44, %v48
  %v72 = vsel %vm63, %v38, %v42
  %v73 = vsel %vm63, %v40, %v44
  %v74 = vsel %vm63, %v58, %v38
  %v75 = vsel %vm63, %v60, %v40
  %76 = vst [vmem:[#allocation2] sm:$0xff] %v74
  %77 = vst [vmem:[#allocation2 + $0x8] sm:$0xff] %v72
  %78 = vst [vmem:[#allocation2 + $0x10] sm:$0xff] %v70
  %79 = vst [vmem:[#allocation2 + $0x18] sm:$0xff] %v68
  %80 = vst [vmem:[#allocation2 + $0x20] sm:$0xff] %v66
  %81 = vst [vmem:[#allocation2 + $0x28] sm:$0xff] %v64
  %82 = vst [vmem:[#allocation2 + $0x30] sm:$0xff] %v75
  %83 = vst [vmem:[#allocation2 + $0x38] sm:$0xff] %v73
  %84 = vst [vmem:[#allocation2 + $0x40] sm:$0xff] %v71
  %85 = vst [vmem:[#allocation2 + $0x48] sm:$0xff] %v69
  %86 = vst [vmem:[#allocation2 + $0x50] sm:$0xff] %v67
  %87 = vst [vmem:[#allocation2 + $0x58] sm:$0xff] %v65
  %88 = vrot.lane.b32.xlu0 %v25, 18
  %v89 = vpop.permute.xlu0 %88
  %90 = vrot.lane.b32.xlu0 %v31, 18
  %v91 = vpop.permute.xlu0 %90
  %92 = vrot.lane.b32.xlu0 %v26, 18
  %v93 = vpop.permute.xlu0 %92
  %94 = vrot.lane.b32.xlu0 %v32, 18
  %v95 = vpop.permute.xlu0 %94
  %96 = vrot.lane.b32.xlu0 %v27, 18
  %v97 = vpop.permute.xlu0 %96
  %98 = vrot.lane.b32.xlu0 %v33, 18
  %v99 = vpop.permute.xlu0 %98
  %100 = vrot.lane.b32.xlu0 %v28, 18
  %v101 = vpop.permute.xlu0 %100
  %102 = vrot.lane.b32.xlu0 %v34, 18
  %v103 = vpop.permute.xlu0 %102
  %104 = vrot.lane.b32.xlu0 %v29, 18
  %v105 = vpop.permute.xlu0 %104
  %106 = vrot.lane.b32.xlu0 %v35, 18
  %v107 = vpop.permute.xlu0 %106
  %108 = vrot.lane.b32.xlu0 %v30, 18
  %v109 = vpop.permute.xlu0 %108
  %110 = vrot.lane.b32.xlu0 %v36, 18
  %v111 = vpop.permute.xlu0 %110
  %vm112 = vcmp.lt.s32.totalorder %v62, 18
  %v113 = vsel %vm112, %v105, %v109
  %v114 = vsel %vm112, %v107, %v111
  %v115 = vsel %vm112, %v101, %v105
  %v116 = vsel %vm112, %v103, %v107
  %v117 = vsel %vm112, %v97, %v101
  %v118 = vsel %vm112, %v99, %v103
  %v119 = vsel %vm112, %v93, %v97
  %v120 = vsel %vm112, %v95, %v99
  %v121 = vsel %vm112, %v89, %v93
  %v122 = vsel %vm112, %v91, %v95
  %v123 = vsel %vm112, %v109, %v89
  %v124 = vsel %vm112, %v111, %v91
  %125 = vst [vmem:[#allocation2 + $0x60] sm:$0xff] %v123
  %126 = vst [vmem:[#allocation2 + $0x68] sm:$0xff] %v121
  %127 = vst [vmem:[#allocation2 + $0x70] sm:$0xff] %v119
  %128 = vst [vmem:[#allocation2 + $0x78] sm:$0xff] %v117
  %129 = vst [vmem:[#allocation2 + $0x80] sm:$0xff] %v115
  %130 = vst [vmem:[#allocation2 + $0x88] sm:$0xff] %v113
  %131 = vst [vmem:[#allocation2 + $0x90] sm:$0xff] %v124
  %132 = vst [vmem:[#allocation2 + $0x98] sm:$0xff] %v122
  %133 = vst [vmem:[#allocation2 + $0xa0] sm:$0xff] %v120
  %134 = vst [vmem:[#allocation2 + $0xa8] sm:$0xff] %v118
  %135 = vst [vmem:[#allocation2 + $0xb0] sm:$0xff] %v116
  %136 = vst [vmem:[#allocation2 + $0xb8] sm:$0xff] %v114
  %137 = vrot.lane.b32.xlu0 %v25, 17
  %v138 = vpop.permute.xlu0 %137
  %139 = vrot.lane.b32.xlu0 %v31, 17
  %v140 = vpop.permute.xlu0 %139
  %141 = vrot.lane.b32.xlu0 %v26, 17
  %v142 = vpop.permute.xlu0 %141
  %143 = vrot.lane.b32.xlu0 %v32, 17
  %v144 = vpop.permute.xlu0 %143
  %145 = vrot.lane.b32.xlu0 %v27, 17
  %v146 = vpop.permute.xlu0 %145
  %147 = vrot.lane.b32.xlu0 %v33, 17
  %v148 = vpop.permute.xlu0 %147
  %149 = vrot.lane.b32.xlu0 %v28, 17
  %v150 = vpop.permute.xlu0 %149
  %151 = vrot.lane.b32.xlu0 %v34, 17
  %v152 = vpop.permute.xlu0 %151
  %153 = vrot.lane.b32.xlu0 %v29, 17
  %v154 = vpop.permute.xlu0 %153
  %155 = vrot.lane.b32.xlu0 %v35, 17
  %v156 = vpop.permute.xlu0 %155
  %157 = vrot.lane.b32.xlu0 %v30, 17
  %v158 = vpop.permute.xlu0 %157
  %159 = vrot.lane.b32.xlu0 %v36, 17
  %v160 = vpop.permute.xlu0 %159
  %vm161 = vcmp.lt.s32.totalorder %v62, 17
  %v162 = vsel %vm161, %v154, %v158
  %v163 = vsel %vm161, %v156, %v160
  %v164 = vsel %vm161, %v150, %v154
  %v165 = vsel %vm161, %v152, %v156
  %v166 = vsel %vm161, %v146, %v150
  %v167 = vsel %vm161, %v148, %v152
  %v168 = vsel %vm161, %v142, %v146
  %v169 = vsel %vm161, %v144, %v148
  %v170 = vsel %vm161, %v138, %v142
  %v171 = vsel %vm161, %v140, %v144
  %v172 = vsel %vm161, %v158, %v138
  %v173 = vsel %vm161, %v160, %v140
  %174 = vst [vmem:[#allocation2 + $0xc0] sm:$0xff] %v172
  %175 = vst [vmem:[#allocation2 + $0xc8] sm:$0xff] %v170
  %176 = vst [vmem:[#allocation2 + $0xd0] sm:$0xff] %v168
  %177 = vst [vmem:[#allocation2 + $0xd8] sm:$0xff] %v166
  %178 = vst [vmem:[#allocation2 + $0xe0] sm:$0xff] %v164
  %179 = vst [vmem:[#allocation2 + $0xe8] sm:$0xff] %v162
  %180 = vst [vmem:[#allocation2 + $0xf0] sm:$0xff] %v173
  %181 = vst [vmem:[#allocation2 + $0xf8] sm:$0xff] %v171
  %182 = vst [vmem:[#allocation2 + $0x100] sm:$0xff] %v169
  %183 = vst [vmem:[#allocation2 + $0x108] sm:$0xff] %v167
  %184 = vst [vmem:[#allocation2 + $0x110] sm:$0xff] %v165
  %185 = vst [vmem:[#allocation2 + $0x118] sm:$0xff] %v163
  %186 = vrot.lane.b32.xlu0 %v25, 1
  %v187 = vpop.permute.xlu0 %186
  %188 = vrot.lane.b32.xlu0 %v31, 1
  %v189 = vpop.permute.xlu0 %188
  %190 = vrot.lane.b32.xlu0 %v26, 1
  %v191 = vpop.permute.xlu0 %190
  %192 = vrot.lane.b32.xlu0 %v32, 1
  %v193 = vpop.permute.xlu0 %192
  %194 = vrot.lane.b32.xlu0 %v27, 1
  %v195 = vpop.permute.xlu0 %194
  %196 = vrot.lane.b32.xlu0 %v33, 1
  %v197 = vpop.permute.xlu0 %196
  %198 = vrot.lane.b32.xlu0 %v28, 1
  %v199 = vpop.permute.xlu0 %198
  %200 = vrot.lane.b32.xlu0 %v34, 1
  %v201 = vpop.permute.xlu0 %200
  %202 = vrot.lane.b32.xlu0 %v29, 1
  %v203 = vpop.permute.xlu0 %202
  %204 = vrot.lane.b32.xlu0 %v35, 1
  %v205 = vpop.permute.xlu0 %204
  %206 = vrot.lane.b32.xlu0 %v30, 1
  %v207 = vpop.permute.xlu0 %206
  %208 = vrot.lane.b32.xlu0 %v36, 1
  %v209 = vpop.permute.xlu0 %208
  %vm210 = vcmp.lt.s32.totalorder %v62, 1
  %v211 = vsel %vm210, %v203, %v207
  %v212 = vsel %vm210, %v205, %v209
  %v213 = vsel %vm210, %v199, %v203
  %v214 = vsel %vm210, %v201, %v205
  %v215 = vsel %vm210, %v195, %v199
  %v216 = vsel %vm210, %v197, %v201
  %v217 = vsel %vm210, %v191, %v195
  %v218 = vsel %vm210, %v193, %v197
  %v219 = vsel %vm210, %v187, %v191
  %v220 = vsel %vm210, %v189, %v193
  %v221 = vsel %vm210, %v207, %v187
  %v222 = vsel %vm210, %v209, %v189
  %223 = vst [vmem:[#allocation2 + $0x120] sm:$0xff] %v221
  %224 = vst [vmem:[#allocation2 + $0x128] sm:$0xff] %v219
  %225 = vst [vmem:[#allocation2 + $0x130] sm:$0xff] %v217
  %226 = vst [vmem:[#allocation2 + $0x138] sm:$0xff] %v215
  %227 = vst [vmem:[#allocation2 + $0x140] sm:$0xff] %v213
  %228 = vst [vmem:[#allocation2 + $0x148] sm:$0xff] %v211
  %229 = vst [vmem:[#allocation2 + $0x150] sm:$0xff] %v222
  %230 = vst [vmem:[#allocation2 + $0x158] sm:$0xff] %v220
  %231 = vst [vmem:[#allocation2 + $0x160] sm:$0xff] %v218
  %232 = vst [vmem:[#allocation2 + $0x168] sm:$0xff] %v216
  %233 = vst [vmem:[#allocation2 + $0x170] sm:$0xff] %v214
  %234 = vst [vmem:[#allocation2 + $0x178] sm:$0xff] %v212
  %235 = vst [vmem:[#allocation2 + $0x180] sm:$0xff] %v25
  %236 = vst [vmem:[#allocation2 + $0x188] sm:$0xff] %v26
  %237 = vst [vmem:[#allocation2 + $0x190] sm:$0xff] %v27
  %238 = vst [vmem:[#allocation2 + $0x198] sm:$0xff] %v28
  %239 = vst [vmem:[#allocation2 + $0x1a0] sm:$0xff] %v29
  %240 = vst [vmem:[#allocation2 + $0x1a8] sm:$0xff] %v30
  %241 = vst [vmem:[#allocation2 + $0x1b0] sm:$0xff] %v31
  %242 = vst [vmem:[#allocation2 + $0x1b8] sm:$0xff] %v32
  %243 = vst [vmem:[#allocation2 + $0x1c0] sm:$0xff] %v33
  %244 = vst [vmem:[#allocation2 + $0x1c8] sm:$0xff] %v34
  %245 = vst [vmem:[#allocation2 + $0x1d0] sm:$0xff] %v35
  %246 = vst [vmem:[#allocation2 + $0x1d8] sm:$0xff] %v36
  %247 = vrot.lane.b32.xlu0 %v25, 127
  %v248 = vpop.permute.xlu0 %247
  %249 = vrot.lane.b32.xlu0 %v31, 127
  %v250 = vpop.permute.xlu0 %249
  %251 = vrot.lane.b32.xlu0 %v26, 127
  %v252 = vpop.permute.xlu0 %251
  %253 = vrot.lane.b32.xlu0 %v32, 127
  %v254 = vpop.permute.xlu0 %253
  %255 = vrot.lane.b32.xlu0 %v27, 127
  %v256 = vpop.permute.xlu0 %255
  %257 = vrot.lane.b32.xlu0 %v33, 127
  %v258 = vpop.permute.xlu0 %257
  %259 = vrot.lane.b32.xlu0 %v28, 127
  %v260 = vpop.permute.xlu0 %259
  %261 = vrot.lane.b32.xlu0 %v34, 127
  %v262 = vpop.permute.xlu0 %261
  %263 = vrot.lane.b32.xlu0 %v29, 127
  %v264 = vpop.permute.xlu0 %263
  %265 = vrot.lane.b32.xlu0 %v35, 127
  %v266 = vpop.permute.xlu0 %265
  %267 = vrot.lane.b32.xlu0 %v30, 127
  %v268 = vpop.permute.xlu0 %267
  %269 = vrot.lane.b32.xlu0 %v36, 127
  %v270 = vpop.permute.xlu0 %269
  %vm271 = vcmp.lt.s32.totalorder %v62, 127
  %v272 = vsel %vm271, %v264, %v268
  %v273 = vsel %vm271, %v266, %v270
  %v274 = vsel %vm271, %v260, %v264
  %v275 = vsel %vm271, %v262, %v266
  %v276 = vsel %vm271, %v256, %v260
  %v277 = vsel %vm271, %v258, %v262
  %v278 = vsel %vm271, %v252, %v256
  %v279 = vsel %vm271, %v254, %v258
  %v280 = vsel %vm271, %v248, %v252
  %v281 = vsel %vm271, %v250, %v254
  %v282 = vsel %vm271, %v268, %v248
  %v283 = vsel %vm271, %v270, %v250
  %284 = vst [vmem:[#allocation2 + $0x1e0] sm:$0xff] %v280
  %285 = vst [vmem:[#allocation2 + $0x1e8] sm:$0xff] %v278
  %286 = vst [vmem:[#allocation2 + $0x1f0] sm:$0xff] %v276
  %287 = vst [vmem:[#allocation2 + $0x1f8] sm:$0xff] %v274
  %288 = vst [vmem:[#allocation2 + $0x200] sm:$0xff] %v272
  %289 = vst [vmem:[#allocation2 + $0x208] sm:$0xff] %v282
  %290 = vst [vmem:[#allocation2 + $0x210] sm:$0xff] %v281
  %291 = vst [vmem:[#allocation2 + $0x218] sm:$0xff] %v279
  %292 = vst [vmem:[#allocation2 + $0x220] sm:$0xff] %v277
  %293 = vst [vmem:[#allocation2 + $0x228] sm:$0xff] %v275
  %294 = vst [vmem:[#allocation2 + $0x230] sm:$0xff] %v273
  %295 = vst [vmem:[#allocation2 + $0x238] sm:$0xff] %v283
  %296 = vrot.lane.b32.xlu0 %v25, 111
  %v297 = vpop.permute.xlu0 %296
  %298 = vrot.lane.b32.xlu0 %v31, 111
  %v299 = vpop.permute.xlu0 %298
  %300 = vrot.lane.b32.xlu0 %v26, 111
  %v301 = vpop.permute.xlu0 %300
  %302 = vrot.lane.b32.xlu0 %v32, 111
  %v303 = vpop.permute.xlu0 %302
  %304 = vrot.lane.b32.xlu0 %v27, 111
  %v305 = vpop.permute.xlu0 %304
  %306 = vrot.lane.b32.xlu0 %v33, 111
  %v307 = vpop.permute.xlu0 %306
  %308 = vrot.lane.b32.xlu0 %v28, 111
  %v309 = vpop.permute.xlu0 %308
  %310 = vrot.lane.b32.xlu0 %v34, 111
  %v311 = vpop.permute.xlu0 %310
  %312 = vrot.lane.b32.xlu0 %v29, 111
  %v313 = vpop.permute.xlu0 %312
  %314 = vrot.lane.b32.xlu0 %v35, 111
  %v315 = vpop.permute.xlu0 %314
  %316 = vrot.lane.b32.xlu0 %v30, 111
  %v317 = vpop.permute.xlu0 %316
  %318 = vrot.lane.b32.xlu0 %v36, 111
  %v319 = vpop.permute.xlu0 %318
  %vm320 = vcmp.lt.s32.totalorder %v62, 111
  %v321 = vsel %vm320, %v313, %v317
  %v322 = vsel %vm320, %v315, %v319
  %v323 = vsel %vm320, %v309, %v313
  %v324 = vsel %vm320, %v311, %v315
  %v325 = vsel %vm320, %v305, %v309
  %v326 = vsel %vm320, %v307, %v311
  %v327 = vsel %vm320, %v301, %v305
  %v328 = vsel %vm320, %v303, %v307
  %v329 = vsel %vm320, %v297, %v301
  %v330 = vsel %vm320, %v299, %v303
  %v331 = vsel %vm320, %v317, %v297
  %v332 = vsel %vm320, %v319, %v299
  %333 = vst [vmem:[#allocation2 + $0x240] sm:$0xff] %v329
  %334 = vst [vmem:[#allocation2 + $0x248] sm:$0xff] %v327
  %335 = vst [vmem:[#allocation2 + $0x250] sm:$0xff] %v325
  %336 = vst [vmem:[#allocation2 + $0x258] sm:$0xff] %v323
  %337 = vst [vmem:[#allocation2 + $0x260] sm:$0xff] %v321
  %338 = vst [vmem:[#allocation2 + $0x268] sm:$0xff] %v331
  %339 = vst [vmem:[#allocation2 + $0x270] sm:$0xff] %v330
  %340 = vst [vmem:[#allocation2 + $0x278] sm:$0xff] %v328
  %341 = vst [vmem:[#allocation2 + $0x280] sm:$0xff] %v326
  %342 = vst [vmem:[#allocation2 + $0x288] sm:$0xff] %v324
  %343 = vst [vmem:[#allocation2 + $0x290] sm:$0xff] %v322
  %344 = vst [vmem:[#allocation2 + $0x298] sm:$0xff] %v332
  %345 = vrot.lane.b32.xlu0 %v25, 110
  %v346 = vpop.permute.xlu0 %345
  %347 = vrot.lane.b32.xlu0 %v31, 110
  %v348 = vpop.permute.xlu0 %347
  %349 = vrot.lane.b32.xlu0 %v26, 110
  %v350 = vpop.permute.xlu0 %349
  %351 = vrot.lane.b32.xlu0 %v32, 110
  %v352 = vpop.permute.xlu0 %351
  %353 = vrot.lane.b32.xlu0 %v27, 110
  %v354 = vpop.permute.xlu0 %353
  %355 = vrot.lane.b32.xlu0 %v33, 110
  %v356 = vpop.permute.xlu0 %355
  %357 = vrot.lane.b32.xlu0 %v28, 110
  %v358 = vpop.permute.xlu0 %357
  %359 = vrot.lane.b32.xlu0 %v34, 110
  %v360 = vpop.permute.xlu0 %359
  %361 = vrot.lane.b32.xlu0 %v29, 110
  %v362 = vpop.permute.xlu0 %361
  %363 = vrot.lane.b32.xlu0 %v35, 110
  %v364 = vpop.permute.xlu0 %363
  %365 = vrot.lane.b32.xlu0 %v30, 110
  %v366 = vpop.permute.xlu0 %365
  %367 = vrot.lane.b32.xlu0 %v36, 110
  %v368 = vpop.permute.xlu0 %367
  %vm369 = vcmp.lt.s32.totalorder %v62, 110
  %v370 = vsel %vm369, %v362, %v366
  %v371 = vsel %vm369, %v364, %v368
  %v372 = vsel %vm369, %v358, %v362
  %v373 = vsel %vm369, %v360, %v364
  %v374 = vsel %vm369, %v354, %v358
  %v375 = vsel %vm369, %v356, %v360
  %v376 = vsel %vm369, %v350, %v354
  %v377 = vsel %vm369, %v352, %v356
  %v378 = vsel %vm369, %v346, %v350
  %v379 = vsel %vm369, %v348, %v352
  %v380 = vsel %vm369, %v366, %v346
  %v381 = vsel %vm369, %v368, %v348
  %382 = vst [vmem:[#allocation2 + $0x2a0] sm:$0xff] %v378
  %383 = vst [vmem:[#allocation2 + $0x2a8] sm:$0xff] %v376
  %384 = vst [vmem:[#allocation2 + $0x2b0] sm:$0xff] %v374
  %385 = vst [vmem:[#allocation2 + $0x2b8] sm:$0xff] %v372
  %386 = vst [vmem:[#allocation2 + $0x2c0] sm:$0xff] %v370
  %387 = vst [vmem:[#allocation2 + $0x2c8] sm:$0xff] %v380
  %388 = vst [vmem:[#allocation2 + $0x2d0] sm:$0xff] %v379
  %389 = vst [vmem:[#allocation2 + $0x2d8] sm:$0xff] %v377
  %390 = vst [vmem:[#allocation2 + $0x2e0] sm:$0xff] %v375
  %391 = vst [vmem:[#allocation2 + $0x2e8] sm:$0xff] %v373
  %392 = vst [vmem:[#allocation2 + $0x2f0] sm:$0xff] %v371
  %393 = vst [vmem:[#allocation2 + $0x2f8] sm:$0xff] %v381
  %394 = vrot.lane.b32.xlu0 %v25, 109
  %v395 = vpop.permute.xlu0 %394
  %396 = vrot.lane.b32.xlu0 %v31, 109
  %v397 = vpop.permute.xlu0 %396
  %398 = vrot.lane.b32.xlu0 %v26, 109
  %v399 = vpop.permute.xlu0 %398
  %400 = vrot.lane.b32.xlu0 %v32, 109
  %v401 = vpop.permute.xlu0 %400
  %402 = vrot.lane.b32.xlu0 %v27, 109
  %v403 = vpop.permute.xlu0 %402
  %404 = vrot.lane.b32.xlu0 %v33, 109
  %v405 = vpop.permute.xlu0 %404
  %406 = vrot.lane.b32.xlu0 %v28, 109
  %v407 = vpop.permute.xlu0 %406
  %408 = vrot.lane.b32.xlu0 %v34, 109
  %v409 = vpop.permute.xlu0 %408
  %410 = vrot.lane.b32.xlu0 %v29, 109
  %v411 = vpop.permute.xlu0 %410
  %412 = vrot.lane.b32.xlu0 %v35, 109
  %v413 = vpop.permute.xlu0 %412
  %414 = vrot.lane.b32.xlu0 %v30, 109
  %v415 = vpop.permute.xlu0 %414
  %416 = vrot.lane.b32.xlu0 %v36, 109
  %v417 = vpop.permute.xlu0 %416
  %vm418 = vcmp.lt.s32.totalorder %v62, 109
  %v419 = vsel %vm418, %v411, %v415
  %v420 = vsel %vm418, %v413, %v417
  %v421 = vsel %vm418, %v407, %v411
  %v422 = vsel %vm418, %v409, %v413
  %v423 = vsel %vm418, %v403, %v407
  %v424 = vsel %vm418, %v405, %v409
  %v425 = vsel %vm418, %v399, %v403
  %v426 = vsel %vm418, %v401, %v405
  %v427 = vsel %vm418, %v395, %v399
  %v428 = vsel %vm418, %v397, %v401
  %v429 = vsel %vm418, %v415, %v395
  %v430 = vsel %vm418, %v417, %v397
  %431 = vst [vmem:[#allocation2 + $0x300] sm:$0xff] %v427
  %432 = vst [vmem:[#allocation2 + $0x308] sm:$0xff] %v425
  %433 = vst [vmem:[#allocation2 + $0x310] sm:$0xff] %v423
  %434 = vst [vmem:[#allocation2 + $0x318] sm:$0xff] %v421
  %435 = vst [vmem:[#allocation2 + $0x320] sm:$0xff] %v419
  %436 = vst [vmem:[#allocation2 + $0x328] sm:$0xff] %v429
  %437 = vst [vmem:[#allocation2 + $0x330] sm:$0xff] %v428
  %438 = vst [vmem:[#allocation2 + $0x338] sm:$0xff] %v426
  %439 = vst [vmem:[#allocation2 + $0x340] sm:$0xff] %v424
  %440 = vst [vmem:[#allocation2 + $0x348] sm:$0xff] %v422
  %441 = vst [vmem:[#allocation2 + $0x350] sm:$0xff] %v420
  %442 = vst [vmem:[#allocation2 + $0x358] sm:$0xff] %v430
  %v443 = vld [vmem:[%s1] sm:$0xff]
  %v444 = vld [vmem:[%s1 + $0x8] sm:$0xff]
  %v445 = vld [vmem:[%s1 + $0x10] sm:$0xff]
  %v446 = vld [vmem:[%s1 + $0x18] sm:$0xff]
  %v447 = vld [vmem:[#allocation2] sm:$0xff]
  %v448 = vld [vmem:[#allocation2 + $0x8] sm:$0xff]
  %v449 = vld [vmem:[#allocation2 + $0x10] sm:$0xff]
  %v450 = vld [vmem:[#allocation2 + $0x18] sm:$0xff]
  %v451 = vld [vmem:[#allocation2 + $0x20] sm:$0xff]
  %v452 = vld [vmem:[#allocation2 + $0x28] sm:$0xff]
  %v453 = vld [vmem:[#allocation2 + $0x30] sm:$0xff]
  %v454 = vld [vmem:[#allocation2 + $0x38] sm:$0xff]
  %v455 = vld [vmem:[#allocation2 + $0x40] sm:$0xff]
  %v456 = vld [vmem:[#allocation2 + $0x48] sm:$0xff]
  %v457 = vld [vmem:[#allocation2 + $0x50] sm:$0xff]
  %v458 = vld [vmem:[#allocation2 + $0x58] sm:$0xff]
  %v459 = vld [vmem:[#allocation2 + $0x60] sm:$0xff]
  %v460 = vld [vmem:[#allocation2 + $0x68] sm:$0xff]
  %v461 = vld [vmem:[#allocation2 + $0x70] sm:$0xff]
  %v462 = vld [vmem:[#allocation2 + $0x78] sm:$0xff]
  %v463 = vld [vmem:[#allocation2 + $0x80] sm:$0xff]
  %v464 = vld [vmem:[#allocation2 + $0x88] sm:$0xff]
  %v465 = vld [vmem:[#allocation2 + $0x90] sm:$0xff]
  %v466 = vld [vmem:[#allocation2 + $0x98] sm:$0xff]
  %v467 = vld [vmem:[#allocation2 + $0xa0] sm:$0xff]
  %v468 = vld [vmem:[#allocation2 + $0xa8] sm:$0xff]
  %v469 = vld [vmem:[#allocation2 + $0xb0] sm:$0xff]
  %v470 = vld [vmem:[#allocation2 + $0xb8] sm:$0xff]
  %v471 = vld [vmem:[#allocation2 + $0xc0] sm:$0xff]
  %v472 = vld [vmem:[#allocation2 + $0xc8] sm:$0xff]
  %v473 = vld [vmem:[#allocation2 + $0xd0] sm:$0xff]
  %v474 = vld [vmem:[#allocation2 + $0xd8] sm:$0xff]
  %v475 = vld [vmem:[#allocation2 + $0xe0] sm:$0xff]
  %v476 = vld [vmem:[#allocation2 + $0xe8] sm:$0xff]
  %v477 = vld [vmem:[#allocation2 + $0xf0] sm:$0xff]
  %v478 = vld [vmem:[#allocation2 + $0xf8] sm:$0xff]
  %v479 = vld [vmem:[#allocation2 + $0x100] sm:$0xff]
  %v480 = vld [vmem:[#allocation2 + $0x108] sm:$0xff]
  %v481 = vld [vmem:[#allocation2 + $0x110] sm:$0xff]
  %v482 = vld [vmem:[#allocation2 + $0x118] sm:$0xff]
  %v483 = vld [vmem:[#allocation2 + $0x120] sm:$0xff]
  %v484 = vld [vmem:[#allocation2 + $0x128] sm:$0xff]
  %v485 = vld [vmem:[#allocation2 + $0x130] sm:$0xff]
  %v486 = vld [vmem:[#allocation2 + $0x138] sm:$0xff]
  %v487 = vld [vmem:[#allocation2 + $0x140] sm:$0xff]
  %v488 = vld [vmem:[#allocation2 + $0x148] sm:$0xff]
  %v489 = vld [vmem:[#allocation2 + $0x150] sm:$0xff]
  %v490 = vld [vmem:[#allocation2 + $0x158] sm:$0xff]
  %v491 = vld [vmem:[#allocation2 + $0x160] sm:$0xff]
  %v492 = vld [vmem:[#allocation2 + $0x168] sm:$0xff]
  %v493 = vld [vmem:[#allocation2 + $0x170] sm:$0xff]
  %v494 = vld [vmem:[#allocation2 + $0x178] sm:$0xff]
  %v495 = vld [vmem:[#allocation2 + $0x180] sm:$0xff]
  %v496 = vld [vmem:[#allocation2 + $0x188] sm:$0xff]
  %v497 = vld [vmem:[#allocation2 + $0x190] sm:$0xff]
  %v498 = vld [vmem:[#allocation2 + $0x198] sm:$0xff]
  %v499 = vld [vmem:[#allocation2 + $0x1a0] sm:$0xff]
  %v500 = vld [vmem:[#allocation2 + $0x1a8] sm:$0xff]
  %v501 = vld [vmem:[#allocation2 + $0x1b0] sm:$0xff]
  %v502 = vld [vmem:[#allocation2 + $0x1b8] sm:$0xff]
  %v503 = vld [vmem:[#allocation2 + $0x1c0] sm:$0xff]
  %v504 = vld [vmem:[#allocation2 + $0x1c8] sm:$0xff]
  %v505 = vld [vmem:[#allocation2 + $0x1d0] sm:$0xff]
  %v506 = vld [vmem:[#allocation2 + $0x1d8] sm:$0xff]
  %v507 = vld [vmem:[#allocation2 + $0x1e0] sm:$0xff]
  %v508 = vld [vmem:[#allocation2 + $0x1e8] sm:$0xff]
  %v509 = vld [vmem:[#allocation2 + $0x1f0] sm:$0xff]
  %v510 = vld [vmem:[#allocation2 + $0x1f8] sm:$0xff]
  %v511 = vld [vmem:[#allocation2 + $0x200] sm:$0xff]
  %v512 = vld [vmem:[#allocation2 + $0x208] sm:$0xff]
  %v513 = vld [vmem:[#allocation2 + $0x210] sm:$0xff]
  %v514 = vld [vmem:[#allocation2 + $0x218] sm:$0xff]
  %v515 = vld [vmem:[#allocation2 + $0x220] sm:$0xff]
  %v516 = vld [vmem:[#allocation2 + $0x228] sm:$0xff]
  %v517 = vld [vmem:[#allocation2 + $0x230] sm:$0xff]
  %v518 = vld [vmem:[#allocation2 + $0x238] sm:$0xff]
  %v519 = vld [vmem:[#allocation2 + $0x240] sm:$0xff]
  %v520 = vld [vmem:[#allocation2 + $0x248] sm:$0xff]
  %v521 = vld [vmem:[#allocation2 + $0x250] sm:$0xff]
  %v522 = vld [vmem:[#allocation2 + $0x258] sm:$0xff]
  %v523 = vld [vmem:[#allocation2 + $0x260] sm:$0xff]
  %v524 = vld [vmem:[#allocation2 + $0x268] sm:$0xff]
  %v525 = vld [vmem:[#allocation2 + $0x270] sm:$0xff]
  %v526 = vld [vmem:[#allocation2 + $0x278] sm:$0xff]
  %v527 = vld [vmem:[#allocation2 + $0x280] sm:$0xff]
  %v528 = vld [vmem:[#allocation2 + $0x288] sm:$0xff]
  %v529 = vld [vmem:[#allocation2 + $0x290] sm:$0xff]
  %v530 = vld [vmem:[#allocation2 + $0x298] sm:$0xff]
  %v531 = vld [vmem:[#allocation2 + $0x2a0] sm:$0xff]
  %v532 = vld [vmem:[#allocation2 + $0x2a8] sm:$0xff]
  %v533 = vld [vmem:[#allocation2 + $0x2b0] sm:$0xff]
  %v534 = vld [vmem:[#allocation2 + $0x2b8] sm:$0xff]
  %v535 = vld [vmem:[#allocation2 + $0x2c0] sm:$0xff]
  %v536 = vld [vmem:[#allocation2 + $0x2c8] sm:$0xff]
  %v537 = vld [vmem:[#allocation2 + $0x2d0] sm:$0xff]
  %v538 = vld [vmem:[#allocation2 + $0x2d8] sm:$0xff]
  %v539 = vld [vmem:[#allocation2 + $0x2e0] sm:$0xff]
  %v540 = vld [vmem:[#allocation2 + $0x2e8] sm:$0xff]
  %v541 = vld [vmem:[#allocation2 + $0x2f0] sm:$0xff]
  %v542 = vld [vmem:[#allocation2 + $0x2f8] sm:$0xff]
  %v543 = vld [vmem:[#allocation2 + $0x300] sm:$0xff]
  %v544 = vld [vmem:[#allocation2 + $0x308] sm:$0xff]
  %v545 = vld [vmem:[#allocation2 + $0x310] sm:$0xff]
  %v546 = vld [vmem:[#allocation2 + $0x318] sm:$0xff]
  %v547 = vld [vmem:[#allocation2 + $0x320] sm:$0xff]
  %v548 = vld [vmem:[#allocation2 + $0x328] sm:$0xff]
  %v549 = vld [vmem:[#allocation2 + $0x330] sm:$0xff]
  %v550 = vld [vmem:[#allocation2 + $0x338] sm:$0xff]
  %v551 = vld [vmem:[#allocation2 + $0x340] sm:$0xff]
  %v552 = vld [vmem:[#allocation2 + $0x348] sm:$0xff]
  %v553 = vld [vmem:[#allocation2 + $0x350] sm:$0xff]
  %v554 = vld [vmem:[#allocation2 + $0x358] sm:$0xff]
  %v555 = vld [vmem:[%s2] sm:$0xff]
  %v556 = vld [vmem:[%s2 + $0x8] sm:$0xff]
  %558 = vset.pattern.permute.xlu0 0
  %559 = vperm.xlu0 %558, %v555
  %v560 = vpop.permute.xlu0 %559
  %563 = vset.pattern.permute.xlu0 0
  %564 = vperm.xlu0 %563, %v556
  %v565 = vpop.permute.xlu0 %564
  %vm567 = vcmask 130048
  %v569 = vsel %vm567, %v444, 0
  %v572 = vsel %vm567, %v446, 0
  %574 = vmatprep.subr.mxu0 %v448
  %575 = vmatpush1.msra.mxu0 %v447
  %576 = vmatprep.subr.mxu0 %v454
  %577 = vmatpush1.msra.mxu0 %v453
  %578 = vmatprep.subr.mxu0 %v460
  %579 = vmatpush1.msra.mxu0 %v459
  %580 = vmatprep.subr.mxu0 %v466
  %581 = vmatpush1.msra.mxu0 %v465
  %582 = vmatprep.subr.mxu0 %v472
  %583 = vmatpush1.msra.mxu0 %v471
  %584 = vmatprep.subr.mxu0 %v478
  %585 = vmatpush1.msra.mxu0 %v477
  %586 = vmatprep.subr.mxu0 %v484
  %587 = vmatpush1.msra.mxu0 %v483
  %588 = vmatprep.subr.mxu0 %v490
  %589 = vmatpush1.msra.mxu0 %v489
  %590 = vmatprep.subr.mxu0 %v496
  %591 = vmatpush1.msra.mxu0 %v495
  %592 = vmatprep.subr.mxu0 %v502
  %593 = vmatpush1.msra.mxu0 %v501
  %594 = vmatprep.subr.mxu0 %v508
  %595 = vmatpush1.msra.mxu0 %v507
  %596 = vmatprep.subr.mxu0 %v514
  %597 = vmatpush1.msra.mxu0 %v513
  %598 = vmatprep.subr.mxu0 %v520
  %599 = vmatpush1.msra.mxu0 %v519
  %600 = vmatprep.subr.mxu0 %v526
  %601 = vmatpush1.msra.mxu0 %v525
  %602 = vmatprep.subr.mxu0 %v532
  %603 = vmatpush1.msra.mxu0 %v531
  %604 = vmatprep.subr.mxu0 %v538
  %605 = vmatpush1.msra.mxu0 %v537
  %606 = vmatprep.subr.mxu0 %v544
  %607 = vmatpush1.msra.mxu0 %v543
  %608 = vmatprep.subr.mxu0 %v550
  %609 = vmatpush1.msra.mxu0 %v549
  %610 = vmatprep.subr.mxu0 0.0
  %611 = vmatpush1.msra.mxu0 0.0
  %612 = vmatprep.subr.mxu0 0.0
  %613 = vmatpush1.msra.mxu0 0.0
  %614 = vmatprep.subr.mxu0 0.0
  %615 = vmatpush1.msra.mxu0 0.0
  %616 = vmatprep.subr.mxu0 0.0
  %617 = vmatpush1.msra.mxu0 0.0
  %618 = vmatprep.subr.mxu0 0.0
  %619 = vmatpush1.msra.mxu0 0.0
  %620 = vmatprep.subr.mxu0 0.0
  %621 = vmatpush1.msra.mxu0 0.0
  %622 = vmatprep.subr.mxu0 0.0
  %623 = vmatpush1.msra.mxu0 0.0
  %624 = vmatprep.subr.mxu0 0.0
  %625 = vmatpush1.msra.mxu0 0.0
  %626 = vmatprep.subr.mxu0 0.0
  %627 = vmatpush1.msra.mxu0 0.0
  %628 = vmatprep.subr.mxu0 0.0
  %629 = vmatpush1.msra.mxu0 0.0
  %630 = vmatprep.subr.mxu0 0.0
  %631 = vmatpush1.msra.mxu0 0.0
  %632 = vmatprep.subr.mxu0 0.0
  %633 = vmatpush1.msra.mxu0 0.0
  %634 = vmatprep.subr.mxu0 0.0
  %635 = vmatpush1.msra.mxu0 0.0
  %636 = vmatprep.subr.mxu0 0.0
  %637 = vmatpush1.msra.mxu0 0.0
  %638 = vmatprep.mubr.f32.mxu0 %v569
  %639 = vmatmul.mubr.f32.gmra.mrb[0].mxu0 %v443
  %v640 = vpop.f32.mrb[0].mxu0
  %v641 = vadd.f32 %v560, %v640
  %v642 = vpop.f32.mrb[0].mxu0
  %v643 = vadd.f32 %v560, %v642
  %644 = vmatprep.mubr.f32.mxu0 %v572
  %645 = vmatmul.mubr.f32.gmra.mrb[0].mxu0 %v445
  %v646 = vpop.f32.mrb[0].mxu0
  %v647 = vadd.f32 %v565, %v646
  %v648 = vpop.f32.mrb[0].mxu0
  %v649 = vadd.f32 %v565, %v648
  %650 = vdwg.mxu0
  %651 = vmatprep.subr.mxu0 %v450
  %652 = vmatpush1.msra.mxu0 %v449
  %653 = vmatprep.subr.mxu0 %v456
  %654 = vmatpush1.msra.mxu0 %v455
  %655 = vmatprep.subr.mxu0 %v462
  %656 = vmatpush1.msra.mxu0 %v461
  %657 = vmatprep.subr.mxu0 %v468
  %658 = vmatpush1.msra.mxu0 %v467
  %659 = vmatprep.subr.mxu0 %v474
  %660 = vmatpush1.msra.mxu0 %v473
  %661 = vmatprep.subr.mxu0 %v480
  %662 = vmatpush1.msra.mxu0 %v479
  %663 = vmatprep.subr.mxu0 %v486
  %664 = vmatpush1.msra.mxu0 %v485
  %665 = vmatprep.subr.mxu0 %v492
  %666 = vmatpush1.msra.mxu0 %v491
  %667 = vmatprep.subr.mxu0 %v498
  %668 = vmatpush1.msra.mxu0 %v497
  %669 = vmatprep.subr.mxu0 %v504
  %670 = vmatpush1.msra.mxu0 %v503
  %671 = vmatprep.subr.mxu0 %v510
  %672 = vmatpush1.msra.mxu0 %v509
  %673 = vmatprep.subr.mxu0 %v516
  %674 = vmatpush1.msra.mxu0 %v515
  %675 = vmatprep.subr.mxu0 %v522
  %676 = vmatpush1.msra.mxu0 %v521
  %677 = vmatprep.subr.mxu0 %v528
  %678 = vmatpush1.msra.mxu0 %v527
  %679 = vmatprep.subr.mxu0 %v534
  %680 = vmatpush1.msra.mxu0 %v533
  %681 = vmatprep.subr.mxu0 %v540
  %682 = vmatpush1.msra.mxu0 %v539
  %683 = vmatprep.subr.mxu0 %v546
  %684 = vmatpush1.msra.mxu0 %v545
  %685 = vmatprep.subr.mxu0 %v552
  %686 = vmatpush1.msra.mxu0 %v551
  %687 = vmatprep.subr.mxu0 0.0
  %688 = vmatpush1.msra.mxu0 0.0
  %689 = vmatprep.subr.mxu0 0.0
  %690 = vmatpush1.msra.mxu0 0.0
  %691 = vmatprep.subr.mxu0 0.0
  %692 = vmatpush1.msra.mxu0 0.0
  %693 = vmatprep.subr.mxu0 0.0
  %694 = vmatpush1.msra.mxu0 0.0
  %695 = vmatprep.subr.mxu0 0.0
  %696 = vmatpush1.msra.mxu0 0.0
  %697 = vmatprep.subr.mxu0 0.0
  %698 = vmatpush1.msra.mxu0 0.0
  %699 = vmatprep.subr.mxu0 0.0
  %700 = vmatpush1.msra.mxu0 0.0
  %701 = vmatprep.subr.mxu0 0.0
  %702 = vmatpush1.msra.mxu0 0.0
  %703 = vmatprep.subr.mxu0 0.0
  %704 = vmatpush1.msra.mxu0 0.0
  %705 = vmatprep.subr.mxu0 0.0
  %706 = vmatpush1.msra.mxu0 0.0
  %707 = vmatprep.subr.mxu0 0.0
  %708 = vmatpush1.msra.mxu0 0.0
  %709 = vmatprep.subr.mxu0 0.0
  %710 = vmatpush1.msra.mxu0 0.0
  %711 = vmatprep.subr.mxu0 0.0
  %712 = vmatpush1.msra.mxu0 0.0
  %713 = vmatprep.subr.mxu0 0.0
  %714 = vmatpush1.msra.mxu0 0.0
  %715 = vmatprep.mubr.f32.mxu0 %v569
  %716 = vmatmul.mubr.f32.gmra.mrb[0].mxu0 %v443
  %v717 = vpop.f32.mrb[0].mxu0
  %v718 = vadd.f32 %v560, %v717
  %v719 = vpop.f32.mrb[0].mxu0
  %v720 = vadd.f32 %v560, %v719
  %721 = vmatprep.mubr.f32.mxu0 %v572
  %722 = vmatmul.mubr.f32.gmra.mrb[0].mxu0 %v445
  %v723 = vpop.f32.mrb[0].mxu0
  %v724 = vadd.f32 %v565, %v723
  %v725 = vpop.f32.mrb[0].mxu0
  %v726 = vadd.f32 %v565, %v725
  %727 = vdwg.mxu0
  %728 = vmatprep.subr.mxu0 %v452
  %729 = vmatpush1.msra.mxu0 %v451
  %730 = vmatprep.subr.mxu0 %v458
  %731 = vmatpush1.msra.mxu0 %v457
  %732 = vmatprep.subr.mxu0 %v464
  %733 = vmatpush1.msra.mxu0 %v463
  %734 = vmatprep.subr.mxu0 %v470
  %735 = vmatpush1.msra.mxu0 %v469
  %736 = vmatprep.subr.mxu0 %v476
  %737 = vmatpush1.msra.mxu0 %v475
  %738 = vmatprep.subr.mxu0 %v482
  %739 = vmatpush1.msra.mxu0 %v481
  %740 = vmatprep.subr.mxu0 %v488
  %741 = vmatpush1.msra.mxu0 %v487
  %742 = vmatprep.subr.mxu0 %v494
  %743 = vmatpush1.msra.mxu0 %v493
  %744 = vmatprep.subr.mxu0 %v500
  %745 = vmatpush1.msra.mxu0 %v499
  %746 = vmatprep.subr.mxu0 %v506
  %747 = vmatpush1.msra.mxu0 %v505
  %748 = vmatprep.subr.mxu0 %v512
  %749 = vmatpush1.msra.mxu0 %v511
  %750 = vmatprep.subr.mxu0 %v518
  %751 = vmatpush1.msra.mxu0 %v517
  %752 = vmatprep.subr.mxu0 %v524
  %753 = vmatpush1.msra.mxu0 %v523
  %754 = vmatprep.subr.mxu0 %v530
  %755 = vmatpush1.msra.mxu0 %v529
  %756 = vmatprep.subr.mxu0 %v536
  %757 = vmatpush1.msra.mxu0 %v535
  %758 = vmatprep.subr.mxu0 %v542
  %759 = vmatpush1.msra.mxu0 %v541
  %760 = vmatprep.subr.mxu0 %v548
  %761 = vmatpush1.msra.mxu0 %v547
  %762 = vmatprep.subr.mxu0 %v554
  %763 = vmatpush1.msra.mxu0 %v553
  %764 = vmatprep.subr.mxu0 0.0
  %765 = vmatpush1.msra.mxu0 0.0
  %766 = vmatprep.subr.mxu0 0.0
  %767 = vmatpush1.msra.mxu0 0.0
  %768 = vmatprep.subr.mxu0 0.0
  %769 = vmatpush1.msra.mxu0 0.0
  %770 = vmatprep.subr.mxu0 0.0
  %771 = vmatpush1.msra.mxu0 0.0
  %772 = vmatprep.subr.mxu0 0.0
  %773 = vmatpush1.msra.mxu0 0.0
  %774 = vmatprep.subr.mxu0 0.0
  %775 = vmatpush1.msra.mxu0 0.0
  %776 = vmatprep.subr.mxu0 0.0
  %777 = vmatpush1.msra.mxu0 0.0
  %778 = vmatprep.subr.mxu0 0.0
  %779 = vmatpush1.msra.mxu0 0.0
  %780 = vmatprep.subr.mxu0 0.0
  %781 = vmatpush1.msra.mxu0 0.0
  %782 = vmatprep.subr.mxu0 0.0
  %783 = vmatpush1.msra.mxu0 0.0
  %784 = vmatprep.subr.mxu0 0.0
  %785 = vmatpush1.msra.mxu0 0.0
  %786 = vmatprep.subr.mxu0 0.0
  %787 = vmatpush1.msra.mxu0 0.0
  %788 = vmatprep.subr.mxu0 0.0
  %789 = vmatpush1.msra.mxu0 0.0
  %790 = vmatprep.subr.mxu0 0.0
  %791 = vmatpush1.msra.mxu0 0.0
  %792 = vmatprep.mubr.f32.mxu0 %v569
  %793 = vmatmul.mubr.f32.gmra.mrb[0].mxu0 %v443
  %v794 = vpop.f32.mrb[0].mxu0
  %v795 = vadd.f32 %v560, %v794
  %v796 = vpop.f32.mrb[0].mxu0
  %v797 = vadd.f32 %v560, %v796
  %798 = vmatprep.mubr.f32.mxu0 %v572
  %799 = vmatmul.mubr.f32.gmra.mrb[0].mxu0 %v445
  %v800 = vpop.f32.mrb[0].mxu0
  %v801 = vadd.f32 %v565, %v800
  %v802 = vpop.f32.mrb[0].mxu0
  %v803 = vadd.f32 %v565, %v802
  %804 = vdwg.mxu0
  %v805 = vmax.f32 %v641, 0.0
  %v806 = vmax.f32 %v643, 0.0
  %v807 = vmax.f32 %v718, 0.0
  %v808 = vmax.f32 %v720, 0.0
  %v809 = vmax.f32 %v795, 0.0
  %v810 = vmax.f32 %v797, 0.0
  %v811 = vmax.f32 %v647, 0.0
  %v812 = vmax.f32 %v649, 0.0
  %v813 = vmax.f32 %v724, 0.0
  %v814 = vmax.f32 %v726, 0.0
  %v815 = vmax.f32 %v801, 0.0
  %v816 = vmax.f32 %v803, 0.0
  %v818 = vlaneseq
  %v819 = vshrl.u32 %v818, 7
  %v820 = vsub.s32 0, %v819
  %v821 = vrot.slane %v23, %v820
  %v822 = vlaneseq
  %v823 = vshrl.u32 %v822, 7
  %v824 = vsub.s32 1, %v823
  %v825 = vrot.slane %v23, %v824
  %v826 = vlaneseq
  %v827 = vshrl.u32 %v826, 7
  %v828 = vsub.s32 2, %v827
  %v829 = vrot.slane %v23, %v828
  %v830 = vlaneseq
  %v831 = vshrl.u32 %v830, 7
  %v832 = vsub.s32 3, %v831
  %v833 = vrot.slane %v23, %v832
  %v834 = vlaneseq
  %v835 = vshrl.u32 %v834, 7
  %v836 = vsub.s32 4, %v835
  %v837 = vrot.slane %v23, %v836
  %v838 = vlaneseq
  %v839 = vshrl.u32 %v838, 7
  %v840 = vsub.s32 5, %v839
  %v841 = vrot.slane %v23, %v840
  %v848 = vmul.f32 %v805, %v821
  %v849 = vmul.f32 %v806, %v825
  %v850 = vmul.f32 %v807, %v829
  %v851 = vmul.f32 %v808, %v833
  %v852 = vmul.f32 %v809, %v837
  %v853 = vmul.f32 %v810, %v841
  %v854 = vmul.f32 %v811, %v821
  %v855 = vmul.f32 %v812, %v825
  %v856 = vmul.f32 %v813, %v829
  %v857 = vmul.f32 %v814, %v833
  %v858 = vmul.f32 %v815, %v837
  %v859 = vmul.f32 %v816, %v841
  %860 = vrot.lane.b32.xlu0 %v848, 19
  %v861 = vpop.permute.xlu0 %860
  %862 = vrot.lane.b32.xlu0 %v854, 19
  %v863 = vpop.permute.xlu0 %862
  %864 = vrot.lane.b32.xlu0 %v849, 19
  %v865 = vpop.permute.xlu0 %864
  %866 = vrot.lane.b32.xlu0 %v855, 19
  %v867 = vpop.permute.xlu0 %866
  %868 = vrot.lane.b32.xlu0 %v850, 19
  %v869 = vpop.permute.xlu0 %868
  %870 = vrot.lane.b32.xlu0 %v856, 19
  %v871 = vpop.permute.xlu0 %870
  %872 = vrot.lane.b32.xlu0 %v851, 19
  %v873 = vpop.permute.xlu0 %872
  %874 = vrot.lane.b32.xlu0 %v857, 19
  %v875 = vpop.permute.xlu0 %874
  %876 = vrot.lane.b32.xlu0 %v852, 19
  %v877 = vpop.permute.xlu0 %876
  %878 = vrot.lane.b32.xlu0 %v858, 19
  %v879 = vpop.permute.xlu0 %878
  %880 = vrot.lane.b32.xlu0 %v853, 19
  %v881 = vpop.permute.xlu0 %880
  %882 = vrot.lane.b32.xlu0 %v859, 19
  %v883 = vpop.permute.xlu0 %882
  %v884 = vsel %vm63, %v877, %v881
  %v885 = vsel %vm63, %v879, %v883
  %v886 = vsel %vm63, %v873, %v877
  %v887 = vsel %vm63, %v875, %v879
  %v888 = vsel %vm63, %v869, %v873
  %v889 = vsel %vm63, %v871, %v875
  %v890 = vsel %vm63, %v865, %v869
  %v891 = vsel %vm63, %v867, %v871
  %v892 = vsel %vm63, %v861, %v865
  %v893 = vsel %vm63, %v863, %v867
  %v894 = vsel %vm63, %v881, %v861
  %v895 = vsel %vm63, %v883, %v863
  %896 = vst [vmem:[#allocation2] sm:$0xff] %v894
  %897 = vst [vmem:[#allocation2 + $0x8] sm:$0xff] %v892
  %898 = vst [vmem:[#allocation2 + $0x10] sm:$0xff] %v890
  %899 = vst [vmem:[#allocation2 + $0x18] sm:$0xff] %v888
  %900 = vst [vmem:[#allocation2 + $0x20] sm:$0xff] %v886
  %901 = vst [vmem:[#allocation2 + $0x28] sm:$0xff] %v884
  %902 = vst [vmem:[#allocation2 + $0x30] sm:$0xff] %v895
  %903 = vst [vmem:[#allocation2 + $0x38] sm:$0xff] %v893
  %904 = vst [vmem:[#allocation2 + $0x40] sm:$0xff] %v891
  %905 = vst [vmem:[#allocation2 + $0x48] sm:$0xff] %v889
  %906 = vst [vmem:[#allocation2 + $0x50] sm:$0xff] %v887
  %907 = vst [vmem:[#allocation2 + $0x58] sm:$0xff] %v885
  %908 = vrot.lane.b32.xlu0 %v848, 18
  %v909 = vpop.permute.xlu0 %908
  %910 = vrot.lane.b32.xlu0 %v854, 18
  %v911 = vpop.permute.xlu0 %910
  %912 = vrot.lane.b32.xlu0 %v849, 18
  %v913 = vpop.permute.xlu0 %912
  %914 = vrot.lane.b32.xlu0 %v855, 18
  %v915 = vpop.permute.xlu0 %914
  %916 = vrot.lane.b32.xlu0 %v850, 18
  %v917 = vpop.permute.xlu0 %916
  %918 = vrot.lane.b32.xlu0 %v856, 18
  %v919 = vpop.permute.xlu0 %918
  %920 = vrot.lane.b32.xlu0 %v851, 18
  %v921 = vpop.permute.xlu0 %920
  %922 = vrot.lane.b32.xlu0 %v857, 18
  %v923 = vpop.permute.xlu0 %922
  %924 = vrot.lane.b32.xlu0 %v852, 18
  %v925 = vpop.permute.xlu0 %924
  %926 = vrot.lane.b32.xlu0 %v858, 18
  %v927 = vpop.permute.xlu0 %926
  %928 = vrot.lane.b32.xlu0 %v853, 18
  %v929 = vpop.permute.xlu0 %928
  %930 = vrot.lane.b32.xlu0 %v859, 18
  %v931 = vpop.permute.xlu0 %930
  %v932 = vsel %vm112, %v925, %v929
  %v933 = vsel %vm112, %v927, %v931
  %v934 = vsel %vm112, %v921, %v925
  %v935 = vsel %vm112, %v923, %v927
  %v936 = vsel %vm112, %v917, %v921
  %v937 = vsel %vm112, %v919, %v923
  %v938 = vsel %vm112, %v913, %v917
  %v939 = vsel %vm112, %v915, %v919
  %v940 = vsel %vm112, %v909, %v913
  %v941 = vsel %vm112, %v911, %v915
  %v942 = vsel %vm112, %v929, %v909
  %v943 = vsel %vm112, %v931, %v911
  %944 = vst [vmem:[#allocation2 + $0x60] sm:$0xff] %v942
  %945 = vst [vmem:[#allocation2 + $0x68] sm:$0xff] %v940
  %946 = vst [vmem:[#allocation2 + $0x70] sm:$0xff] %v938
  %947 = vst [vmem:[#allocation2 + $0x78] sm:$0xff] %v936
  %948 = vst [vmem:[#allocation2 + $0x80] sm:$0xff] %v934
  %949 = vst [vmem:[#allocation2 + $0x88] sm:$0xff] %v932
  %950 = vst [vmem:[#allocation2 + $0x90] sm:$0xff] %v943
  %951 = vst [vmem:[#allocation2 + $0x98] sm:$0xff] %v941
  %952 = vst [vmem:[#allocation2 + $0xa0] sm:$0xff] %v939
  %953 = vst [vmem:[#allocation2 + $0xa8] sm:$0xff] %v937
  %954 = vst [vmem:[#allocation2 + $0xb0] sm:$0xff] %v935
  %955 = vst [vmem:[#allocation2 + $0xb8] sm:$0xff] %v933
  %956 = vrot.lane.b32.xlu0 %v848, 17
  %v957 = vpop.permute.xlu0 %956
  %958 = vrot.lane.b32.xlu0 %v854, 17
  %v959 = vpop.permute.xlu0 %958
  %960 = vrot.lane.b32.xlu0 %v849, 17
  %v961 = vpop.permute.xlu0 %960
  %962 = vrot.lane.b32.xlu0 %v855, 17
  %v963 = vpop.permute.xlu0 %962
  %964 = vrot.lane.b32.xlu0 %v850, 17
  %v965 = vpop.permute.xlu0 %964
  %966 = vrot.lane.b32.xlu0 %v856, 17
  %v967 = vpop.permute.xlu0 %966
  %968 = vrot.lane.b32.xlu0 %v851, 17
  %v969 = vpop.permute.xlu0 %968
  %970 = vrot.lane.b32.xlu0 %v857, 17
  %v971 = vpop.permute.xlu0 %970
  %972 = vrot.lane.b32.xlu0 %v852, 17
  %v973 = vpop.permute.xlu0 %972
  %974 = vrot.lane.b32.xlu0 %v858, 17
  %v975 = vpop.permute.xlu0 %974
  %976 = vrot.lane.b32.xlu0 %v853, 17
  %v977 = vpop.permute.xlu0 %976
  %978 = vrot.lane.b32.xlu0 %v859, 17
  %v979 = vpop.permute.xlu0 %978
  %v980 = vsel %vm161, %v973, %v977
  %v981 = vsel %vm161, %v975, %v979
  %v982 = vsel %vm161, %v969, %v973
  %v983 = vsel %vm161, %v971, %v975
  %v984 = vsel %vm161, %v965, %v969
  %v985 = vsel %vm161, %v967, %v971
  %v986 = vsel %vm161, %v961, %v965
  %v987 = vsel %vm161, %v963, %v967
  %v988 = vsel %vm161, %v957, %v961
  %v989 = vsel %vm161, %v959, %v963
  %v990 = vsel %vm161, %v977, %v957
  %v991 = vsel %vm161, %v979, %v959
  %992 = vst [vmem:[#allocation2 + $0xc0] sm:$0xff] %v990
  %993 = vst [vmem:[#allocation2 + $0xc8] sm:$0xff] %v988
  %994 = vst [vmem:[#allocation2 + $0xd0] sm:$0xff] %v986
  %995 = vst [vmem:[#allocation2 + $0xd8] sm:$0xff] %v984
  %996 = vst [vmem:[#allocation2 + $0xe0] sm:$0xff] %v982
  %997 = vst [vmem:[#allocation2 + $0xe8] sm:$0xff] %v980
  %998 = vst [vmem:[#allocation2 + $0xf0] sm:$0xff] %v991
  %999 = vst [vmem:[#allocation2 + $0xf8] sm:$0xff] %v989
  %1000 = vst [vmem:[#allocation2 + $0x100] sm:$0xff] %v987
  %1001 = vst [vmem:[#allocation2 + $0x108] sm:$0xff] %v985
  %1002 = vst [vmem:[#allocation2 + $0x110] sm:$0xff] %v983
  %1003 = vst [vmem:[#allocation2 + $0x118] sm:$0xff] %v981
  %1004 = vrot.lane.b32.xlu0 %v848, 1
  %v1005 = vpop.permute.xlu0 %1004
  %1006 = vrot.lane.b32.xlu0 %v854, 1
  %v1007 = vpop.permute.xlu0 %1006
  %1008 = vrot.lane.b32.xlu0 %v849, 1
  %v1009 = vpop.permute.xlu0 %1008
  %1010 = vrot.lane.b32.xlu0 %v855, 1
  %v1011 = vpop.permute.xlu0 %1010
  %1012 = vrot.lane.b32.xlu0 %v850, 1
  %v1013 = vpop.permute.xlu0 %1012
  %1014 = vrot.lane.b32.xlu0 %v856, 1
  %v1015 = vpop.permute.xlu0 %1014
  %1016 = vrot.lane.b32.xlu0 %v851, 1
  %v1017 = vpop.permute.xlu0 %1016
  %1018 = vrot.lane.b32.xlu0 %v857, 1
  %v1019 = vpop.permute.xlu0 %1018
  %1020 = vrot.lane.b32.xlu0 %v852, 1
  %v1021 = vpop.permute.xlu0 %1020
  %1022 = vrot.lane.b32.xlu0 %v858, 1
  %v1023 = vpop.permute.xlu0 %1022
  %1024 = vrot.lane.b32.xlu0 %v853, 1
  %v1025 = vpop.permute.xlu0 %1024
  %1026 = vrot.lane.b32.xlu0 %v859, 1
  %v1027 = vpop.permute.xlu0 %1026
  %v1028 = vsel %vm210, %v1021, %v1025
  %v1029 = vsel %vm210, %v1023, %v1027
  %v1030 = vsel %vm210, %v1017, %v1021
  %v1031 = vsel %vm210, %v1019, %v1023
  %v1032 = vsel %vm210, %v1013, %v1017
  %v1033 = vsel %vm210, %v1015, %v1019
  %v1034 = vsel %vm210, %v1009, %v1013
  %v1035 = vsel %vm210, %v1011, %v1015
  %v1036 = vsel %vm210, %v1005, %v1009
  %v1037 = vsel %vm210, %v1007, %v1011
  %v1038 = vsel %vm210, %v1025, %v1005
  %v1039 = vsel %vm210, %v1027, %v1007
  %1040 = vst [vmem:[#allocation2 + $0x120] sm:$0xff] %v1038
  %1041 = vst [vmem:[#allocation2 + $0x128] sm:$0xff] %v1036
  %1042 = vst [vmem:[#allocation2 + $0x130] sm:$0xff] %v1034
  %1043 = vst [vmem:[#allocation2 + $0x138] sm:$0xff] %v1032
  %1044 = vst [vmem:[#allocation2 + $0x140] sm:$0xff] %v1030
  %1045 = vst [vmem:[#allocation2 + $0x148] sm:$0xff] %v1028
  %1046 = vst [vmem:[#allocation2 + $0x150] sm:$0xff] %v1039
  %1047 = vst [vmem:[#allocation2 + $0x158] sm:$0xff] %v1037
  %1048 = vst [vmem:[#allocation2 + $0x160] sm:$0xff] %v1035
  %1049 = vst [vmem:[#allocation2 + $0x168] sm:$0xff] %v1033
  %1050 = vst [vmem:[#allocation2 + $0x170] sm:$0xff] %v1031
  %1051 = vst [vmem:[#allocation2 + $0x178] sm:$0xff] %v1029
  %1052 = vst [vmem:[#allocation2 + $0x180] sm:$0xff] %v848
  %1053 = vst [vmem:[#allocation2 + $0x188] sm:$0xff] %v849
  %1054 = vst [vmem:[#allocation2 + $0x190] sm:$0xff] %v850
  %1055 = vst [vmem:[#allocation2 + $0x198] sm:$0xff] %v851
  %1056 = vst [vmem:[#allocation2 + $0x1a0] sm:$0xff] %v852
  %1057 = vst [vmem:[#allocation2 + $0x1a8] sm:$0xff] %v853
  %1058 = vst [vmem:[#allocation2 + $0x1b0] sm:$0xff] %v854
  %1059 = vst [vmem:[#allocation2 + $0x1b8] sm:$0xff] %v855
  %1060 = vst [vmem:[#allocation2 + $0x1c0] sm:$0xff] %v856
  %1061 = vst [vmem:[#allocation2 + $0x1c8] sm:$0xff] %v857
  %1062 = vst [vmem:[#allocation2 + $0x1d0] sm:$0xff] %v858
  %1063 = vst [vmem:[#allocation2 + $0x1d8] sm:$0xff] %v859
  %1064 = vrot.lane.b32.xlu0 %v848, 127
  %v1065 = vpop.permute.xlu0 %1064
  %1066 = vrot.lane.b32.xlu0 %v854, 127
  %v1067 = vpop.permute.xlu0 %1066
  %1068 = vrot.lane.b32.xlu0 %v849, 127
  %v1069 = vpop.permute.xlu0 %1068
  %1070 = vrot.lane.b32.xlu0 %v855, 127
  %v1071 = vpop.permute.xlu0 %1070
  %1072 = vrot.lane.b32.xlu0 %v850, 127
  %v1073 = vpop.permute.xlu0 %1072
  %1074 = vrot.lane.b32.xlu0 %v856, 127
  %v1075 = vpop.permute.xlu0 %1074
  %1076 = vrot.lane.b32.xlu0 %v851, 127
  %v1077 = vpop.permute.xlu0 %1076
  %1078 = vrot.lane.b32.xlu0 %v857, 127
  %v1079 = vpop.permute.xlu0 %1078
  %1080 = vrot.lane.b32.xlu0 %v852, 127
  %v1081 = vpop.permute.xlu0 %1080
  %1082 = vrot.lane.b32.xlu0 %v858, 127
  %v1083 = vpop.permute.xlu0 %1082
  %1084 = vrot.lane.b32.xlu0 %v853, 127
  %v1085 = vpop.permute.xlu0 %1084
  %1086 = vrot.lane.b32.xlu0 %v859, 127
  %v1087 = vpop.permute.xlu0 %1086
  %v1088 = vsel %vm271, %v1081, %v1085
  %v1089 = vsel %vm271, %v1083, %v1087
  %v1090 = vsel %vm271, %v1077, %v1081
  %v1091 = vsel %vm271, %v1079, %v1083
  %v1092 = vsel %vm271, %v1073, %v1077
  %v1093 = vsel %vm271, %v1075, %v1079
  %v1094 = vsel %vm271, %v1069, %v1073
  %v1095 = vsel %vm271, %v1071, %v1075
  %v1096 = vsel %vm271, %v1065, %v1069
  %v1097 = vsel %vm271, %v1067, %v1071
  %v1098 = vsel %vm271, %v1085, %v1065
  %v1099 = vsel %vm271, %v1087, %v1067
  %1100 = vst [vmem:[#allocation2 + $0x1e0] sm:$0xff] %v1096
  %1101 = vst [vmem:[#allocation2 + $0x1e8] sm:$0xff] %v1094
  %1102 = vst [vmem:[#allocation2 + $0x1f0] sm:$0xff] %v1092
  %1103 = vst [vmem:[#allocation2 + $0x1f8] sm:$0xff] %v1090
  %1104 = vst [vmem:[#allocation2 + $0x200] sm:$0xff] %v1088
  %1105 = vst [vmem:[#allocation2 + $0x208] sm:$0xff] %v1098
  %1106 = vst [vmem:[#allocation2 + $0x210] sm:$0xff] %v1097
  %1107 = vst [vmem:[#allocation2 + $0x218] sm:$0xff] %v1095
  %1108 = vst [vmem:[#allocation2 + $0x220] sm:$0xff] %v1093
  %1109 = vst [vmem:[#allocation2 + $0x228] sm:$0xff] %v1091
  %1110 = vst [vmem:[#allocation2 + $0x230] sm:$0xff] %v1089
  %1111 = vst [vmem:[#allocation2 + $0x238] sm:$0xff] %v1099
  %1112 = vrot.lane.b32.xlu0 %v848, 111
  %v1113 = vpop.permute.xlu0 %1112
  %1114 = vrot.lane.b32.xlu0 %v854, 111
  %v1115 = vpop.permute.xlu0 %1114
  %1116 = vrot.lane.b32.xlu0 %v849, 111
  %v1117 = vpop.permute.xlu0 %1116
  %1118 = vrot.lane.b32.xlu0 %v855, 111
  %v1119 = vpop.permute.xlu0 %1118
  %1120 = vrot.lane.b32.xlu0 %v850, 111
  %v1121 = vpop.permute.xlu0 %1120
  %1122 = vrot.lane.b32.xlu0 %v856, 111
  %v1123 = vpop.permute.xlu0 %1122
  %1124 = vrot.lane.b32.xlu0 %v851, 111
  %v1125 = vpop.permute.xlu0 %1124
  %1126 = vrot.lane.b32.xlu0 %v857, 111
  %v1127 = vpop.permute.xlu0 %1126
  %1128 = vrot.lane.b32.xlu0 %v852, 111
  %v1129 = vpop.permute.xlu0 %1128
  %1130 = vrot.lane.b32.xlu0 %v858, 111
  %v1131 = vpop.permute.xlu0 %1130
  %1132 = vrot.lane.b32.xlu0 %v853, 111
  %v1133 = vpop.permute.xlu0 %1132
  %1134 = vrot.lane.b32.xlu0 %v859, 111
  %v1135 = vpop.permute.xlu0 %1134
  %v1136 = vsel %vm320, %v1129, %v1133
  %v1137 = vsel %vm320, %v1131, %v1135
  %v1138 = vsel %vm320, %v1125, %v1129
  %v1139 = vsel %vm320, %v1127, %v1131
  %v1140 = vsel %vm320, %v1121, %v1125
  %v1141 = vsel %vm320, %v1123, %v1127
  %v1142 = vsel %vm320, %v1117, %v1121
  %v1143 = vsel %vm320, %v1119, %v1123
  %v1144 = vsel %vm320, %v1113, %v1117
  %v1145 = vsel %vm320, %v1115, %v1119
  %v1146 = vsel %vm320, %v1133, %v1113
  %v1147 = vsel %vm320, %v1135, %v1115
  %1148 = vst [vmem:[#allocation2 + $0x240] sm:$0xff] %v1144
  %1149 = vst [vmem:[#allocation2 + $0x248] sm:$0xff] %v1142
  %1150 = vst [vmem:[#allocation2 + $0x250] sm:$0xff] %v1140
  %1151 = vst [vmem:[#allocation2 + $0x258] sm:$0xff] %v1138
  %1152 = vst [vmem:[#allocation2 + $0x260] sm:$0xff] %v1136
  %1153 = vst [vmem:[#allocation2 + $0x268] sm:$0xff] %v1146
  %1154 = vst [vmem:[#allocation2 + $0x270] sm:$0xff] %v1145
  %1155 = vst [vmem:[#allocation2 + $0x278] sm:$0xff] %v1143
  %1156 = vst [vmem:[#allocation2 + $0x280] sm:$0xff] %v1141
  %1157 = vst [vmem:[#allocation2 + $0x288] sm:$0xff] %v1139
  %1158 = vst [vmem:[#allocation2 + $0x290] sm:$0xff] %v1137
  %1159 = vst [vmem:[#allocation2 + $0x298] sm:$0xff] %v1147
  %1160 = vrot.lane.b32.xlu0 %v848, 110
  %v1161 = vpop.permute.xlu0 %1160
  %1162 = vrot.lane.b32.xlu0 %v854, 110
  %v1163 = vpop.permute.xlu0 %1162
  %1164 = vrot.lane.b32.xlu0 %v849, 110
  %v1165 = vpop.permute.xlu0 %1164
  %1166 = vrot.lane.b32.xlu0 %v855, 110
  %v1167 = vpop.permute.xlu0 %1166
  %1168 = vrot.lane.b32.xlu0 %v850, 110
  %v1169 = vpop.permute.xlu0 %1168
  %1170 = vrot.lane.b32.xlu0 %v856, 110
  %v1171 = vpop.permute.xlu0 %1170
  %1172 = vrot.lane.b32.xlu0 %v851, 110
  %v1173 = vpop.permute.xlu0 %1172
  %1174 = vrot.lane.b32.xlu0 %v857, 110
  %v1175 = vpop.permute.xlu0 %1174
  %1176 = vrot.lane.b32.xlu0 %v852, 110
  %v1177 = vpop.permute.xlu0 %1176
  %1178 = vrot.lane.b32.xlu0 %v858, 110
  %v1179 = vpop.permute.xlu0 %1178
  %1180 = vrot.lane.b32.xlu0 %v853, 110
  %v1181 = vpop.permute.xlu0 %1180
  %1182 = vrot.lane.b32.xlu0 %v859, 110
  %v1183 = vpop.permute.xlu0 %1182
  %v1184 = vsel %vm369, %v1177, %v1181
  %v1185 = vsel %vm369, %v1179, %v1183
  %v1186 = vsel %vm369, %v1173, %v1177
  %v1187 = vsel %vm369, %v1175, %v1179
  %v1188 = vsel %vm369, %v1169, %v1173
  %v1189 = vsel %vm369, %v1171, %v1175
  %v1190 = vsel %vm369, %v1165, %v1169
  %v1191 = vsel %vm369, %v1167, %v1171
  %v1192 = vsel %vm369, %v1161, %v1165
  %v1193 = vsel %vm369, %v1163, %v1167
  %v1194 = vsel %vm369, %v1181, %v1161
  %v1195 = vsel %vm369, %v1183, %v1163
  %1196 = vst [vmem:[#allocation2 + $0x2a0] sm:$0xff] %v1192
  %1197 = vst [vmem:[#allocation2 + $0x2a8] sm:$0xff] %v1190
  %1198 = vst [vmem:[#allocation2 + $0x2b0] sm:$0xff] %v1188
  %1199 = vst [vmem:[#allocation2 + $0x2b8] sm:$0xff] %v1186
  %1200 = vst [vmem:[#allocation2 + $0x2c0] sm:$0xff] %v1184
  %1201 = vst [vmem:[#allocation2 + $0x2c8] sm:$0xff] %v1194
  %1202 = vst [vmem:[#allocation2 + $0x2d0] sm:$0xff] %v1193
  %1203 = vst [vmem:[#allocation2 + $0x2d8] sm:$0xff] %v1191
  %1204 = vst [vmem:[#allocation2 + $0x2e0] sm:$0xff] %v1189
  %1205 = vst [vmem:[#allocation2 + $0x2e8] sm:$0xff] %v1187
  %1206 = vst [vmem:[#allocation2 + $0x2f0] sm:$0xff] %v1185
  %1207 = vst [vmem:[#allocation2 + $0x2f8] sm:$0xff] %v1195
  %1208 = vrot.lane.b32.xlu0 %v848, 109
  %v1209 = vpop.permute.xlu0 %1208
  %1210 = vrot.lane.b32.xlu0 %v854, 109
  %v1211 = vpop.permute.xlu0 %1210
  %1212 = vrot.lane.b32.xlu0 %v849, 109
  %v1213 = vpop.permute.xlu0 %1212
  %1214 = vrot.lane.b32.xlu0 %v855, 109
  %v1215 = vpop.permute.xlu0 %1214
  %1216 = vrot.lane.b32.xlu0 %v850, 109
  %v1217 = vpop.permute.xlu0 %1216
  %1218 = vrot.lane.b32.xlu0 %v856, 109
  %v1219 = vpop.permute.xlu0 %1218
  %1220 = vrot.lane.b32.xlu0 %v851, 109
  %v1221 = vpop.permute.xlu0 %1220
  %1222 = vrot.lane.b32.xlu0 %v857, 109
  %v1223 = vpop.permute.xlu0 %1222
  %1224 = vrot.lane.b32.xlu0 %v852, 109
  %v1225 = vpop.permute.xlu0 %1224
  %1226 = vrot.lane.b32.xlu0 %v858, 109
  %v1227 = vpop.permute.xlu0 %1226
  %1228 = vrot.lane.b32.xlu0 %v853, 109
  %v1229 = vpop.permute.xlu0 %1228
  %1230 = vrot.lane.b32.xlu0 %v859, 109
  %v1231 = vpop.permute.xlu0 %1230
  %v1232 = vsel %vm418, %v1225, %v1229
  %v1233 = vsel %vm418, %v1227, %v1231
  %v1234 = vsel %vm418, %v1221, %v1225
  %v1235 = vsel %vm418, %v1223, %v1227
  %v1236 = vsel %vm418, %v1217, %v1221
  %v1237 = vsel %vm418, %v1219, %v1223
  %v1238 = vsel %vm418, %v1213, %v1217
  %v1239 = vsel %vm418, %v1215, %v1219
  %v1240 = vsel %vm418, %v1209, %v1213
  %v1241 = vsel %vm418, %v1211, %v1215
  %v1242 = vsel %vm418, %v1229, %v1209
  %v1243 = vsel %vm418, %v1231, %v1211
  %1244 = vst [vmem:[#allocation2 + $0x300] sm:$0xff] %v1240
  %1245 = vst [vmem:[#allocation2 + $0x308] sm:$0xff] %v1238
  %1246 = vst [vmem:[#allocation2 + $0x310] sm:$0xff] %v1236
  %1247 = vst [vmem:[#allocation2 + $0x318] sm:$0xff] %v1234
  %1248 = vst [vmem:[#allocation2 + $0x320] sm:$0xff] %v1232
  %1249 = vst [vmem:[#allocation2 + $0x328] sm:$0xff] %v1242
  %1250 = vst [vmem:[#allocation2 + $0x330] sm:$0xff] %v1241
  %1251 = vst [vmem:[#allocation2 + $0x338] sm:$0xff] %v1239
  %1252 = vst [vmem:[#allocation2 + $0x340] sm:$0xff] %v1237
  %1253 = vst [vmem:[#allocation2 + $0x348] sm:$0xff] %v1235
  %1254 = vst [vmem:[#allocation2 + $0x350] sm:$0xff] %v1233
  %1255 = vst [vmem:[#allocation2 + $0x358] sm:$0xff] %v1243
  %s1256 = scalar_lea.vmem %s1, 32
  %v1257 = vld [vmem:[%s1256] sm:$0xff]
  %v1258 = vld [vmem:[%s1256 + $0x8] sm:$0xff]
  %v1259 = vld [vmem:[%s1256 + $0x10] sm:$0xff]
  %v1260 = vld [vmem:[%s1256 + $0x18] sm:$0xff]
  %v1261 = vld [vmem:[#allocation2] sm:$0xff]
  %v1262 = vld [vmem:[#allocation2 + $0x8] sm:$0xff]
  %v1263 = vld [vmem:[#allocation2 + $0x10] sm:$0xff]
  %v1264 = vld [vmem:[#allocation2 + $0x18] sm:$0xff]
  %v1265 = vld [vmem:[#allocation2 + $0x20] sm:$0xff]
  %v1266 = vld [vmem:[#allocation2 + $0x28] sm:$0xff]
  %v1267 = vld [vmem:[#allocation2 + $0x30] sm:$0xff]
  %v1268 = vld [vmem:[#allocation2 + $0x38] sm:$0xff]
  %v1269 = vld [vmem:[#allocation2 + $0x40] sm:$0xff]
  %v1270 = vld [vmem:[#allocation2 + $0x48] sm:$0xff]
  %v1271 = vld [vmem:[#allocation2 + $0x50] sm:$0xff]
  %v1272 = vld [vmem:[#allocation2 + $0x58] sm:$0xff]
  %v1273 = vld [vmem:[#allocation2 + $0x60] sm:$0xff]
  %v1274 = vld [vmem:[#allocation2 + $0x68] sm:$0xff]
  %v1275 = vld [vmem:[#allocation2 + $0x70] sm:$0xff]
  %v1276 = vld [vmem:[#allocation2 + $0x78] sm:$0xff]
  %v1277 = vld [vmem:[#allocation2 + $0x80] sm:$0xff]
  %v1278 = vld [vmem:[#allocation2 + $0x88] sm:$0xff]
  %v1279 = vld [vmem:[#allocation2 + $0x90] sm:$0xff]
  %v1280 = vld [vmem:[#allocation2 + $0x98] sm:$0xff]
  %v1281 = vld [vmem:[#allocation2 + $0xa0] sm:$0xff]
  %v1282 = vld [vmem:[#allocation2 + $0xa8] sm:$0xff]
  %v1283 = vld [vmem:[#allocation2 + $0xb0] sm:$0xff]
  %v1284 = vld [vmem:[#allocation2 + $0xb8] sm:$0xff]
  %v1285 = vld [vmem:[#allocation2 + $0xc0] sm:$0xff]
  %v1286 = vld [vmem:[#allocation2 + $0xc8] sm:$0xff]
  %v1287 = vld [vmem:[#allocation2 + $0xd0] sm:$0xff]
  %v1288 = vld [vmem:[#allocation2 + $0xd8] sm:$0xff]
  %v1289 = vld [vmem:[#allocation2 + $0xe0] sm:$0xff]
  %v1290 = vld [vmem:[#allocation2 + $0xe8] sm:$0xff]
  %v1291 = vld [vmem:[#allocation2 + $0xf0] sm:$0xff]
  %v1292 = vld [vmem:[#allocation2 + $0xf8] sm:$0xff]
  %v1293 = vld [vmem:[#allocation2 + $0x100] sm:$0xff]
  %v1294 = vld [vmem:[#allocation2 + $0x108] sm:$0xff]
  %v1295 = vld [vmem:[#allocation2 + $0x110] sm:$0xff]
  %v1296 = vld [vmem:[#allocation2 + $0x118] sm:$0xff]
  %v1297 = vld [vmem:[#allocation2 + $0x120] sm:$0xff]
  %v1298 = vld [vmem:[#allocation2 + $0x128] sm:$0xff]
  %v1299 = vld [vmem:[#allocation2 + $0x130] sm:$0xff]
  %v1300 = vld [vmem:[#allocation2 + $0x138] sm:$0xff]
  %v1301 = vld [vmem:[#allocation2 + $0x140] sm:$0xff]
  %v1302 = vld [vmem:[#allocation2 + $0x148] sm:$0xff]
  %v1303 = vld [vmem:[#allocation2 + $0x150] sm:$0xff]
  %v1304 = vld [vmem:[#allocation2 + $0x158] sm:$0xff]
  %v1305 = vld [vmem:[#allocation2 + $0x160] sm:$0xff]
  %v1306 = vld [vmem:[#allocation2 + $0x168] sm:$0xff]
  %v1307 = vld [vmem:[#allocation2 + $0x170] sm:$0xff]
  %v1308 = vld [vmem:[#allocation2 + $0x178] sm:$0xff]
  %v1309 = vld [vmem:[#allocation2 + $0x180] sm:$0xff]
  %v1310 = vld [vmem:[#allocation2 + $0x188] sm:$0xff]
  %v1311 = vld [vmem:[#allocation2 + $0x190] sm:$0xff]
  %v1312 = vld [vmem:[#allocation2 + $0x198] sm:$0xff]
  %v1313 = vld [vmem:[#allocation2 + $0x1a0] sm:$0xff]
  %v1314 = vld [vmem:[#allocation2 + $0x1a8] sm:$0xff]
  %v1315 = vld [vmem:[#allocation2 + $0x1b0] sm:$0xff]
  %v1316 = vld [vmem:[#allocation2 + $0x1b8] sm:$0xff]
  %v1317 = vld [vmem:[#allocation2 + $0x1c0] sm:$0xff]
  %v1318 = vld [vmem:[#allocation2 + $0x1c8] sm:$0xff]
  %v1319 = vld [vmem:[#allocation2 + $0x1d0] sm:$0xff]
  %v1320 = vld [vmem:[#allocation2 + $0x1d8] sm:$0xff]
  %v1321 = vld [vmem:[#allocation2 + $0x1e0] sm:$0xff]
  %v1322 = vld [vmem:[#allocation2 + $0x1e8] sm:$0xff]
  %v1323 = vld [vmem:[#allocation2 + $0x1f0] sm:$0xff]
  %v1324 = vld [vmem:[#allocation2 + $0x1f8] sm:$0xff]
  %v1325 = vld [vmem:[#allocation2 + $0x200] sm:$0xff]
  %v1326 = vld [vmem:[#allocation2 + $0x208] sm:$0xff]
  %v1327 = vld [vmem:[#allocation2 + $0x210] sm:$0xff]
  %v1328 = vld [vmem:[#allocation2 + $0x218] sm:$0xff]
  %v1329 = vld [vmem:[#allocation2 + $0x220] sm:$0xff]
  %v1330 = vld [vmem:[#allocation2 + $0x228] sm:$0xff]
  %v1331 = vld [vmem:[#allocation2 + $0x230] sm:$0xff]
  %v1332 = vld [vmem:[#allocation2 + $0x238] sm:$0xff]
  %v1333 = vld [vmem:[#allocation2 + $0x240] sm:$0xff]
  %v1334 = vld [vmem:[#allocation2 + $0x248] sm:$0xff]
  %v1335 = vld [vmem:[#allocation2 + $0x250] sm:$0xff]
  %v1336 = vld [vmem:[#allocation2 + $0x258] sm:$0xff]
  %v1337 = vld [vmem:[#allocation2 + $0x260] sm:$0xff]
  %v1338 = vld [vmem:[#allocation2 + $0x268] sm:$0xff]
  %v1339 = vld [vmem:[#allocation2 + $0x270] sm:$0xff]
  %v1340 = vld [vmem:[#allocation2 + $0x278] sm:$0xff]
  %v1341 = vld [vmem:[#allocation2 + $0x280] sm:$0xff]
  %v1342 = vld [vmem:[#allocation2 + $0x288] sm:$0xff]
  %v1343 = vld [vmem:[#allocation2 + $0x290] sm:$0xff]
  %v1344 = vld [vmem:[#allocation2 + $0x298] sm:$0xff]
  %v1345 = vld [vmem:[#allocation2 + $0x2a0] sm:$0xff]
  %v1346 = vld [vmem:[#allocation2 + $0x2a8] sm:$0xff]
  %v1347 = vld [vmem:[#allocation2 + $0x2b0] sm:$0xff]
  %v1348 = vld [vmem:[#allocation2 + $0x2b8] sm:$0xff]
  %v1349 = vld [vmem:[#allocation2 + $0x2c0] sm:$0xff]
  %v1350 = vld [vmem:[#allocation2 + $0x2c8] sm:$0xff]
  %v1351 = vld [vmem:[#allocation2 + $0x2d0] sm:$0xff]
  %v1352 = vld [vmem:[#allocation2 + $0x2d8] sm:$0xff]
  %v1353 = vld [vmem:[#allocation2 + $0x2e0] sm:$0xff]
  %v1354 = vld [vmem:[#allocation2 + $0x2e8] sm:$0xff]
  %v1355 = vld [vmem:[#allocation2 + $0x2f0] sm:$0xff]
  %v1356 = vld [vmem:[#allocation2 + $0x2f8] sm:$0xff]
  %v1357 = vld [vmem:[#allocation2 + $0x300] sm:$0xff]
  %v1358 = vld [vmem:[#allocation2 + $0x308] sm:$0xff]
  %v1359 = vld [vmem:[#allocation2 + $0x310] sm:$0xff]
  %v1360 = vld [vmem:[#allocation2 + $0x318] sm:$0xff]
  %v1361 = vld [vmem:[#allocation2 + $0x320] sm:$0xff]
  %v1362 = vld [vmem:[#allocation2 + $0x328] sm:$0xff]
  %v1363 = vld [vmem:[#allocation2 + $0x330] sm:$0xff]
  %v1364 = vld [vmem:[#allocation2 + $0x338] sm:$0xff]
  %v1365 = vld [vmem:[#allocation2 + $0x340] sm:$0xff]
  %v1366 = vld [vmem:[#allocation2 + $0x348] sm:$0xff]
  %v1367 = vld [vmem:[#allocation2 + $0x350] sm:$0xff]
  %v1368 = vld [vmem:[#allocation2 + $0x358] sm:$0xff]
  %s1369 = scalar_lea.vmem %s2, 16
  %v1370 = vld [vmem:[%s1369] sm:$0xff]
  %v1371 = vld [vmem:[%s1369 + $0x8] sm:$0xff]
  %1373 = vset.pattern.permute.xlu0 0
  %1374 = vperm.xlu0 %1373, %v1370
  %v1375 = vpop.permute.xlu0 %1374
  %1378 = vset.pattern.permute.xlu0 0
  %1379 = vperm.xlu0 %1378, %v1371
  %v1380 = vpop.permute.xlu0 %1379
  %v1383 = vsel %vm567, %v1258, 0
  %v1386 = vsel %vm567, %v1260, 0
  %1388 = vmatprep.subr.mxu0 %v1262
  %1389 = vmatpush1.msra.mxu0 %v1261
  %1390 = vmatprep.subr.mxu0 %v1268
  %1391 = vmatpush1.msra.mxu0 %v1267
  %1392 = vmatprep.subr.mxu0 %v1274
  %1393 = vmatpush1.msra.mxu0 %v1273
  %1394 = vmatprep.subr.mxu0 %v1280
  %1395 = vmatpush1.msra.mxu0 %v1279
  %1396 = vmatprep.subr.mxu0 %v1286
  %1397 = vmatpush1.msra.mxu0 %v1285
  %1398 = vmatprep.subr.mxu0 %v1292
  %1399 = vmatpush1.msra.mxu0 %v1291
  %1400 = vmatprep.subr.mxu0 %v1298
  %1401 = vmatpush1.msra.mxu0 %v1297
  %1402 = vmatprep.subr.mxu0 %v1304
  %1403 = vmatpush1.msra.mxu0 %v1303
  %1404 = vmatprep.subr.mxu0 %v1310
  %1405 = vmatpush1.msra.mxu0 %v1309
  %1406 = vmatprep.subr.mxu0 %v1316
  %1407 = vmatpush1.msra.mxu0 %v1315
  %1408 = vmatprep.subr.mxu0 %v1322
  %1409 = vmatpush1.msra.mxu0 %v1321
  %1410 = vmatprep.subr.mxu0 %v1328
  %1411 = vmatpush1.msra.mxu0 %v1327
  %1412 = vmatprep.subr.mxu0 %v1334
  %1413 = vmatpush1.msra.mxu0 %v1333
  %1414 = vmatprep.subr.mxu0 %v1340
  %1415 = vmatpush1.msra.mxu0 %v1339
  %1416 = vmatprep.subr.mxu0 %v1346
  %1417 = vmatpush1.msra.mxu0 %v1345
  %1418 = vmatprep.subr.mxu0 %v1352
  %1419 = vmatpush1.msra.mxu0 %v1351
  %1420 = vmatprep.subr.mxu0 %v1358
  %1421 = vmatpush1.msra.mxu0 %v1357
  %1422 = vmatprep.subr.mxu0 %v1364
  %1423 = vmatpush1.msra.mxu0 %v1363
  %1424 = vmatprep.subr.mxu0 0.0
  %1425 = vmatpush1.msra.mxu0 0.0
  %1426 = vmatprep.subr.mxu0 0.0
  %1427 = vmatpush1.msra.mxu0 0.0
  %1428 = vmatprep.subr.mxu0 0.0
  %1429 = vmatpush1.msra.mxu0 0.0
  %1430 = vmatprep.subr.mxu0 0.0
  %1431 = vmatpush1.msra.mxu0 0.0
  %1432 = vmatprep.subr.mxu0 0.0
  %1433 = vmatpush1.msra.mxu0 0.0
  %1434 = vmatprep.subr.mxu0 0.0
  %1435 = vmatpush1.msra.mxu0 0.0
  %1436 = vmatprep.subr.mxu0 0.0
  %1437 = vmatpush1.msra.mxu0 0.0
  %1438 = vmatprep.subr.mxu0 0.0
  %1439 = vmatpush1.msra.mxu0 0.0
  %1440 = vmatprep.subr.mxu0 0.0
  %1441 = vmatpush1.msra.mxu0 0.0
  %1442 = vmatprep.subr.mxu0 0.0
  %1443 = vmatpush1.msra.mxu0 0.0
  %1444 = vmatprep.subr.mxu0 0.0
  %1445 = vmatpush1.msra.mxu0 0.0
  %1446 = vmatprep.subr.mxu0 0.0
  %1447 = vmatpush1.msra.mxu0 0.0
  %1448 = vmatprep.subr.mxu0 0.0
  %1449 = vmatpush1.msra.mxu0 0.0
  %1450 = vmatprep.subr.mxu0 0.0
  %1451 = vmatpush1.msra.mxu0 0.0
  %1452 = vmatprep.mubr.f32.mxu0 %v1383
  %1453 = vmatmul.mubr.f32.gmra.mrb[0].mxu0 %v1257
  %v1454 = vpop.f32.mrb[0].mxu0
  %v1455 = vadd.f32 %v1375, %v1454
  %v1456 = vpop.f32.mrb[0].mxu0
  %v1457 = vadd.f32 %v1375, %v1456
  %1458 = vmatprep.mubr.f32.mxu0 %v1386
  %1459 = vmatmul.mubr.f32.gmra.mrb[0].mxu0 %v1259
  %v1460 = vpop.f32.mrb[0].mxu0
  %v1461 = vadd.f32 %v1380, %v1460
  %v1462 = vpop.f32.mrb[0].mxu0
  %v1463 = vadd.f32 %v1380, %v1462
  %1464 = vdwg.mxu0
  %1465 = vmatprep.subr.mxu0 %v1264
  %1466 = vmatpush1.msra.mxu0 %v1263
  %1467 = vmatprep.subr.mxu0 %v1270
  %1468 = vmatpush1.msra.mxu0 %v1269
  %1469 = vmatprep.subr.mxu0 %v1276
  %1470 = vmatpush1.msra.mxu0 %v1275
  %1471 = vmatprep.subr.mxu0 %v1282
  %1472 = vmatpush1.msra.mxu0 %v1281
  %1473 = vmatprep.subr.mxu0 %v1288
  %1474 = vmatpush1.msra.mxu0 %v1287
  %1475 = vmatprep.subr.mxu0 %v1294
  %1476 = vmatpush1.msra.mxu0 %v1293
  %1477 = vmatprep.subr.mxu0 %v1300
  %1478 = vmatpush1.msra.mxu0 %v1299
  %1479 = vmatprep.subr.mxu0 %v1306
  %1480 = vmatpush1.msra.mxu0 %v1305
  %1481 = vmatprep.subr.mxu0 %v1312
  %1482 = vmatpush1.msra.mxu0 %v1311
  %1483 = vmatprep.subr.mxu0 %v1318
  %1484 = vmatpush1.msra.mxu0 %v1317
  %1485 = vmatprep.subr.mxu0 %v1324
  %1486 = vmatpush1.msra.mxu0 %v1323
  %1487 = vmatprep.subr.mxu0 %v1330
  %1488 = vmatpush1.msra.mxu0 %v1329
  %1489 = vmatprep.subr.mxu0 %v1336
  %1490 = vmatpush1.msra.mxu0 %v1335
  %1491 = vmatprep.subr.mxu0 %v1342
  %1492 = vmatpush1.msra.mxu0 %v1341
  %1493 = vmatprep.subr.mxu0 %v1348
  %1494 = vmatpush1.msra.mxu0 %v1347
  %1495 = vmatprep.subr.mxu0 %v1354
  %1496 = vmatpush1.msra.mxu0 %v1353
  %1497 = vmatprep.subr.mxu0 %v1360
  %1498 = vmatpush1.msra.mxu0 %v1359
  %1499 = vmatprep.subr.mxu0 %v1366
  %1500 = vmatpush1.msra.mxu0 %v1365
  %1501 = vmatprep.subr.mxu0 0.0
  %1502 = vmatpush1.msra.mxu0 0.0
  %1503 = vmatprep.subr.mxu0 0.0
  %1504 = vmatpush1.msra.mxu0 0.0
  %1505 = vmatprep.subr.mxu0 0.0
  %1506 = vmatpush1.msra.mxu0 0.0
  %1507 = vmatprep.subr.mxu0 0.0
  %1508 = vmatpush1.msra.mxu0 0.0
  %1509 = vmatprep.subr.mxu0 0.0
  %1510 = vmatpush1.msra.mxu0 0.0
  %1511 = vmatprep.subr.mxu0 0.0
  %1512 = vmatpush1.msra.mxu0 0.0
  %1513 = vmatprep.subr.mxu0 0.0
  %1514 = vmatpush1.msra.mxu0 0.0
  %1515 = vmatprep.subr.mxu0 0.0
  %1516 = vmatpush1.msra.mxu0 0.0
  %1517 = vmatprep.subr.mxu0 0.0
  %1518 = vmatpush1.msra.mxu0 0.0
  %1519 = vmatprep.subr.mxu0 0.0
  %1520 = vmatpush1.msra.mxu0 0.0
  %1521 = vmatprep.subr.mxu0 0.0
  %1522 = vmatpush1.msra.mxu0 0.0
  %1523 = vmatprep.subr.mxu0 0.0
  %1524 = vmatpush1.msra.mxu0 0.0
  %1525 = vmatprep.subr.mxu0 0.0
  %1526 = vmatpush1.msra.mxu0 0.0
  %1527 = vmatprep.subr.mxu0 0.0
  %1528 = vmatpush1.msra.mxu0 0.0
  %1529 = vmatprep.mubr.f32.mxu0 %v1383
  %1530 = vmatmul.mubr.f32.gmra.mrb[0].mxu0 %v1257
  %v1531 = vpop.f32.mrb[0].mxu0
  %v1532 = vadd.f32 %v1375, %v1531
  %v1533 = vpop.f32.mrb[0].mxu0
  %v1534 = vadd.f32 %v1375, %v1533
  %1535 = vmatprep.mubr.f32.mxu0 %v1386
  %1536 = vmatmul.mubr.f32.gmra.mrb[0].mxu0 %v1259
  %v1537 = vpop.f32.mrb[0].mxu0
  %v1538 = vadd.f32 %v1380, %v1537
  %v1539 = vpop.f32.mrb[0].mxu0
  %v1540 = vadd.f32 %v1380, %v1539
  %1541 = vdwg.mxu0
  %1542 = vmatprep.subr.mxu0 %v1266
  %1543 = vmatpush1.msra.mxu0 %v1265
  %1544 = vmatprep.subr.mxu0 %v1272
  %1545 = vmatpush1.msra.mxu0 %v1271
  %1546 = vmatprep.subr.mxu0 %v1278
  %1547 = vmatpush1.msra.mxu0 %v1277
  %1548 = vmatprep.subr.mxu0 %v1284
  %1549 = vmatpush1.msra.mxu0 %v1283
  %1550 = vmatprep.subr.mxu0 %v1290
  %1551 = vmatpush1.msra.mxu0 %v1289
  %1552 = vmatprep.subr.mxu0 %v1296
  %1553 = vmatpush1.msra.mxu0 %v1295
  %1554 = vmatprep.subr.mxu0 %v1302
  %1555 = vmatpush1.msra.mxu0 %v1301
  %1556 = vmatprep.subr.mxu0 %v1308
  %1557 = vmatpush1.msra.mxu0 %v1307
  %1558 = vmatprep.subr.mxu0 %v1314
  %1559 = vmatpush1.msra.mxu0 %v1313
  %1560 = vmatprep.subr.mxu0 %v1320
  %1561 = vmatpush1.msra.mxu0 %v1319
  %1562 = vmatprep.subr.mxu0 %v1326
  %1563 = vmatpush1.msra.mxu0 %v1325
  %1564 = vmatprep.subr.mxu0 %v1332
  %1565 = vmatpush1.msra.mxu0 %v1331
  %1566 = vmatprep.subr.mxu0 %v1338
  %1567 = vmatpush1.msra.mxu0 %v1337
  %1568 = vmatprep.subr.mxu0 %v1344
  %1569 = vmatpush1.msra.mxu0 %v1343
  %1570 = vmatprep.subr.mxu0 %v1350
  %1571 = vmatpush1.msra.mxu0 %v1349
  %1572 = vmatprep.subr.mxu0 %v1356
  %1573 = vmatpush1.msra.mxu0 %v1355
  %1574 = vmatprep.subr.mxu0 %v1362
  %1575 = vmatpush1.msra.mxu0 %v1361
  %1576 = vmatprep.subr.mxu0 %v1368
  %1577 = vmatpush1.msra.mxu0 %v1367
  %1578 = vmatprep.subr.mxu0 0.0
  %1579 = vmatpush1.msra.mxu0 0.0
  %1580 = vmatprep.subr.mxu0 0.0
  %1581 = vmatpush1.msra.mxu0 0.0
  %1582 = vmatprep.subr.mxu0 0.0
  %1583 = vmatpush1.msra.mxu0 0.0
  %1584 = vmatprep.subr.mxu0 0.0
  %1585 = vmatpush1.msra.mxu0 0.0
  %1586 = vmatprep.subr.mxu0 0.0
  %1587 = vmatpush1.msra.mxu0 0.0
  %1588 = vmatprep.subr.mxu0 0.0
  %1589 = vmatpush1.msra.mxu0 0.0
  %1590 = vmatprep.subr.mxu0 0.0
  %1591 = vmatpush1.msra.mxu0 0.0
  %1592 = vmatprep.subr.mxu0 0.0
  %1593 = vmatpush1.msra.mxu0 0.0
  %1594 = vmatprep.subr.mxu0 0.0
  %1595 = vmatpush1.msra.mxu0 0.0
  %1596 = vmatprep.subr.mxu0 0.0
  %1597 = vmatpush1.msra.mxu0 0.0
  %1598 = vmatprep.subr.mxu0 0.0
  %1599 = vmatpush1.msra.mxu0 0.0
  %1600 = vmatprep.subr.mxu0 0.0
  %1601 = vmatpush1.msra.mxu0 0.0
  %1602 = vmatprep.subr.mxu0 0.0
  %1603 = vmatpush1.msra.mxu0 0.0
  %1604 = vmatprep.subr.mxu0 0.0
  %1605 = vmatpush1.msra.mxu0 0.0
  %1606 = vmatprep.mubr.f32.mxu0 %v1383
  %1607 = vmatmul.mubr.f32.gmra.mrb[0].mxu0 %v1257
  %v1608 = vpop.f32.mrb[0].mxu0
  %v1609 = vadd.f32 %v1375, %v1608
  %v1610 = vpop.f32.mrb[0].mxu0
  %v1611 = vadd.f32 %v1375, %v1610
  %1612 = vmatprep.mubr.f32.mxu0 %v1386
  %1613 = vmatmul.mubr.f32.gmra.mrb[0].mxu0 %v1259
  %v1614 = vpop.f32.mrb[0].mxu0
  %v1615 = vadd.f32 %v1380, %v1614
  %v1616 = vpop.f32.mrb[0].mxu0
  %v1617 = vadd.f32 %v1380, %v1616
  %1618 = vdwg.mxu0
  %v1619 = vmax.f32 %v1455, 0.0
  %v1620 = vmax.f32 %v1457, 0.0
  %v1621 = vmax.f32 %v1532, 0.0
  %v1622 = vmax.f32 %v1534, 0.0
  %v1623 = vmax.f32 %v1609, 0.0
  %v1624 = vmax.f32 %v1611, 0.0
  %v1625 = vmax.f32 %v1461, 0.0
  %v1626 = vmax.f32 %v1463, 0.0
  %v1627 = vmax.f32 %v1538, 0.0
  %v1628 = vmax.f32 %v1540, 0.0
  %v1629 = vmax.f32 %v1615, 0.0
  %v1630 = vmax.f32 %v1617, 0.0
  %v1631 = vmul.f32 %v1619, %v821
  %v1632 = vmul.f32 %v1620, %v825
  %v1633 = vmul.f32 %v1621, %v829
  %v1634 = vmul.f32 %v1622, %v833
  %v1635 = vmul.f32 %v1623, %v837
  %v1636 = vmul.f32 %v1624, %v841
  %v1637 = vmul.f32 %v1625, %v821
  %v1638 = vmul.f32 %v1626, %v825
  %v1639 = vmul.f32 %v1627, %v829
  %v1640 = vmul.f32 %v1628, %v833
  %v1641 = vmul.f32 %v1629, %v837
  %v1642 = vmul.f32 %v1630, %v841
  %1643 = vrot.lane.b32.xlu0 %v1631, 19
  %v1644 = vpop.permute.xlu0 %1643
  %1645 = vrot.lane.b32.xlu0 %v1637, 19
  %v1646 = vpop.permute.xlu0 %1645
  %1647 = vrot.lane.b32.xlu0 %v1632, 19
  %v1648 = vpop.permute.xlu0 %1647
  %1649 = vrot.lane.b32.xlu0 %v1638, 19
  %v1650 = vpop.permute.xlu0 %1649
  %1651 = vrot.lane.b32.xlu0 %v1633, 19
  %v1652 = vpop.permute.xlu0 %1651
  %1653 = vrot.lane.b32.xlu0 %v1639, 19
  %v1654 = vpop.permute.xlu0 %1653
  %1655 = vrot.lane.b32.xlu0 %v1634, 19
  %v1656 = vpop.permute.xlu0 %1655
  %1657 = vrot.lane.b32.xlu0 %v1640, 19
  %v1658 = vpop.permute.xlu0 %1657
  %1659 = vrot.lane.b32.xlu0 %v1635, 19
  %v1660 = vpop.permute.xlu0 %1659
  %1661 = vrot.lane.b32.xlu0 %v1641, 19
  %v1662 = vpop.permute.xlu0 %1661
  %1663 = vrot.lane.b32.xlu0 %v1636, 19
  %v1664 = vpop.permute.xlu0 %1663
  %1665 = vrot.lane.b32.xlu0 %v1642, 19
  %v1666 = vpop.permute.xlu0 %1665
  %v1667 = vsel %vm63, %v1660, %v1664
  %v1668 = vsel %vm63, %v1662, %v1666
  %v1669 = vsel %vm63, %v1656, %v1660
  %v1670 = vsel %vm63, %v1658, %v1662
  %v1671 = vsel %vm63, %v1652, %v1656
  %v1672 = vsel %vm63, %v1654, %v1658
  %v1673 = vsel %vm63, %v1648, %v1652
  %v1674 = vsel %vm63, %v1650, %v1654
  %v1675 = vsel %vm63, %v1644, %v1648
  %v1676 = vsel %vm63, %v1646, %v1650
  %v1677 = vsel %vm63, %v1664, %v1644
  %v1678 = vsel %vm63, %v1666, %v1646
  %1679 = vst [vmem:[#allocation2] sm:$0xff] %v1677
  %1680 = vst [vmem:[#allocation2 + $0x8] sm:$0xff] %v1675
  %1681 = vst [vmem:[#allocation2 + $0x10] sm:$0xff] %v1673
  %1682 = vst [vmem:[#allocation2 + $0x18] sm:$0xff] %v1671
  %1683 = vst [vmem:[#allocation2 + $0x20] sm:$0xff] %v1669
  %1684 = vst [vmem:[#allocation2 + $0x28] sm:$0xff] %v1667
  %1685 = vst [vmem:[#allocation2 + $0x30] sm:$0xff] %v1678
  %1686 = vst [vmem:[#allocation2 + $0x38] sm:$0xff] %v1676
  %1687 = vst [vmem:[#allocation2 + $0x40] sm:$0xff] %v1674
  %1688 = vst [vmem:[#allocation2 + $0x48] sm:$0xff] %v1672
  %1689 = vst [vmem:[#allocation2 + $0x50] sm:$0xff] %v1670
  %1690 = vst [vmem:[#allocation2 + $0x58] sm:$0xff] %v1668
  %1691 = vrot.lane.b32.xlu0 %v1631, 18
  %v1692 = vpop.permute.xlu0 %1691
  %1693 = vrot.lane.b32.xlu0 %v1637, 18
  %v1694 = vpop.permute.xlu0 %1693
  %1695 = vrot.lane.b32.xlu0 %v1632, 18
  %v1696 = vpop.permute.xlu0 %1695
  %1697 = vrot.lane.b32.xlu0 %v1638, 18
  %v1698 = vpop.permute.xlu0 %1697
  %1699 = vrot.lane.b32.xlu0 %v1633, 18
  %v1700 = vpop.permute.xlu0 %1699
  %1701 = vrot.lane.b32.xlu0 %v1639, 18
  %v1702 = vpop.permute.xlu0 %1701
  %1703 = vrot.lane.b32.xlu0 %v1634, 18
  %v1704 = vpop.permute.xlu0 %1703
  %1705 = vrot.lane.b32.xlu0 %v1640, 18
  %v1706 = vpop.permute.xlu0 %1705
  %1707 = vrot.lane.b32.xlu0 %v1635, 18
  %v1708 = vpop.permute.xlu0 %1707
  %1709 = vrot.lane.b32.xlu0 %v1641, 18
  %v1710 = vpop.permute.xlu0 %1709
  %1711 = vrot.lane.b32.xlu0 %v1636, 18
  %v1712 = vpop.permute.xlu0 %1711
  %1713 = vrot.lane.b32.xlu0 %v1642, 18
  %v1714 = vpop.permute.xlu0 %1713
  %v1715 = vsel %vm112, %v1708, %v1712
  %v1716 = vsel %vm112, %v1710, %v1714
  %v1717 = vsel %vm112, %v1704, %v1708
  %v1718 = vsel %vm112, %v1706, %v1710
  %v1719 = vsel %vm112, %v1700, %v1704
  %v1720 = vsel %vm112, %v1702, %v1706
  %v1721 = vsel %vm112, %v1696, %v1700
  %v1722 = vsel %vm112, %v1698, %v1702
  %v1723 = vsel %vm112, %v1692, %v1696
  %v1724 = vsel %vm112, %v1694, %v1698
  %v1725 = vsel %vm112, %v1712, %v1692
  %v1726 = vsel %vm112, %v1714, %v1694
  %1727 = vst [vmem:[#allocation2 + $0x60] sm:$0xff] %v1725
  %1728 = vst [vmem:[#allocation2 + $0x68] sm:$0xff] %v1723
  %1729 = vst [vmem:[#allocation2 + $0x70] sm:$0xff] %v1721
  %1730 = vst [vmem:[#allocation2 + $0x78] sm:$0xff] %v1719
  %1731 = vst [vmem:[#allocation2 + $0x80] sm:$0xff] %v1717
  %1732 = vst [vmem:[#allocation2 + $0x88] sm:$0xff] %v1715
  %1733 = vst [vmem:[#allocation2 + $0x90] sm:$0xff] %v1726
  %1734 = vst [vmem:[#allocation2 + $0x98] sm:$0xff] %v1724
  %1735 = vst [vmem:[#allocation2 + $0xa0] sm:$0xff] %v1722
  %1736 = vst [vmem:[#allocation2 + $0xa8] sm:$0xff] %v1720
  %1737 = vst [vmem:[#allocation2 + $0xb0] sm:$0xff] %v1718
  %1738 = vst [vmem:[#allocation2 + $0xb8] sm:$0xff] %v1716
  %1739 = vrot.lane.b32.xlu0 %v1631, 17
  %v1740 = vpop.permute.xlu0 %1739
  %1741 = vrot.lane.b32.xlu0 %v1637, 17
  %v1742 = vpop.permute.xlu0 %1741
  %1743 = vrot.lane.b32.xlu0 %v1632, 17
  %v1744 = vpop.permute.xlu0 %1743
  %1745 = vrot.lane.b32.xlu0 %v1638, 17
  %v1746 = vpop.permute.xlu0 %1745
  %1747 = vrot.lane.b32.xlu0 %v1633, 17
  %v1748 = vpop.permute.xlu0 %1747
  %1749 = vrot.lane.b32.xlu0 %v1639, 17
  %v1750 = vpop.permute.xlu0 %1749
  %1751 = vrot.lane.b32.xlu0 %v1634, 17
  %v1752 = vpop.permute.xlu0 %1751
  %1753 = vrot.lane.b32.xlu0 %v1640, 17
  %v1754 = vpop.permute.xlu0 %1753
  %1755 = vrot.lane.b32.xlu0 %v1635, 17
  %v1756 = vpop.permute.xlu0 %1755
  %1757 = vrot.lane.b32.xlu0 %v1641, 17
  %v1758 = vpop.permute.xlu0 %1757
  %1759 = vrot.lane.b32.xlu0 %v1636, 17
  %v1760 = vpop.permute.xlu0 %1759
  %1761 = vrot.lane.b32.xlu0 %v1642, 17
  %v1762 = vpop.permute.xlu0 %1761
  %v1763 = vsel %vm161, %v1756, %v1760
  %v1764 = vsel %vm161, %v1758, %v1762
  %v1765 = vsel %vm161, %v1752, %v1756
  %v1766 = vsel %vm161, %v1754, %v1758
  %v1767 = vsel %vm161, %v1748, %v1752
  %v1768 = vsel %vm161, %v1750, %v1754
  %v1769 = vsel %vm161, %v1744, %v1748
  %v1770 = vsel %vm161, %v1746, %v1750
  %v1771 = vsel %vm161, %v1740, %v1744
  %v1772 = vsel %vm161, %v1742, %v1746
  %v1773 = vsel %vm161, %v1760, %v1740
  %v1774 = vsel %vm161, %v1762, %v1742
  %1775 = vst [vmem:[#allocation2 + $0xc0] sm:$0xff] %v1773
  %1776 = vst [vmem:[#allocation2 + $0xc8] sm:$0xff] %v1771
  %1777 = vst [vmem:[#allocation2 + $0xd0] sm:$0xff] %v1769
  %1778 = vst [vmem:[#allocation2 + $0xd8] sm:$0xff] %v1767
  %1779 = vst [vmem:[#allocation2 + $0xe0] sm:$0xff] %v1765
  %1780 = vst [vmem:[#allocation2 + $0xe8] sm:$0xff] %v1763
  %1781 = vst [vmem:[#allocation2 + $0xf0] sm:$0xff] %v1774
  %1782 = vst [vmem:[#allocation2 + $0xf8] sm:$0xff] %v1772
  %1783 = vst [vmem:[#allocation2 + $0x100] sm:$0xff] %v1770
  %1784 = vst [vmem:[#allocation2 + $0x108] sm:$0xff] %v1768
  %1785 = vst [vmem:[#allocation2 + $0x110] sm:$0xff] %v1766
  %1786 = vst [vmem:[#allocation2 + $0x118] sm:$0xff] %v1764
  %1787 = vrot.lane.b32.xlu0 %v1631, 1
  %v1788 = vpop.permute.xlu0 %1787
  %1789 = vrot.lane.b32.xlu0 %v1637, 1
  %v1790 = vpop.permute.xlu0 %1789
  %1791 = vrot.lane.b32.xlu0 %v1632, 1
  %v1792 = vpop.permute.xlu0 %1791
  %1793 = vrot.lane.b32.xlu0 %v1638, 1
  %v1794 = vpop.permute.xlu0 %1793
  %1795 = vrot.lane.b32.xlu0 %v1633, 1
  %v1796 = vpop.permute.xlu0 %1795
  %1797 = vrot.lane.b32.xlu0 %v1639, 1
  %v1798 = vpop.permute.xlu0 %1797
  %1799 = vrot.lane.b32.xlu0 %v1634, 1
  %v1800 = vpop.permute.xlu0 %1799
  %1801 = vrot.lane.b32.xlu0 %v1640, 1
  %v1802 = vpop.permute.xlu0 %1801
  %1803 = vrot.lane.b32.xlu0 %v1635, 1
  %v1804 = vpop.permute.xlu0 %1803
  %1805 = vrot.lane.b32.xlu0 %v1641, 1
  %v1806 = vpop.permute.xlu0 %1805
  %1807 = vrot.lane.b32.xlu0 %v1636, 1
  %v1808 = vpop.permute.xlu0 %1807
  %1809 = vrot.lane.b32.xlu0 %v1642, 1
  %v1810 = vpop.permute.xlu0 %1809
  %v1811 = vsel %vm210, %v1804, %v1808
  %v1812 = vsel %vm210, %v1806, %v1810
  %v1813 = vsel %vm210, %v1800, %v1804
  %v1814 = vsel %vm210, %v1802, %v1806
  %v1815 = vsel %vm210, %v1796, %v1800
  %v1816 = vsel %vm210, %v1798, %v1802
  %v1817 = vsel %vm210, %v1792, %v1796
  %v1818 = vsel %vm210, %v1794, %v1798
  %v1819 = vsel %vm210, %v1788, %v1792
  %v1820 = vsel %vm210, %v1790, %v1794
  %v1821 = vsel %vm210, %v1808, %v1788
  %v1822 = vsel %vm210, %v1810, %v1790
  %1823 = vst [vmem:[#allocation2 + $0x120] sm:$0xff] %v1821
  %1824 = vst [vmem:[#allocation2 + $0x128] sm:$0xff] %v1819
  %1825 = vst [vmem:[#allocation2 + $0x130] sm:$0xff] %v1817
  %1826 = vst [vmem:[#allocation2 + $0x138] sm:$0xff] %v1815
  %1827 = vst [vmem:[#allocation2 + $0x140] sm:$0xff] %v1813
  %1828 = vst [vmem:[#allocation2 + $0x148] sm:$0xff] %v1811
  %1829 = vst [vmem:[#allocation2 + $0x150] sm:$0xff] %v1822
  %1830 = vst [vmem:[#allocation2 + $0x158] sm:$0xff] %v1820
  %1831 = vst [vmem:[#allocation2 + $0x160] sm:$0xff] %v1818
  %1832 = vst [vmem:[#allocation2 + $0x168] sm:$0xff] %v1816
  %1833 = vst [vmem:[#allocation2 + $0x170] sm:$0xff] %v1814
  %1834 = vst [vmem:[#allocation2 + $0x178] sm:$0xff] %v1812
  %1835 = vst [vmem:[#allocation2 + $0x180] sm:$0xff] %v1631
  %1836 = vst [vmem:[#allocation2 + $0x188] sm:$0xff] %v1632
  %1837 = vst [vmem:[#allocation2 + $0x190] sm:$0xff] %v1633
  %1838 = vst [vmem:[#allocation2 + $0x198] sm:$0xff] %v1634
  %1839 = vst [vmem:[#allocation2 + $0x1a0] sm:$0xff] %v1635
  %1840 = vst [vmem:[#allocation2 + $0x1a8] sm:$0xff] %v1636
  %1841 = vst [vmem:[#allocation2 + $0x1b0] sm:$0xff] %v1637
  %1842 = vst [vmem:[#allocation2 + $0x1b8] sm:$0xff] %v1638
  %1843 = vst [vmem:[#allocation2 + $0x1c0] sm:$0xff] %v1639
  %1844 = vst [vmem:[#allocation2 + $0x1c8] sm:$0xff] %v1640
  %1845 = vst [vmem:[#allocation2 + $0x1d0] sm:$0xff] %v1641
  %1846 = vst [vmem:[#allocation2 + $0x1d8] sm:$0xff] %v1642
  %1847 = vrot.lane.b32.xlu0 %v1631, 127
  %v1848 = vpop.permute.xlu0 %1847
  %1849 = vrot.lane.b32.xlu0 %v1637, 127
  %v1850 = vpop.permute.xlu0 %1849
  %1851 = vrot.lane.b32.xlu0 %v1632, 127
  %v1852 = vpop.permute.xlu0 %1851
  %1853 = vrot.lane.b32.xlu0 %v1638, 127
  %v1854 = vpop.permute.xlu0 %1853
  %1855 = vrot.lane.b32.xlu0 %v1633, 127
  %v1856 = vpop.permute.xlu0 %1855
  %1857 = vrot.lane.b32.xlu0 %v1639, 127
  %v1858 = vpop.permute.xlu0 %1857
  %1859 = vrot.lane.b32.xlu0 %v1634, 127
  %v1860 = vpop.permute.xlu0 %1859
  %1861 = vrot.lane.b32.xlu0 %v1640, 127
  %v1862 = vpop.permute.xlu0 %1861
  %1863 = vrot.lane.b32.xlu0 %v1635, 127
  %v1864 = vpop.permute.xlu0 %1863
  %1865 = vrot.lane.b32.xlu0 %v1641, 127
  %v1866 = vpop.permute.xlu0 %1865
  %1867 = vrot.lane.b32.xlu0 %v1636, 127
  %v1868 = vpop.permute.xlu0 %1867
  %1869 = vrot.lane.b32.xlu0 %v1642, 127
  %v1870 = vpop.permute.xlu0 %1869
  %v1871 = vsel %vm271, %v1864, %v1868
  %v1872 = vsel %vm271, %v1866, %v1870
  %v1873 = vsel %vm271, %v1860, %v1864
  %v1874 = vsel %vm271, %v1862, %v1866
  %v1875 = vsel %vm271, %v1856, %v1860
  %v1876 = vsel %vm271, %v1858, %v1862
  %v1877 = vsel %vm271, %v1852, %v1856
  %v1878 = vsel %vm271, %v1854, %v1858
  %v1879 = vsel %vm271, %v1848, %v1852
  %v1880 = vsel %vm271, %v1850, %v1854
  %v1881 = vsel %vm271, %v1868, %v1848
  %v1882 = vsel %vm271, %v1870, %v1850
  %1883 = vst [vmem:[#allocation2 + $0x1e0] sm:$0xff] %v1879
  %1884 = vst [vmem:[#allocation2 + $0x1e8] sm:$0xff] %v1877
  %1885 = vst [vmem:[#allocation2 + $0x1f0] sm:$0xff] %v1875
  %1886 = vst [vmem:[#allocation2 + $0x1f8] sm:$0xff] %v1873
  %1887 = vst [vmem:[#allocation2 + $0x200] sm:$0xff] %v1871
  %1888 = vst [vmem:[#allocation2 + $0x208] sm:$0xff] %v1881
  %1889 = vst [vmem:[#allocation2 + $0x210] sm:$0xff] %v1880
  %1890 = vst [vmem:[#allocation2 + $0x218] sm:$0xff] %v1878
  %1891 = vst [vmem:[#allocation2 + $0x220] sm:$0xff] %v1876
  %1892 = vst [vmem:[#allocation2 + $0x228] sm:$0xff] %v1874
  %1893 = vst [vmem:[#allocation2 + $0x230] sm:$0xff] %v1872
  %1894 = vst [vmem:[#allocation2 + $0x238] sm:$0xff] %v1882
  %1895 = vrot.lane.b32.xlu0 %v1631, 111
  %v1896 = vpop.permute.xlu0 %1895
  %1897 = vrot.lane.b32.xlu0 %v1637, 111
  %v1898 = vpop.permute.xlu0 %1897
  %1899 = vrot.lane.b32.xlu0 %v1632, 111
  %v1900 = vpop.permute.xlu0 %1899
  %1901 = vrot.lane.b32.xlu0 %v1638, 111
  %v1902 = vpop.permute.xlu0 %1901
  %1903 = vrot.lane.b32.xlu0 %v1633, 111
  %v1904 = vpop.permute.xlu0 %1903
  %1905 = vrot.lane.b32.xlu0 %v1639, 111
  %v1906 = vpop.permute.xlu0 %1905
  %1907 = vrot.lane.b32.xlu0 %v1634, 111
  %v1908 = vpop.permute.xlu0 %1907
  %1909 = vrot.lane.b32.xlu0 %v1640, 111
  %v1910 = vpop.permute.xlu0 %1909
  %1911 = vrot.lane.b32.xlu0 %v1635, 111
  %v1912 = vpop.permute.xlu0 %1911
  %1913 = vrot.lane.b32.xlu0 %v1641, 111
  %v1914 = vpop.permute.xlu0 %1913
  %1915 = vrot.lane.b32.xlu0 %v1636, 111
  %v1916 = vpop.permute.xlu0 %1915
  %1917 = vrot.lane.b32.xlu0 %v1642, 111
  %v1918 = vpop.permute.xlu0 %1917
  %v1919 = vsel %vm320, %v1912, %v1916
  %v1920 = vsel %vm320, %v1914, %v1918
  %v1921 = vsel %vm320, %v1908, %v1912
  %v1922 = vsel %vm320, %v1910, %v1914
  %v1923 = vsel %vm320, %v1904, %v1908
  %v1924 = vsel %vm320, %v1906, %v1910
  %v1925 = vsel %vm320, %v1900, %v1904
  %v1926 = vsel %vm320, %v1902, %v1906
  %v1927 = vsel %vm320, %v1896, %v1900
  %v1928 = vsel %vm320, %v1898, %v1902
  %v1929 = vsel %vm320, %v1916, %v1896
  %v1930 = vsel %vm320, %v1918, %v1898
  %1931 = vst [vmem:[#allocation2 + $0x240] sm:$0xff] %v1927
  %1932 = vst [vmem:[#allocation2 + $0x248] sm:$0xff] %v1925
  %1933 = vst [vmem:[#allocation2 + $0x250] sm:$0xff] %v1923
  %1934 = vst [vmem:[#allocation2 + $0x258] sm:$0xff] %v1921
  %1935 = vst [vmem:[#allocation2 + $0x260] sm:$0xff] %v1919
  %1936 = vst [vmem:[#allocation2 + $0x268] sm:$0xff] %v1929
  %1937 = vst [vmem:[#allocation2 + $0x270] sm:$0xff] %v1928
  %1938 = vst [vmem:[#allocation2 + $0x278] sm:$0xff] %v1926
  %1939 = vst [vmem:[#allocation2 + $0x280] sm:$0xff] %v1924
  %1940 = vst [vmem:[#allocation2 + $0x288] sm:$0xff] %v1922
  %1941 = vst [vmem:[#allocation2 + $0x290] sm:$0xff] %v1920
  %1942 = vst [vmem:[#allocation2 + $0x298] sm:$0xff] %v1930
  %1943 = vrot.lane.b32.xlu0 %v1631, 110
  %v1944 = vpop.permute.xlu0 %1943
  %1945 = vrot.lane.b32.xlu0 %v1637, 110
  %v1946 = vpop.permute.xlu0 %1945
  %1947 = vrot.lane.b32.xlu0 %v1632, 110
  %v1948 = vpop.permute.xlu0 %1947
  %1949 = vrot.lane.b32.xlu0 %v1638, 110
  %v1950 = vpop.permute.xlu0 %1949
  %1951 = vrot.lane.b32.xlu0 %v1633, 110
  %v1952 = vpop.permute.xlu0 %1951
  %1953 = vrot.lane.b32.xlu0 %v1639, 110
  %v1954 = vpop.permute.xlu0 %1953
  %1955 = vrot.lane.b32.xlu0 %v1634, 110
  %v1956 = vpop.permute.xlu0 %1955
  %1957 = vrot.lane.b32.xlu0 %v1640, 110
  %v1958 = vpop.permute.xlu0 %1957
  %1959 = vrot.lane.b32.xlu0 %v1635, 110
  %v1960 = vpop.permute.xlu0 %1959
  %1961 = vrot.lane.b32.xlu0 %v1641, 110
  %v1962 = vpop.permute.xlu0 %1961
  %1963 = vrot.lane.b32.xlu0 %v1636, 110
  %v1964 = vpop.permute.xlu0 %1963
  %1965 = vrot.lane.b32.xlu0 %v1642, 110
  %v1966 = vpop.permute.xlu0 %1965
  %v1967 = vsel %vm369, %v1960, %v1964
  %v1968 = vsel %vm369, %v1962, %v1966
  %v1969 = vsel %vm369, %v1956, %v1960
  %v1970 = vsel %vm369, %v1958, %v1962
  %v1971 = vsel %vm369, %v1952, %v1956
  %v1972 = vsel %vm369, %v1954, %v1958
  %v1973 = vsel %vm369, %v1948, %v1952
  %v1974 = vsel %vm369, %v1950, %v1954
  %v1975 = vsel %vm369, %v1944, %v1948
  %v1976 = vsel %vm369, %v1946, %v1950
  %v1977 = vsel %vm369, %v1964, %v1944
  %v1978 = vsel %vm369, %v1966, %v1946
  %1979 = vst [vmem:[#allocation2 + $0x2a0] sm:$0xff] %v1975
  %1980 = vst [vmem:[#allocation2 + $0x2a8] sm:$0xff] %v1973
  %1981 = vst [vmem:[#allocation2 + $0x2b0] sm:$0xff] %v1971
  %1982 = vst [vmem:[#allocation2 + $0x2b8] sm:$0xff] %v1969
  %1983 = vst [vmem:[#allocation2 + $0x2c0] sm:$0xff] %v1967
  %1984 = vst [vmem:[#allocation2 + $0x2c8] sm:$0xff] %v1977
  %1985 = vst [vmem:[#allocation2 + $0x2d0] sm:$0xff] %v1976
  %1986 = vst [vmem:[#allocation2 + $0x2d8] sm:$0xff] %v1974
  %1987 = vst [vmem:[#allocation2 + $0x2e0] sm:$0xff] %v1972
  %1988 = vst [vmem:[#allocation2 + $0x2e8] sm:$0xff] %v1970
  %1989 = vst [vmem:[#allocation2 + $0x2f0] sm:$0xff] %v1968
  %1990 = vst [vmem:[#allocation2 + $0x2f8] sm:$0xff] %v1978
  %1991 = vrot.lane.b32.xlu0 %v1631, 109
  %v1992 = vpop.permute.xlu0 %1991
  %1993 = vrot.lane.b32.xlu0 %v1637, 109
  %v1994 = vpop.permute.xlu0 %1993
  %1995 = vrot.lane.b32.xlu0 %v1632, 109
  %v1996 = vpop.permute.xlu0 %1995
  %1997 = vrot.lane.b32.xlu0 %v1638, 109
  %v1998 = vpop.permute.xlu0 %1997
  %1999 = vrot.lane.b32.xlu0 %v1633, 109
  %v2000 = vpop.permute.xlu0 %1999
  %2001 = vrot.lane.b32.xlu0 %v1639, 109
  %v2002 = vpop.permute.xlu0 %2001
  %2003 = vrot.lane.b32.xlu0 %v1634, 109
  %v2004 = vpop.permute.xlu0 %2003
  %2005 = vrot.lane.b32.xlu0 %v1640, 109
  %v2006 = vpop.permute.xlu0 %2005
  %2007 = vrot.lane.b32.xlu0 %v1635, 109
  %v2008 = vpop.permute.xlu0 %2007
  %2009 = vrot.lane.b32.xlu0 %v1641, 109
  %v2010 = vpop.permute.xlu0 %2009
  %2011 = vrot.lane.b32.xlu0 %v1636, 109
  %v2012 = vpop.permute.xlu0 %2011
  %2013 = vrot.lane.b32.xlu0 %v1642, 109
  %v2014 = vpop.permute.xlu0 %2013
  %v2015 = vsel %vm418, %v2008, %v2012
  %v2016 = vsel %vm418, %v2010, %v2014
  %v2017 = vsel %vm418, %v2004, %v2008
  %v2018 = vsel %vm418, %v2006, %v2010
  %v2019 = vsel %vm418, %v2000, %v2004
  %v2020 = vsel %vm418, %v2002, %v2006
  %v2021 = vsel %vm418, %v1996, %v2000
  %v2022 = vsel %vm418, %v1998, %v2002
  %v2023 = vsel %vm418, %v1992, %v1996
  %v2024 = vsel %vm418, %v1994, %v1998
  %v2025 = vsel %vm418, %v2012, %v1992
  %v2026 = vsel %vm418, %v2014, %v1994
  %2027 = vst [vmem:[#allocation2 + $0x300] sm:$0xff] %v2023
  %2028 = vst [vmem:[#allocation2 + $0x308] sm:$0xff] %v2021
  %2029 = vst [vmem:[#allocation2 + $0x310] sm:$0xff] %v2019
  %2030 = vst [vmem:[#allocation2 + $0x318] sm:$0xff] %v2017
  %2031 = vst [vmem:[#allocation2 + $0x320] sm:$0xff] %v2015
  %2032 = vst [vmem:[#allocation2 + $0x328] sm:$0xff] %v2025
  %2033 = vst [vmem:[#allocation2 + $0x330] sm:$0xff] %v2024
  %2034 = vst [vmem:[#allocation2 + $0x338] sm:$0xff] %v2022
  %2035 = vst [vmem:[#allocation2 + $0x340] sm:$0xff] %v2020
  %2036 = vst [vmem:[#allocation2 + $0x348] sm:$0xff] %v2018
  %2037 = vst [vmem:[#allocation2 + $0x350] sm:$0xff] %v2016
  %2038 = vst [vmem:[#allocation2 + $0x358] sm:$0xff] %v2026
  %s2039 = scalar_lea.vmem %s1, 64
  %v2040 = vld [vmem:[%s2039] sm:$0xff]
  %v2041 = vld [vmem:[%s2039 + $0x8] sm:$0xff]
  %v2042 = vld [vmem:[%s2039 + $0x10] sm:$0xff]
  %v2043 = vld [vmem:[%s2039 + $0x18] sm:$0xff]
  %v2044 = vld [vmem:[#allocation2] sm:$0xff]
  %v2045 = vld [vmem:[#allocation2 + $0x8] sm:$0xff]
  %v2046 = vld [vmem:[#allocation2 + $0x10] sm:$0xff]
  %v2047 = vld [vmem:[#allocation2 + $0x18] sm:$0xff]
  %v2048 = vld [vmem:[#allocation2 + $0x20] sm:$0xff]
  %v2049 = vld [vmem:[#allocation2 + $0x28] sm:$0xff]
  %v2050 = vld [vmem:[#allocation2 + $0x30] sm:$0xff]
  %v2051 = vld [vmem:[#allocation2 + $0x38] sm:$0xff]
  %v2052 = vld [vmem:[#allocation2 + $0x40] sm:$0xff]
  %v2053 = vld [vmem:[#allocation2 + $0x48] sm:$0xff]
  %v2054 = vld [vmem:[#allocation2 + $0x50] sm:$0xff]
  %v2055 = vld [vmem:[#allocation2 + $0x58] sm:$0xff]
  %v2056 = vld [vmem:[#allocation2 + $0x60] sm:$0xff]
  %v2057 = vld [vmem:[#allocation2 + $0x68] sm:$0xff]
  %v2058 = vld [vmem:[#allocation2 + $0x70] sm:$0xff]
  %v2059 = vld [vmem:[#allocation2 + $0x78] sm:$0xff]
  %v2060 = vld [vmem:[#allocation2 + $0x80] sm:$0xff]
  %v2061 = vld [vmem:[#allocation2 + $0x88] sm:$0xff]
  %v2062 = vld [vmem:[#allocation2 + $0x90] sm:$0xff]
  %v2063 = vld [vmem:[#allocation2 + $0x98] sm:$0xff]
  %v2064 = vld [vmem:[#allocation2 + $0xa0] sm:$0xff]
  %v2065 = vld [vmem:[#allocation2 + $0xa8] sm:$0xff]
  %v2066 = vld [vmem:[#allocation2 + $0xb0] sm:$0xff]
  %v2067 = vld [vmem:[#allocation2 + $0xb8] sm:$0xff]
  %v2068 = vld [vmem:[#allocation2 + $0xc0] sm:$0xff]
  %v2069 = vld [vmem:[#allocation2 + $0xc8] sm:$0xff]
  %v2070 = vld [vmem:[#allocation2 + $0xd0] sm:$0xff]
  %v2071 = vld [vmem:[#allocation2 + $0xd8] sm:$0xff]
  %v2072 = vld [vmem:[#allocation2 + $0xe0] sm:$0xff]
  %v2073 = vld [vmem:[#allocation2 + $0xe8] sm:$0xff]
  %v2074 = vld [vmem:[#allocation2 + $0xf0] sm:$0xff]
  %v2075 = vld [vmem:[#allocation2 + $0xf8] sm:$0xff]
  %v2076 = vld [vmem:[#allocation2 + $0x100] sm:$0xff]
  %v2077 = vld [vmem:[#allocation2 + $0x108] sm:$0xff]
  %v2078 = vld [vmem:[#allocation2 + $0x110] sm:$0xff]
  %v2079 = vld [vmem:[#allocation2 + $0x118] sm:$0xff]
  %v2080 = vld [vmem:[#allocation2 + $0x120] sm:$0xff]
  %v2081 = vld [vmem:[#allocation2 + $0x128] sm:$0xff]
  %v2082 = vld [vmem:[#allocation2 + $0x130] sm:$0xff]
  %v2083 = vld [vmem:[#allocation2 + $0x138] sm:$0xff]
  %v2084 = vld [vmem:[#allocation2 + $0x140] sm:$0xff]
  %v2085 = vld [vmem:[#allocation2 + $0x148] sm:$0xff]
  %v2086 = vld [vmem:[#allocation2 + $0x150] sm:$0xff]
  %v2087 = vld [vmem:[#allocation2 + $0x158] sm:$0xff]
  %v2088 = vld [vmem:[#allocation2 + $0x160] sm:$0xff]
  %v2089 = vld [vmem:[#allocation2 + $0x168] sm:$0xff]
  %v2090 = vld [vmem:[#allocation2 + $0x170] sm:$0xff]
  %v2091 = vld [vmem:[#allocation2 + $0x178] sm:$0xff]
  %v2092 = vld [vmem:[#allocation2 + $0x180] sm:$0xff]
  %v2093 = vld [vmem:[#allocation2 + $0x188] sm:$0xff]
  %v2094 = vld [vmem:[#allocation2 + $0x190] sm:$0xff]
  %v2095 = vld [vmem:[#allocation2 + $0x198] sm:$0xff]
  %v2096 = vld [vmem:[#allocation2 + $0x1a0] sm:$0xff]
  %v2097 = vld [vmem:[#allocation2 + $0x1a8] sm:$0xff]
  %v2098 = vld [vmem:[#allocation2 + $0x1b0] sm:$0xff]
  %v2099 = vld [vmem:[#allocation2 + $0x1b8] sm:$0xff]
  %v2100 = vld [vmem:[#allocation2 + $0x1c0] sm:$0xff]
  %v2101 = vld [vmem:[#allocation2 + $0x1c8] sm:$0xff]
  %v2102 = vld [vmem:[#allocation2 + $0x1d0] sm:$0xff]
  %v2103 = vld [vmem:[#allocation2 + $0x1d8] sm:$0xff]
  %v2104 = vld [vmem:[#allocation2 + $0x1e0] sm:$0xff]
  %v2105 = vld [vmem:[#allocation2 + $0x1e8] sm:$0xff]
  %v2106 = vld [vmem:[#allocation2 + $0x1f0] sm:$0xff]
  %v2107 = vld [vmem:[#allocation2 + $0x1f8] sm:$0xff]
  %v2108 = vld [vmem:[#allocation2 + $0x200] sm:$0xff]
  %v2109 = vld [vmem:[#allocation2 + $0x208] sm:$0xff]
  %v2110 = vld [vmem:[#allocation2 + $0x210] sm:$0xff]
  %v2111 = vld [vmem:[#allocation2 + $0x218] sm:$0xff]
  %v2112 = vld [vmem:[#allocation2 + $0x220] sm:$0xff]
  %v2113 = vld [vmem:[#allocation2 + $0x228] sm:$0xff]
  %v2114 = vld [vmem:[#allocation2 + $0x230] sm:$0xff]
  %v2115 = vld [vmem:[#allocation2 + $0x238] sm:$0xff]
  %v2116 = vld [vmem:[#allocation2 + $0x240] sm:$0xff]
  %v2117 = vld [vmem:[#allocation2 + $0x248] sm:$0xff]
  %v2118 = vld [vmem:[#allocation2 + $0x250] sm:$0xff]
  %v2119 = vld [vmem:[#allocation2 + $0x258] sm:$0xff]
  %v2120 = vld [vmem:[#allocation2 + $0x260] sm:$0xff]
  %v2121 = vld [vmem:[#allocation2 + $0x268] sm:$0xff]
  %v2122 = vld [vmem:[#allocation2 + $0x270] sm:$0xff]
  %v2123 = vld [vmem:[#allocation2 + $0x278] sm:$0xff]
  %v2124 = vld [vmem:[#allocation2 + $0x280] sm:$0xff]
  %v2125 = vld [vmem:[#allocation2 + $0x288] sm:$0xff]
  %v2126 = vld [vmem:[#allocation2 + $0x290] sm:$0xff]
  %v2127 = vld [vmem:[#allocation2 + $0x298] sm:$0xff]
  %v2128 = vld [vmem:[#allocation2 + $0x2a0] sm:$0xff]
  %v2129 = vld [vmem:[#allocation2 + $0x2a8] sm:$0xff]
  %v2130 = vld [vmem:[#allocation2 + $0x2b0] sm:$0xff]
  %v2131 = vld [vmem:[#allocation2 + $0x2b8] sm:$0xff]
  %v2132 = vld [vmem:[#allocation2 + $0x2c0] sm:$0xff]
  %v2133 = vld [vmem:[#allocation2 + $0x2c8] sm:$0xff]
  %v2134 = vld [vmem:[#allocation2 + $0x2d0] sm:$0xff]
  %v2135 = vld [vmem:[#allocation2 + $0x2d8] sm:$0xff]
  %v2136 = vld [vmem:[#allocation2 + $0x2e0] sm:$0xff]
  %v2137 = vld [vmem:[#allocation2 + $0x2e8] sm:$0xff]
  %v2138 = vld [vmem:[#allocation2 + $0x2f0] sm:$0xff]
  %v2139 = vld [vmem:[#allocation2 + $0x2f8] sm:$0xff]
  %v2140 = vld [vmem:[#allocation2 + $0x300] sm:$0xff]
  %v2141 = vld [vmem:[#allocation2 + $0x308] sm:$0xff]
  %v2142 = vld [vmem:[#allocation2 + $0x310] sm:$0xff]
  %v2143 = vld [vmem:[#allocation2 + $0x318] sm:$0xff]
  %v2144 = vld [vmem:[#allocation2 + $0x320] sm:$0xff]
  %v2145 = vld [vmem:[#allocation2 + $0x328] sm:$0xff]
  %v2146 = vld [vmem:[#allocation2 + $0x330] sm:$0xff]
  %v2147 = vld [vmem:[#allocation2 + $0x338] sm:$0xff]
  %v2148 = vld [vmem:[#allocation2 + $0x340] sm:$0xff]
  %v2149 = vld [vmem:[#allocation2 + $0x348] sm:$0xff]
  %v2150 = vld [vmem:[#allocation2 + $0x350] sm:$0xff]
  %v2151 = vld [vmem:[#allocation2 + $0x358] sm:$0xff]
  %s2152 = scalar_lea.vmem %s2, 32
  %v2153 = vld [vmem:[%s2152] sm:$0xff]
  %v2154 = vld [vmem:[%s2152 + $0x8] sm:$0xff]
  %2156 = vset.pattern.permute.xlu0 0
  %2157 = vperm.xlu0 %2156, %v2153
  %v2158 = vpop.permute.xlu0 %2157
  %2161 = vset.pattern.permute.xlu0 0
  %2162 = vperm.xlu0 %2161, %v2154
  %v2163 = vpop.permute.xlu0 %2162
  %v2166 = vsel %vm567, %v2041, 0
  %v2169 = vsel %vm567, %v2043, 0
  %2171 = vmatprep.subr.mxu0 %v2045
  %2172 = vmatpush1.msra.mxu0 %v2044
  %2173 = vmatprep.subr.mxu0 %v2051
  %2174 = vmatpush1.msra.mxu0 %v2050
  %2175 = vmatprep.subr.mxu0 %v2057
  %2176 = vmatpush1.msra.mxu0 %v2056
  %2177 = vmatprep.subr.mxu0 %v2063
  %2178 = vmatpush1.msra.mxu0 %v2062
  %2179 = vmatprep.subr.mxu0 %v2069
  %2180 = vmatpush1.msra.mxu0 %v2068
  %2181 = vmatprep.subr.mxu0 %v2075
  %2182 = vmatpush1.msra.mxu0 %v2074
  %2183 = vmatprep.subr.mxu0 %v2081
  %2184 = vmatpush1.msra.mxu0 %v2080
  %2185 = vmatprep.subr.mxu0 %v2087
  %2186 = vmatpush1.msra.mxu0 %v2086
  %2187 = vmatprep.subr.mxu0 %v2093
  %2188 = vmatpush1.msra.mxu0 %v2092
  %2189 = vmatprep.subr.mxu0 %v2099
  %2190 = vmatpush1.msra.mxu0 %v2098
  %2191 = vmatprep.subr.mxu0 %v2105
  %2192 = vmatpush1.msra.mxu0 %v2104
  %2193 = vmatprep.subr.mxu0 %v2111
  %2194 = vmatpush1.msra.mxu0 %v2110
  %2195 = vmatprep.subr.mxu0 %v2117
  %2196 = vmatpush1.msra.mxu0 %v2116
  %2197 = vmatprep.subr.mxu0 %v2123
  %2198 = vmatpush1.msra.mxu0 %v2122
  %2199 = vmatprep.subr.mxu0 %v2129
  %2200 = vmatpush1.msra.mxu0 %v2128
  %2201 = vmatprep.subr.mxu0 %v2135
  %2202 = vmatpush1.msra.mxu0 %v2134
  %2203 = vmatprep.subr.mxu0 %v2141
  %2204 = vmatpush1.msra.mxu0 %v2140
  %2205 = vmatprep.subr.mxu0 %v2147
  %2206 = vmatpush1.msra.mxu0 %v2146
  %2207 = vmatprep.subr.mxu0 0.0
  %2208 = vmatpush1.msra.mxu0 0.0
  %2209 = vmatprep.subr.mxu0 0.0
  %2210 = vmatpush1.msra.mxu0 0.0
  %2211 = vmatprep.subr.mxu0 0.0
  %2212 = vmatpush1.msra.mxu0 0.0
  %2213 = vmatprep.subr.mxu0 0.0
  %2214 = vmatpush1.msra.mxu0 0.0
  %2215 = vmatprep.subr.mxu0 0.0
  %2216 = vmatpush1.msra.mxu0 0.0
  %2217 = vmatprep.subr.mxu0 0.0
  %2218 = vmatpush1.msra.mxu0 0.0
  %2219 = vmatprep.subr.mxu0 0.0
  %2220 = vmatpush1.msra.mxu0 0.0
  %2221 = vmatprep.subr.mxu0 0.0
  %2222 = vmatpush1.msra.mxu0 0.0
  %2223 = vmatprep.subr.mxu0 0.0
  %2224 = vmatpush1.msra.mxu0 0.0
  %2225 = vmatprep.subr.mxu0 0.0
  %2226 = vmatpush1.msra.mxu0 0.0
  %2227 = vmatprep.subr.mxu0 0.0
  %2228 = vmatpush1.msra.mxu0 0.0
  %2229 = vmatprep.subr.mxu0 0.0
  %2230 = vmatpush1.msra.mxu0 0.0
  %2231 = vmatprep.subr.mxu0 0.0
  %2232 = vmatpush1.msra.mxu0 0.0
  %2233 = vmatprep.subr.mxu0 0.0
  %2234 = vmatpush1.msra.mxu0 0.0
  %2235 = vmatprep.mubr.f32.mxu0 %v2166
  %2236 = vmatmul.mubr.f32.gmra.mrb[0].mxu0 %v2040
  %v2237 = vpop.f32.mrb[0].mxu0
  %v2238 = vadd.f32 %v2158, %v2237
  %v2239 = vpop.f32.mrb[0].mxu0
  %v2240 = vadd.f32 %v2158, %v2239
  %2241 = vmatprep.mubr.f32.mxu0 %v2169
  %2242 = vmatmul.mubr.f32.gmra.mrb[0].mxu0 %v2042
  %v2243 = vpop.f32.mrb[0].mxu0
  %v2244 = vadd.f32 %v2163, %v2243
  %v2245 = vpop.f32.mrb[0].mxu0
  %v2246 = vadd.f32 %v2163, %v2245
  %2247 = vdwg.mxu0
  %2248 = vmatprep.subr.mxu0 %v2047
  %2249 = vmatpush1.msra.mxu0 %v2046
  %2250 = vmatprep.subr.mxu0 %v2053
  %2251 = vmatpush1.msra.mxu0 %v2052
  %2252 = vmatprep.subr.mxu0 %v2059
  %2253 = vmatpush1.msra.mxu0 %v2058
  %2254 = vmatprep.subr.mxu0 %v2065
  %2255 = vmatpush1.msra.mxu0 %v2064
  %2256 = vmatprep.subr.mxu0 %v2071
  %2257 = vmatpush1.msra.mxu0 %v2070
  %2258 = vmatprep.subr.mxu0 %v2077
  %2259 = vmatpush1.msra.mxu0 %v2076
  %2260 = vmatprep.subr.mxu0 %v2083
  %2261 = vmatpush1.msra.mxu0 %v2082
  %2262 = vmatprep.subr.mxu0 %v2089
  %2263 = vmatpush1.msra.mxu0 %v2088
  %2264 = vmatprep.subr.mxu0 %v2095
  %2265 = vmatpush1.msra.mxu0 %v2094
  %2266 = vmatprep.subr.mxu0 %v2101
  %2267 = vmatpush1.msra.mxu0 %v2100
  %2268 = vmatprep.subr.mxu0 %v2107
  %2269 = vmatpush1.msra.mxu0 %v2106
  %2270 = vmatprep.subr.mxu0 %v2113
  %2271 = vmatpush1.msra.mxu0 %v2112
  %2272 = vmatprep.subr.mxu0 %v2119
  %2273 = vmatpush1.msra.mxu0 %v2118
  %2274 = vmatprep.subr.mxu0 %v2125
  %2275 = vmatpush1.msra.mxu0 %v2124
  %2276 = vmatprep.subr.mxu0 %v2131
  %2277 = vmatpush1.msra.mxu0 %v2130
  %2278 = vmatprep.subr.mxu0 %v2137
  %2279 = vmatpush1.msra.mxu0 %v2136
  %2280 = vmatprep.subr.mxu0 %v2143
  %2281 = vmatpush1.msra.mxu0 %v2142
  %2282 = vmatprep.subr.mxu0 %v2149
  %2283 = vmatpush1.msra.mxu0 %v2148
  %2284 = vmatprep.subr.mxu0 0.0
  %2285 = vmatpush1.msra.mxu0 0.0
  %2286 = vmatprep.subr.mxu0 0.0
  %2287 = vmatpush1.msra.mxu0 0.0
  %2288 = vmatprep.subr.mxu0 0.0
  %2289 = vmatpush1.msra.mxu0 0.0
  %2290 = vmatprep.subr.mxu0 0.0
  %2291 = vmatpush1.msra.mxu0 0.0
  %2292 = vmatprep.subr.mxu0 0.0
  %2293 = vmatpush1.msra.mxu0 0.0
  %2294 = vmatprep.subr.mxu0 0.0
  %2295 = vmatpush1.msra.mxu0 0.0
  %2296 = vmatprep.subr.mxu0 0.0
  %2297 = vmatpush1.msra.mxu0 0.0
  %2298 = vmatprep.subr.mxu0 0.0
  %2299 = vmatpush1.msra.mxu0 0.0
  %2300 = vmatprep.subr.mxu0 0.0
  %2301 = vmatpush1.msra.mxu0 0.0
  %2302 = vmatprep.subr.mxu0 0.0
  %2303 = vmatpush1.msra.mxu0 0.0
  %2304 = vmatprep.subr.mxu0 0.0
  %2305 = vmatpush1.msra.mxu0 0.0
  %2306 = vmatprep.subr.mxu0 0.0
  %2307 = vmatpush1.msra.mxu0 0.0
  %2308 = vmatprep.subr.mxu0 0.0
  %2309 = vmatpush1.msra.mxu0 0.0
  %2310 = vmatprep.subr.mxu0 0.0
  %2311 = vmatpush1.msra.mxu0 0.0
  %2312 = vmatprep.mubr.f32.mxu0 %v2166
  %2313 = vmatmul.mubr.f32.gmra.mrb[0].mxu0 %v2040
  %v2314 = vpop.f32.mrb[0].mxu0
  %v2315 = vadd.f32 %v2158, %v2314
  %v2316 = vpop.f32.mrb[0].mxu0
  %v2317 = vadd.f32 %v2158, %v2316
  %2318 = vmatprep.mubr.f32.mxu0 %v2169
  %2319 = vmatmul.mubr.f32.gmra.mrb[0].mxu0 %v2042
  %v2320 = vpop.f32.mrb[0].mxu0
  %v2321 = vadd.f32 %v2163, %v2320
  %v2322 = vpop.f32.mrb[0].mxu0
  %v2323 = vadd.f32 %v2163, %v2322
  %2324 = vdwg.mxu0
  %2325 = vmatprep.subr.mxu0 %v2049
  %2326 = vmatpush1.msra.mxu0 %v2048
  %2327 = vmatprep.subr.mxu0 %v2055
  %2328 = vmatpush1.msra.mxu0 %v2054
  %2329 = vmatprep.subr.mxu0 %v2061
  %2330 = vmatpush1.msra.mxu0 %v2060
  %2331 = vmatprep.subr.mxu0 %v2067
  %2332 = vmatpush1.msra.mxu0 %v2066
  %2333 = vmatprep.subr.mxu0 %v2073
  %2334 = vmatpush1.msra.mxu0 %v2072
  %2335 = vmatprep.subr.mxu0 %v2079
  %2336 = vmatpush1.msra.mxu0 %v2078
  %2337 = vmatprep.subr.mxu0 %v2085
  %2338 = vmatpush1.msra.mxu0 %v2084
  %2339 = vmatprep.subr.mxu0 %v2091
  %2340 = vmatpush1.msra.mxu0 %v2090
  %2341 = vmatprep.subr.mxu0 %v2097
  %2342 = vmatpush1.msra.mxu0 %v2096
  %2343 = vmatprep.subr.mxu0 %v2103
  %2344 = vmatpush1.msra.mxu0 %v2102
  %2345 = vmatprep.subr.mxu0 %v2109
  %2346 = vmatpush1.msra.mxu0 %v2108
  %2347 = vmatprep.subr.mxu0 %v2115
  %2348 = vmatpush1.msra.mxu0 %v2114
  %2349 = vmatprep.subr.mxu0 %v2121
  %2350 = vmatpush1.msra.mxu0 %v2120
  %2351 = vmatprep.subr.mxu0 %v2127
  %2352 = vmatpush1.msra.mxu0 %v2126
  %2353 = vmatprep.subr.mxu0 %v2133
  %2354 = vmatpush1.msra.mxu0 %v2132
  %2355 = vmatprep.subr.mxu0 %v2139
  %2356 = vmatpush1.msra.mxu0 %v2138
  %2357 = vmatprep.subr.mxu0 %v2145
  %2358 = vmatpush1.msra.mxu0 %v2144
  %2359 = vmatprep.subr.mxu0 %v2151
  %2360 = vmatpush1.msra.mxu0 %v2150
  %2361 = vmatprep.subr.mxu0 0.0
  %2362 = vmatpush1.msra.mxu0 0.0
  %2363 = vmatprep.subr.mxu0 0.0
  %2364 = vmatpush1.msra.mxu0 0.0
  %2365 = vmatprep.subr.mxu0 0.0
  %2366 = vmatpush1.msra.mxu0 0.0
  %2367 = vmatprep.subr.mxu0 0.0
  %2368 = vmatpush1.msra.mxu0 0.0
  %2369 = vmatprep.subr.mxu0 0.0
  %2370 = vmatpush1.msra.mxu0 0.0
  %2371 = vmatprep.subr.mxu0 0.0
  %2372 = vmatpush1.msra.mxu0 0.0
  %2373 = vmatprep.subr.mxu0 0.0
  %2374 = vmatpush1.msra.mxu0 0.0
  %2375 = vmatprep.subr.mxu0 0.0
  %2376 = vmatpush1.msra.mxu0 0.0
  %2377 = vmatprep.subr.mxu0 0.0
  %2378 = vmatpush1.msra.mxu0 0.0
  %2379 = vmatprep.subr.mxu0 0.0
  %2380 = vmatpush1.msra.mxu0 0.0
  %2381 = vmatprep.subr.mxu0 0.0
  %2382 = vmatpush1.msra.mxu0 0.0
  %2383 = vmatprep.subr.mxu0 0.0
  %2384 = vmatpush1.msra.mxu0 0.0
  %2385 = vmatprep.subr.mxu0 0.0
  %2386 = vmatpush1.msra.mxu0 0.0
  %2387 = vmatprep.subr.mxu0 0.0
  %2388 = vmatpush1.msra.mxu0 0.0
  %2389 = vmatprep.mubr.f32.mxu0 %v2166
  %2390 = vmatmul.mubr.f32.gmra.mrb[0].mxu0 %v2040
  %v2391 = vpop.f32.mrb[0].mxu0
  %v2392 = vadd.f32 %v2158, %v2391
  %v2393 = vpop.f32.mrb[0].mxu0
  %v2394 = vadd.f32 %v2158, %v2393
  %2395 = vmatprep.mubr.f32.mxu0 %v2169
  %2396 = vmatmul.mubr.f32.gmra.mrb[0].mxu0 %v2042
  %v2397 = vpop.f32.mrb[0].mxu0
  %v2398 = vadd.f32 %v2163, %v2397
  %v2399 = vpop.f32.mrb[0].mxu0
  %v2400 = vadd.f32 %v2163, %v2399
  %2401 = vdwg.mxu0
  %v2402 = vmax.f32 %v2238, 0.0
  %v2403 = vmax.f32 %v2240, 0.0
  %v2404 = vmax.f32 %v2315, 0.0
  %v2405 = vmax.f32 %v2317, 0.0
  %v2406 = vmax.f32 %v2392, 0.0
  %v2407 = vmax.f32 %v2394, 0.0
  %v2408 = vmax.f32 %v2244, 0.0
  %v2409 = vmax.f32 %v2246, 0.0
  %v2410 = vmax.f32 %v2321, 0.0
  %v2411 = vmax.f32 %v2323, 0.0
  %v2412 = vmax.f32 %v2398, 0.0
  %v2413 = vmax.f32 %v2400, 0.0
  %v2414 = vmul.f32 %v2402, %v821
  %v2415 = vmul.f32 %v2403, %v825
  %v2416 = vmul.f32 %v2404, %v829
  %v2417 = vmul.f32 %v2405, %v833
  %v2418 = vmul.f32 %v2406, %v837
  %v2419 = vmul.f32 %v2407, %v841
  %v2420 = vmul.f32 %v2408, %v821
  %v2421 = vmul.f32 %v2409, %v825
  %v2422 = vmul.f32 %v2410, %v829
  %v2423 = vmul.f32 %v2411, %v833
  %v2424 = vmul.f32 %v2412, %v837
  %v2425 = vmul.f32 %v2413, %v841
  %2426 = vrot.lane.b32.xlu0 %v2414, 127
  %v2427 = vpop.permute.xlu0 %2426
  %2428 = vrot.lane.b32.xlu0 %v2420, 127
  %v2429 = vpop.permute.xlu0 %2428
  %2430 = vrot.lane.b32.xlu0 %v2415, 127
  %v2431 = vpop.permute.xlu0 %2430
  %2432 = vrot.lane.b32.xlu0 %v2421, 127
  %v2433 = vpop.permute.xlu0 %2432
  %2434 = vrot.lane.b32.xlu0 %v2416, 127
  %v2435 = vpop.permute.xlu0 %2434
  %2436 = vrot.lane.b32.xlu0 %v2422, 127
  %v2437 = vpop.permute.xlu0 %2436
  %2438 = vrot.lane.b32.xlu0 %v2417, 127
  %v2439 = vpop.permute.xlu0 %2438
  %2440 = vrot.lane.b32.xlu0 %v2423, 127
  %v2441 = vpop.permute.xlu0 %2440
  %2442 = vrot.lane.b32.xlu0 %v2418, 127
  %v2443 = vpop.permute.xlu0 %2442
  %2444 = vrot.lane.b32.xlu0 %v2424, 127
  %v2445 = vpop.permute.xlu0 %2444
  %2446 = vrot.lane.b32.xlu0 %v2419, 127
  %v2447 = vpop.permute.xlu0 %2446
  %2448 = vrot.lane.b32.xlu0 %v2425, 127
  %v2449 = vpop.permute.xlu0 %2448
  %v2450 = vsel %vm271, %v2443, %v2447
  %v2451 = vsel %vm271, %v2445, %v2449
  %v2452 = vsel %vm271, %v2439, %v2443
  %v2453 = vsel %vm271, %v2441, %v2445
  %v2454 = vsel %vm271, %v2435, %v2439
  %v2455 = vsel %vm271, %v2437, %v2441
  %v2456 = vsel %vm271, %v2431, %v2435
  %v2457 = vsel %vm271, %v2433, %v2437
  %v2458 = vsel %vm271, %v2427, %v2431
  %v2459 = vsel %vm271, %v2429, %v2433
  %v2460 = vsel %vm271, %v2447, %v2427
  %v2461 = vsel %vm271, %v2449, %v2429
  %2462 = vrot.lane.b32.xlu0 %v2414, 1
  %v2463 = vpop.permute.xlu0 %2462
  %2464 = vrot.lane.b32.xlu0 %v2420, 1
  %v2465 = vpop.permute.xlu0 %2464
  %2466 = vrot.lane.b32.xlu0 %v2415, 1
  %v2467 = vpop.permute.xlu0 %2466
  %2468 = vrot.lane.b32.xlu0 %v2421, 1
  %v2469 = vpop.permute.xlu0 %2468
  %2470 = vrot.lane.b32.xlu0 %v2416, 1
  %v2471 = vpop.permute.xlu0 %2470
  %2472 = vrot.lane.b32.xlu0 %v2422, 1
  %v2473 = vpop.permute.xlu0 %2472
  %2474 = vrot.lane.b32.xlu0 %v2417, 1
  %v2475 = vpop.permute.xlu0 %2474
  %2476 = vrot.lane.b32.xlu0 %v2423, 1
  %v2477 = vpop.permute.xlu0 %2476
  %2478 = vrot.lane.b32.xlu0 %v2418, 1
  %v2479 = vpop.permute.xlu0 %2478
  %2480 = vrot.lane.b32.xlu0 %v2424, 1
  %v2481 = vpop.permute.xlu0 %2480
  %2482 = vrot.lane.b32.xlu0 %v2419, 1
  %v2483 = vpop.permute.xlu0 %2482
  %2484 = vrot.lane.b32.xlu0 %v2425, 1
  %v2485 = vpop.permute.xlu0 %2484
  %v2486 = vsel %vm210, %v2479, %v2483
  %v2487 = vsel %vm210, %v2481, %v2485
  %v2488 = vsel %vm210, %v2475, %v2479
  %v2489 = vsel %vm210, %v2477, %v2481
  %v2490 = vsel %vm210, %v2471, %v2475
  %v2491 = vsel %vm210, %v2473, %v2477
  %v2492 = vsel %vm210, %v2467, %v2471
  %v2493 = vsel %vm210, %v2469, %v2473
  %v2494 = vsel %vm210, %v2463, %v2467
  %v2495 = vsel %vm210, %v2465, %v2469
  %v2496 = vsel %vm210, %v2483, %v2463
  %v2497 = vsel %vm210, %v2485, %v2465
  %v2498 = vmax.f32 %v2458, %v2496
  %v2499 = vmax.f32 %v2456, %v2494
  %v2500 = vmax.f32 %v2454, %v2492
  %v2501 = vmax.f32 %v2452, %v2490
  %v2502 = vmax.f32 %v2450, %v2488
  %v2503 = vmax.f32 %v2460, %v2486
  %v2504 = vmax.f32 %v2459, %v2497
  %v2505 = vmax.f32 %v2457, %v2495
  %v2506 = vmax.f32 %v2455, %v2493
  %v2507 = vmax.f32 %v2453, %v2491
  %v2508 = vmax.f32 %v2451, %v2489
  %v2509 = vmax.f32 %v2461, %v2487
  %v2510 = vmax.f32 %v2414, %v2498
  %v2511 = vmax.f32 %v2415, %v2499
  %v2512 = vmax.f32 %v2416, %v2500
  %v2513 = vmax.f32 %v2417, %v2501
  %v2514 = vmax.f32 %v2418, %v2502
  %v2515 = vmax.f32 %v2419, %v2503
  %v2516 = vmax.f32 %v2420, %v2504
  %v2517 = vmax.f32 %v2421, %v2505
  %v2518 = vmax.f32 %v2422, %v2506
  %v2519 = vmax.f32 %v2423, %v2507
  %v2520 = vmax.f32 %v2424, %v2508
  %v2521 = vmax.f32 %v2425, %v2509
  %2522 = vrot.lane.b32.xlu0 %v2510, 110
  %v2523 = vpop.permute.xlu0 %2522
  %2524 = vrot.lane.b32.xlu0 %v2516, 110
  %v2525 = vpop.permute.xlu0 %2524
  %2526 = vrot.lane.b32.xlu0 %v2511, 110
  %v2527 = vpop.permute.xlu0 %2526
  %2528 = vrot.lane.b32.xlu0 %v2517, 110
  %v2529 = vpop.permute.xlu0 %2528
  %2530 = vrot.lane.b32.xlu0 %v2512, 110
  %v2531 = vpop.permute.xlu0 %2530
  %2532 = vrot.lane.b32.xlu0 %v2518, 110
  %v2533 = vpop.permute.xlu0 %2532
  %2534 = vrot.lane.b32.xlu0 %v2513, 110
  %v2535 = vpop.permute.xlu0 %2534
  %2536 = vrot.lane.b32.xlu0 %v2519, 110
  %v2537 = vpop.permute.xlu0 %2536
  %2538 = vrot.lane.b32.xlu0 %v2514, 110
  %v2539 = vpop.permute.xlu0 %2538
  %2540 = vrot.lane.b32.xlu0 %v2520, 110
  %v2541 = vpop.permute.xlu0 %2540
  %2542 = vrot.lane.b32.xlu0 %v2515, 110
  %v2543 = vpop.permute.xlu0 %2542
  %2544 = vrot.lane.b32.xlu0 %v2521, 110
  %v2545 = vpop.permute.xlu0 %2544
  %v2546 = vsel %vm369, %v2539, %v2543
  %v2547 = vsel %vm369, %v2541, %v2545
  %v2548 = vsel %vm369, %v2535, %v2539
  %v2549 = vsel %vm369, %v2537, %v2541
  %v2550 = vsel %vm369, %v2531, %v2535
  %v2551 = vsel %vm369, %v2533, %v2537
  %v2552 = vsel %vm369, %v2527, %v2531
  %v2553 = vsel %vm369, %v2529, %v2533
  %v2554 = vsel %vm369, %v2523, %v2527
  %v2555 = vsel %vm369, %v2525, %v2529
  %v2556 = vsel %vm369, %v2543, %v2523
  %v2557 = vsel %vm369, %v2545, %v2525
  %2558 = vrot.lane.b32.xlu0 %v2510, 18
  %v2559 = vpop.permute.xlu0 %2558
  %2560 = vrot.lane.b32.xlu0 %v2516, 18
  %v2561 = vpop.permute.xlu0 %2560
  %2562 = vrot.lane.b32.xlu0 %v2511, 18
  %v2563 = vpop.permute.xlu0 %2562
  %2564 = vrot.lane.b32.xlu0 %v2517, 18
  %v2565 = vpop.permute.xlu0 %2564
  %2566 = vrot.lane.b32.xlu0 %v2512, 18
  %v2567 = vpop.permute.xlu0 %2566
  %2568 = vrot.lane.b32.xlu0 %v2518, 18
  %v2569 = vpop.permute.xlu0 %2568
  %2570 = vrot.lane.b32.xlu0 %v2513, 18
  %v2571 = vpop.permute.xlu0 %2570
  %2572 = vrot.lane.b32.xlu0 %v2519, 18
  %v2573 = vpop.permute.xlu0 %2572
  %2574 = vrot.lane.b32.xlu0 %v2514, 18
  %v2575 = vpop.permute.xlu0 %2574
  %2576 = vrot.lane.b32.xlu0 %v2520, 18
  %v2577 = vpop.permute.xlu0 %2576
  %2578 = vrot.lane.b32.xlu0 %v2515, 18
  %v2579 = vpop.permute.xlu0 %2578
  %2580 = vrot.lane.b32.xlu0 %v2521, 18
  %v2581 = vpop.permute.xlu0 %2580
  %v2582 = vsel %vm112, %v2575, %v2579
  %v2583 = vsel %vm112, %v2577, %v2581
  %v2584 = vsel %vm112, %v2571, %v2575
  %v2585 = vsel %vm112, %v2573, %v2577
  %v2586 = vsel %vm112, %v2567, %v2571
  %v2587 = vsel %vm112, %v2569, %v2573
  %v2588 = vsel %vm112, %v2563, %v2567
  %v2589 = vsel %vm112, %v2565, %v2569
  %v2590 = vsel %vm112, %v2559, %v2563
  %v2591 = vsel %vm112, %v2561, %v2565
  %v2592 = vsel %vm112, %v2579, %v2559
  %v2593 = vsel %vm112, %v2581, %v2561
  %v2594 = vmax.f32 %v2554, %v2592
  %v2595 = vmax.f32 %v2552, %v2590
  %v2596 = vmax.f32 %v2550, %v2588
  %v2597 = vmax.f32 %v2548, %v2586
  %v2598 = vmax.f32 %v2546, %v2584
  %v2599 = vmax.f32 %v2556, %v2582
  %v2600 = vmax.f32 %v2555, %v2593
  %v2601 = vmax.f32 %v2553, %v2591
  %v2602 = vmax.f32 %v2551, %v2589
  %v2603 = vmax.f32 %v2549, %v2587
  %v2604 = vmax.f32 %v2547, %v2585
  %v2605 = vmax.f32 %v2557, %v2583
  %v2606 = vmax.f32 %v2510, %v2594
  %v2607 = vmax.f32 %v2511, %v2595
  %v2608 = vmax.f32 %v2512, %v2596
  %v2609 = vmax.f32 %v2513, %v2597
  %v2610 = vmax.f32 %v2514, %v2598
  %v2611 = vmax.f32 %v2515, %v2599
  %v2612 = vmax.f32 %v2516, %v2600
  %v2613 = vmax.f32 %v2517, %v2601
  %v2614 = vmax.f32 %v2518, %v2602
  %v2615 = vmax.f32 %v2519, %v2603
  %v2616 = vmax.f32 %v2520, %v2604
  %v2617 = vmax.f32 %v2521, %v2605
  %v2618 = vld [vmem:[%s5] sm:$0xff]
  %v2619 = vld [vmem:[%s5 + $0x8] sm:$0xff]
  %v2620 = vld [vmem:[%s5 + $0x10] sm:$0xff]
  %v2621 = vld [vmem:[%s5 + $0x18] sm:$0xff]
  %v2622 = vld [vmem:[%s5 + $0x20] sm:$0xff]
  %v2623 = vld [vmem:[%s5 + $0x28] sm:$0xff]
  %v2624 = vld [vmem:[%s5 + $0x30] sm:$0xff]
  %v2625 = vld [vmem:[%s5 + $0x38] sm:$0xff]
  %v2626 = vld [vmem:[%s5 + $0x40] sm:$0xff]
  %v2627 = vld [vmem:[%s5 + $0x48] sm:$0xff]
  %v2628 = vld [vmem:[%s5 + $0x50] sm:$0xff]
  %v2629 = vld [vmem:[%s5 + $0x58] sm:$0xff]
  %v2630 = vld [vmem:[%s5 + $0x60] sm:$0xff]
  %v2631 = vld [vmem:[%s5 + $0x68] sm:$0xff]
  %v2632 = vld [vmem:[%s5 + $0x70] sm:$0xff]
  %v2633 = vld [vmem:[%s5 + $0x78] sm:$0xff]
  %v2634 = vld [vmem:[%s5 + $0x80] sm:$0xff]
  %v2635 = vld [vmem:[%s5 + $0x88] sm:$0xff]
  %v2636 = vld [vmem:[%s5 + $0x90] sm:$0xff]
  %v2637 = vld [vmem:[%s5 + $0x98] sm:$0xff]
  %v2638 = vld [vmem:[%s5 + $0xa0] sm:$0xff]
  %v2639 = vld [vmem:[%s5 + $0xa8] sm:$0xff]
  %v2640 = vld [vmem:[%s5 + $0xb0] sm:$0xff]
  %v2641 = vld [vmem:[%s5 + $0xb8] sm:$0xff]
  %v2642 = vld [vmem:[%s5 + $0xc0] sm:$0xff]
  %v2643 = vld [vmem:[%s5 + $0xc8] sm:$0xff]
  %v2644 = vld [vmem:[%s5 + $0xd0] sm:$0xff]
  %v2645 = vld [vmem:[%s5 + $0xd8] sm:$0xff]
  %v2646 = vld [vmem:[%s5 + $0xe0] sm:$0xff]
  %v2647 = vld [vmem:[%s5 + $0xe8] sm:$0xff]
  %v2648 = vld [vmem:[%s5 + $0xf0] sm:$0xff]
  %v2649 = vld [vmem:[%s5 + $0xf8] sm:$0xff]
  %v2650 = vld [vmem:[%s5 + $0x100] sm:$0xff]
  %v2651 = vld [vmem:[%s5 + $0x108] sm:$0xff]
  %v2652 = vld [vmem:[%s5 + $0x110] sm:$0xff]
  %v2653 = vld [vmem:[%s5 + $0x118] sm:$0xff]
  %v2654 = vld [vmem:[%s5 + $0x120] sm:$0xff]
  %v2655 = vld [vmem:[%s5 + $0x128] sm:$0xff]
  %v2656 = vld [vmem:[%s5 + $0x130] sm:$0xff]
  %v2657 = vld [vmem:[%s5 + $0x138] sm:$0xff]
  %v2658 = vld [vmem:[%s5 + $0x140] sm:$0xff]
  %v2659 = vld [vmem:[%s5 + $0x148] sm:$0xff]
  %v2660 = vld [vmem:[%s5 + $0x150] sm:$0xff]
  %v2661 = vld [vmem:[%s5 + $0x158] sm:$0xff]
  %v2662 = vld [vmem:[%s5 + $0x160] sm:$0xff]
  %v2663 = vld [vmem:[%s5 + $0x168] sm:$0xff]
  %v2664 = vld [vmem:[%s5 + $0x170] sm:$0xff]
  %v2665 = vld [vmem:[%s5 + $0x178] sm:$0xff]
  %v2666 = vld [vmem:[%s5 + $0x180] sm:$0xff]
  %v2667 = vld [vmem:[%s5 + $0x188] sm:$0xff]
  %v2668 = vld [vmem:[%s5 + $0x190] sm:$0xff]
  %v2669 = vld [vmem:[%s5 + $0x198] sm:$0xff]
  %v2670 = vld [vmem:[%s5 + $0x1a0] sm:$0xff]
  %v2671 = vld [vmem:[%s5 + $0x1a8] sm:$0xff]
  %v2672 = vld [vmem:[%s5 + $0x1b0] sm:$0xff]
  %v2673 = vld [vmem:[%s5 + $0x1b8] sm:$0xff]
  %v2674 = vld [vmem:[%s5 + $0x1c0] sm:$0xff]
  %v2675 = vld [vmem:[%s5 + $0x1c8] sm:$0xff]
  %v2676 = vld [vmem:[%s5 + $0x1d0] sm:$0xff]
  %v2677 = vld [vmem:[%s5 + $0x1d8] sm:$0xff]
  %v2678 = vld [vmem:[%s5 + $0x1e0] sm:$0xff]
  %v2679 = vld [vmem:[%s5 + $0x1e8] sm:$0xff]
  %v2680 = vld [vmem:[%s5 + $0x1f0] sm:$0xff]
  %v2681 = vld [vmem:[%s5 + $0x1f8] sm:$0xff]
  %v2682 = vld [vmem:[%s5 + $0x200] sm:$0xff]
  %v2683 = vld [vmem:[%s5 + $0x208] sm:$0xff]
  %v2684 = vld [vmem:[%s5 + $0x210] sm:$0xff]
  %v2685 = vld [vmem:[%s5 + $0x218] sm:$0xff]
  %v2686 = vld [vmem:[%s5 + $0x220] sm:$0xff]
  %v2687 = vld [vmem:[%s5 + $0x228] sm:$0xff]
  %v2688 = vld [vmem:[%s5 + $0x230] sm:$0xff]
  %v2689 = vld [vmem:[%s5 + $0x238] sm:$0xff]
  %v2690 = vld [vmem:[%s5 + $0x240] sm:$0xff]
  %v2691 = vld [vmem:[%s5 + $0x248] sm:$0xff]
  %v2692 = vld [vmem:[%s5 + $0x250] sm:$0xff]
  %v2693 = vld [vmem:[%s5 + $0x258] sm:$0xff]
  %v2694 = vld [vmem:[%s5 + $0x260] sm:$0xff]
  %v2695 = vld [vmem:[%s5 + $0x268] sm:$0xff]
  %v2696 = vld [vmem:[%s5 + $0x270] sm:$0xff]
  %v2697 = vld [vmem:[%s5 + $0x278] sm:$0xff]
  %v2698 = vld [vmem:[%s5 + $0x280] sm:$0xff]
  %v2699 = vld [vmem:[%s5 + $0x288] sm:$0xff]
  %v2700 = vld [vmem:[%s5 + $0x290] sm:$0xff]
  %v2701 = vld [vmem:[%s5 + $0x298] sm:$0xff]
  %v2702 = vld [vmem:[%s5 + $0x2a0] sm:$0xff]
  %v2703 = vld [vmem:[%s5 + $0x2a8] sm:$0xff]
  %v2704 = vld [vmem:[%s5 + $0x2b0] sm:$0xff]
  %v2705 = vld [vmem:[%s5 + $0x2b8] sm:$0xff]
  %v2706 = vld [vmem:[%s5 + $0x2c0] sm:$0xff]
  %v2707 = vld [vmem:[%s5 + $0x2c8] sm:$0xff]
  %v2708 = vld [vmem:[%s5 + $0x2d0] sm:$0xff]
  %v2709 = vld [vmem:[%s5 + $0x2d8] sm:$0xff]
  %v2710 = vld [vmem:[%s5 + $0x2e0] sm:$0xff]
  %v2711 = vld [vmem:[%s5 + $0x2e8] sm:$0xff]
  %v2712 = vld [vmem:[%s5 + $0x2f0] sm:$0xff]
  %v2713 = vld [vmem:[%s5 + $0x2f8] sm:$0xff]
  %v2714 = vld [vmem:[%s5 + $0x300] sm:$0xff]
  %v2715 = vld [vmem:[%s5 + $0x308] sm:$0xff]
  %v2716 = vld [vmem:[%s5 + $0x310] sm:$0xff]
  %v2717 = vld [vmem:[%s5 + $0x318] sm:$0xff]
  %v2718 = vld [vmem:[%s5 + $0x320] sm:$0xff]
  %v2719 = vld [vmem:[%s5 + $0x328] sm:$0xff]
  %v2720 = vld [vmem:[%s5 + $0x330] sm:$0xff]
  %v2721 = vld [vmem:[%s5 + $0x338] sm:$0xff]
  %v2722 = vld [vmem:[%s5 + $0x340] sm:$0xff]
  %v2723 = vld [vmem:[%s5 + $0x348] sm:$0xff]
  %v2724 = vld [vmem:[%s5 + $0x350] sm:$0xff]
  %v2725 = vld [vmem:[%s5 + $0x358] sm:$0xff]
  %v2726 = vld [vmem:[%s5 + $0x360] sm:$0xff]
  %v2727 = vld [vmem:[%s5 + $0x368] sm:$0xff]
  %v2728 = vld [vmem:[%s5 + $0x370] sm:$0xff]
  %v2729 = vld [vmem:[%s5 + $0x378] sm:$0xff]
  %v2730 = vld [vmem:[%s5 + $0x380] sm:$0xff]
  %v2731 = vld [vmem:[%s5 + $0x388] sm:$0xff]
  %v2732 = vld [vmem:[%s5 + $0x390] sm:$0xff]
  %v2733 = vld [vmem:[%s5 + $0x398] sm:$0xff]
  %v2734 = vld [vmem:[%s5 + $0x3a0] sm:$0xff]
  %v2735 = vld [vmem:[%s5 + $0x3a8] sm:$0xff]
  %v2736 = vld [vmem:[%s5 + $0x3b0] sm:$0xff]
  %v2737 = vld [vmem:[%s5 + $0x3b8] sm:$0xff]
  %v2738 = vld [vmem:[%s5 + $0x3c0] sm:$0xff]
  %v2739 = vld [vmem:[%s5 + $0x3c8] sm:$0xff]
  %v2740 = vld [vmem:[%s5 + $0x3d0] sm:$0xff]
  %v2741 = vld [vmem:[%s5 + $0x3d8] sm:$0xff]
  %v2742 = vld [vmem:[%s5 + $0x3e0] sm:$0xff]
  %v2743 = vld [vmem:[%s5 + $0x3e8] sm:$0xff]
  %v2744 = vld [vmem:[%s5 + $0x3f0] sm:$0xff]
  %v2745 = vld [vmem:[%s5 + $0x3f8] sm:$0xff]
  %v2746 = vld [vmem:[%s5 + $0x400] sm:$0xff]
  %v2747 = vld [vmem:[%s5 + $0x408] sm:$0xff]
  %v2748 = vld [vmem:[%s5 + $0x410] sm:$0xff]
  %v2749 = vld [vmem:[%s5 + $0x418] sm:$0xff]
  %v2750 = vld [vmem:[%s5 + $0x420] sm:$0xff]
  %v2751 = vld [vmem:[%s5 + $0x428] sm:$0xff]
  %v2752 = vld [vmem:[%s5 + $0x430] sm:$0xff]
  %v2753 = vld [vmem:[%s5 + $0x438] sm:$0xff]
  %v2754 = vld [vmem:[%s5 + $0x440] sm:$0xff]
  %v2755 = vld [vmem:[%s5 + $0x448] sm:$0xff]
  %v2756 = vld [vmem:[%s5 + $0x450] sm:$0xff]
  %v2757 = vld [vmem:[%s5 + $0x458] sm:$0xff]
  %v2758 = vld [vmem:[%s5 + $0x460] sm:$0xff]
  %v2759 = vld [vmem:[%s5 + $0x468] sm:$0xff]
  %v2760 = vld [vmem:[%s5 + $0x470] sm:$0xff]
  %v2761 = vld [vmem:[%s5 + $0x478] sm:$0xff]
  %v2762 = vld [vmem:[%s5 + $0x480] sm:$0xff]
  %v2763 = vld [vmem:[%s5 + $0x488] sm:$0xff]
  %v2764 = vld [vmem:[%s5 + $0x490] sm:$0xff]
  %v2765 = vld [vmem:[%s5 + $0x498] sm:$0xff]
  %v2766 = vld [vmem:[%s5 + $0x4a0] sm:$0xff]
  %v2767 = vld [vmem:[%s5 + $0x4a8] sm:$0xff]
  %v2768 = vld [vmem:[%s5 + $0x4b0] sm:$0xff]
  %v2769 = vld [vmem:[%s5 + $0x4b8] sm:$0xff]
  %v2770 = vld [vmem:[%s5 + $0x4c0] sm:$0xff]
  %v2771 = vld [vmem:[%s5 + $0x4c8] sm:$0xff]
  %v2772 = vld [vmem:[%s5 + $0x4d0] sm:$0xff]
  %v2773 = vld [vmem:[%s5 + $0x4d8] sm:$0xff]
  %v2774 = vld [vmem:[%s5 + $0x4e0] sm:$0xff]
  %v2775 = vld [vmem:[%s5 + $0x4e8] sm:$0xff]
  %v2776 = vld [vmem:[%s5 + $0x4f0] sm:$0xff]
  %v2777 = vld [vmem:[%s5 + $0x4f8] sm:$0xff]
  %v2778 = vld [vmem:[%s5 + $0x500] sm:$0xff]
  %v2779 = vld [vmem:[%s5 + $0x508] sm:$0xff]
  %v2780 = vld [vmem:[%s5 + $0x510] sm:$0xff]
  %v2781 = vld [vmem:[%s5 + $0x518] sm:$0xff]
  %v2782 = vld [vmem:[%s5 + $0x520] sm:$0xff]
  %v2783 = vld [vmem:[%s5 + $0x528] sm:$0xff]
  %v2784 = vld [vmem:[%s5 + $0x530] sm:$0xff]
  %v2785 = vld [vmem:[%s5 + $0x538] sm:$0xff]
  %v2786 = vld [vmem:[%s5 + $0x540] sm:$0xff]
  %v2787 = vld [vmem:[%s5 + $0x548] sm:$0xff]
  %v2788 = vld [vmem:[%s5 + $0x550] sm:$0xff]
  %v2789 = vld [vmem:[%s5 + $0x558] sm:$0xff]
  %v2790 = vld [vmem:[%s5 + $0x560] sm:$0xff]
  %v2791 = vld [vmem:[%s5 + $0x568] sm:$0xff]
  %v2792 = vld [vmem:[%s5 + $0x570] sm:$0xff]
  %v2793 = vld [vmem:[%s5 + $0x578] sm:$0xff]
  %v2794 = vld [vmem:[%s5 + $0x580] sm:$0xff]
  %v2795 = vld [vmem:[%s5 + $0x588] sm:$0xff]
  %v2796 = vld [vmem:[%s5 + $0x590] sm:$0xff]
  %v2797 = vld [vmem:[%s5 + $0x598] sm:$0xff]
  %v2798 = vld [vmem:[%s5 + $0x5a0] sm:$0xff]
  %v2799 = vld [vmem:[%s5 + $0x5a8] sm:$0xff]
  %v2800 = vld [vmem:[%s5 + $0x5b0] sm:$0xff]
  %v2801 = vld [vmem:[%s5 + $0x5b8] sm:$0xff]
  %v2802 = vld [vmem:[%s5 + $0x5c0] sm:$0xff]
  %v2803 = vld [vmem:[%s5 + $0x5c8] sm:$0xff]
  %v2804 = vld [vmem:[%s5 + $0x5d0] sm:$0xff]
  %v2805 = vld [vmem:[%s5 + $0x5d8] sm:$0xff]
  %v2806 = vld [vmem:[%s5 + $0x5e0] sm:$0xff]
  %v2807 = vld [vmem:[%s5 + $0x5e8] sm:$0xff]
  %v2808 = vld [vmem:[%s5 + $0x5f0] sm:$0xff]
  %v2809 = vld [vmem:[%s5 + $0x5f8] sm:$0xff]
  %2810 = vmatprep.subr.mxu0 %v2619
  %2811 = vmatpush1.msra.mxu0 %v2618
  %2812 = vmatprep.subr.mxu0 %v2621
  %2813 = vmatpush1.msra.mxu0 %v2620
  %2814 = vmatprep.subr.mxu0 %v2623
  %2815 = vmatpush1.msra.mxu0 %v2622
  %2816 = vmatprep.subr.mxu0 %v2625
  %2817 = vmatpush1.msra.mxu0 %v2624
  %2818 = vmatprep.subr.mxu0 %v2627
  %2819 = vmatpush1.msra.mxu0 %v2626
  %2820 = vmatprep.subr.mxu0 %v2629
  %2821 = vmatpush1.msra.mxu0 %v2628
  %2822 = vmatprep.subr.mxu0 %v2631
  %2823 = vmatpush1.msra.mxu0 %v2630
  %2824 = vmatprep.subr.mxu0 %v2633
  %2825 = vmatpush1.msra.mxu0 %v2632
  %2826 = vmatprep.subr.mxu0 %v2635
  %2827 = vmatpush1.msra.mxu0 %v2634
  %2828 = vmatprep.subr.mxu0 %v2637
  %2829 = vmatpush1.msra.mxu0 %v2636
  %2830 = vmatprep.subr.mxu0 %v2639
  %2831 = vmatpush1.msra.mxu0 %v2638
  %2832 = vmatprep.subr.mxu0 %v2641
  %2833 = vmatpush1.msra.mxu0 %v2640
  %2834 = vmatprep.subr.mxu0 %v2643
  %2835 = vmatpush1.msra.mxu0 %v2642
  %2836 = vmatprep.subr.mxu0 %v2645
  %2837 = vmatpush1.msra.mxu0 %v2644
  %2838 = vmatprep.subr.mxu0 %v2647
  %2839 = vmatpush1.msra.mxu0 %v2646
  %2840 = vmatprep.subr.mxu0 %v2649
  %2841 = vmatpush1.msra.mxu0 %v2648
  %2842 = vmatprep.subr.mxu0 %v2651
  %2843 = vmatpush1.msra.mxu0 %v2650
  %2844 = vmatprep.subr.mxu0 %v2653
  %2845 = vmatpush1.msra.mxu0 %v2652
  %2846 = vmatprep.subr.mxu0 %v2655
  %2847 = vmatpush1.msra.mxu0 %v2654
  %2848 = vmatprep.subr.mxu0 %v2657
  %2849 = vmatpush1.msra.mxu0 %v2656
  %2850 = vmatprep.subr.mxu0 %v2659
  %2851 = vmatpush1.msra.mxu0 %v2658
  %2852 = vmatprep.subr.mxu0 %v2661
  %2853 = vmatpush1.msra.mxu0 %v2660
  %2854 = vmatprep.subr.mxu0 %v2663
  %2855 = vmatpush1.msra.mxu0 %v2662
  %2856 = vmatprep.subr.mxu0 %v2665
  %2857 = vmatpush1.msra.mxu0 %v2664
  %2858 = vmatprep.subr.mxu0 %v2667
  %2859 = vmatpush1.msra.mxu0 %v2666
  %2860 = vmatprep.subr.mxu0 %v2669
  %2861 = vmatpush1.msra.mxu0 %v2668
  %2862 = vmatprep.subr.mxu0 %v2671
  %2863 = vmatpush1.msra.mxu0 %v2670
  %2864 = vmatprep.subr.mxu0 %v2673
  %2865 = vmatpush1.msra.mxu0 %v2672
  %2866 = vmatprep.subr.mxu0 %v2675
  %2867 = vmatpush1.msra.mxu0 %v2674
  %2868 = vmatprep.subr.mxu0 %v2677
  %2869 = vmatpush1.msra.mxu0 %v2676
  %2870 = vmatprep.subr.mxu0 %v2679
  %2871 = vmatpush1.msra.mxu0 %v2678
  %2872 = vmatprep.subr.mxu0 %v2681
  %2873 = vmatpush1.msra.mxu0 %v2680
  %2874 = vmatprep.mubr.f32.mxu0 %v2607
  %2875 = vmatmul.mubr.f32.gmra.mrb[0].mxu0 %v2606
  %v2876 = vpop.f32.mrb[0].mxu0
  %v2877 = vadd.f32 0.0, %v2876
  %v2878 = vpop.f32.mrb[0].mxu0
  %v2879 = vadd.f32 0.0, %v2878
  %2880 = vmatprep.mubr.f32.mxu0 %v2613
  %2881 = vmatmul.mubr.f32.gmra.mrb[0].mxu0 %v2612
  %v2882 = vpop.f32.mrb[0].mxu0
  %v2883 = vadd.f32 0.0, %v2882
  %v2884 = vpop.f32.mrb[0].mxu0
  %v2885 = vadd.f32 0.0, %v2884
  %2886 = vdwg.mxu0
  %2887 = vmatprep.subr.mxu0 %v2683
  %2888 = vmatpush1.msra.mxu0 %v2682
  %2889 = vmatprep.subr.mxu0 %v2685
  %2890 = vmatpush1.msra.mxu0 %v2684
  %2891 = vmatprep.subr.mxu0 %v2687
  %2892 = vmatpush1.msra.mxu0 %v2686
  %2893 = vmatprep.subr.mxu0 %v2689
  %2894 = vmatpush1.msra.mxu0 %v2688
  %2895 = vmatprep.subr.mxu0 %v2691
  %2896 = vmatpush1.msra.mxu0 %v2690
  %2897 = vmatprep.subr.mxu0 %v2693
  %2898 = vmatpush1.msra.mxu0 %v2692
  %2899 = vmatprep.subr.mxu0 %v2695
  %2900 = vmatpush1.msra.mxu0 %v2694
  %2901 = vmatprep.subr.mxu0 %v2697
  %2902 = vmatpush1.msra.mxu0 %v2696
  %2903 = vmatprep.subr.mxu0 %v2699
  %2904 = vmatpush1.msra.mxu0 %v2698
  %2905 = vmatprep.subr.mxu0 %v2701
  %2906 = vmatpush1.msra.mxu0 %v2700
  %2907 = vmatprep.subr.mxu0 %v2703
  %2908 = vmatpush1.msra.mxu0 %v2702
  %2909 = vmatprep.subr.mxu0 %v2705
  %2910 = vmatpush1.msra.mxu0 %v2704
  %2911 = vmatprep.subr.mxu0 %v2707
  %2912 = vmatpush1.msra.mxu0 %v2706
  %2913 = vmatprep.subr.mxu0 %v2709
  %2914 = vmatpush1.msra.mxu0 %v2708
  %2915 = vmatprep.subr.mxu0 %v2711
  %2916 = vmatpush1.msra.mxu0 %v2710
  %2917 = vmatprep.subr.mxu0 %v2713
  %2918 = vmatpush1.msra.mxu0 %v2712
  %2919 = vmatprep.subr.mxu0 %v2715
  %2920 = vmatpush1.msra.mxu0 %v2714
  %2921 = vmatprep.subr.mxu0 %v2717
  %2922 = vmatpush1.msra.mxu0 %v2716
  %2923 = vmatprep.subr.mxu0 %v2719
  %2924 = vmatpush1.msra.mxu0 %v2718
  %2925 = vmatprep.subr.mxu0 %v2721
  %2926 = vmatpush1.msra.mxu0 %v2720
  %2927 = vmatprep.subr.mxu0 %v2723
  %2928 = vmatpush1.msra.mxu0 %v2722
  %2929 = vmatprep.subr.mxu0 %v2725
  %2930 = vmatpush1.msra.mxu0 %v2724
  %2931 = vmatprep.subr.mxu0 %v2727
  %2932 = vmatpush1.msra.mxu0 %v2726
  %2933 = vmatprep.subr.mxu0 %v2729
  %2934 = vmatpush1.msra.mxu0 %v2728
  %2935 = vmatprep.subr.mxu0 %v2731
  %2936 = vmatpush1.msra.mxu0 %v2730
  %2937 = vmatprep.subr.mxu0 %v2733
  %2938 = vmatpush1.msra.mxu0 %v2732
  %2939 = vmatprep.subr.mxu0 %v2735
  %2940 = vmatpush1.msra.mxu0 %v2734
  %2941 = vmatprep.subr.mxu0 %v2737
  %2942 = vmatpush1.msra.mxu0 %v2736
  %2943 = vmatprep.subr.mxu0 %v2739
  %2944 = vmatpush1.msra.mxu0 %v2738
  %2945 = vmatprep.subr.mxu0 %v2741
  %2946 = vmatpush1.msra.mxu0 %v2740
  %2947 = vmatprep.subr.mxu0 %v2743
  %2948 = vmatpush1.msra.mxu0 %v2742
  %2949 = vmatprep.subr.mxu0 %v2745
  %2950 = vmatpush1.msra.mxu0 %v2744
  %2951 = vmatprep.mubr.f32.mxu0 %v2609
  %2952 = vmatmul.mubr.f32.gmra.mrb[0].mxu0 %v2608
  %v2953 = vpop.f32.mrb[0].mxu0
  %v2954 = vadd.f32 %v2877, %v2953
  %v2955 = vpop.f32.mrb[0].mxu0
  %v2956 = vadd.f32 %v2879, %v2955
  %2957 = vmatprep.mubr.f32.mxu0 %v2615
  %2958 = vmatmul.mubr.f32.gmra.mrb[0].mxu0 %v2614
  %v2959 = vpop.f32.mrb[0].mxu0
  %v2960 = vadd.f32 %v2883, %v2959
  %v2961 = vpop.f32.mrb[0].mxu0
  %v2962 = vadd.f32 %v2885, %v2961
  %2963 = vdwg.mxu0
  %2964 = vmatprep.subr.mxu0 %v2747
  %2965 = vmatpush1.msra.mxu0 %v2746
  %2966 = vmatprep.subr.mxu0 %v2749
  %2967 = vmatpush1.msra.mxu0 %v2748
  %2968 = vmatprep.subr.mxu0 %v2751
  %2969 = vmatpush1.msra.mxu0 %v2750
  %2970 = vmatprep.subr.mxu0 %v2753
  %2971 = vmatpush1.msra.mxu0 %v2752
  %2972 = vmatprep.subr.mxu0 %v2755
  %2973 = vmatpush1.msra.mxu0 %v2754
  %2974 = vmatprep.subr.mxu0 %v2757
  %2975 = vmatpush1.msra.mxu0 %v2756
  %2976 = vmatprep.subr.mxu0 %v2759
  %2977 = vmatpush1.msra.mxu0 %v2758
  %2978 = vmatprep.subr.mxu0 %v2761
  %2979 = vmatpush1.msra.mxu0 %v2760
  %2980 = vmatprep.subr.mxu0 %v2763
  %2981 = vmatpush1.msra.mxu0 %v2762
  %2982 = vmatprep.subr.mxu0 %v2765
  %2983 = vmatpush1.msra.mxu0 %v2764
  %2984 = vmatprep.subr.mxu0 %v2767
  %2985 = vmatpush1.msra.mxu0 %v2766
  %2986 = vmatprep.subr.mxu0 %v2769
  %2987 = vmatpush1.msra.mxu0 %v2768
  %2988 = vmatprep.subr.mxu0 %v2771
  %2989 = vmatpush1.msra.mxu0 %v2770
  %2990 = vmatprep.subr.mxu0 %v2773
  %2991 = vmatpush1.msra.mxu0 %v2772
  %2992 = vmatprep.subr.mxu0 %v2775
  %2993 = vmatpush1.msra.mxu0 %v2774
  %2994 = vmatprep.subr.mxu0 %v2777
  %2995 = vmatpush1.msra.mxu0 %v2776
  %2996 = vmatprep.subr.mxu0 %v2779
  %2997 = vmatpush1.msra.mxu0 %v2778
  %2998 = vmatprep.subr.mxu0 %v2781
  %2999 = vmatpush1.msra.mxu0 %v2780
  %3000 = vmatprep.subr.mxu0 %v2783
  %3001 = vmatpush1.msra.mxu0 %v2782
  %3002 = vmatprep.subr.mxu0 %v2785
  %3003 = vmatpush1.msra.mxu0 %v2784
  %3004 = vmatprep.subr.mxu0 %v2787
  %3005 = vmatpush1.msra.mxu0 %v2786
  %3006 = vmatprep.subr.mxu0 %v2789
  %3007 = vmatpush1.msra.mxu0 %v2788
  %3008 = vmatprep.subr.mxu0 %v2791
  %3009 = vmatpush1.msra.mxu0 %v2790
  %3010 = vmatprep.subr.mxu0 %v2793
  %3011 = vmatpush1.msra.mxu0 %v2792
  %3012 = vmatprep.subr.mxu0 %v2795
  %3013 = vmatpush1.msra.mxu0 %v2794
  %3014 = vmatprep.subr.mxu0 %v2797
  %3015 = vmatpush1.msra.mxu0 %v2796
  %3016 = vmatprep.subr.mxu0 %v2799
  %3017 = vmatpush1.msra.mxu0 %v2798
  %3018 = vmatprep.subr.mxu0 %v2801
  %3019 = vmatpush1.msra.mxu0 %v2800
  %3020 = vmatprep.subr.mxu0 %v2803
  %3021 = vmatpush1.msra.mxu0 %v2802
  %3022 = vmatprep.subr.mxu0 %v2805
  %3023 = vmatpush1.msra.mxu0 %v2804
  %3024 = vmatprep.subr.mxu0 %v2807
  %3025 = vmatpush1.msra.mxu0 %v2806
  %3026 = vmatprep.subr.mxu0 %v2809
  %3027 = vmatpush1.msra.mxu0 %v2808
  %3028 = vmatprep.mubr.f32.mxu0 %v2611
  %3029 = vmatmul.mubr.f32.gmra.mrb[0].mxu0 %v2610
  %v3030 = vpop.f32.mrb[0].mxu0
  %v3031 = vadd.f32 %v2954, %v3030
  %v3032 = vpop.f32.mrb[0].mxu0
  %v3033 = vadd.f32 %v2956, %v3032
  %3034 = vmatprep.mubr.f32.mxu0 %v2617
  %3035 = vmatmul.mubr.f32.gmra.mrb[0].mxu0 %v2616
  %v3036 = vpop.f32.mrb[0].mxu0
  %v3037 = vadd.f32 %v2960, %v3036
  %v3038 = vpop.f32.mrb[0].mxu0
  %v3039 = vadd.f32 %v2962, %v3038
  %3040 = vdwg.mxu0
  %3041 = vrot.lane.b32.xlu0 %v3031, 11
  %v3042 = vpop.permute.xlu0 %3041
  %3043 = vrot.lane.b32.xlu0 %v3037, 11
  %v3044 = vpop.permute.xlu0 %3043
  %3045 = vrot.lane.b32.xlu0 %v3033, 11
  %v3046 = vpop.permute.xlu0 %3045
  %3047 = vrot.lane.b32.xlu0 %v3039, 11
  %v3048 = vpop.permute.xlu0 %3047
  %vm3049 = vcmp.lt.s32.totalorder %v62, 11
  %v3050 = vsel %vm3049, %v3042, %v3046
  %v3051 = vsel %vm3049, %v3044, %v3048
  %v3052 = vsel %vm3049, %v3046, %v3042
  %v3053 = vsel %vm3049, %v3048, %v3044
  %3054 = vst [vmem:[#allocation3] sm:$0xff] %v3052
  %3055 = vst [vmem:[#allocation3 + $0x8] sm:$0xff] %v3050
  %3056 = vst [vmem:[#allocation3 + $0x10] sm:$0xff] %v3053
  %3057 = vst [vmem:[#allocation3 + $0x18] sm:$0xff] %v3051
  %3058 = vrot.lane.b32.xlu0 %v3031, 10
  %v3059 = vpop.permute.xlu0 %3058
  %3060 = vrot.lane.b32.xlu0 %v3037, 10
  %v3061 = vpop.permute.xlu0 %3060
  %3062 = vrot.lane.b32.xlu0 %v3033, 10
  %v3063 = vpop.permute.xlu0 %3062
  %3064 = vrot.lane.b32.xlu0 %v3039, 10
  %v3065 = vpop.permute.xlu0 %3064
  %vm3066 = vcmp.lt.s32.totalorder %v62, 10
  %v3067 = vsel %vm3066, %v3059, %v3063
  %v3068 = vsel %vm3066, %v3061, %v3065
  %v3069 = vsel %vm3066, %v3063, %v3059
  %v3070 = vsel %vm3066, %v3065, %v3061
  %3071 = vst [vmem:[#allocation3 + $0x20] sm:$0xff] %v3069
  %3072 = vst [vmem:[#allocation3 + $0x28] sm:$0xff] %v3067
  %3073 = vst [vmem:[#allocation3 + $0x30] sm:$0xff] %v3070
  %3074 = vst [vmem:[#allocation3 + $0x38] sm:$0xff] %v3068
  %3075 = vrot.lane.b32.xlu0 %v3031, 9
  %v3076 = vpop.permute.xlu0 %3075
  %3077 = vrot.lane.b32.xlu0 %v3037, 9
  %v3078 = vpop.permute.xlu0 %3077
  %3079 = vrot.lane.b32.xlu0 %v3033, 9
  %v3080 = vpop.permute.xlu0 %3079
  %3081 = vrot.lane.b32.xlu0 %v3039, 9
  %v3082 = vpop.permute.xlu0 %3081
  %vm3083 = vcmp.lt.s32.totalorder %v62, 9
  %v3084 = vsel %vm3083, %v3076, %v3080
  %v3085 = vsel %vm3083, %v3078, %v3082
  %v3086 = vsel %vm3083, %v3080, %v3076
  %v3087 = vsel %vm3083, %v3082, %v3078
  %3088 = vst [vmem:[#allocation3 + $0x40] sm:$0xff] %v3086
  %3089 = vst [vmem:[#allocation3 + $0x48] sm:$0xff] %v3084
  %3090 = vst [vmem:[#allocation3 + $0x50] sm:$0xff] %v3087
  %3091 = vst [vmem:[#allocation3 + $0x58] sm:$0xff] %v3085
  %3092 = vrot.lane.b32.xlu0 %v3031, 1
  %v3093 = vpop.permute.xlu0 %3092
  %3094 = vrot.lane.b32.xlu0 %v3037, 1
  %v3095 = vpop.permute.xlu0 %3094
  %3096 = vrot.lane.b32.xlu0 %v3033, 1
  %v3097 = vpop.permute.xlu0 %3096
  %3098 = vrot.lane.b32.xlu0 %v3039, 1
  %v3099 = vpop.permute.xlu0 %3098
  %v3100 = vsel %vm210, %v3093, %v3097
  %v3101 = vsel %vm210, %v3095, %v3099
  %v3102 = vsel %vm210, %v3097, %v3093
  %v3103 = vsel %vm210, %v3099, %v3095
  %3104 = vst [vmem:[#allocation3 + $0x60] sm:$0xff] %v3102
  %3105 = vst [vmem:[#allocation3 + $0x68] sm:$0xff] %v3100
  %3106 = vst [vmem:[#allocation3 + $0x70] sm:$0xff] %v3103
  %3107 = vst [vmem:[#allocation3 + $0x78] sm:$0xff] %v3101
  %3108 = vst [vmem:[#allocation3 + $0x80] sm:$0xff] %v3031
  %3109 = vst [vmem:[#allocation3 + $0x88] sm:$0xff] %v3033
  %3110 = vst [vmem:[#allocation3 + $0x90] sm:$0xff] %v3037
  %3111 = vst [vmem:[#allocation3 + $0x98] sm:$0xff] %v3039
  %3112 = vrot.lane.b32.xlu0 %v3031, 127
  %v3113 = vpop.permute.xlu0 %3112
  %3114 = vrot.lane.b32.xlu0 %v3037, 127
  %v3115 = vpop.permute.xlu0 %3114
  %3116 = vrot.lane.b32.xlu0 %v3033, 127
  %v3117 = vpop.permute.xlu0 %3116
  %3118 = vrot.lane.b32.xlu0 %v3039, 127
  %v3119 = vpop.permute.xlu0 %3118
  %v3120 = vsel %vm271, %v3113, %v3117
  %v3121 = vsel %vm271, %v3115, %v3119
  %v3122 = vsel %vm271, %v3117, %v3113
  %v3123 = vsel %vm271, %v3119, %v3115
  %3124 = vst [vmem:[#allocation3 + $0xa0] sm:$0xff] %v3120
  %3125 = vst [vmem:[#allocation3 + $0xa8] sm:$0xff] %v3122
  %3126 = vst [vmem:[#allocation3 + $0xb0] sm:$0xff] %v3121
  %3127 = vst [vmem:[#allocation3 + $0xb8] sm:$0xff] %v3123
  %3128 = vrot.lane.b32.xlu0 %v3031, 119
  %v3129 = vpop.permute.xlu0 %3128
  %3130 = vrot.lane.b32.xlu0 %v3037, 119
  %v3131 = vpop.permute.xlu0 %3130
  %3132 = vrot.lane.b32.xlu0 %v3033, 119
  %v3133 = vpop.permute.xlu0 %3132
  %3134 = vrot.lane.b32.xlu0 %v3039, 119
  %v3135 = vpop.permute.xlu0 %3134
  %vm3136 = vcmp.lt.s32.totalorder %v62, 119
  %v3137 = vsel %vm3136, %v3129, %v3133
  %v3138 = vsel %vm3136, %v3131, %v3135
  %v3139 = vsel %vm3136, %v3133, %v3129
  %v3140 = vsel %vm3136, %v3135, %v3131
  %3141 = vst [vmem:[#allocation3 + $0xc0] sm:$0xff] %v3137
  %3142 = vst [vmem:[#allocation3 + $0xc8] sm:$0xff] %v3139
  %3143 = vst [vmem:[#allocation3 + $0xd0] sm:$0xff] %v3138
  %3144 = vst [vmem:[#allocation3 + $0xd8] sm:$0xff] %v3140
  %3145 = vrot.lane.b32.xlu0 %v3031, 118
  %v3146 = vpop.permute.xlu0 %3145
  %3147 = vrot.lane.b32.xlu0 %v3037, 118
  %v3148 = vpop.permute.xlu0 %3147
  %3149 = vrot.lane.b32.xlu0 %v3033, 118
  %v3150 = vpop.permute.xlu0 %3149
  %3151 = vrot.lane.b32.xlu0 %v3039, 118
  %v3152 = vpop.permute.xlu0 %3151
  %vm3153 = vcmp.lt.s32.totalorder %v62, 118
  %v3154 = vsel %vm3153, %v3146, %v3150
  %v3155 = vsel %vm3153, %v3148, %v3152
  %v3156 = vsel %vm3153, %v3150, %v3146
  %v3157 = vsel %vm3153, %v3152, %v3148
  %3158 = vst [vmem:[#allocation3 + $0xe0] sm:$0xff] %v3154
  %3159 = vst [vmem:[#allocation3 + $0xe8] sm:$0xff] %v3156
  %3160 = vst [vmem:[#allocation3 + $0xf0] sm:$0xff] %v3155
  %3161 = vst [vmem:[#allocation3 + $0xf8] sm:$0xff] %v3157
  %3162 = vrot.lane.b32.xlu0 %v3031, 117
  %v3163 = vpop.permute.xlu0 %3162
  %3164 = vrot.lane.b32.xlu0 %v3037, 117
  %v3165 = vpop.permute.xlu0 %3164
  %3166 = vrot.lane.b32.xlu0 %v3033, 117
  %v3167 = vpop.permute.xlu0 %3166
  %3168 = vrot.lane.b32.xlu0 %v3039, 117
  %v3169 = vpop.permute.xlu0 %3168
  %vm3170 = vcmp.lt.s32.totalorder %v62, 117
  %v3171 = vsel %vm3170, %v3163, %v3167
  %v3172 = vsel %vm3170, %v3165, %v3169
  %v3173 = vsel %vm3170, %v3167, %v3163
  %v3174 = vsel %vm3170, %v3169, %v3165
  %3175 = vst [vmem:[#allocation3 + $0x100] sm:$0xff] %v3171
  %3176 = vst [vmem:[#allocation3 + $0x108] sm:$0xff] %v3173
  %3177 = vst [vmem:[#allocation3 + $0x110] sm:$0xff] %v3172
  %3178 = vst [vmem:[#allocation3 + $0x118] sm:$0xff] %v3174
  %s3179 = scalar_lea.vmem %s1, 96
  %v3180 = vld [vmem:[%s3179] sm:$0xff]
  %v3181 = vld [vmem:[%s3179 + $0x8] sm:$0xff]
  %v3182 = vld [vmem:[%s3179 + $0x10] sm:$0xff]
  %v3183 = vld [vmem:[%s3179 + $0x18] sm:$0xff]
  %v3184 = vld [vmem:[#allocation3] sm:$0xff]
  %v3185 = vld [vmem:[#allocation3 + $0x8] sm:$0xff]
  %v3186 = vld [vmem:[#allocation3 + $0x10] sm:$0xff]
  %v3187 = vld [vmem:[#allocation3 + $0x18] sm:$0xff]
  %v3188 = vld [vmem:[#allocation3 + $0x20] sm:$0xff]
  %v3189 = vld [vmem:[#allocation3 + $0x28] sm:$0xff]
  %v3190 = vld [vmem:[#allocation3 + $0x30] sm:$0xff]
  %v3191 = vld [vmem:[#allocation3 + $0x38] sm:$0xff]
  %v3192 = vld [vmem:[#allocation3 + $0x40] sm:$0xff]
  %v3193 = vld [vmem:[#allocation3 + $0x48] sm:$0xff]
  %v3194 = vld [vmem:[#allocation3 + $0x50] sm:$0xff]
  %v3195 = vld [vmem:[#allocation3 + $0x58] sm:$0xff]
  %v3196 = vld [vmem:[#allocation3 + $0x60] sm:$0xff]
  %v3197 = vld [vmem:[#allocation3 + $0x68] sm:$0xff]
  %v3198 = vld [vmem:[#allocation3 + $0x70] sm:$0xff]
  %v3199 = vld [vmem:[#allocation3 + $0x78] sm:$0xff]
  %v3200 = vld [vmem:[#allocation3 + $0x80] sm:$0xff]
  %v3201 = vld [vmem:[#allocation3 + $0x88] sm:$0xff]
  %v3202 = vld [vmem:[#allocation3 + $0x90] sm:$0xff]
  %v3203 = vld [vmem:[#allocation3 + $0x98] sm:$0xff]
  %v3204 = vld [vmem:[#allocation3 + $0xa0] sm:$0xff]
  %v3205 = vld [vmem:[#allocation3 + $0xa8] sm:$0xff]
  %v3206 = vld [vmem:[#allocation3 + $0xb0] sm:$0xff]
  %v3207 = vld [vmem:[#allocation3 + $0xb8] sm:$0xff]
  %v3208 = vld [vmem:[#allocation3 + $0xc0] sm:$0xff]
  %v3209 = vld [vmem:[#allocation3 + $0xc8] sm:$0xff]
  %v3210 = vld [vmem:[#allocation3 + $0xd0] sm:$0xff]
  %v3211 = vld [vmem:[#allocation3 + $0xd8] sm:$0xff]
  %v3212 = vld [vmem:[#allocation3 + $0xe0] sm:$0xff]
  %v3213 = vld [vmem:[#allocation3 + $0xe8] sm:$0xff]
  %v3214 = vld [vmem:[#allocation3 + $0xf0] sm:$0xff]
  %v3215 = vld [vmem:[#allocation3 + $0xf8] sm:$0xff]
  %v3216 = vld [vmem:[#allocation3 + $0x100] sm:$0xff]
  %v3217 = vld [vmem:[#allocation3 + $0x108] sm:$0xff]
  %v3218 = vld [vmem:[#allocation3 + $0x110] sm:$0xff]
  %v3219 = vld [vmem:[#allocation3 + $0x118] sm:$0xff]
  %s3220 = scalar_lea.vmem %s2, 48
  %v3221 = vld [vmem:[%s3220] sm:$0xff]
  %v3222 = vld [vmem:[%s3220 + $0x8] sm:$0xff]
  %3224 = vset.pattern.permute.xlu0 0
  %3225 = vperm.xlu0 %3224, %v3221
  %v3226 = vpop.permute.xlu0 %3225
  %3229 = vset.pattern.permute.xlu0 0
  %3230 = vperm.xlu0 %3229, %v3222
  %v3231 = vpop.permute.xlu0 %3230
  %v3234 = vsel %vm567, %v3181, 0
  %v3237 = vsel %vm567, %v3183, 0
  %3239 = vmatprep.subr.mxu0 %v3185
  %3240 = vmatpush1.msra.mxu0 %v3184
  %3241 = vmatprep.subr.mxu0 %v3187
  %3242 = vmatpush1.msra.mxu0 %v3186
  %3243 = vmatprep.subr.mxu0 %v3189
  %3244 = vmatpush1.msra.mxu0 %v3188
  %3245 = vmatprep.subr.mxu0 %v3191
  %3246 = vmatpush1.msra.mxu0 %v3190
  %3247 = vmatprep.subr.mxu0 %v3193
  %3248 = vmatpush1.msra.mxu0 %v3192
  %3249 = vmatprep.subr.mxu0 %v3195
  %3250 = vmatpush1.msra.mxu0 %v3194
  %3251 = vmatprep.subr.mxu0 %v3197
  %3252 = vmatpush1.msra.mxu0 %v3196
  %3253 = vmatprep.subr.mxu0 %v3199
  %3254 = vmatpush1.msra.mxu0 %v3198
  %3255 = vmatprep.subr.mxu0 %v3201
  %3256 = vmatpush1.msra.mxu0 %v3200
  %3257 = vmatprep.subr.mxu0 %v3203
  %3258 = vmatpush1.msra.mxu0 %v3202
  %3259 = vmatprep.subr.mxu0 %v3205
  %3260 = vmatpush1.msra.mxu0 %v3204
  %3261 = vmatprep.subr.mxu0 %v3207
  %3262 = vmatpush1.msra.mxu0 %v3206
  %3263 = vmatprep.subr.mxu0 %v3209
  %3264 = vmatpush1.msra.mxu0 %v3208
  %3265 = vmatprep.subr.mxu0 %v3211
  %3266 = vmatpush1.msra.mxu0 %v3210
  %3267 = vmatprep.subr.mxu0 %v3213
  %3268 = vmatpush1.msra.mxu0 %v3212
  %3269 = vmatprep.subr.mxu0 %v3215
  %3270 = vmatpush1.msra.mxu0 %v3214
  %3271 = vmatprep.subr.mxu0 %v3217
  %3272 = vmatpush1.msra.mxu0 %v3216
  %3273 = vmatprep.subr.mxu0 %v3219
  %3274 = vmatpush1.msra.mxu0 %v3218
  %3275 = vmatprep.subr.mxu0 0.0
  %3276 = vmatpush1.msra.mxu0 0.0
  %3277 = vmatprep.subr.mxu0 0.0
  %3278 = vmatpush1.msra.mxu0 0.0
  %3279 = vmatprep.subr.mxu0 0.0
  %3280 = vmatpush1.msra.mxu0 0.0
  %3281 = vmatprep.subr.mxu0 0.0
  %3282 = vmatpush1.msra.mxu0 0.0
  %3283 = vmatprep.subr.mxu0 0.0
  %3284 = vmatpush1.msra.mxu0 0.0
  %3285 = vmatprep.subr.mxu0 0.0
  %3286 = vmatpush1.msra.mxu0 0.0
  %3287 = vmatprep.subr.mxu0 0.0
  %3288 = vmatpush1.msra.mxu0 0.0
  %3289 = vmatprep.subr.mxu0 0.0
  %3290 = vmatpush1.msra.mxu0 0.0
  %3291 = vmatprep.subr.mxu0 0.0
  %3292 = vmatpush1.msra.mxu0 0.0
  %3293 = vmatprep.subr.mxu0 0.0
  %3294 = vmatpush1.msra.mxu0 0.0
  %3295 = vmatprep.subr.mxu0 0.0
  %3296 = vmatpush1.msra.mxu0 0.0
  %3297 = vmatprep.subr.mxu0 0.0
  %3298 = vmatpush1.msra.mxu0 0.0
  %3299 = vmatprep.subr.mxu0 0.0
  %3300 = vmatpush1.msra.mxu0 0.0
  %3301 = vmatprep.subr.mxu0 0.0
  %3302 = vmatpush1.msra.mxu0 0.0
  %3303 = vmatprep.mubr.f32.mxu0 %v3234
  %3304 = vmatmul.mubr.f32.gmra.mrb[0].mxu0 %v3180
  %v3305 = vpop.f32.mrb[0].mxu0
  %v3306 = vadd.f32 %v3226, %v3305
  %v3307 = vpop.f32.mrb[0].mxu0
  %v3308 = vadd.f32 %v3226, %v3307
  %3309 = vmatprep.mubr.f32.mxu0 %v3237
  %3310 = vmatmul.mubr.f32.gmra.mrb[0].mxu0 %v3182
  %v3311 = vpop.f32.mrb[0].mxu0
  %v3312 = vadd.f32 %v3231, %v3311
  %v3313 = vpop.f32.mrb[0].mxu0
  %v3314 = vadd.f32 %v3231, %v3313
  %3315 = vdwg.mxu0
  %v3316 = vmax.f32 %v3306, 0.0
  %v3317 = vmax.f32 %v3308, 0.0
  %v3318 = vmax.f32 %v3312, 0.0
  %v3319 = vmax.f32 %v3314, 0.0
  %v3321 = vlaneseq
  %v3322 = vshrl.u32 %v3321, 7
  %v3323 = vsub.s32 0, %v3322
  %v3324 = vrot.slane %v24, %v3323
  %v3325 = vlaneseq
  %v3326 = vshrl.u32 %v3325, 7
  %v3327 = vsub.s32 1, %v3326
  %v3328 = vrot.slane %v24, %v3327
  %v3331 = vmul.f32 %v3316, %v3324
  %v3332 = vmul.f32 %v3317, %v3328
  %v3333 = vmul.f32 %v3318, %v3324
  %v3334 = vmul.f32 %v3319, %v3328
  %3335 = vrot.lane.b32.xlu0 %v3331, 11
  %v3336 = vpop.permute.xlu0 %3335
  %3337 = vrot.lane.b32.xlu0 %v3333, 11
  %v3338 = vpop.permute.xlu0 %3337
  %3339 = vrot.lane.b32.xlu0 %v3332, 11
  %v3340 = vpop.permute.xlu0 %3339
  %3341 = vrot.lane.b32.xlu0 %v3334, 11
  %v3342 = vpop.permute.xlu0 %3341
  %v3343 = vsel %vm3049, %v3336, %v3340
  %v3344 = vsel %vm3049, %v3338, %v3342
  %v3345 = vsel %vm3049, %v3340, %v3336
  %v3346 = vsel %vm3049, %v3342, %v3338
  %3347 = vst [vmem:[#allocation3] sm:$0xff] %v3345
  %3348 = vst [vmem:[#allocation3 + $0x8] sm:$0xff] %v3343
  %3349 = vst [vmem:[#allocation3 + $0x10] sm:$0xff] %v3346
  %3350 = vst [vmem:[#allocation3 + $0x18] sm:$0xff] %v3344
  %3351 = vrot.lane.b32.xlu0 %v3331, 10
  %v3352 = vpop.permute.xlu0 %3351
  %3353 = vrot.lane.b32.xlu0 %v3333, 10
  %v3354 = vpop.permute.xlu0 %3353
  %3355 = vrot.lane.b32.xlu0 %v3332, 10
  %v3356 = vpop.permute.xlu0 %3355
  %3357 = vrot.lane.b32.xlu0 %v3334, 10
  %v3358 = vpop.permute.xlu0 %3357
  %v3359 = vsel %vm3066, %v3352, %v3356
  %v3360 = vsel %vm3066, %v3354, %v3358
  %v3361 = vsel %vm3066, %v3356, %v3352
  %v3362 = vsel %vm3066, %v3358, %v3354
  %3363 = vst [vmem:[#allocation3 + $0x20] sm:$0xff] %v3361
  %3364 = vst [vmem:[#allocation3 + $0x28] sm:$0xff] %v3359
  %3365 = vst [vmem:[#allocation3 + $0x30] sm:$0xff] %v3362
  %3366 = vst [vmem:[#allocation3 + $0x38] sm:$0xff] %v3360
  %3367 = vrot.lane.b32.xlu0 %v3331, 9
  %v3368 = vpop.permute.xlu0 %3367
  %3369 = vrot.lane.b32.xlu0 %v3333, 9
  %v3370 = vpop.permute.xlu0 %3369
  %3371 = vrot.lane.b32.xlu0 %v3332, 9
  %v3372 = vpop.permute.xlu0 %3371
  %3373 = vrot.lane.b32.xlu0 %v3334, 9
  %v3374 = vpop.permute.xlu0 %3373
  %v3375 = vsel %vm3083, %v3368, %v3372
  %v3376 = vsel %vm3083, %v3370, %v3374
  %v3377 = vsel %vm3083, %v3372, %v3368
  %v3378 = vsel %vm3083, %v3374, %v3370
  %3379 = vst [vmem:[#allocation3 + $0x40] sm:$0xff] %v3377
  %3380 = vst [vmem:[#allocation3 + $0x48] sm:$0xff] %v3375
  %3381 = vst [vmem:[#allocation3 + $0x50] sm:$0xff] %v3378
  %3382 = vst [vmem:[#allocation3 + $0x58] sm:$0xff] %v3376
  %3383 = vrot.lane.b32.xlu0 %v3331, 1
  %v3384 = vpop.permute.xlu0 %3383
  %3385 = vrot.lane.b32.xlu0 %v3333, 1
  %v3386 = vpop.permute.xlu0 %3385
  %3387 = vrot.lane.b32.xlu0 %v3332, 1
  %v3388 = vpop.permute.xlu0 %3387
  %3389 = vrot.lane.b32.xlu0 %v3334, 1
  %v3390 = vpop.permute.xlu0 %3389
  %v3391 = vsel %vm210, %v3384, %v3388
  %v3392 = vsel %vm210, %v3386, %v3390
  %v3393 = vsel %vm210, %v3388, %v3384
  %v3394 = vsel %vm210, %v3390, %v3386
  %3395 = vst [vmem:[#allocation3 + $0x60] sm:$0xff] %v3393
  %3396 = vst [vmem:[#allocation3 + $0x68] sm:$0xff] %v3391
  %3397 = vst [vmem:[#allocation3 + $0x70] sm:$0xff] %v3394
  %3398 = vst [vmem:[#allocation3 + $0x78] sm:$0xff] %v3392
  %3399 = vst [vmem:[#allocation3 + $0x80] sm:$0xff] %v3331
  %3400 = vst [vmem:[#allocation3 + $0x88] sm:$0xff] %v3332
  %3401 = vst [vmem:[#allocation3 + $0x90] sm:$0xff] %v3333
  %3402 = vst [vmem:[#allocation3 + $0x98] sm:$0xff] %v3334
  %3403 = vrot.lane.b32.xlu0 %v3331, 127
  %v3404 = vpop.permute.xlu0 %3403
  %3405 = vrot.lane.b32.xlu0 %v3333, 127
  %v3406 = vpop.permute.xlu0 %3405
  %3407 = vrot.lane.b32.xlu0 %v3332, 127
  %v3408 = vpop.permute.xlu0 %3407
  %3409 = vrot.lane.b32.xlu0 %v3334, 127
  %v3410 = vpop.permute.xlu0 %3409
  %v3411 = vsel %vm271, %v3404, %v3408
  %v3412 = vsel %vm271, %v3406, %v3410
  %v3413 = vsel %vm271, %v3408, %v3404
  %v3414 = vsel %vm271, %v3410, %v3406
  %3415 = vst [vmem:[#allocation3 + $0xa0] sm:$0xff] %v3411
  %3416 = vst [vmem:[#allocation3 + $0xa8] sm:$0xff] %v3413
  %3417 = vst [vmem:[#allocation3 + $0xb0] sm:$0xff] %v3412
  %3418 = vst [vmem:[#allocation3 + $0xb8] sm:$0xff] %v3414
  %3419 = vrot.lane.b32.xlu0 %v3331, 119
  %v3420 = vpop.permute.xlu0 %3419
  %3421 = vrot.lane.b32.xlu0 %v3333, 119
  %v3422 = vpop.permute.xlu0 %3421
  %3423 = vrot.lane.b32.xlu0 %v3332, 119
  %v3424 = vpop.permute.xlu0 %3423
  %3425 = vrot.lane.b32.xlu0 %v3334, 119
  %v3426 = vpop.permute.xlu0 %3425
  %v3427 = vsel %vm3136, %v3420, %v3424
  %v3428 = vsel %vm3136, %v3422, %v3426
  %v3429 = vsel %vm3136, %v3424, %v3420
  %v3430 = vsel %vm3136, %v3426, %v3422
  %3431 = vst [vmem:[#allocation3 + $0xc0] sm:$0xff] %v3427
  %3432 = vst [vmem:[#allocation3 + $0xc8] sm:$0xff] %v3429
  %3433 = vst [vmem:[#allocation3 + $0xd0] sm:$0xff] %v3428
  %3434 = vst [vmem:[#allocation3 + $0xd8] sm:$0xff] %v3430
  %3435 = vrot.lane.b32.xlu0 %v3331, 118
  %v3436 = vpop.permute.xlu0 %3435
  %3437 = vrot.lane.b32.xlu0 %v3333, 118
  %v3438 = vpop.permute.xlu0 %3437
  %3439 = vrot.lane.b32.xlu0 %v3332, 118
  %v3440 = vpop.permute.xlu0 %3439
  %3441 = vrot.lane.b32.xlu0 %v3334, 118
  %v3442 = vpop.permute.xlu0 %3441
  %v3443 = vsel %vm3153, %v3436, %v3440
  %v3444 = vsel %vm3153, %v3438, %v3442
  %v3445 = vsel %vm3153, %v3440, %v3436
  %v3446 = vsel %vm3153, %v3442, %v3438
  %3447 = vst [vmem:[#allocation3 + $0xe0] sm:$0xff] %v3443
  %3448 = vst [vmem:[#allocation3 + $0xe8] sm:$0xff] %v3445
  %3449 = vst [vmem:[#allocation3 + $0xf0] sm:$0xff] %v3444
  %3450 = vst [vmem:[#allocation3 + $0xf8] sm:$0xff] %v3446
  %3451 = vrot.lane.b32.xlu0 %v3331, 117
  %v3452 = vpop.permute.xlu0 %3451
  %3453 = vrot.lane.b32.xlu0 %v3333, 117
  %v3454 = vpop.permute.xlu0 %3453
  %3455 = vrot.lane.b32.xlu0 %v3332, 117
  %v3456 = vpop.permute.xlu0 %3455
  %3457 = vrot.lane.b32.xlu0 %v3334, 117
  %v3458 = vpop.permute.xlu0 %3457
  %v3459 = vsel %vm3170, %v3452, %v3456
  %v3460 = vsel %vm3170, %v3454, %v3458
  %v3461 = vsel %vm3170, %v3456, %v3452
  %v3462 = vsel %vm3170, %v3458, %v3454
  %3463 = vst [vmem:[#allocation3 + $0x100] sm:$0xff] %v3459
  %3464 = vst [vmem:[#allocation3 + $0x108] sm:$0xff] %v3461
  %3465 = vst [vmem:[#allocation3 + $0x110] sm:$0xff] %v3460
  %3466 = vst [vmem:[#allocation3 + $0x118] sm:$0xff] %v3462
  %s3467 = scalar_lea.vmem %s1, 128
  %v3468 = vld [vmem:[%s3467] sm:$0xff]
  %v3469 = vld [vmem:[%s3467 + $0x8] sm:$0xff]
  %v3470 = vld [vmem:[%s3467 + $0x10] sm:$0xff]
  %v3471 = vld [vmem:[%s3467 + $0x18] sm:$0xff]
  %v3472 = vld [vmem:[#allocation3] sm:$0xff]
  %v3473 = vld [vmem:[#allocation3 + $0x8] sm:$0xff]
  %v3474 = vld [vmem:[#allocation3 + $0x10] sm:$0xff]
  %v3475 = vld [vmem:[#allocation3 + $0x18] sm:$0xff]
  %v3476 = vld [vmem:[#allocation3 + $0x20] sm:$0xff]
  %v3477 = vld [vmem:[#allocation3 + $0x28] sm:$0xff]
  %v3478 = vld [vmem:[#allocation3 + $0x30] sm:$0xff]
  %v3479 = vld [vmem:[#allocation3 + $0x38] sm:$0xff]
  %v3480 = vld [vmem:[#allocation3 + $0x40] sm:$0xff]
  %v3481 = vld [vmem:[#allocation3 + $0x48] sm:$0xff]
  %v3482 = vld [vmem:[#allocation3 + $0x50] sm:$0xff]
  %v3483 = vld [vmem:[#allocation3 + $0x58] sm:$0xff]
  %v3484 = vld [vmem:[#allocation3 + $0x60] sm:$0xff]
  %v3485 = vld [vmem:[#allocation3 + $0x68] sm:$0xff]
  %v3486 = vld [vmem:[#allocation3 + $0x70] sm:$0xff]
  %v3487 = vld [vmem:[#allocation3 + $0x78] sm:$0xff]
  %v3488 = vld [vmem:[#allocation3 + $0x80] sm:$0xff]
  %v3489 = vld [vmem:[#allocation3 + $0x88] sm:$0xff]
  %v3490 = vld [vmem:[#allocation3 + $0x90] sm:$0xff]
  %v3491 = vld [vmem:[#allocation3 + $0x98] sm:$0xff]
  %v3492 = vld [vmem:[#allocation3 + $0xa0] sm:$0xff]
  %v3493 = vld [vmem:[#allocation3 + $0xa8] sm:$0xff]
  %v3494 = vld [vmem:[#allocation3 + $0xb0] sm:$0xff]
  %v3495 = vld [vmem:[#allocation3 + $0xb8] sm:$0xff]
  %v3496 = vld [vmem:[#allocation3 + $0xc0] sm:$0xff]
  %v3497 = vld [vmem:[#allocation3 + $0xc8] sm:$0xff]
  %v3498 = vld [vmem:[#allocation3 + $0xd0] sm:$0xff]
  %v3499 = vld [vmem:[#allocation3 + $0xd8] sm:$0xff]
  %v3500 = vld [vmem:[#allocation3 + $0xe0] sm:$0xff]
  %v3501 = vld [vmem:[#allocation3 + $0xe8] sm:$0xff]
  %v3502 = vld [vmem:[#allocation3 + $0xf0] sm:$0xff]
  %v3503 = vld [vmem:[#allocation3 + $0xf8] sm:$0xff]
  %v3504 = vld [vmem:[#allocation3 + $0x100] sm:$0xff]
  %v3505 = vld [vmem:[#allocation3 + $0x108] sm:$0xff]
  %v3506 = vld [vmem:[#allocation3 + $0x110] sm:$0xff]
  %v3507 = vld [vmem:[#allocation3 + $0x118] sm:$0xff]
  %s3508 = scalar_lea.vmem %s2, 64
  %v3509 = vld [vmem:[%s3508] sm:$0xff]
  %v3510 = vld [vmem:[%s3508 + $0x8] sm:$0xff]
  %3512 = vset.pattern.permute.xlu0 0
  %3513 = vperm.xlu0 %3512, %v3509
  %v3514 = vpop.permute.xlu0 %3513
  %3517 = vset.pattern.permute.xlu0 0
  %3518 = vperm.xlu0 %3517, %v3510
  %v3519 = vpop.permute.xlu0 %3518
  %v3522 = vsel %vm567, %v3469, 0
  %v3525 = vsel %vm567, %v3471, 0
  %3527 = vmatprep.subr.mxu0 %v3473
  %3528 = vmatpush1.msra.mxu0 %v3472
  %3529 = vmatprep.subr.mxu0 %v3475
  %3530 = vmatpush1.msra.mxu0 %v3474
  %3531 = vmatprep.subr.mxu0 %v3477
  %3532 = vmatpush1.msra.mxu0 %v3476
  %3533 = vmatprep.subr.mxu0 %v3479
  %3534 = vmatpush1.msra.mxu0 %v3478
  %3535 = vmatprep.subr.mxu0 %v3481
  %3536 = vmatpush1.msra.mxu0 %v3480
  %3537 = vmatprep.subr.mxu0 %v3483
  %3538 = vmatpush1.msra.mxu0 %v3482
  %3539 = vmatprep.subr.mxu0 %v3485
  %3540 = vmatpush1.msra.mxu0 %v3484
  %3541 = vmatprep.subr.mxu0 %v3487
  %3542 = vmatpush1.msra.mxu0 %v3486
  %3543 = vmatprep.subr.mxu0 %v3489
  %3544 = vmatpush1.msra.mxu0 %v3488
  %3545 = vmatprep.subr.mxu0 %v3491
  %3546 = vmatpush1.msra.mxu0 %v3490
  %3547 = vmatprep.subr.mxu0 %v3493
  %3548 = vmatpush1.msra.mxu0 %v3492
  %3549 = vmatprep.subr.mxu0 %v3495
  %3550 = vmatpush1.msra.mxu0 %v3494
  %3551 = vmatprep.subr.mxu0 %v3497
  %3552 = vmatpush1.msra.mxu0 %v3496
  %3553 = vmatprep.subr.mxu0 %v3499
  %3554 = vmatpush1.msra.mxu0 %v3498
  %3555 = vmatprep.subr.mxu0 %v3501
  %3556 = vmatpush1.msra.mxu0 %v3500
  %3557 = vmatprep.subr.mxu0 %v3503
  %3558 = vmatpush1.msra.mxu0 %v3502
  %3559 = vmatprep.subr.mxu0 %v3505
  %3560 = vmatpush1.msra.mxu0 %v3504
  %3561 = vmatprep.subr.mxu0 %v3507
  %3562 = vmatpush1.msra.mxu0 %v3506
  %3563 = vmatprep.subr.mxu0 0.0
  %3564 = vmatpush1.msra.mxu0 0.0
  %3565 = vmatprep.subr.mxu0 0.0
  %3566 = vmatpush1.msra.mxu0 0.0
  %3567 = vmatprep.subr.mxu0 0.0
  %3568 = vmatpush1.msra.mxu0 0.0
  %3569 = vmatprep.subr.mxu0 0.0
  %3570 = vmatpush1.msra.mxu0 0.0
  %3571 = vmatprep.subr.mxu0 0.0
  %3572 = vmatpush1.msra.mxu0 0.0
  %3573 = vmatprep.subr.mxu0 0.0
  %3574 = vmatpush1.msra.mxu0 0.0
  %3575 = vmatprep.subr.mxu0 0.0
  %3576 = vmatpush1.msra.mxu0 0.0
  %3577 = vmatprep.subr.mxu0 0.0
  %3578 = vmatpush1.msra.mxu0 0.0
  %3579 = vmatprep.subr.mxu0 0.0
  %3580 = vmatpush1.msra.mxu0 0.0
  %3581 = vmatprep.subr.mxu0 0.0
  %3582 = vmatpush1.msra.mxu0 0.0
  %3583 = vmatprep.subr.mxu0 0.0
  %3584 = vmatpush1.msra.mxu0 0.0
  %3585 = vmatprep.subr.mxu0 0.0
  %3586 = vmatpush1.msra.mxu0 0.0
  %3587 = vmatprep.subr.mxu0 0.0
  %3588 = vmatpush1.msra.mxu0 0.0
  %3589 = vmatprep.subr.mxu0 0.0
  %3590 = vmatpush1.msra.mxu0 0.0
  %3591 = vmatprep.mubr.f32.mxu0 %v3522
  %3592 = vmatmul.mubr.f32.gmra.mrb[0].mxu0 %v3468
  %v3593 = vpop.f32.mrb[0].mxu0
  %v3594 = vadd.f32 %v3514, %v3593
  %v3595 = vpop.f32.mrb[0].mxu0
  %v3596 = vadd.f32 %v3514, %v3595
  %3597 = vmatprep.mubr.f32.mxu0 %v3525
  %3598 = vmatmul.mubr.f32.gmra.mrb[0].mxu0 %v3470
  %v3599 = vpop.f32.mrb[0].mxu0
  %v3600 = vadd.f32 %v3519, %v3599
  %v3601 = vpop.f32.mrb[0].mxu0
  %v3602 = vadd.f32 %v3519, %v3601
  %3603 = vdwg.mxu0
  %v3604 = vmax.f32 %v3594, 0.0
  %v3605 = vmax.f32 %v3596, 0.0
  %v3606 = vmax.f32 %v3600, 0.0
  %v3607 = vmax.f32 %v3602, 0.0
  %v3608 = vmul.f32 %v3604, %v3324
  %v3609 = vmul.f32 %v3605, %v3328
  %v3610 = vmul.f32 %v3606, %v3324
  %v3611 = vmul.f32 %v3607, %v3328
  %3612 = vrot.lane.b32.xlu0 %v3608, 11
  %v3613 = vpop.permute.xlu0 %3612
  %3614 = vrot.lane.b32.xlu0 %v3610, 11
  %v3615 = vpop.permute.xlu0 %3614
  %3616 = vrot.lane.b32.xlu0 %v3609, 11
  %v3617 = vpop.permute.xlu0 %3616
  %3618 = vrot.lane.b32.xlu0 %v3611, 11
  %v3619 = vpop.permute.xlu0 %3618
  %v3620 = vsel %vm3049, %v3613, %v3617
  %v3621 = vsel %vm3049, %v3615, %v3619
  %v3622 = vsel %vm3049, %v3617, %v3613
  %v3623 = vsel %vm3049, %v3619, %v3615
  %3624 = vst [vmem:[#allocation3] sm:$0xff] %v3622
  %3625 = vst [vmem:[#allocation3 + $0x8] sm:$0xff] %v3620
  %3626 = vst [vmem:[#allocation3 + $0x10] sm:$0xff] %v3623
  %3627 = vst [vmem:[#allocation3 + $0x18] sm:$0xff] %v3621
  %3628 = vrot.lane.b32.xlu0 %v3608, 10
  %v3629 = vpop.permute.xlu0 %3628
  %3630 = vrot.lane.b32.xlu0 %v3610, 10
  %v3631 = vpop.permute.xlu0 %3630
  %3632 = vrot.lane.b32.xlu0 %v3609, 10
  %v3633 = vpop.permute.xlu0 %3632
  %3634 = vrot.lane.b32.xlu0 %v3611, 10
  %v3635 = vpop.permute.xlu0 %3634
  %v3636 = vsel %vm3066, %v3629, %v3633
  %v3637 = vsel %vm3066, %v3631, %v3635
  %v3638 = vsel %vm3066, %v3633, %v3629
  %v3639 = vsel %vm3066, %v3635, %v3631
  %3640 = vst [vmem:[#allocation3 + $0x20] sm:$0xff] %v3638
  %3641 = vst [vmem:[#allocation3 + $0x28] sm:$0xff] %v3636
  %3642 = vst [vmem:[#allocation3 + $0x30] sm:$0xff] %v3639
  %3643 = vst [vmem:[#allocation3 + $0x38] sm:$0xff] %v3637
  %3644 = vrot.lane.b32.xlu0 %v3608, 9
  %v3645 = vpop.permute.xlu0 %3644
  %3646 = vrot.lane.b32.xlu0 %v3610, 9
  %v3647 = vpop.permute.xlu0 %3646
  %3648 = vrot.lane.b32.xlu0 %v3609, 9
  %v3649 = vpop.permute.xlu0 %3648
  %3650 = vrot.lane.b32.xlu0 %v3611, 9
  %v3651 = vpop.permute.xlu0 %3650
  %v3652 = vsel %vm3083, %v3645, %v3649
  %v3653 = vsel %vm3083, %v3647, %v3651
  %v3654 = vsel %vm3083, %v3649, %v3645
  %v3655 = vsel %vm3083, %v3651, %v3647
  %3656 = vst [vmem:[#allocation3 + $0x40] sm:$0xff] %v3654
  %3657 = vst [vmem:[#allocation3 + $0x48] sm:$0xff] %v3652
  %3658 = vst [vmem:[#allocation3 + $0x50] sm:$0xff] %v3655
  %3659 = vst [vmem:[#allocation3 + $0x58] sm:$0xff] %v3653
  %3660 = vrot.lane.b32.xlu0 %v3608, 1
  %v3661 = vpop.permute.xlu0 %3660
  %3662 = vrot.lane.b32.xlu0 %v3610, 1
  %v3663 = vpop.permute.xlu0 %3662
  %3664 = vrot.lane.b32.xlu0 %v3609, 1
  %v3665 = vpop.permute.xlu0 %3664
  %3666 = vrot.lane.b32.xlu0 %v3611, 1
  %v3667 = vpop.permute.xlu0 %3666
  %v3668 = vsel %vm210, %v3661, %v3665
  %v3669 = vsel %vm210, %v3663, %v3667
  %v3670 = vsel %vm210, %v3665, %v3661
  %v3671 = vsel %vm210, %v3667, %v3663
  %3672 = vst [vmem:[#allocation3 + $0x60] sm:$0xff] %v3670
  %3673 = vst [vmem:[#allocation3 + $0x68] sm:$0xff] %v3668
  %3674 = vst [vmem:[#allocation3 + $0x70] sm:$0xff] %v3671
  %3675 = vst [vmem:[#allocation3 + $0x78] sm:$0xff] %v3669
  %3676 = vst [vmem:[#allocation3 + $0x80] sm:$0xff] %v3608
  %3677 = vst [vmem:[#allocation3 + $0x88] sm:$0xff] %v3609
  %3678 = vst [vmem:[#allocation3 + $0x90] sm:$0xff] %v3610
  %3679 = vst [vmem:[#allocation3 + $0x98] sm:$0xff] %v3611
  %3680 = vrot.lane.b32.xlu0 %v3608, 127
  %v3681 = vpop.permute.xlu0 %3680
  %3682 = vrot.lane.b32.xlu0 %v3610, 127
  %v3683 = vpop.permute.xlu0 %3682
  %3684 = vrot.lane.b32.xlu0 %v3609, 127
  %v3685 = vpop.permute.xlu0 %3684
  %3686 = vrot.lane.b32.xlu0 %v3611, 127
  %v3687 = vpop.permute.xlu0 %3686
  %v3688 = vsel %vm271, %v3681, %v3685
  %v3689 = vsel %vm271, %v3683, %v3687
  %v3690 = vsel %vm271, %v3685, %v3681
  %v3691 = vsel %vm271, %v3687, %v3683
  %3692 = vst [vmem:[#allocation3 + $0xa0] sm:$0xff] %v3688
  %3693 = vst [vmem:[#allocation3 + $0xa8] sm:$0xff] %v3690
  %3694 = vst [vmem:[#allocation3 + $0xb0] sm:$0xff] %v3689
  %3695 = vst [vmem:[#allocation3 + $0xb8] sm:$0xff] %v3691
  %3696 = vrot.lane.b32.xlu0 %v3608, 119
  %v3697 = vpop.permute.xlu0 %3696
  %3698 = vrot.lane.b32.xlu0 %v3610, 119
  %v3699 = vpop.permute.xlu0 %3698
  %3700 = vrot.lane.b32.xlu0 %v3609, 119
  %v3701 = vpop.permute.xlu0 %3700
  %3702 = vrot.lane.b32.xlu0 %v3611, 119
  %v3703 = vpop.permute.xlu0 %3702
  %v3704 = vsel %vm3136, %v3697, %v3701
  %v3705 = vsel %vm3136, %v3699, %v3703
  %v3706 = vsel %vm3136, %v3701, %v3697
  %v3707 = vsel %vm3136, %v3703, %v3699
  %3708 = vst [vmem:[#allocation3 + $0xc0] sm:$0xff] %v3704
  %3709 = vst [vmem:[#allocation3 + $0xc8] sm:$0xff] %v3706
  %3710 = vst [vmem:[#allocation3 + $0xd0] sm:$0xff] %v3705
  %3711 = vst [vmem:[#allocation3 + $0xd8] sm:$0xff] %v3707
  %3712 = vrot.lane.b32.xlu0 %v3608, 118
  %v3713 = vpop.permute.xlu0 %3712
  %3714 = vrot.lane.b32.xlu0 %v3610, 118
  %v3715 = vpop.permute.xlu0 %3714
  %3716 = vrot.lane.b32.xlu0 %v3609, 118
  %v3717 = vpop.permute.xlu0 %3716
  %3718 = vrot.lane.b32.xlu0 %v3611, 118
  %v3719 = vpop.permute.xlu0 %3718
  %v3720 = vsel %vm3153, %v3713, %v3717
  %v3721 = vsel %vm3153, %v3715, %v3719
  %v3722 = vsel %vm3153, %v3717, %v3713
  %v3723 = vsel %vm3153, %v3719, %v3715
  %3724 = vst [vmem:[#allocation3 + $0xe0] sm:$0xff] %v3720
  %3725 = vst [vmem:[#allocation3 + $0xe8] sm:$0xff] %v3722
  %3726 = vst [vmem:[#allocation3 + $0xf0] sm:$0xff] %v3721
  %3727 = vst [vmem:[#allocation3 + $0xf8] sm:$0xff] %v3723
  %3728 = vrot.lane.b32.xlu0 %v3608, 117
  %v3729 = vpop.permute.xlu0 %3728
  %3730 = vrot.lane.b32.xlu0 %v3610, 117
  %v3731 = vpop.permute.xlu0 %3730
  %3732 = vrot.lane.b32.xlu0 %v3609, 117
  %v3733 = vpop.permute.xlu0 %3732
  %3734 = vrot.lane.b32.xlu0 %v3611, 117
  %v3735 = vpop.permute.xlu0 %3734
  %v3736 = vsel %vm3170, %v3729, %v3733
  %v3737 = vsel %vm3170, %v3731, %v3735
  %v3738 = vsel %vm3170, %v3733, %v3729
  %v3739 = vsel %vm3170, %v3735, %v3731
  %3740 = vst [vmem:[#allocation3 + $0x100] sm:$0xff] %v3736
  %3741 = vst [vmem:[#allocation3 + $0x108] sm:$0xff] %v3738
  %3742 = vst [vmem:[#allocation3 + $0x110] sm:$0xff] %v3737
  %3743 = vst [vmem:[#allocation3 + $0x118] sm:$0xff] %v3739
  %s3744 = scalar_lea.vmem %s1, 160
  %v3745 = vld [vmem:[%s3744] sm:$0xff]
  %v3746 = vld [vmem:[%s3744 + $0x8] sm:$0xff]
  %v3747 = vld [vmem:[%s3744 + $0x10] sm:$0xff]
  %v3748 = vld [vmem:[%s3744 + $0x18] sm:$0xff]
  %v3749 = vld [vmem:[#allocation3] sm:$0xff]
  %v3750 = vld [vmem:[#allocation3 + $0x8] sm:$0xff]
  %v3751 = vld [vmem:[#allocation3 + $0x10] sm:$0xff]
  %v3752 = vld [vmem:[#allocation3 + $0x18] sm:$0xff]
  %v3753 = vld [vmem:[#allocation3 + $0x20] sm:$0xff]
  %v3754 = vld [vmem:[#allocation3 + $0x28] sm:$0xff]
  %v3755 = vld [vmem:[#allocation3 + $0x30] sm:$0xff]
  %v3756 = vld [vmem:[#allocation3 + $0x38] sm:$0xff]
  %v3757 = vld [vmem:[#allocation3 + $0x40] sm:$0xff]
  %v3758 = vld [vmem:[#allocation3 + $0x48] sm:$0xff]
  %v3759 = vld [vmem:[#allocation3 + $0x50] sm:$0xff]
  %v3760 = vld [vmem:[#allocation3 + $0x58] sm:$0xff]
  %v3761 = vld [vmem:[#allocation3 + $0x60] sm:$0xff]
  %v3762 = vld [vmem:[#allocation3 + $0x68] sm:$0xff]
  %v3763 = vld [vmem:[#allocation3 + $0x70] sm:$0xff]
  %v3764 = vld [vmem:[#allocation3 + $0x78] sm:$0xff]
  %v3765 = vld [vmem:[#allocation3 + $0x80] sm:$0xff]
  %v3766 = vld [vmem:[#allocation3 + $0x88] sm:$0xff]
  %v3767 = vld [vmem:[#allocation3 + $0x90] sm:$0xff]
  %v3768 = vld [vmem:[#allocation3 + $0x98] sm:$0xff]
  %v3769 = vld [vmem:[#allocation3 + $0xa0] sm:$0xff]
  %v3770 = vld [vmem:[#allocation3 + $0xa8] sm:$0xff]
  %v3771 = vld [vmem:[#allocation3 + $0xb0] sm:$0xff]
  %v3772 = vld [vmem:[#allocation3 + $0xb8] sm:$0xff]
  %v3773 = vld [vmem:[#allocation3 + $0xc0] sm:$0xff]
  %v3774 = vld [vmem:[#allocation3 + $0xc8] sm:$0xff]
  %v3775 = vld [vmem:[#allocation3 + $0xd0] sm:$0xff]
  %v3776 = vld [vmem:[#allocation3 + $0xd8] sm:$0xff]
  %v3777 = vld [vmem:[#allocation3 + $0xe0] sm:$0xff]
  %v3778 = vld [vmem:[#allocation3 + $0xe8] sm:$0xff]
  %v3779 = vld [vmem:[#allocation3 + $0xf0] sm:$0xff]
  %v3780 = vld [vmem:[#allocation3 + $0xf8] sm:$0xff]
  %v3781 = vld [vmem:[#allocation3 + $0x100] sm:$0xff]
  %v3782 = vld [vmem:[#allocation3 + $0x108] sm:$0xff]
  %v3783 = vld [vmem:[#allocation3 + $0x110] sm:$0xff]
  %v3784 = vld [vmem:[#allocation3 + $0x118] sm:$0xff]
  %s3785 = scalar_lea.vmem %s2, 80
  %v3786 = vld [vmem:[%s3785] sm:$0xff]
  %v3787 = vld [vmem:[%s3785 + $0x8] sm:$0xff]
  %3789 = vset.pattern.permute.xlu0 0
  %3790 = vperm.xlu0 %3789, %v3786
  %v3791 = vpop.permute.xlu0 %3790
  %3794 = vset.pattern.permute.xlu0 0
  %3795 = vperm.xlu0 %3794, %v3787
  %v3796 = vpop.permute.xlu0 %3795
  %v3799 = vsel %vm567, %v3746, 0
  %v3802 = vsel %vm567, %v3748, 0
  %3804 = vmatprep.subr.mxu0 %v3750
  %3805 = vmatpush1.msra.mxu0 %v3749
  %3806 = vmatprep.subr.mxu0 %v3752
  %3807 = vmatpush1.msra.mxu0 %v3751
  %3808 = vmatprep.subr.mxu0 %v3754
  %3809 = vmatpush1.msra.mxu0 %v3753
  %3810 = vmatprep.subr.mxu0 %v3756
  %3811 = vmatpush1.msra.mxu0 %v3755
  %3812 = vmatprep.subr.mxu0 %v3758
  %3813 = vmatpush1.msra.mxu0 %v3757
  %3814 = vmatprep.subr.mxu0 %v3760
  %3815 = vmatpush1.msra.mxu0 %v3759
  %3816 = vmatprep.subr.mxu0 %v3762
  %3817 = vmatpush1.msra.mxu0 %v3761
  %3818 = vmatprep.subr.mxu0 %v3764
  %3819 = vmatpush1.msra.mxu0 %v3763
  %3820 = vmatprep.subr.mxu0 %v3766
  %3821 = vmatpush1.msra.mxu0 %v3765
  %3822 = vmatprep.subr.mxu0 %v3768
  %3823 = vmatpush1.msra.mxu0 %v3767
  %3824 = vmatprep.subr.mxu0 %v3770
  %3825 = vmatpush1.msra.mxu0 %v3769
  %3826 = vmatprep.subr.mxu0 %v3772
  %3827 = vmatpush1.msra.mxu0 %v3771
  %3828 = vmatprep.subr.mxu0 %v3774
  %3829 = vmatpush1.msra.mxu0 %v3773
  %3830 = vmatprep.subr.mxu0 %v3776
  %3831 = vmatpush1.msra.mxu0 %v3775
  %3832 = vmatprep.subr.mxu0 %v3778
  %3833 = vmatpush1.msra.mxu0 %v3777
  %3834 = vmatprep.subr.mxu0 %v3780
  %3835 = vmatpush1.msra.mxu0 %v3779
  %3836 = vmatprep.subr.mxu0 %v3782
  %3837 = vmatpush1.msra.mxu0 %v3781
  %3838 = vmatprep.subr.mxu0 %v3784
  %3839 = vmatpush1.msra.mxu0 %v3783
  %3840 = vmatprep.subr.mxu0 0.0
  %3841 = vmatpush1.msra.mxu0 0.0
  %3842 = vmatprep.subr.mxu0 0.0
  %3843 = vmatpush1.msra.mxu0 0.0
  %3844 = vmatprep.subr.mxu0 0.0
  %3845 = vmatpush1.msra.mxu0 0.0
  %3846 = vmatprep.subr.mxu0 0.0
  %3847 = vmatpush1.msra.mxu0 0.0
  %3848 = vmatprep.subr.mxu0 0.0
  %3849 = vmatpush1.msra.mxu0 0.0
  %3850 = vmatprep.subr.mxu0 0.0
  %3851 = vmatpush1.msra.mxu0 0.0
  %3852 = vmatprep.subr.mxu0 0.0
  %3853 = vmatpush1.msra.mxu0 0.0
  %3854 = vmatprep.subr.mxu0 0.0
  %3855 = vmatpush1.msra.mxu0 0.0
  %3856 = vmatprep.subr.mxu0 0.0
  %3857 = vmatpush1.msra.mxu0 0.0
  %3858 = vmatprep.subr.mxu0 0.0
  %3859 = vmatpush1.msra.mxu0 0.0
  %3860 = vmatprep.subr.mxu0 0.0
  %3861 = vmatpush1.msra.mxu0 0.0
  %3862 = vmatprep.subr.mxu0 0.0
  %3863 = vmatpush1.msra.mxu0 0.0
  %3864 = vmatprep.subr.mxu0 0.0
  %3865 = vmatpush1.msra.mxu0 0.0
  %3866 = vmatprep.subr.mxu0 0.0
  %3867 = vmatpush1.msra.mxu0 0.0
  %3868 = vmatprep.mubr.f32.mxu0 %v3799
  %3869 = vmatmul.mubr.f32.gmra.mrb[0].mxu0 %v3745
  %v3870 = vpop.f32.mrb[0].mxu0
  %v3871 = vadd.f32 %v3791, %v3870
  %v3872 = vpop.f32.mrb[0].mxu0
  %v3873 = vadd.f32 %v3791, %v3872
  %3874 = vmatprep.mubr.f32.mxu0 %v3802
  %3875 = vmatmul.mubr.f32.gmra.mrb[0].mxu0 %v3747
  %v3876 = vpop.f32.mrb[0].mxu0
  %v3877 = vadd.f32 %v3796, %v3876
  %v3878 = vpop.f32.mrb[0].mxu0
  %v3879 = vadd.f32 %v3796, %v3878
  %3880 = vdwg.mxu0
  %v3881 = vmax.f32 %v3871, 0.0
  %v3882 = vmax.f32 %v3873, 0.0
  %v3883 = vmax.f32 %v3877, 0.0
  %v3884 = vmax.f32 %v3879, 0.0
  %v3885 = vmul.f32 %v3881, %v3324
  %v3886 = vmul.f32 %v3882, %v3328
  %v3887 = vmul.f32 %v3883, %v3324
  %v3888 = vmul.f32 %v3884, %v3328
  %3889 = vrot.lane.b32.xlu0 %v3885, 11
  %v3890 = vpop.permute.xlu0 %3889
  %3891 = vrot.lane.b32.xlu0 %v3887, 11
  %v3892 = vpop.permute.xlu0 %3891
  %3893 = vrot.lane.b32.xlu0 %v3886, 11
  %v3894 = vpop.permute.xlu0 %3893
  %3895 = vrot.lane.b32.xlu0 %v3888, 11
  %v3896 = vpop.permute.xlu0 %3895
  %v3897 = vsel %vm3049, %v3890, %v3894
  %v3898 = vsel %vm3049, %v3892, %v3896
  %v3899 = vsel %vm3049, %v3894, %v3890
  %v3900 = vsel %vm3049, %v3896, %v3892
  %3901 = vst [vmem:[#allocation3] sm:$0xff] %v3899
  %3902 = vst [vmem:[#allocation3 + $0x8] sm:$0xff] %v3897
  %3903 = vst [vmem:[#allocation3 + $0x10] sm:$0xff] %v3900
  %3904 = vst [vmem:[#allocation3 + $0x18] sm:$0xff] %v3898
  %3905 = vrot.lane.b32.xlu0 %v3885, 10
  %v3906 = vpop.permute.xlu0 %3905
  %3907 = vrot.lane.b32.xlu0 %v3887, 10
  %v3908 = vpop.permute.xlu0 %3907
  %3909 = vrot.lane.b32.xlu0 %v3886, 10
  %v3910 = vpop.permute.xlu0 %3909
  %3911 = vrot.lane.b32.xlu0 %v3888, 10
  %v3912 = vpop.permute.xlu0 %3911
  %v3913 = vsel %vm3066, %v3906, %v3910
  %v3914 = vsel %vm3066, %v3908, %v3912
  %v3915 = vsel %vm3066, %v3910, %v3906
  %v3916 = vsel %vm3066, %v3912, %v3908
  %3917 = vst [vmem:[#allocation3 + $0x20] sm:$0xff] %v3915
  %3918 = vst [vmem:[#allocation3 + $0x28] sm:$0xff] %v3913
  %3919 = vst [vmem:[#allocation3 + $0x30] sm:$0xff] %v3916
  %3920 = vst [vmem:[#allocation3 + $0x38] sm:$0xff] %v3914
  %3921 = vrot.lane.b32.xlu0 %v3885, 9
  %v3922 = vpop.permute.xlu0 %3921
  %3923 = vrot.lane.b32.xlu0 %v3887, 9
  %v3924 = vpop.permute.xlu0 %3923
  %3925 = vrot.lane.b32.xlu0 %v3886, 9
  %v3926 = vpop.permute.xlu0 %3925
  %3927 = vrot.lane.b32.xlu0 %v3888, 9
  %v3928 = vpop.permute.xlu0 %3927
  %v3929 = vsel %vm3083, %v3922, %v3926
  %v3930 = vsel %vm3083, %v3924, %v3928
  %v3931 = vsel %vm3083, %v3926, %v3922
  %v3932 = vsel %vm3083, %v3928, %v3924
  %3933 = vst [vmem:[#allocation3 + $0x40] sm:$0xff] %v3931
  %3934 = vst [vmem:[#allocation3 + $0x48] sm:$0xff] %v3929
  %3935 = vst [vmem:[#allocation3 + $0x50] sm:$0xff] %v3932
  %3936 = vst [vmem:[#allocation3 + $0x58] sm:$0xff] %v3930
  %3937 = vrot.lane.b32.xlu0 %v3885, 1
  %v3938 = vpop.permute.xlu0 %3937
  %3939 = vrot.lane.b32.xlu0 %v3887, 1
  %v3940 = vpop.permute.xlu0 %3939
  %3941 = vrot.lane.b32.xlu0 %v3886, 1
  %v3942 = vpop.permute.xlu0 %3941
  %3943 = vrot.lane.b32.xlu0 %v3888, 1
  %v3944 = vpop.permute.xlu0 %3943
  %v3945 = vsel %vm210, %v3938, %v3942
  %v3946 = vsel %vm210, %v3940, %v3944
  %v3947 = vsel %vm210, %v3942, %v3938
  %v3948 = vsel %vm210, %v3944, %v3940
  %3949 = vst [vmem:[#allocation3 + $0x60] sm:$0xff] %v3947
  %3950 = vst [vmem:[#allocation3 + $0x68] sm:$0xff] %v3945
  %3951 = vst [vmem:[#allocation3 + $0x70] sm:$0xff] %v3948
  %3952 = vst [vmem:[#allocation3 + $0x78] sm:$0xff] %v3946
  %3953 = vst [vmem:[#allocation3 + $0x80] sm:$0xff] %v3885
  %3954 = vst [vmem:[#allocation3 + $0x88] sm:$0xff] %v3886
  %3955 = vst [vmem:[#allocation3 + $0x90] sm:$0xff] %v3887
  %3956 = vst [vmem:[#allocation3 + $0x98] sm:$0xff] %v3888
  %3957 = vrot.lane.b32.xlu0 %v3885, 127
  %v3958 = vpop.permute.xlu0 %3957
  %3959 = vrot.lane.b32.xlu0 %v3887, 127
  %v3960 = vpop.permute.xlu0 %3959
  %3961 = vrot.lane.b32.xlu0 %v3886, 127
  %v3962 = vpop.permute.xlu0 %3961
  %3963 = vrot.lane.b32.xlu0 %v3888, 127
  %v3964 = vpop.permute.xlu0 %3963
  %v3965 = vsel %vm271, %v3958, %v3962
  %v3966 = vsel %vm271, %v3960, %v3964
  %v3967 = vsel %vm271, %v3962, %v3958
  %v3968 = vsel %vm271, %v3964, %v3960
  %3969 = vst [vmem:[#allocation3 + $0xa0] sm:$0xff] %v3965
  %3970 = vst [vmem:[#allocation3 + $0xa8] sm:$0xff] %v3967
  %3971 = vst [vmem:[#allocation3 + $0xb0] sm:$0xff] %v3966
  %3972 = vst [vmem:[#allocation3 + $0xb8] sm:$0xff] %v3968
  %3973 = vrot.lane.b32.xlu0 %v3885, 119
  %v3974 = vpop.permute.xlu0 %3973
  %3975 = vrot.lane.b32.xlu0 %v3887, 119
  %v3976 = vpop.permute.xlu0 %3975
  %3977 = vrot.lane.b32.xlu0 %v3886, 119
  %v3978 = vpop.permute.xlu0 %3977
  %3979 = vrot.lane.b32.xlu0 %v3888, 119
  %v3980 = vpop.permute.xlu0 %3979
  %v3981 = vsel %vm3136, %v3974, %v3978
  %v3982 = vsel %vm3136, %v3976, %v3980
  %v3983 = vsel %vm3136, %v3978, %v3974
  %v3984 = vsel %vm3136, %v3980, %v3976
  %3985 = vst [vmem:[#allocation3 + $0xc0] sm:$0xff] %v3981
  %3986 = vst [vmem:[#allocation3 + $0xc8] sm:$0xff] %v3983
  %3987 = vst [vmem:[#allocation3 + $0xd0] sm:$0xff] %v3982
  %3988 = vst [vmem:[#allocation3 + $0xd8] sm:$0xff] %v3984
  %3989 = vrot.lane.b32.xlu0 %v3885, 118
  %v3990 = vpop.permute.xlu0 %3989
  %3991 = vrot.lane.b32.xlu0 %v3887, 118
  %v3992 = vpop.permute.xlu0 %3991
  %3993 = vrot.lane.b32.xlu0 %v3886, 118
  %v3994 = vpop.permute.xlu0 %3993
  %3995 = vrot.lane.b32.xlu0 %v3888, 118
  %v3996 = vpop.permute.xlu0 %3995
  %v3997 = vsel %vm3153, %v3990, %v3994
  %v3998 = vsel %vm3153, %v3992, %v3996
  %v3999 = vsel %vm3153, %v3994, %v3990
  %v4000 = vsel %vm3153, %v3996, %v3992
  %4001 = vst [vmem:[#allocation3 + $0xe0] sm:$0xff] %v3997
  %4002 = vst [vmem:[#allocation3 + $0xe8] sm:$0xff] %v3999
  %4003 = vst [vmem:[#allocation3 + $0xf0] sm:$0xff] %v3998
  %4004 = vst [vmem:[#allocation3 + $0xf8] sm:$0xff] %v4000
  %4005 = vrot.lane.b32.xlu0 %v3885, 117
  %v4006 = vpop.permute.xlu0 %4005
  %4007 = vrot.lane.b32.xlu0 %v3887, 117
  %v4008 = vpop.permute.xlu0 %4007
  %4009 = vrot.lane.b32.xlu0 %v3886, 117
  %v4010 = vpop.permute.xlu0 %4009
  %4011 = vrot.lane.b32.xlu0 %v3888, 117
  %v4012 = vpop.permute.xlu0 %4011
  %v4013 = vsel %vm3170, %v4006, %v4010
  %v4014 = vsel %vm3170, %v4008, %v4012
  %v4015 = vsel %vm3170, %v4010, %v4006
  %v4016 = vsel %vm3170, %v4012, %v4008
  %4017 = vst [vmem:[#allocation3 + $0x100] sm:$0xff] %v4013
  %4018 = vst [vmem:[#allocation3 + $0x108] sm:$0xff] %v4015
  %4019 = vst [vmem:[#allocation3 + $0x110] sm:$0xff] %v4014
  %4020 = vst [vmem:[#allocation3 + $0x118] sm:$0xff] %v4016
  %s4021 = scalar_lea.vmem %s1, 192
  %v4022 = vld [vmem:[%s4021] sm:$0xff]
  %v4023 = vld [vmem:[%s4021 + $0x8] sm:$0xff]
  %v4024 = vld [vmem:[%s4021 + $0x10] sm:$0xff]
  %v4025 = vld [vmem:[%s4021 + $0x18] sm:$0xff]
  %v4026 = vld [vmem:[#allocation3] sm:$0xff]
  %v4027 = vld [vmem:[#allocation3 + $0x8] sm:$0xff]
  %v4028 = vld [vmem:[#allocation3 + $0x10] sm:$0xff]
  %v4029 = vld [vmem:[#allocation3 + $0x18] sm:$0xff]
  %v4030 = vld [vmem:[#allocation3 + $0x20] sm:$0xff]
  %v4031 = vld [vmem:[#allocation3 + $0x28] sm:$0xff]
  %v4032 = vld [vmem:[#allocation3 + $0x30] sm:$0xff]
  %v4033 = vld [vmem:[#allocation3 + $0x38] sm:$0xff]
  %v4034 = vld [vmem:[#allocation3 + $0x40] sm:$0xff]
  %v4035 = vld [vmem:[#allocation3 + $0x48] sm:$0xff]
  %v4036 = vld [vmem:[#allocation3 + $0x50] sm:$0xff]
  %v4037 = vld [vmem:[#allocation3 + $0x58] sm:$0xff]
  %v4038 = vld [vmem:[#allocation3 + $0x60] sm:$0xff]
  %v4039 = vld [vmem:[#allocation3 + $0x68] sm:$0xff]
  %v4040 = vld [vmem:[#allocation3 + $0x70] sm:$0xff]
  %v4041 = vld [vmem:[#allocation3 + $0x78] sm:$0xff]
  %v4042 = vld [vmem:[#allocation3 + $0x80] sm:$0xff]
  %v4043 = vld [vmem:[#allocation3 + $0x88] sm:$0xff]
  %v4044 = vld [vmem:[#allocation3 + $0x90] sm:$0xff]
  %v4045 = vld [vmem:[#allocation3 + $0x98] sm:$0xff]
  %v4046 = vld [vmem:[#allocation3 + $0xa0] sm:$0xff]
  %v4047 = vld [vmem:[#allocation3 + $0xa8] sm:$0xff]
  %v4048 = vld [vmem:[#allocation3 + $0xb0] sm:$0xff]
  %v4049 = vld [vmem:[#allocation3 + $0xb8] sm:$0xff]
  %v4050 = vld [vmem:[#allocation3 + $0xc0] sm:$0xff]
  %v4051 = vld [vmem:[#allocation3 + $0xc8] sm:$0xff]
  %v4052 = vld [vmem:[#allocation3 + $0xd0] sm:$0xff]
  %v4053 = vld [vmem:[#allocation3 + $0xd8] sm:$0xff]
  %v4054 = vld [vmem:[#allocation3 + $0xe0] sm:$0xff]
  %v4055 = vld [vmem:[#allocation3 + $0xe8] sm:$0xff]
  %v4056 = vld [vmem:[#allocation3 + $0xf0] sm:$0xff]
  %v4057 = vld [vmem:[#allocation3 + $0xf8] sm:$0xff]
  %v4058 = vld [vmem:[#allocation3 + $0x100] sm:$0xff]
  %v4059 = vld [vmem:[#allocation3 + $0x108] sm:$0xff]
  %v4060 = vld [vmem:[#allocation3 + $0x110] sm:$0xff]
  %v4061 = vld [vmem:[#allocation3 + $0x118] sm:$0xff]
  %s4062 = scalar_lea.vmem %s2, 96
  %v4063 = vld [vmem:[%s4062] sm:$0xff]
  %v4064 = vld [vmem:[%s4062 + $0x8] sm:$0xff]
  %4066 = vset.pattern.permute.xlu0 0
  %4067 = vperm.xlu0 %4066, %v4063
  %v4068 = vpop.permute.xlu0 %4067
  %4071 = vset.pattern.permute.xlu0 0
  %4072 = vperm.xlu0 %4071, %v4064
  %v4073 = vpop.permute.xlu0 %4072
  %v4076 = vsel %vm567, %v4023, 0
  %v4079 = vsel %vm567, %v4025, 0
  %4081 = vmatprep.subr.mxu0 %v4027
  %4082 = vmatpush1.msra.mxu0 %v4026
  %4083 = vmatprep.subr.mxu0 %v4029
  %4084 = vmatpush1.msra.mxu0 %v4028
  %4085 = vmatprep.subr.mxu0 %v4031
  %4086 = vmatpush1.msra.mxu0 %v4030
  %4087 = vmatprep.subr.mxu0 %v4033
  %4088 = vmatpush1.msra.mxu0 %v4032
  %4089 = vmatprep.subr.mxu0 %v4035
  %4090 = vmatpush1.msra.mxu0 %v4034
  %4091 = vmatprep.subr.mxu0 %v4037
  %4092 = vmatpush1.msra.mxu0 %v4036
  %4093 = vmatprep.subr.mxu0 %v4039
  %4094 = vmatpush1.msra.mxu0 %v4038
  %4095 = vmatprep.subr.mxu0 %v4041
  %4096 = vmatpush1.msra.mxu0 %v4040
  %4097 = vmatprep.subr.mxu0 %v4043
  %4098 = vmatpush1.msra.mxu0 %v4042
  %4099 = vmatprep.subr.mxu0 %v4045
  %4100 = vmatpush1.msra.mxu0 %v4044
  %4101 = vmatprep.subr.mxu0 %v4047
  %4102 = vmatpush1.msra.mxu0 %v4046
  %4103 = vmatprep.subr.mxu0 %v4049
  %4104 = vmatpush1.msra.mxu0 %v4048
  %4105 = vmatprep.subr.mxu0 %v4051
  %4106 = vmatpush1.msra.mxu0 %v4050
  %4107 = vmatprep.subr.mxu0 %v4053
  %4108 = vmatpush1.msra.mxu0 %v4052
  %4109 = vmatprep.subr.mxu0 %v4055
  %4110 = vmatpush1.msra.mxu0 %v4054
  %4111 = vmatprep.subr.mxu0 %v4057
  %4112 = vmatpush1.msra.mxu0 %v4056
  %4113 = vmatprep.subr.mxu0 %v4059
  %4114 = vmatpush1.msra.mxu0 %v4058
  %4115 = vmatprep.subr.mxu0 %v4061
  %4116 = vmatpush1.msra.mxu0 %v4060
  %4117 = vmatprep.subr.mxu0 0.0
  %4118 = vmatpush1.msra.mxu0 0.0
  %4119 = vmatprep.subr.mxu0 0.0
  %4120 = vmatpush1.msra.mxu0 0.0
  %4121 = vmatprep.subr.mxu0 0.0
  %4122 = vmatpush1.msra.mxu0 0.0
  %4123 = vmatprep.subr.mxu0 0.0
  %4124 = vmatpush1.msra.mxu0 0.0
  %4125 = vmatprep.subr.mxu0 0.0
  %4126 = vmatpush1.msra.mxu0 0.0
  %4127 = vmatprep.subr.mxu0 0.0
  %4128 = vmatpush1.msra.mxu0 0.0
  %4129 = vmatprep.subr.mxu0 0.0
  %4130 = vmatpush1.msra.mxu0 0.0
  %4131 = vmatprep.subr.mxu0 0.0
  %4132 = vmatpush1.msra.mxu0 0.0
  %4133 = vmatprep.subr.mxu0 0.0
  %4134 = vmatpush1.msra.mxu0 0.0
  %4135 = vmatprep.subr.mxu0 0.0
  %4136 = vmatpush1.msra.mxu0 0.0
  %4137 = vmatprep.subr.mxu0 0.0
  %4138 = vmatpush1.msra.mxu0 0.0
  %4139 = vmatprep.subr.mxu0 0.0
  %4140 = vmatpush1.msra.mxu0 0.0
  %4141 = vmatprep.subr.mxu0 0.0
  %4142 = vmatpush1.msra.mxu0 0.0
  %4143 = vmatprep.subr.mxu0 0.0
  %4144 = vmatpush1.msra.mxu0 0.0
  %4145 = vmatprep.mubr.f32.mxu0 %v4076
  %4146 = vmatmul.mubr.f32.gmra.mrb[0].mxu0 %v4022
  %v4147 = vpop.f32.mrb[0].mxu0
  %v4148 = vadd.f32 %v4068, %v4147
  %v4149 = vpop.f32.mrb[0].mxu0
  %v4150 = vadd.f32 %v4068, %v4149
  %4151 = vmatprep.mubr.f32.mxu0 %v4079
  %4152 = vmatmul.mubr.f32.gmra.mrb[0].mxu0 %v4024
  %v4153 = vpop.f32.mrb[0].mxu0
  %v4154 = vadd.f32 %v4073, %v4153
  %v4155 = vpop.f32.mrb[0].mxu0
  %v4156 = vadd.f32 %v4073, %v4155
  %4157 = vdwg.mxu0
  %v4158 = vmax.f32 %v4148, 0.0
  %v4159 = vmax.f32 %v4150, 0.0
  %v4160 = vmax.f32 %v4154, 0.0
  %v4161 = vmax.f32 %v4156, 0.0
  %v4162 = vmul.f32 %v4158, %v3324
  %v4163 = vmul.f32 %v4159, %v3328
  %v4164 = vmul.f32 %v4160, %v3324
  %v4165 = vmul.f32 %v4161, %v3328
  %4166 = vrot.lane.b32.xlu0 %v4162, 11
  %v4167 = vpop.permute.xlu0 %4166
  %4168 = vrot.lane.b32.xlu0 %v4164, 11
  %v4169 = vpop.permute.xlu0 %4168
  %4170 = vrot.lane.b32.xlu0 %v4163, 11
  %v4171 = vpop.permute.xlu0 %4170
  %4172 = vrot.lane.b32.xlu0 %v4165, 11
  %v4173 = vpop.permute.xlu0 %4172
  %v4174 = vsel %vm3049, %v4167, %v4171
  %v4175 = vsel %vm3049, %v4169, %v4173
  %v4176 = vsel %vm3049, %v4171, %v4167
  %v4177 = vsel %vm3049, %v4173, %v4169
  %4178 = vst [vmem:[#allocation3] sm:$0xff] %v4176
  %4179 = vst [vmem:[#allocation3 + $0x8] sm:$0xff] %v4174
  %4180 = vst [vmem:[#allocation3 + $0x10] sm:$0xff] %v4177
  %4181 = vst [vmem:[#allocation3 + $0x18] sm:$0xff] %v4175
  %4182 = vrot.lane.b32.xlu0 %v4162, 10
  %v4183 = vpop.permute.xlu0 %4182
  %4184 = vrot.lane.b32.xlu0 %v4164, 10
  %v4185 = vpop.permute.xlu0 %4184
  %4186 = vrot.lane.b32.xlu0 %v4163, 10
  %v4187 = vpop.permute.xlu0 %4186
  %4188 = vrot.lane.b32.xlu0 %v4165, 10
  %v4189 = vpop.permute.xlu0 %4188
  %v4190 = vsel %vm3066, %v4183, %v4187
  %v4191 = vsel %vm3066, %v4185, %v4189
  %v4192 = vsel %vm3066, %v4187, %v4183
  %v4193 = vsel %vm3066, %v4189, %v4185
  %4194 = vst [vmem:[#allocation3 + $0x20] sm:$0xff] %v4192
  %4195 = vst [vmem:[#allocation3 + $0x28] sm:$0xff] %v4190
  %4196 = vst [vmem:[#allocation3 + $0x30] sm:$0xff] %v4193
  %4197 = vst [vmem:[#allocation3 + $0x38] sm:$0xff] %v4191
  %4198 = vrot.lane.b32.xlu0 %v4162, 9
  %v4199 = vpop.permute.xlu0 %4198
  %4200 = vrot.lane.b32.xlu0 %v4164, 9
  %v4201 = vpop.permute.xlu0 %4200
  %4202 = vrot.lane.b32.xlu0 %v4163, 9
  %v4203 = vpop.permute.xlu0 %4202
  %4204 = vrot.lane.b32.xlu0 %v4165, 9
  %v4205 = vpop.permute.xlu0 %4204
  %v4206 = vsel %vm3083, %v4199, %v4203
  %v4207 = vsel %vm3083, %v4201, %v4205
  %v4208 = vsel %vm3083, %v4203, %v4199
  %v4209 = vsel %vm3083, %v4205, %v4201
  %4210 = vst [vmem:[#allocation3 + $0x40] sm:$0xff] %v4208
  %4211 = vst [vmem:[#allocation3 + $0x48] sm:$0xff] %v4206
  %4212 = vst [vmem:[#allocation3 + $0x50] sm:$0xff] %v4209
  %4213 = vst [vmem:[#allocation3 + $0x58] sm:$0xff] %v4207
  %4214 = vrot.lane.b32.xlu0 %v4162, 1
  %v4215 = vpop.permute.xlu0 %4214
  %4216 = vrot.lane.b32.xlu0 %v4164, 1
  %v4217 = vpop.permute.xlu0 %4216
  %4218 = vrot.lane.b32.xlu0 %v4163, 1
  %v4219 = vpop.permute.xlu0 %4218
  %4220 = vrot.lane.b32.xlu0 %v4165, 1
  %v4221 = vpop.permute.xlu0 %4220
  %v4222 = vsel %vm210, %v4215, %v4219
  %v4223 = vsel %vm210, %v4217, %v4221
  %v4224 = vsel %vm210, %v4219, %v4215
  %v4225 = vsel %vm210, %v4221, %v4217
  %4226 = vst [vmem:[#allocation3 + $0x60] sm:$0xff] %v4224
  %4227 = vst [vmem:[#allocation3 + $0x68] sm:$0xff] %v4222
  %4228 = vst [vmem:[#allocation3 + $0x70] sm:$0xff] %v4225
  %4229 = vst [vmem:[#allocation3 + $0x78] sm:$0xff] %v4223
  %4230 = vst [vmem:[#allocation3 + $0x80] sm:$0xff] %v4162
  %4231 = vst [vmem:[#allocation3 + $0x88] sm:$0xff] %v4163
  %4232 = vst [vmem:[#allocation3 + $0x90] sm:$0xff] %v4164
  %4233 = vst [vmem:[#allocation3 + $0x98] sm:$0xff] %v4165
  %4234 = vrot.lane.b32.xlu0 %v4162, 127
  %v4235 = vpop.permute.xlu0 %4234
  %4236 = vrot.lane.b32.xlu0 %v4164, 127
  %v4237 = vpop.permute.xlu0 %4236
  %4238 = vrot.lane.b32.xlu0 %v4163, 127
  %v4239 = vpop.permute.xlu0 %4238
  %4240 = vrot.lane.b32.xlu0 %v4165, 127
  %v4241 = vpop.permute.xlu0 %4240
  %v4242 = vsel %vm271, %v4235, %v4239
  %v4243 = vsel %vm271, %v4237, %v4241
  %v4244 = vsel %vm271, %v4239, %v4235
  %v4245 = vsel %vm271, %v4241, %v4237
  %4246 = vst [vmem:[#allocation3 + $0xa0] sm:$0xff] %v4242
  %4247 = vst [vmem:[#allocation3 + $0xa8] sm:$0xff] %v4244
  %4248 = vst [vmem:[#allocation3 + $0xb0] sm:$0xff] %v4243
  %4249 = vst [vmem:[#allocation3 + $0xb8] sm:$0xff] %v4245
  %4250 = vrot.lane.b32.xlu0 %v4162, 119
  %v4251 = vpop.permute.xlu0 %4250
  %4252 = vrot.lane.b32.xlu0 %v4164, 119
  %v4253 = vpop.permute.xlu0 %4252
  %4254 = vrot.lane.b32.xlu0 %v4163, 119
  %v4255 = vpop.permute.xlu0 %4254
  %4256 = vrot.lane.b32.xlu0 %v4165, 119
  %v4257 = vpop.permute.xlu0 %4256
  %v4258 = vsel %vm3136, %v4251, %v4255
  %v4259 = vsel %vm3136, %v4253, %v4257
  %v4260 = vsel %vm3136, %v4255, %v4251
  %v4261 = vsel %vm3136, %v4257, %v4253
  %4262 = vst [vmem:[#allocation3 + $0xc0] sm:$0xff] %v4258
  %4263 = vst [vmem:[#allocation3 + $0xc8] sm:$0xff] %v4260
  %4264 = vst [vmem:[#allocation3 + $0xd0] sm:$0xff] %v4259
  %4265 = vst [vmem:[#allocation3 + $0xd8] sm:$0xff] %v4261
  %4266 = vrot.lane.b32.xlu0 %v4162, 118
  %v4267 = vpop.permute.xlu0 %4266
  %4268 = vrot.lane.b32.xlu0 %v4164, 118
  %v4269 = vpop.permute.xlu0 %4268
  %4270 = vrot.lane.b32.xlu0 %v4163, 118
  %v4271 = vpop.permute.xlu0 %4270
  %4272 = vrot.lane.b32.xlu0 %v4165, 118
  %v4273 = vpop.permute.xlu0 %4272
  %v4274 = vsel %vm3153, %v4267, %v4271
  %v4275 = vsel %vm3153, %v4269, %v4273
  %v4276 = vsel %vm3153, %v4271, %v4267
  %v4277 = vsel %vm3153, %v4273, %v4269
  %4278 = vst [vmem:[#allocation3 + $0xe0] sm:$0xff] %v4274
  %4279 = vst [vmem:[#allocation3 + $0xe8] sm:$0xff] %v4276
  %4280 = vst [vmem:[#allocation3 + $0xf0] sm:$0xff] %v4275
  %4281 = vst [vmem:[#allocation3 + $0xf8] sm:$0xff] %v4277
  %4282 = vrot.lane.b32.xlu0 %v4162, 117
  %v4283 = vpop.permute.xlu0 %4282
  %4284 = vrot.lane.b32.xlu0 %v4164, 117
  %v4285 = vpop.permute.xlu0 %4284
  %4286 = vrot.lane.b32.xlu0 %v4163, 117
  %v4287 = vpop.permute.xlu0 %4286
  %4288 = vrot.lane.b32.xlu0 %v4165, 117
  %v4289 = vpop.permute.xlu0 %4288
  %v4290 = vsel %vm3170, %v4283, %v4287
  %v4291 = vsel %vm3170, %v4285, %v4289
  %v4292 = vsel %vm3170, %v4287, %v4283
  %v4293 = vsel %vm3170, %v4289, %v4285
  %4294 = vst [vmem:[#allocation3 + $0x100] sm:$0xff] %v4290
  %4295 = vst [vmem:[#allocation3 + $0x108] sm:$0xff] %v4292
  %4296 = vst [vmem:[#allocation3 + $0x110] sm:$0xff] %v4291
  %4297 = vst [vmem:[#allocation3 + $0x118] sm:$0xff] %v4293
  %s4298 = scalar_lea.vmem %s1, 224
  %v4299 = vld [vmem:[%s4298] sm:$0xff]
  %v4300 = vld [vmem:[%s4298 + $0x8] sm:$0xff]
  %v4301 = vld [vmem:[%s4298 + $0x10] sm:$0xff]
  %v4302 = vld [vmem:[%s4298 + $0x18] sm:$0xff]
  %v4303 = vld [vmem:[#allocation3] sm:$0xff]
  %v4304 = vld [vmem:[#allocation3 + $0x8] sm:$0xff]
  %v4305 = vld [vmem:[#allocation3 + $0x10] sm:$0xff]
  %v4306 = vld [vmem:[#allocation3 + $0x18] sm:$0xff]
  %v4307 = vld [vmem:[#allocation3 + $0x20] sm:$0xff]
  %v4308 = vld [vmem:[#allocation3 + $0x28] sm:$0xff]
  %v4309 = vld [vmem:[#allocation3 + $0x30] sm:$0xff]
  %v4310 = vld [vmem:[#allocation3 + $0x38] sm:$0xff]
  %v4311 = vld [vmem:[#allocation3 + $0x40] sm:$0xff]
  %v4312 = vld [vmem:[#allocation3 + $0x48] sm:$0xff]
  %v4313 = vld [vmem:[#allocation3 + $0x50] sm:$0xff]
  %v4314 = vld [vmem:[#allocation3 + $0x58] sm:$0xff]
  %v4315 = vld [vmem:[#allocation3 + $0x60] sm:$0xff]
  %v4316 = vld [vmem:[#allocation3 + $0x68] sm:$0xff]
  %v4317 = vld [vmem:[#allocation3 + $0x70] sm:$0xff]
  %v4318 = vld [vmem:[#allocation3 + $0x78] sm:$0xff]
  %v4319 = vld [vmem:[#allocation3 + $0x80] sm:$0xff]
  %v4320 = vld [vmem:[#allocation3 + $0x88] sm:$0xff]
  %v4321 = vld [vmem:[#allocation3 + $0x90] sm:$0xff]
  %v4322 = vld [vmem:[#allocation3 + $0x98] sm:$0xff]
  %v4323 = vld [vmem:[#allocation3 + $0xa0] sm:$0xff]
  %v4324 = vld [vmem:[#allocation3 + $0xa8] sm:$0xff]
  %v4325 = vld [vmem:[#allocation3 + $0xb0] sm:$0xff]
  %v4326 = vld [vmem:[#allocation3 + $0xb8] sm:$0xff]
  %v4327 = vld [vmem:[#allocation3 + $0xc0] sm:$0xff]
  %v4328 = vld [vmem:[#allocation3 + $0xc8] sm:$0xff]
  %v4329 = vld [vmem:[#allocation3 + $0xd0] sm:$0xff]
  %v4330 = vld [vmem:[#allocation3 + $0xd8] sm:$0xff]
  %v4331 = vld [vmem:[#allocation3 + $0xe0] sm:$0xff]
  %v4332 = vld [vmem:[#allocation3 + $0xe8] sm:$0xff]
  %v4333 = vld [vmem:[#allocation3 + $0xf0] sm:$0xff]
  %v4334 = vld [vmem:[#allocation3 + $0xf8] sm:$0xff]
  %v4335 = vld [vmem:[#allocation3 + $0x100] sm:$0xff]
  %v4336 = vld [vmem:[#allocation3 + $0x108] sm:$0xff]
  %v4337 = vld [vmem:[#allocation3 + $0x110] sm:$0xff]
  %v4338 = vld [vmem:[#allocation3 + $0x118] sm:$0xff]
  %s4339 = scalar_lea.vmem %s2, 112
  %v4340 = vld [vmem:[%s4339] sm:$0xff]
  %v4341 = vld [vmem:[%s4339 + $0x8] sm:$0xff]
  %4343 = vset.pattern.permute.xlu0 0
  %4344 = vperm.xlu0 %4343, %v4340
  %v4345 = vpop.permute.xlu0 %4344
  %4348 = vset.pattern.permute.xlu0 0
  %4349 = vperm.xlu0 %4348, %v4341
  %v4350 = vpop.permute.xlu0 %4349
  %v4353 = vsel %vm567, %v4300, 0
  %v4356 = vsel %vm567, %v4302, 0
  %4358 = vmatprep.subr.mxu0 %v4304
  %4359 = vmatpush1.msra.mxu0 %v4303
  %4360 = vmatprep.subr.mxu0 %v4306
  %4361 = vmatpush1.msra.mxu0 %v4305
  %4362 = vmatprep.subr.mxu0 %v4308
  %4363 = vmatpush1.msra.mxu0 %v4307
  %4364 = vmatprep.subr.mxu0 %v4310
  %4365 = vmatpush1.msra.mxu0 %v4309
  %4366 = vmatprep.subr.mxu0 %v4312
  %4367 = vmatpush1.msra.mxu0 %v4311
  %4368 = vmatprep.subr.mxu0 %v4314
  %4369 = vmatpush1.msra.mxu0 %v4313
  %4370 = vmatprep.subr.mxu0 %v4316
  %4371 = vmatpush1.msra.mxu0 %v4315
  %4372 = vmatprep.subr.mxu0 %v4318
  %4373 = vmatpush1.msra.mxu0 %v4317
  %4374 = vmatprep.subr.mxu0 %v4320
  %4375 = vmatpush1.msra.mxu0 %v4319
  %4376 = vmatprep.subr.mxu0 %v4322
  %4377 = vmatpush1.msra.mxu0 %v4321
  %4378 = vmatprep.subr.mxu0 %v4324
  %4379 = vmatpush1.msra.mxu0 %v4323
  %4380 = vmatprep.subr.mxu0 %v4326
  %4381 = vmatpush1.msra.mxu0 %v4325
  %4382 = vmatprep.subr.mxu0 %v4328
  %4383 = vmatpush1.msra.mxu0 %v4327
  %4384 = vmatprep.subr.mxu0 %v4330
  %4385 = vmatpush1.msra.mxu0 %v4329
  %4386 = vmatprep.subr.mxu0 %v4332
  %4387 = vmatpush1.msra.mxu0 %v4331
  %4388 = vmatprep.subr.mxu0 %v4334
  %4389 = vmatpush1.msra.mxu0 %v4333
  %4390 = vmatprep.subr.mxu0 %v4336
  %4391 = vmatpush1.msra.mxu0 %v4335
  %4392 = vmatprep.subr.mxu0 %v4338
  %4393 = vmatpush1.msra.mxu0 %v4337
  %4394 = vmatprep.subr.mxu0 0.0
  %4395 = vmatpush1.msra.mxu0 0.0
  %4396 = vmatprep.subr.mxu0 0.0
  %4397 = vmatpush1.msra.mxu0 0.0
  %4398 = vmatprep.subr.mxu0 0.0
  %4399 = vmatpush1.msra.mxu0 0.0
  %4400 = vmatprep.subr.mxu0 0.0
  %4401 = vmatpush1.msra.mxu0 0.0
  %4402 = vmatprep.subr.mxu0 0.0
  %4403 = vmatpush1.msra.mxu0 0.0
  %4404 = vmatprep.subr.mxu0 0.0
  %4405 = vmatpush1.msra.mxu0 0.0
  %4406 = vmatprep.subr.mxu0 0.0
  %4407 = vmatpush1.msra.mxu0 0.0
  %4408 = vmatprep.subr.mxu0 0.0
  %4409 = vmatpush1.msra.mxu0 0.0
  %4410 = vmatprep.subr.mxu0 0.0
  %4411 = vmatpush1.msra.mxu0 0.0
  %4412 = vmatprep.subr.mxu0 0.0
  %4413 = vmatpush1.msra.mxu0 0.0
  %4414 = vmatprep.subr.mxu0 0.0
  %4415 = vmatpush1.msra.mxu0 0.0
  %4416 = vmatprep.subr.mxu0 0.0
  %4417 = vmatpush1.msra.mxu0 0.0
  %4418 = vmatprep.subr.mxu0 0.0
  %4419 = vmatpush1.msra.mxu0 0.0
  %4420 = vmatprep.subr.mxu0 0.0
  %4421 = vmatpush1.msra.mxu0 0.0
  %4422 = vmatprep.mubr.f32.mxu0 %v4353
  %4423 = vmatmul.mubr.f32.gmra.mrb[0].mxu0 %v4299
  %v4424 = vpop.f32.mrb[0].mxu0
  %v4425 = vadd.f32 %v4345, %v4424
  %v4426 = vpop.f32.mrb[0].mxu0
  %v4427 = vadd.f32 %v4345, %v4426
  %4428 = vmatprep.mubr.f32.mxu0 %v4356
  %4429 = vmatmul.mubr.f32.gmra.mrb[0].mxu0 %v4301
  %v4430 = vpop.f32.mrb[0].mxu0
  %v4431 = vadd.f32 %v4350, %v4430
  %v4432 = vpop.f32.mrb[0].mxu0
  %v4433 = vadd.f32 %v4350, %v4432
  %4434 = vdwg.mxu0
  %v4435 = vmax.f32 %v4425, 0.0
  %v4436 = vmax.f32 %v4427, 0.0
  %v4437 = vmax.f32 %v4431, 0.0
  %v4438 = vmax.f32 %v4433, 0.0
  %v4439 = vmul.f32 %v4435, %v3324
  %v4440 = vmul.f32 %v4436, %v3328
  %v4441 = vmul.f32 %v4437, %v3324
  %v4442 = vmul.f32 %v4438, %v3328
  %4443 = vrot.lane.b32.xlu0 %v4439, 11
  %v4444 = vpop.permute.xlu0 %4443
  %4445 = vrot.lane.b32.xlu0 %v4441, 11
  %v4446 = vpop.permute.xlu0 %4445
  %4447 = vrot.lane.b32.xlu0 %v4440, 11
  %v4448 = vpop.permute.xlu0 %4447
  %4449 = vrot.lane.b32.xlu0 %v4442, 11
  %v4450 = vpop.permute.xlu0 %4449
  %v4451 = vsel %vm3049, %v4444, %v4448
  %v4452 = vsel %vm3049, %v4446, %v4450
  %v4453 = vsel %vm3049, %v4448, %v4444
  %v4454 = vsel %vm3049, %v4450, %v4446
  %4455 = vst [vmem:[#allocation3] sm:$0xff] %v4453
  %4456 = vst [vmem:[#allocation3 + $0x8] sm:$0xff] %v4451
  %4457 = vst [vmem:[#allocation3 + $0x10] sm:$0xff] %v4454
  %4458 = vst [vmem:[#allocation3 + $0x18] sm:$0xff] %v4452
  %4459 = vrot.lane.b32.xlu0 %v4439, 10
  %v4460 = vpop.permute.xlu0 %4459
  %4461 = vrot.lane.b32.xlu0 %v4441, 10
  %v4462 = vpop.permute.xlu0 %4461
  %4463 = vrot.lane.b32.xlu0 %v4440, 10
  %v4464 = vpop.permute.xlu0 %4463
  %4465 = vrot.lane.b32.xlu0 %v4442, 10
  %v4466 = vpop.permute.xlu0 %4465
  %v4467 = vsel %vm3066, %v4460, %v4464
  %v4468 = vsel %vm3066, %v4462, %v4466
  %v4469 = vsel %vm3066, %v4464, %v4460
  %v4470 = vsel %vm3066, %v4466, %v4462
  %4471 = vst [vmem:[#allocation3 + $0x20] sm:$0xff] %v4469
  %4472 = vst [vmem:[#allocation3 + $0x28] sm:$0xff] %v4467
  %4473 = vst [vmem:[#allocation3 + $0x30] sm:$0xff] %v4470
  %4474 = vst [vmem:[#allocation3 + $0x38] sm:$0xff] %v4468
  %4475 = vrot.lane.b32.xlu0 %v4439, 9
  %v4476 = vpop.permute.xlu0 %4475
  %4477 = vrot.lane.b32.xlu0 %v4441, 9
  %v4478 = vpop.permute.xlu0 %4477
  %4479 = vrot.lane.b32.xlu0 %v4440, 9
  %v4480 = vpop.permute.xlu0 %4479
  %4481 = vrot.lane.b32.xlu0 %v4442, 9
  %v4482 = vpop.permute.xlu0 %4481
  %v4483 = vsel %vm3083, %v4476, %v4480
  %v4484 = vsel %vm3083, %v4478, %v4482
  %v4485 = vsel %vm3083, %v4480, %v4476
  %v4486 = vsel %vm3083, %v4482, %v4478
  %4487 = vst [vmem:[#allocation3 + $0x40] sm:$0xff] %v4485
  %4488 = vst [vmem:[#allocation3 + $0x48] sm:$0xff] %v4483
  %4489 = vst [vmem:[#allocation3 + $0x50] sm:$0xff] %v4486
  %4490 = vst [vmem:[#allocation3 + $0x58] sm:$0xff] %v4484
  %4491 = vrot.lane.b32.xlu0 %v4439, 1
  %v4492 = vpop.permute.xlu0 %4491
  %4493 = vrot.lane.b32.xlu0 %v4441, 1
  %v4494 = vpop.permute.xlu0 %4493
  %4495 = vrot.lane.b32.xlu0 %v4440, 1
  %v4496 = vpop.permute.xlu0 %4495
  %4497 = vrot.lane.b32.xlu0 %v4442, 1
  %v4498 = vpop.permute.xlu0 %4497
  %v4499 = vsel %vm210, %v4492, %v4496
  %v4500 = vsel %vm210, %v4494, %v4498
  %v4501 = vsel %vm210, %v4496, %v4492
  %v4502 = vsel %vm210, %v4498, %v4494
  %4503 = vst [vmem:[#allocation3 + $0x60] sm:$0xff] %v4501
  %4504 = vst [vmem:[#allocation3 + $0x68] sm:$0xff] %v4499
  %4505 = vst [vmem:[#allocation3 + $0x70] sm:$0xff] %v4502
  %4506 = vst [vmem:[#allocation3 + $0x78] sm:$0xff] %v4500
  %4507 = vst [vmem:[#allocation3 + $0x80] sm:$0xff] %v4439
  %4508 = vst [vmem:[#allocation3 + $0x88] sm:$0xff] %v4440
  %4509 = vst [vmem:[#allocation3 + $0x90] sm:$0xff] %v4441
  %4510 = vst [vmem:[#allocation3 + $0x98] sm:$0xff] %v4442
  %4511 = vrot.lane.b32.xlu0 %v4439, 127
  %v4512 = vpop.permute.xlu0 %4511
  %4513 = vrot.lane.b32.xlu0 %v4441, 127
  %v4514 = vpop.permute.xlu0 %4513
  %4515 = vrot.lane.b32.xlu0 %v4440, 127
  %v4516 = vpop.permute.xlu0 %4515
  %4517 = vrot.lane.b32.xlu0 %v4442, 127
  %v4518 = vpop.permute.xlu0 %4517
  %v4519 = vsel %vm271, %v4512, %v4516
  %v4520 = vsel %vm271, %v4514, %v4518
  %v4521 = vsel %vm271, %v4516, %v4512
  %v4522 = vsel %vm271, %v4518, %v4514
  %4523 = vst [vmem:[#allocation3 + $0xa0] sm:$0xff] %v4519
  %4524 = vst [vmem:[#allocation3 + $0xa8] sm:$0xff] %v4521
  %4525 = vst [vmem:[#allocation3 + $0xb0] sm:$0xff] %v4520
  %4526 = vst [vmem:[#allocation3 + $0xb8] sm:$0xff] %v4522
  %4527 = vrot.lane.b32.xlu0 %v4439, 119
  %v4528 = vpop.permute.xlu0 %4527
  %4529 = vrot.lane.b32.xlu0 %v4441, 119
  %v4530 = vpop.permute.xlu0 %4529
  %4531 = vrot.lane.b32.xlu0 %v4440, 119
  %v4532 = vpop.permute.xlu0 %4531
  %4533 = vrot.lane.b32.xlu0 %v4442, 119
  %v4534 = vpop.permute.xlu0 %4533
  %v4535 = vsel %vm3136, %v4528, %v4532
  %v4536 = vsel %vm3136, %v4530, %v4534
  %v4537 = vsel %vm3136, %v4532, %v4528
  %v4538 = vsel %vm3136, %v4534, %v4530
  %4539 = vst [vmem:[#allocation3 + $0xc0] sm:$0xff] %v4535
  %4540 = vst [vmem:[#allocation3 + $0xc8] sm:$0xff] %v4537
  %4541 = vst [vmem:[#allocation3 + $0xd0] sm:$0xff] %v4536
  %4542 = vst [vmem:[#allocation3 + $0xd8] sm:$0xff] %v4538
  %4543 = vrot.lane.b32.xlu0 %v4439, 118
  %v4544 = vpop.permute.xlu0 %4543
  %4545 = vrot.lane.b32.xlu0 %v4441, 118
  %v4546 = vpop.permute.xlu0 %4545
  %4547 = vrot.lane.b32.xlu0 %v4440, 118
  %v4548 = vpop.permute.xlu0 %4547
  %4549 = vrot.lane.b32.xlu0 %v4442, 118
  %v4550 = vpop.permute.xlu0 %4549
  %v4551 = vsel %vm3153, %v4544, %v4548
  %v4552 = vsel %vm3153, %v4546, %v4550
  %v4553 = vsel %vm3153, %v4548, %v4544
  %v4554 = vsel %vm3153, %v4550, %v4546
  %4555 = vst [vmem:[#allocation3 + $0xe0] sm:$0xff] %v4551
  %4556 = vst [vmem:[#allocation3 + $0xe8] sm:$0xff] %v4553
  %4557 = vst [vmem:[#allocation3 + $0xf0] sm:$0xff] %v4552
  %4558 = vst [vmem:[#allocation3 + $0xf8] sm:$0xff] %v4554
  %4559 = vrot.lane.b32.xlu0 %v4439, 117
  %v4560 = vpop.permute.xlu0 %4559
  %4561 = vrot.lane.b32.xlu0 %v4441, 117
  %v4562 = vpop.permute.xlu0 %4561
  %4563 = vrot.lane.b32.xlu0 %v4440, 117
  %v4564 = vpop.permute.xlu0 %4563
  %4565 = vrot.lane.b32.xlu0 %v4442, 117
  %v4566 = vpop.permute.xlu0 %4565
  %v4567 = vsel %vm3170, %v4560, %v4564
  %v4568 = vsel %vm3170, %v4562, %v4566
  %v4569 = vsel %vm3170, %v4564, %v4560
  %v4570 = vsel %vm3170, %v4566, %v4562
  %4571 = vst [vmem:[#allocation3 + $0x100] sm:$0xff] %v4567
  %4572 = vst [vmem:[#allocation3 + $0x108] sm:$0xff] %v4569
  %4573 = vst [vmem:[#allocation3 + $0x110] sm:$0xff] %v4568
  %4574 = vst [vmem:[#allocation3 + $0x118] sm:$0xff] %v4570
  %s4575 = scalar_lea.vmem %s1, 256
  %v4576 = vld [vmem:[%s4575] sm:$0xff]
  %v4577 = vld [vmem:[%s4575 + $0x8] sm:$0xff]
  %v4578 = vld [vmem:[%s4575 + $0x10] sm:$0xff]
  %v4579 = vld [vmem:[%s4575 + $0x18] sm:$0xff]
  %v4580 = vld [vmem:[#allocation3] sm:$0xff]
  %v4581 = vld [vmem:[#allocation3 + $0x8] sm:$0xff]
  %v4582 = vld [vmem:[#allocation3 + $0x10] sm:$0xff]
  %v4583 = vld [vmem:[#allocation3 + $0x18] sm:$0xff]
  %v4584 = vld [vmem:[#allocation3 + $0x20] sm:$0xff]
  %v4585 = vld [vmem:[#allocation3 + $0x28] sm:$0xff]
  %v4586 = vld [vmem:[#allocation3 + $0x30] sm:$0xff]
  %v4587 = vld [vmem:[#allocation3 + $0x38] sm:$0xff]
  %v4588 = vld [vmem:[#allocation3 + $0x40] sm:$0xff]
  %v4589 = vld [vmem:[#allocation3 + $0x48] sm:$0xff]
  %v4590 = vld [vmem:[#allocation3 + $0x50] sm:$0xff]
  %v4591 = vld [vmem:[#allocation3 + $0x58] sm:$0xff]
  %v4592 = vld [vmem:[#allocation3 + $0x60] sm:$0xff]
  %v4593 = vld [vmem:[#allocation3 + $0x68] sm:$0xff]
  %v4594 = vld [vmem:[#allocation3 + $0x70] sm:$0xff]
  %v4595 = vld [vmem:[#allocation3 + $0x78] sm:$0xff]
  %v4596 = vld [vmem:[#allocation3 + $0x80] sm:$0xff]
  %v4597 = vld [vmem:[#allocation3 + $0x88] sm:$0xff]
  %v4598 = vld [vmem:[#allocation3 + $0x90] sm:$0xff]
  %v4599 = vld [vmem:[#allocation3 + $0x98] sm:$0xff]
  %v4600 = vld [vmem:[#allocation3 + $0xa0] sm:$0xff]
  %v4601 = vld [vmem:[#allocation3 + $0xa8] sm:$0xff]
  %v4602 = vld [vmem:[#allocation3 + $0xb0] sm:$0xff]
  %v4603 = vld [vmem:[#allocation3 + $0xb8] sm:$0xff]
  %v4604 = vld [vmem:[#allocation3 + $0xc0] sm:$0xff]
  %v4605 = vld [vmem:[#allocation3 + $0xc8] sm:$0xff]
  %v4606 = vld [vmem:[#allocation3 + $0xd0] sm:$0xff]
  %v4607 = vld [vmem:[#allocation3 + $0xd8] sm:$0xff]
  %v4608 = vld [vmem:[#allocation3 + $0xe0] sm:$0xff]
  %v4609 = vld [vmem:[#allocation3 + $0xe8] sm:$0xff]
  %v4610 = vld [vmem:[#allocation3 + $0xf0] sm:$0xff]
  %v4611 = vld [vmem:[#allocation3 + $0xf8] sm:$0xff]
  %v4612 = vld [vmem:[#allocation3 + $0x100] sm:$0xff]
  %v4613 = vld [vmem:[#allocation3 + $0x108] sm:$0xff]
  %v4614 = vld [vmem:[#allocation3 + $0x110] sm:$0xff]
  %v4615 = vld [vmem:[#allocation3 + $0x118] sm:$0xff]
  %s4616 = scalar_lea.vmem %s2, 128
  %v4617 = vld [vmem:[%s4616] sm:$0xff]
  %v4618 = vld [vmem:[%s4616 + $0x8] sm:$0xff]
  %4620 = vset.pattern.permute.xlu0 0
  %4621 = vperm.xlu0 %4620, %v4617
  %v4622 = vpop.permute.xlu0 %4621
  %4625 = vset.pattern.permute.xlu0 0
  %4626 = vperm.xlu0 %4625, %v4618
  %v4627 = vpop.permute.xlu0 %4626
  %v4630 = vsel %vm567, %v4577, 0
  %v4633 = vsel %vm567, %v4579, 0
  %4635 = vmatprep.subr.mxu0 %v4581
  %4636 = vmatpush1.msra.mxu0 %v4580
  %4637 = vmatprep.subr.mxu0 %v4583
  %4638 = vmatpush1.msra.mxu0 %v4582
  %4639 = vmatprep.subr.mxu0 %v4585
  %4640 = vmatpush1.msra.mxu0 %v4584
  %4641 = vmatprep.subr.mxu0 %v4587
  %4642 = vmatpush1.msra.mxu0 %v4586
  %4643 = vmatprep.subr.mxu0 %v4589
  %4644 = vmatpush1.msra.mxu0 %v4588
  %4645 = vmatprep.subr.mxu0 %v4591
  %4646 = vmatpush1.msra.mxu0 %v4590
  %4647 = vmatprep.subr.mxu0 %v4593
  %4648 = vmatpush1.msra.mxu0 %v4592
  %4649 = vmatprep.subr.mxu0 %v4595
  %4650 = vmatpush1.msra.mxu0 %v4594
  %4651 = vmatprep.subr.mxu0 %v4597
  %4652 = vmatpush1.msra.mxu0 %v4596
  %4653 = vmatprep.subr.mxu0 %v4599
  %4654 = vmatpush1.msra.mxu0 %v4598
  %4655 = vmatprep.subr.mxu0 %v4601
  %4656 = vmatpush1.msra.mxu0 %v4600
  %4657 = vmatprep.subr.mxu0 %v4603
  %4658 = vmatpush1.msra.mxu0 %v4602
  %4659 = vmatprep.subr.mxu0 %v4605
  %4660 = vmatpush1.msra.mxu0 %v4604
  %4661 = vmatprep.subr.mxu0 %v4607
  %4662 = vmatpush1.msra.mxu0 %v4606
  %4663 = vmatprep.subr.mxu0 %v4609
  %4664 = vmatpush1.msra.mxu0 %v4608
  %4665 = vmatprep.subr.mxu0 %v4611
  %4666 = vmatpush1.msra.mxu0 %v4610
  %4667 = vmatprep.subr.mxu0 %v4613
  %4668 = vmatpush1.msra.mxu0 %v4612
  %4669 = vmatprep.subr.mxu0 %v4615
  %4670 = vmatpush1.msra.mxu0 %v4614
  %4671 = vmatprep.subr.mxu0 0.0
  %4672 = vmatpush1.msra.mxu0 0.0
  %4673 = vmatprep.subr.mxu0 0.0
  %4674 = vmatpush1.msra.mxu0 0.0
  %4675 = vmatprep.subr.mxu0 0.0
  %4676 = vmatpush1.msra.mxu0 0.0
  %4677 = vmatprep.subr.mxu0 0.0
  %4678 = vmatpush1.msra.mxu0 0.0
  %4679 = vmatprep.subr.mxu0 0.0
  %4680 = vmatpush1.msra.mxu0 0.0
  %4681 = vmatprep.subr.mxu0 0.0
  %4682 = vmatpush1.msra.mxu0 0.0
  %4683 = vmatprep.subr.mxu0 0.0
  %4684 = vmatpush1.msra.mxu0 0.0
  %4685 = vmatprep.subr.mxu0 0.0
  %4686 = vmatpush1.msra.mxu0 0.0
  %4687 = vmatprep.subr.mxu0 0.0
  %4688 = vmatpush1.msra.mxu0 0.0
  %4689 = vmatprep.subr.mxu0 0.0
  %4690 = vmatpush1.msra.mxu0 0.0
  %4691 = vmatprep.subr.mxu0 0.0
  %4692 = vmatpush1.msra.mxu0 0.0
  %4693 = vmatprep.subr.mxu0 0.0
  %4694 = vmatpush1.msra.mxu0 0.0
  %4695 = vmatprep.subr.mxu0 0.0
  %4696 = vmatpush1.msra.mxu0 0.0
  %4697 = vmatprep.subr.mxu0 0.0
  %4698 = vmatpush1.msra.mxu0 0.0
  %4699 = vmatprep.mubr.f32.mxu0 %v4630
  %4700 = vmatmul.mubr.f32.gmra.mrb[0].mxu0 %v4576
  %v4701 = vpop.f32.mrb[0].mxu0
  %v4702 = vadd.f32 %v4622, %v4701
  %v4703 = vpop.f32.mrb[0].mxu0
  %v4704 = vadd.f32 %v4622, %v4703
  %4705 = vmatprep.mubr.f32.mxu0 %v4633
  %4706 = vmatmul.mubr.f32.gmra.mrb[0].mxu0 %v4578
  %v4707 = vpop.f32.mrb[0].mxu0
  %v4708 = vadd.f32 %v4627, %v4707
  %v4709 = vpop.f32.mrb[0].mxu0
  %v4710 = vadd.f32 %v4627, %v4709
  %4711 = vdwg.mxu0
  %v4712 = vmax.f32 %v4702, 0.0
  %v4713 = vmax.f32 %v4704, 0.0
  %v4714 = vmax.f32 %v4708, 0.0
  %v4715 = vmax.f32 %v4710, 0.0
  %v4716 = vmul.f32 %v4712, %v3324
  %v4717 = vmul.f32 %v4713, %v3328
  %v4718 = vmul.f32 %v4714, %v3324
  %v4719 = vmul.f32 %v4715, %v3328
  %4720 = vst [vmem:[%s6] sm:$0xff] %v4716
  %4721 = vst [vmem:[%s6 + $0x8] sm:$0xff] %v4717
  %4722 = vst [vmem:[%s6 + $0x10] sm:$0xff] %v4718
  %4723 = vst [vmem:[%s6 + $0x18] sm:$0xff] %v4719
  // Predicated region
  $region26: #{cnn9_forward.1} parent=0 // pred_check
    _
  $region27: #{cnn9_forward.1} parent=0 // pred_check_branch
    %4725 = sbr.rel (0) target = $region29
  $region28: #{cnn9_forward.1} parent=0 // pred_region
    _
  $region29: #{cnn9_forward.1} parent=0 // pred_fallthru
    _
  // Predicated region
  $region30: #{cnn9_forward.1} parent=0 // pred_check
    _
  $region31: #{cnn9_forward.1} parent=0 // pred_check_branch
    %4727 = sbr.rel (0) target = $region33
  $region32: #{cnn9_forward.1} parent=0 // pred_region
    _
  $region33: #{cnn9_forward.1} parent=0 // pred_fallthru
    _

</llo_original>
